<compile_context>
chip_gen: v5e
topology: v5e:2x2
jax: 0.10.0
libtpu: 0.0.40
codegen_flags: <defaults>
</compile_context>

<pallas_src>
import functools
from typing import NamedTuple

import jax
import jax.numpy as jnp
from jax.experimental import pallas as pl
from jax.experimental.pallas import tpu as pltpu

LANE = 128   # TPU lane width: keep channel dims multiples of this (lane-dense)


def _round_up(x, m):
    return (x + m - 1) // m * m


def _pick_tile_m(m):
    # Prefer 512-row tiles (near the HBM-roofline plateau), but keep >=2 grid
    # steps when possible so v7x's two TensorCores both get work.
    for t in (512, 256, 128):
        if m >= 2 * t:
            return t
    return min(_round_up(m, 8), 128)


# ----------------------------------------------------------------------------
# Kernel 1: fused multi-branch 1x1 conv + folded BN + SiLU
#   y = silu((sum_b x_b @ w_b) * scale + bias)
# cv1 is the 1-branch case; cv2 consumes all C2f branches directly so the
# channel concat is never written to HBM.
# ----------------------------------------------------------------------------
def _make_conv1x1_kernel(n_branches):
    def kernel(*refs):
        xs = refs[:n_branches]
        ws = refs[n_branches:2 * n_branches]
        scale_ref = refs[2 * n_branches]
        bias_ref = refs[2 * n_branches + 1]
        o_ref = refs[-1]
        acc = jnp.dot(xs[0][...], ws[0][...], preferred_element_type=jnp.float32)
        for b in range(1, n_branches):
            acc = acc + jnp.dot(xs[b][...], ws[b][...],
                                preferred_element_type=jnp.float32)
        y = acc * scale_ref[...] + bias_ref[...]
        y = y * jax.nn.sigmoid(y)                      # SiLU
        o_ref[...] = y.astype(o_ref.dtype)
    return kernel


def conv1x1_bn_silu(xs, ws, scale, bias):
    """xs: list of (M, Cin_b); ws: list of (Cin_b, Cout). Returns (M, Cout)."""
    xs = list(xs)
    ws = list(ws)
    m = xs[0].shape[0]
    cout = ws[0].shape[1]
    tile_m = _pick_tile_m(m)
    mp = _round_up(m, tile_m)
    if mp != m:
        xs = [jnp.pad(x, ((0, mp - m), (0, 0))) for x in xs]
    in_specs = (
        [pl.BlockSpec((tile_m, x.shape[1]), lambda i: (i, 0)) for x in xs]
        + [pl.BlockSpec(w.shape, lambda i: (0, 0)) for w in ws]  # grid-invariant
        + [pl.BlockSpec((1, cout), lambda i: (0, 0)),
           pl.BlockSpec((1, cout), lambda i: (0, 0))]
    )
    out = pl.pallas_call(
        _make_conv1x1_kernel(len(xs)),
        out_shape=jax.ShapeDtypeStruct((mp, cout), xs[0].dtype),
        grid=(mp // tile_m,),
        in_specs=in_specs,
        out_specs=pl.BlockSpec((tile_m, cout), lambda i: (i, 0)),
        compiler_params=pltpu.CompilerParams(
            dimension_semantics=("parallel",)),
    )(*xs, *ws, scale.reshape(1, -1), bias.reshape(1, -1))
    return out[:m]


# ----------------------------------------------------------------------------
# Kernel 2: fused Bottleneck — two 3x3 "same" convs (+BN+SiLU each) and the
# optional residual add, all in one kernel.  The first conv's output stays in a
# VMEM scratch (with zero halo) and feeds the second conv directly; each conv
# is a single MXU dot with K = 9*Cin over 9 shifted views built in VMEM.
# ----------------------------------------------------------------------------
def _make_bottleneck_kernel(h, w, fuse_add):
    def kernel(xp_ref, w1_ref, s1_ref, b1_ref, w2_ref, s2_ref, b2_ref,
               o_ref, hid_ref):
        x = xp_ref[0]                                   # (h+2, w+2, c) padded
        c = x.shape[-1]

        def taps(img):                                  # im2col in VMEM
            cols = [img[dy:dy + h, dx:dx + w, :]
                    for dy in range(3) for dx in range(3)]
            return jnp.concatenate(cols, axis=-1).reshape(h * w, 9 * c)

        # conv1 (3x3) + BN + SiLU
        y = jnp.dot(taps(x), w1_ref[...], preferred_element_type=jnp.float32)
        y = y * s1_ref[...] + b1_ref[...]
        y = y * jax.nn.sigmoid(y)                       # SiLU

        # intermediate stays on-chip: zero halo + interior write into scratch
        hid_ref[...] = jnp.zeros_like(hid_ref)
        hid_ref[pl.ds(1, h), pl.ds(1, w), :] = y.reshape(h, w, c)

        # conv2 (3x3) + BN + SiLU
        y2 = jnp.dot(taps(hid_ref[...]), w2_ref[...],
                     preferred_element_type=jnp.float32)
        y2 = y2 * s2_ref[...] + b2_ref[...]
        y2 = y2 * jax.nn.sigmoid(y2)                    # SiLU

        if fuse_add:                                    # Bottleneck shortcut:
            # residual = interior of the already-loaded padded input
            y2 = y2 + x[1:h + 1, 1:w + 1, :].reshape(h * w, c).astype(jnp.float32)

        o_ref[...] = y2.reshape(o_ref.shape).astype(o_ref.dtype)
    return kernel


def bottleneck_3x3(z_nhwc, w9a, sa, ba, w9b, sb, bb, add):
    """Fused Bottleneck: z (N,H,W,Cpad) -> silu(bn(conv3(silu(bn(conv3(z)))))) [+ z]."""
    n, h, w, c = z_nhwc.shape
    xp = jnp.pad(z_nhwc, ((0, 0), (1, 1), (1, 1), (0, 0)))  # pad once (no 9x taps in HBM)
    in_specs = [
        pl.BlockSpec((1, h + 2, w + 2, c), lambda i: (i, 0, 0, 0)),
        pl.BlockSpec((9 * c, c), lambda i: (0, 0)),     # grid-invariant weights
        pl.BlockSpec((1, c), lambda i: (0, 0)),
        pl.BlockSpec((1, c), lambda i: (0, 0)),
        pl.BlockSpec((9 * c, c), lambda i: (0, 0)),
        pl.BlockSpec((1, c), lambda i: (0, 0)),
        pl.BlockSpec((1, c), lambda i: (0, 0)),
    ]
    return pl.pallas_call(
        _make_bottleneck_kernel(h, w, add),
        out_shape=jax.ShapeDtypeStruct((n, h, w, c), z_nhwc.dtype),
        grid=(n,),
        in_specs=in_specs,
        out_specs=pl.BlockSpec((1, h, w, c), lambda i: (i, 0, 0, 0)),
        scratch_shapes=[pltpu.VMEM((h + 2, w + 2, c), jnp.float32)],
        compiler_params=pltpu.CompilerParams(
            dimension_semantics=("parallel",)),
    )(xp, w9a, sa.reshape(1, -1), ba.reshape(1, -1),
      w9b, sb.reshape(1, -1), bb.reshape(1, -1))


# ----------------------------------------------------------------------------
# Static config + parameter construction (matches nn.Conv2d + nn.BatchNorm2d)
# ----------------------------------------------------------------------------
class C2fConfig(NamedTuple):
    c1: int
    c2: int
    n: int
    c: int
    add: bool


def init_conv_bn(key, cin, cout, k):
    k1, k2, k3, k4, k5 = jax.random.split(key, 5)
    w = jax.random.normal(k1, (cout, cin, k, k), jnp.float32) / jnp.sqrt(cin * k * k)
    gamma = jax.random.uniform(k2, (cout,), minval=0.5, maxval=1.5)
    beta = jax.random.normal(k3, (cout,), jnp.float32) * 0.1
    mean = jax.random.normal(k4, (cout,), jnp.float32) * 0.1
    var = jax.random.uniform(k5, (cout,), minval=0.5, maxval=1.5)
    eps = 1e-5                                    # BatchNorm2d eval mode
    scale = gamma / jnp.sqrt(var + eps)
    bias = beta - mean * scale
    return {"w": w, "scale": scale, "bias": bias}


def init_c2f(key, c1, c2, n=1, shortcut=False, e=0.5):
    c = int(c2 * e)
    keys = jax.random.split(key, 2 + 2 * n)
    raw = {
        "cv1": init_conv_bn(keys[0], c1, 2 * c, 1),
        "cv2": init_conv_bn(keys[1], (2 + n) * c, c2, 1),
        "m": [(init_conv_bn(keys[2 + 2 * i], c, c, 3),
               init_conv_bn(keys[3 + 2 * i], c, c, 3)) for i in range(n)],
    }
    cfg = C2fConfig(c1=c1, c2=c2, n=n, c=c, add=bool(shortcut))  # c1==c2==c inside
    return raw, cfg


def _pad_vec(v, n):
    return jnp.zeros((n,), jnp.float32).at[:v.shape[0]].set(v)


def _pack_w3(w, cin, cout, cin_pad, cout_pad):
    # PyTorch (cout, cin, 3, 3) -> tap-major (9*cin_pad, cout_pad)
    w_t = jnp.transpose(w, (2, 3, 1, 0))                  # (3, 3, cin, cout)
    wp = jnp.zeros((3, 3, cin_pad, cout_pad), jnp.float32)
    wp = wp.at[:, :, :cin, :cout].set(w_t)
    return wp.reshape(9 * cin_pad, cout_pad)


def prepare_c2f_params(raw, cfg):
    c, c1, c2, n = cfg.c, cfg.c1, cfg.c2, cfg.n
    c1_pad = _round_up(c1, LANE)
    c_pad = _round_up(c, LANE)
    c2_pad = _round_up(c2, LANE)

    # cv1 (1x1, c1 -> 2c): output channels laid out as two branch-padded halves
    # so the C2f chunk(2) is a lane-aligned slice.
    w = raw["cv1"]["w"][:, :, 0, 0]                       # (2c, c1)
    w1 = jnp.zeros((c1_pad, 2 * c_pad), jnp.float32)
    w1 = w1.at[:c1, :c].set(w[:c].T).at[:c1, c_pad:c_pad + c].set(w[c:].T)
    s1 = jnp.zeros((2 * c_pad,), jnp.float32)
    s1 = s1.at[:c].set(raw["cv1"]["scale"][:c]).at[c_pad:c_pad + c].set(raw["cv1"]["scale"][c:])
    b1 = jnp.zeros((2 * c_pad,), jnp.float32)
    b1 = b1.at[:c].set(raw["cv1"]["bias"][:c]).at[c_pad:c_pad + c].set(raw["cv1"]["bias"][c:])

    # Bottleneck 3x3 convs (c -> c)
    m_params = []
    for (pa, pb) in raw["m"]:
        m_params.append((
            _pack_w3(pa["w"], c, c, c_pad, c_pad),
            _pad_vec(pa["scale"], c_pad), _pad_vec(pa["bias"], c_pad),
            _pack_w3(pb["w"], c, c, c_pad, c_pad),
            _pad_vec(pb["scale"], c_pad), _pad_vec(pb["bias"], c_pad),
        ))

    # cv2 (1x1, (2+n)c -> c2): per-branch weight chunks, concat never built.
    w2 = raw["cv2"]["w"][:, :, 0, 0]                      # (c2, (2+n)c)
    ws2 = []
    for b in range(2 + n):
        wb = jnp.zeros((c_pad, c2_pad), jnp.float32)
        wb = wb.at[:c, :c2].set(w2[:, b * c:(b + 1) * c].T)
        ws2.append(wb)
    s2 = _pad_vec(raw["cv2"]["scale"], c2_pad)
    b2 = _pad_vec(raw["cv2"]["bias"], c2_pad)

    return {"cv1": (w1, s1, b1), "m": m_params, "cv2": (tuple(ws2), s2, b2)}


# ----------------------------------------------------------------------------
# C2f forward (NCHW in / NCHW out, like the PyTorch module)
# ----------------------------------------------------------------------------
@functools.partial(jax.jit, static_argnames=("cfg",))
def c2f_forward(x_nchw, params, cfg):
    n, c1, h, w = x_nchw.shape
    c1_pad = params["cv1"][0].shape[0]
    c_pad = params["cv1"][0].shape[1] // 2
    m = n * h * w

    x = jnp.transpose(x_nchw, (0, 2, 3, 1))               # -> NHWC
    if c1 < c1_pad:
        x = jnp.pad(x, ((0, 0), (0, 0), (0, 0), (0, c1_pad - c1)))
    xf = x.reshape(m, c1_pad)

    w1, s1, b1 = params["cv1"]
    y0 = conv1x1_bn_silu([xf], [w1], s1, b1)              # (m, 2*c_pad)
    branches = [y0[:, :c_pad], y0[:, c_pad:]]             # chunk(2) lane-aligned

    for (w9a, sa, ba, w9b, sb, bb) in params["m"]:        # fused Bottleneck blocks
        z = branches[-1].reshape(n, h, w, c_pad)
        out3 = bottleneck_3x3(z, w9a, sa, ba, w9b, sb, bb, add=cfg.add)
        branches.append(out3.reshape(m, c_pad))

    ws2, s2, b2 = params["cv2"]
    y = conv1x1_bn_silu(branches, list(ws2), s2, b2)      # (m, c2_pad)
    y = y[:, :cfg.c2].reshape(n, h, w, cfg.c2)
    return jnp.transpose(y, (0, 3, 1, 2))                 # -> NCHW


# ----------------------------------------------------------------------------
# Pure-JAX reference (unpadded weights) for sanity checking
# ----------------------------------------------------------------------------
def _ref_conv(x_nhwc, p, k):
    w_hwio = jnp.transpose(p["w"], (2, 3, 1, 0))          # (k, k, cin, cout)
    y = jax.lax.conv_general_dilated(
        x_nhwc, w_hwio, (1, 1), [(k // 2, k // 2)] * 2,
        dimension_numbers=("NHWC", "HWIO", "NHWC"),
        precision=jax.lax.Precision.HIGHEST)
    y = y * p["scale"] + p["bias"]
    return y * jax.nn.sigmoid(y)


def c2f_reference(x_nchw, raw, cfg):
    x = jnp.transpose(x_nchw, (0, 2, 3, 1))
    c = cfg.c
    y0 = _ref_conv(x, raw["cv1"], 1)
    ys = [y0[..., :c], y0[..., c:]]
    for (pa, pb) in raw["m"]:
        z = ys[-1]
        h = _ref_conv(_ref_conv(z, pa, 3), pb, 3)
        if cfg.add:
            h = z + h
        ys.append(h)
    out = _ref_conv(jnp.concatenate(ys, axis=-1), raw["cv2"], 1)
    return jnp.transpose(out, (0, 3, 1, 2))


if __name__ == "__main__":
    key = jax.random.PRNGKey(0)
    kx, kp = jax.random.split(key)

    N, C1, H, W = 2, 4, 16, 16     # NCHW input, like the PyTorch module
    C2, n = 4, 1                   # C2f(c1=4, c2=4, n=1)

    x = jax.random.normal(kx, (N, C1, H, W), jnp.float32)

    for shortcut in (False, True):  # exercise both the plain and fused-add paths
        raw, cfg = init_c2f(kp, C1, C2, n=n, shortcut=shortcut)
        params = prepare_c2f_params(raw, cfg)
        out = jax.block_until_ready(c2f_forward(x, params, cfg=cfg))
        ref = c2f_reference(x, raw, cfg)
        assert out.shape == (N, C2, H, W), out.shape
        err = float(jnp.max(jnp.abs(out - ref)))
        # tolerance allows for MXU f32 default-precision differences vs XLA conv
        assert err < 5e-2, err

    print("KERNEL_OK")
</pallas_src>

<mosaic_0001>
module attributes {stable_mosaic.version = 11 : i64} {
  func.func @kernel(%arg0: i32, %arg1: memref<256x128xf32, #tpu.memory_space<vmem>>, %arg2: memref<128x256xf32, #tpu.memory_space<vmem>>, %arg3: memref<1x256xf32, #tpu.memory_space<vmem>>, %arg4: memref<1x256xf32, #tpu.memory_space<vmem>>, %arg5: memref<256x256xf32, #tpu.memory_space<vmem>>) attributes {dimension_semantics = [#tpu.dimension_semantics<parallel>], iteration_bounds = array<i64: 2>, scalar_prefetch = 0 : i64, scratch_operands = 0 : i64, tpu.core_type = #tpu.core_type<tc>, window_params = [{transform_indices = @transform_0, window_bounds = array<i64: 256, 128>}, {pipeline_mode = #tpu.pipeline_mode<synchronous>, transform_indices = @transform_1, window_bounds = array<i64: 128, 256>}, {pipeline_mode = #tpu.pipeline_mode<synchronous>, transform_indices = @transform_2, window_bounds = array<i64: 1, 256>}, {pipeline_mode = #tpu.pipeline_mode<synchronous>, transform_indices = @transform_3, window_bounds = array<i64: 1, 256>}, {transform_indices = @transform_4, window_bounds = array<i64: 256, 256>}]} {
    %c0 = arith.constant 0 : index
    %c0_0 = arith.constant 0 : index
    %0 = vector.load %arg1[%c0, %c0_0] : memref<256x128xf32, #tpu.memory_space<vmem>>, vector<256x128xf32>
    %c0_1 = arith.constant 0 : index
    %c0_2 = arith.constant 0 : index
    %1 = vector.load %arg2[%c0_1, %c0_2] : memref<128x256xf32, #tpu.memory_space<vmem>>, vector<128x256xf32>
    %cst = arith.constant dense<0.000000e+00> : vector<256x256xf32>
    %2 = tpu.matmul %0, %1, %cst {dimension_numbers = #tpu.dot_dimension_numbers<[1], [0], [0], [1], [0, 0, 1, 1], [], []>} : vector<256x128xf32>, vector<128x256xf32>, vector<256x256xf32> -> vector<256x256xf32>
    %c0_3 = arith.constant 0 : index
    %c0_4 = arith.constant 0 : index
    %3 = vector.load %arg3[%c0_3, %c0_4] : memref<1x256xf32, #tpu.memory_space<vmem>>, vector<1x256xf32>
    %4 = vector.broadcast %3 : vector<1x256xf32> to vector<256x256xf32>
    %5 = arith.mulf %2, %4 : vector<256x256xf32>
    %c0_5 = arith.constant 0 : index
    %c0_6 = arith.constant 0 : index
    %6 = vector.load %arg4[%c0_5, %c0_6] : memref<1x256xf32, #tpu.memory_space<vmem>>, vector<1x256xf32>
    %7 = vector.broadcast %6 : vector<1x256xf32> to vector<256x256xf32>
    %8 = arith.addf %5, %7 : vector<256x256xf32>
    %9 = arith.negf %8 : vector<256x256xf32>
    %10 = math.exp %9 : vector<256x256xf32>
    %cst_7 = arith.constant 1.000000e+00 : f32
    %11 = vector.broadcast %cst_7 : f32 to vector<256x256xf32>
    %12 = arith.addf %11, %10 : vector<256x256xf32>
    %13 = arith.divf %11, %12 : vector<256x256xf32>
    %14 = arith.mulf %8, %13 : vector<256x256xf32>
    %c0_8 = arith.constant 0 : index
    %c0_9 = arith.constant 0 : index
    %15 = vector.load %arg5[%c0_8, %c0_9] : memref<256x256xf32, #tpu.memory_space<vmem>>, vector<256x256xf32>
    tpu.vector_store %arg5[%c0_8, %c0_9], %14 {strides = array<i32>} : memref<256x256xf32, #tpu.memory_space<vmem>>, vector<256x256xf32>,
    return
  }
  func.func @transform_0(%arg0: i32) -> (i32, i32) {
    %c0_i32 = arith.constant 0 : i32
    %c0_i32_0 = arith.constant 0 : i32
    return %arg0, %c0_i32 : i32, i32
  }
  func.func @transform_1(%arg0: i32) -> (i32, i32) {
    %c0_i32 = arith.constant 0 : i32
    %c0_i32_0 = arith.constant 0 : i32
    %c0_i32_1 = arith.constant 0 : i32
    return %c0_i32, %c0_i32_0 : i32, i32
  }
  func.func @transform_2(%arg0: i32) -> (i32, i32) {
    %c0_i32 = arith.constant 0 : i32
    %c0_i32_0 = arith.constant 0 : i32
    %c0_i32_1 = arith.constant 0 : i32
    return %c0_i32, %c0_i32_0 : i32, i32
  }
  func.func @transform_3(%arg0: i32) -> (i32, i32) {
    %c0_i32 = arith.constant 0 : i32
    %c0_i32_0 = arith.constant 0 : i32
    %c0_i32_1 = arith.constant 0 : i32
    return %c0_i32, %c0_i32_0 : i32, i32
  }
  func.func @transform_4(%arg0: i32) -> (i32, i32) {
    %c0_i32 = arith.constant 0 : i32
    %c0_i32_0 = arith.constant 0 : i32
    return %arg0, %c0_i32 : i32, i32
  }
}

module attributes {stable_mosaic.version = 11 : i64} {
  func.func @kernel(%arg0: i32, %arg1: memref<256x128xf32, #tpu.memory_space<vmem>>, %arg2: memref<256x128xf32, #tpu.memory_space<vmem>>, %arg3: memref<256x128xf32, #tpu.memory_space<vmem>>, %arg4: memref<128x128xf32, #tpu.memory_space<vmem>>, %arg5: memref<128x128xf32, #tpu.memory_space<vmem>>, %arg6: memref<128x128xf32, #tpu.memory_space<vmem>>, %arg7: memref<1x128xf32, #tpu.memory_space<vmem>>, %arg8: memref<1x128xf32, #tpu.memory_space<vmem>>, %arg9: memref<256x128xf32, #tpu.memory_space<vmem>>) attributes {dimension_semantics = [#tpu.dimension_semantics<parallel>], iteration_bounds = array<i64: 2>, scalar_prefetch = 0 : i64, scratch_operands = 0 : i64, tpu.core_type = #tpu.core_type<tc>, window_params = [{transform_indices = @transform_0, window_bounds = array<i64: 256, 128>}, {transform_indices = @transform_1, window_bounds = array<i64: 256, 128>}, {transform_indices = @transform_2, window_bounds = array<i64: 256, 128>}, {pipeline_mode = #tpu.pipeline_mode<synchronous>, transform_indices = @transform_3, window_bounds = array<i64: 128, 128>}, {pipeline_mode = #tpu.pipeline_mode<synchronous>, transform_indices = @transform_4, window_bounds = array<i64: 128, 128>}, {pipeline_mode = #tpu.pipeline_mode<synchronous>, transform_indices = @transform_5, window_bounds = array<i64: 128, 128>}, {pipeline_mode = #tpu.pipeline_mode<synchronous>, transform_indices = @transform_6, window_bounds = array<i64: 1, 128>}, {pipeline_mode = #tpu.pipeline_mode<synchronous>, transform_indices = @transform_7, window_bounds = array<i64: 1, 128>}, {transform_indices = @transform_8, window_bounds = array<i64: 256, 128>}]} {
    %c0 = arith.constant 0 : index
    %c0_0 = arith.constant 0 : index
    %0 = vector.load %arg1[%c0, %c0_0] : memref<256x128xf32, #tpu.memory_space<vmem>>, vector<256x128xf32>
    %c0_1 = arith.constant 0 : index
    %c0_2 = arith.constant 0 : index
    %1 = vector.load %arg4[%c0_1, %c0_2] : memref<128x128xf32, #tpu.memory_space<vmem>>, vector<128x128xf32>
    %cst = arith.constant dense<0.000000e+00> : vector<256x128xf32>
    %2 = tpu.matmul %0, %1, %cst {dimension_numbers = #tpu.dot_dimension_numbers<[1], [0], [0], [1], [0, 0, 1, 1], [], []>} : vector<256x128xf32>, vector<128x128xf32>, vector<256x128xf32> -> vector<256x128xf32>
    %c0_3 = arith.constant 0 : index
    %c0_4 = arith.constant 0 : index
    %3 = vector.load %arg2[%c0_3, %c0_4] : memref<256x128xf32, #tpu.memory_space<vmem>>, vector<256x128xf32>
    %c0_5 = arith.constant 0 : index
    %c0_6 = arith.constant 0 : index
    %4 = vector.load %arg5[%c0_5, %c0_6] : memref<128x128xf32, #tpu.memory_space<vmem>>, vector<128x128xf32>
    %cst_7 = arith.constant dense<0.000000e+00> : vector<256x128xf32>
    %5 = tpu.matmul %3, %4, %cst_7 {dimension_numbers = #tpu.dot_dimension_numbers<[1], [0], [0], [1], [0, 0, 1, 1], [], []>} : vector<256x128xf32>, vector<128x128xf32>, vector<256x128xf32> -> vector<256x128xf32>
    %6 = arith.addf %2, %5 : vector<256x128xf32>
    %c0_8 = arith.constant 0 : index
    %c0_9 = arith.constant 0 : index
    %7 = vector.load %arg3[%c0_8, %c0_9] : memref<256x128xf32, #tpu.memory_space<vmem>>, vector<256x128xf32>
    %c0_10 = arith.constant 0 : index
    %c0_11 = arith.constant 0 : index
    %8 = vector.load %arg6[%c0_10, %c0_11] : memref<128x128xf32, #tpu.memory_space<vmem>>, vector<128x128xf32>
    %cst_12 = arith.constant dense<0.000000e+00> : vector<256x128xf32>
    %9 = tpu.matmul %7, %8, %cst_12 {dimension_numbers = #tpu.dot_dimension_numbers<[1], [0], [0], [1], [0, 0, 1, 1], [], []>} : vector<256x128xf32>, vector<128x128xf32>, vector<256x128xf32> -> vector<256x128xf32>
    %10 = arith.addf %6, %9 : vector<256x128xf32>
    %c0_13 = arith.constant 0 : index
    %c0_14 = arith.constant 0 : index
    %11 = vector.load %arg7[%c0_13, %c0_14] : memref<1x128xf32, #tpu.memory_space<vmem>>, vector<1x128xf32>
    %12 = vector.broadcast %11 : vector<1x128xf32> to vector<256x128xf32>
    %13 = arith.mulf %10, %12 : vector<256x128xf32>
    %c0_15 = arith.constant 0 : index
    %c0_16 = arith.constant 0 : index
    %14 = vector.load %arg8[%c0_15, %c0_16] : memref<1x128xf32, #tpu.memory_space<vmem>>, vector<1x128xf32>
    %15 = vector.broadcast %14 : vector<1x128xf32> to vector<256x128xf32>
    %16 = arith.addf %13, %15 : vector<256x128xf32>
    %17 = arith.negf %16 : vector<256x128xf32>
    %18 = math.exp %17 : vector<256x128xf32>
    %cst_17 = arith.constant 1.000000e+00 : f32
    %19 = vector.broadcast %cst_17 : f32 to vector<256x128xf32>
    %20 = arith.addf %19, %18 : vector<256x128xf32>
    %21 = arith.divf %19, %20 : vector<256x128xf32>
    %22 = arith.mulf %16, %21 : vector<256x128xf32>
    %c0_18 = arith.constant 0 : index
    %c0_19 = arith.constant 0 : index
    %23 = vector.load %arg9[%c0_18, %c0_19] : memref<256x128xf32, #tpu.memory_space<vmem>>, vector<256x128xf32>
    tpu.vector_store %arg9[%c0_18, %c0_19], %22 {strides = array<i32>} : memref<256x128xf32, #tpu.memory_space<vmem>>, vector<256x128xf32>,
    return
  }
  func.func @transform_0(%arg0: i32) -> (i32, i32) {
    %c0_i32 = arith.constant 0 : i32
    %c0_i32_0 = arith.constant 0 : i32
    return %arg0, %c0_i32 : i32, i32
  }
  func.func @transform_1(%arg0: i32) -> (i32, i32) {
    %c0_i32 = arith.constant 0 : i32
    %c0_i32_0 = arith.constant 0 : i32
    return %arg0, %c0_i32 : i32, i32
  }
  func.func @transform_2(%arg0: i32) -> (i32, i32) {
    %c0_i32 = arith.constant 0 : i32
    %c0_i32_0 = arith.constant 0 : i32
    return %arg0, %c0_i32 : i32, i32
  }
  func.func @transform_3(%arg0: i32) -> (i32, i32) {
    %c0_i32 = arith.constant 0 : i32
    %c0_i32_0 = arith.constant 0 : i32
    %c0_i32_1 = arith.constant 0 : i32
    return %c0_i32, %c0_i32_0 : i32, i32
  }
  func.func @transform_4(%arg0: i32) -> (i32, i32) {
    %c0_i32 = arith.constant 0 : i32
    %c0_i32_0 = arith.constant 0 : i32
    %c0_i32_1 = arith.constant 0 : i32
    return %c0_i32, %c0_i32_0 : i32, i32
  }
  func.func @transform_5(%arg0: i32) -> (i32, i32) {
    %c0_i32 = arith.constant 0 : i32
    %c0_i32_0 = arith.constant 0 : i32
    %c0_i32_1 = arith.constant 0 : i32
    return %c0_i32, %c0_i32_0 : i32, i32
  }
  func.func @transform_6(%arg0: i32) -> (i32, i32) {
    %c0_i32 = arith.constant 0 : i32
    %c0_i32_0 = arith.constant 0 : i32
    %c0_i32_1 = arith.constant 0 : i32
    return %c0_i32, %c0_i32_0 : i32, i32
  }
  func.func @transform_7(%arg0: i32) -> (i32, i32) {
    %c0_i32 = arith.constant 0 : i32
    %c0_i32_0 = arith.constant 0 : i32
    %c0_i32_1 = arith.constant 0 : i32
    return %c0_i32, %c0_i32_0 : i32, i32
  }
  func.func @transform_8(%arg0: i32) -> (i32, i32) {
    %c0_i32 = arith.constant 0 : i32
    %c0_i32_0 = arith.constant 0 : i32
    return %arg0, %c0_i32 : i32, i32
  }
}

module attributes {stable_mosaic.version = 11 : i64} {
  func.func @kernel(%arg0: i32, %arg1: memref<1x18x18x128xf32, #tpu.memory_space<vmem>>, %arg2: memref<1152x128xf32, #tpu.memory_space<vmem>>, %arg3: memref<1x128xf32, #tpu.memory_space<vmem>>, %arg4: memref<1x128xf32, #tpu.memory_space<vmem>>, %arg5: memref<1152x128xf32, #tpu.memory_space<vmem>>, %arg6: memref<1x128xf32, #tpu.memory_space<vmem>>, %arg7: memref<1x128xf32, #tpu.memory_space<vmem>>, %arg8: memref<1x16x16x128xf32, #tpu.memory_space<vmem>>, %arg9: memref<18x18x128xf32, #tpu.memory_space<vmem>>) attributes {dimension_semantics = [#tpu.dimension_semantics<parallel>], iteration_bounds = array<i64: 2>, scalar_prefetch = 0 : i64, scratch_operands = 1 : i64, tpu.core_type = #tpu.core_type<tc>, window_params = [{transform_indices = @transform_0, window_bounds = array<i64: 1, 18, 18, 128>}, {pipeline_mode = #tpu.pipeline_mode<synchronous>, transform_indices = @transform_1, window_bounds = array<i64: 1152, 128>}, {pipeline_mode = #tpu.pipeline_mode<synchronous>, transform_indices = @transform_2, window_bounds = array<i64: 1, 128>}, {pipeline_mode = #tpu.pipeline_mode<synchronous>, transform_indices = @transform_3, window_bounds = array<i64: 1, 128>}, {pipeline_mode = #tpu.pipeline_mode<synchronous>, transform_indices = @transform_4, window_bounds = array<i64: 1152, 128>}, {pipeline_mode = #tpu.pipeline_mode<synchronous>, transform_indices = @transform_5, window_bounds = array<i64: 1, 128>}, {pipeline_mode = #tpu.pipeline_mode<synchronous>, transform_indices = @transform_6, window_bounds = array<i64: 1, 128>}, {transform_indices = @transform_7, window_bounds = array<i64: 1, 16, 16, 128>}]} {
    %c0 = arith.constant 0 : index
    %c0_0 = arith.constant 0 : index
    %c0_1 = arith.constant 0 : index
    %c0_2 = arith.constant 0 : index
    %0 = vector.load %arg1[%c0, %c0_0, %c0_1, %c0_2] : memref<1x18x18x128xf32, #tpu.memory_space<vmem>>, vector<1x18x18x128xf32>
    %1 = vector.shape_cast %0 : vector<1x18x18x128xf32> to vector<18x18x128xf32>
    %2 = vector.extract_strided_slice %1 {offsets = [0, 0, 0], sizes = [16, 16, 128], strides = [1, 1, 1]} : vector<18x18x128xf32> to vector<16x16x128xf32>
    %3 = vector.extract_strided_slice %1 {offsets = [0, 1, 0], sizes = [16, 16, 128], strides = [1, 1, 1]} : vector<18x18x128xf32> to vector<16x16x128xf32>
    %4 = vector.extract_strided_slice %1 {offsets = [0, 2, 0], sizes = [16, 16, 128], strides = [1, 1, 1]} : vector<18x18x128xf32> to vector<16x16x128xf32>
    %5 = vector.extract_strided_slice %1 {offsets = [1, 0, 0], sizes = [16, 16, 128], strides = [1, 1, 1]} : vector<18x18x128xf32> to vector<16x16x128xf32>
    %6 = vector.extract_strided_slice %1 {offsets = [1, 1, 0], sizes = [16, 16, 128], strides = [1, 1, 1]} : vector<18x18x128xf32> to vector<16x16x128xf32>
    %7 = vector.extract_strided_slice %1 {offsets = [1, 2, 0], sizes = [16, 16, 128], strides = [1, 1, 1]} : vector<18x18x128xf32> to vector<16x16x128xf32>
    %8 = vector.extract_strided_slice %1 {offsets = [2, 0, 0], sizes = [16, 16, 128], strides = [1, 1, 1]} : vector<18x18x128xf32> to vector<16x16x128xf32>
    %9 = vector.extract_strided_slice %1 {offsets = [2, 1, 0], sizes = [16, 16, 128], strides = [1, 1, 1]} : vector<18x18x128xf32> to vector<16x16x128xf32>
    %10 = vector.extract_strided_slice %1 {offsets = [2, 2, 0], sizes = [16, 16, 128], strides = [1, 1, 1]} : vector<18x18x128xf32> to vector<16x16x128xf32>
    %11 = tpu.concatenate %2, %3, %4, %5, %6, %7, %8, %9, %10 in 2 : vector<16x16x128xf32>, vector<16x16x128xf32>, vector<16x16x128xf32>, vector<16x16x128xf32>, vector<16x16x128xf32>, vector<16x16x128xf32>, vector<16x16x128xf32>, vector<16x16x128xf32>, vector<16x16x128xf32> -> vector<16x16x1152xf32>
    %12 = vector.shape_cast %11 : vector<16x16x1152xf32> to vector<256x1152xf32>
    %c0_3 = arith.constant 0 : index
    %c0_4 = arith.constant 0 : index
    %13 = vector.load %arg2[%c0_3, %c0_4] : memref<1152x128xf32, #tpu.memory_space<vmem>>, vector<1152x128xf32>
    %cst = arith.constant dense<0.000000e+00> : vector<256x128xf32>
    %14 = tpu.matmul %12, %13, %cst {dimension_numbers = #tpu.dot_dimension_numbers<[1], [0], [0], [1], [0, 0, 1, 1], [], []>} : vector<256x1152xf32>, vector<1152x128xf32>, vector<256x128xf32> -> vector<256x128xf32>
    %c0_5 = arith.constant 0 : index
    %c0_6 = arith.constant 0 : index
    %15 = vector.load %arg3[%c0_5, %c0_6] : memref<1x128xf32, #tpu.memory_space<vmem>>, vector<1x128xf32>
    %16 = vector.broadcast %15 : vector<1x128xf32> to vector<256x128xf32>
    %17 = arith.mulf %14, %16 : vector<256x128xf32>
    %c0_7 = arith.constant 0 : index
    %c0_8 = arith.constant 0 : index
    %18 = vector.load %arg4[%c0_7, %c0_8] : memref<1x128xf32, #tpu.memory_space<vmem>>, vector<1x128xf32>
    %19 = vector.broadcast %18 : vector<1x128xf32> to vector<256x128xf32>
    %20 = arith.addf %17, %19 : vector<256x128xf32>
    %21 = arith.negf %20 : vector<256x128xf32>
    %22 = math.exp %21 : vector<256x128xf32>
    %cst_9 = arith.constant 1.000000e+00 : f32
    %23 = vector.broadcast %cst_9 : f32 to vector<256x128xf32>
    %24 = arith.addf %23, %22 : vector<256x128xf32>
    %25 = arith.divf %23, %24 : vector<256x128xf32>
    %26 = arith.mulf %20, %25 : vector<256x128xf32>
    %cst_10 = arith.constant 0.000000e+00 : f32
    %27 = vector.broadcast %cst_10 : f32 to vector<18x18x128xf32>
    %c0_11 = arith.constant 0 : index
    %c0_12 = arith.constant 0 : index
    %c0_13 = arith.constant 0 : index
    %28 = vector.load %arg9[%c0_11, %c0_12, %c0_13] : memref<18x18x128xf32, #tpu.memory_space<vmem>>, vector<18x18x128xf32>
    tpu.vector_store %arg9[%c0_11, %c0_12, %c0_13], %27 {strides = array<i32>} : memref<18x18x128xf32, #tpu.memory_space<vmem>>, vector<18x18x128xf32>,
    %29 = vector.shape_cast %26 : vector<256x128xf32> to vector<16x16x128xf32>
    %c1 = arith.constant 1 : index
    %c1_14 = arith.constant 1 : index
    %c0_15 = arith.constant 0 : index
    %30 = vector.load %arg9[%c1, %c1_14, %c0_15] : memref<18x18x128xf32, #tpu.memory_space<vmem>>, vector<16x16x128xf32>
    tpu.vector_store %arg9[%c1, %c1_14, %c0_15], %29 {strides = array<i32>} : memref<18x18x128xf32, #tpu.memory_space<vmem>>, vector<16x16x128xf32>,
    %c0_16 = arith.constant 0 : index
    %c0_17 = arith.constant 0 : index
    %c0_18 = arith.constant 0 : index
    %31 = vector.load %arg9[%c0_16, %c0_17, %c0_18] : memref<18x18x128xf32, #tpu.memory_space<vmem>>, vector<18x18x128xf32>
    %32 = vector.extract_strided_slice %31 {offsets = [0, 0, 0], sizes = [16, 16, 128], strides = [1, 1, 1]} : vector<18x18x128xf32> to vector<16x16x128xf32>
    %33 = vector.extract_strided_slice %31 {offsets = [0, 1, 0], sizes = [16, 16, 128], strides = [1, 1, 1]} : vector<18x18x128xf32> to vector<16x16x128xf32>
    %34 = vector.extract_strided_slice %31 {offsets = [0, 2, 0], sizes = [16, 16, 128], strides = [1, 1, 1]} : vector<18x18x128xf32> to vector<16x16x128xf32>
    %35 = vector.extract_strided_slice %31 {offsets = [1, 0, 0], sizes = [16, 16, 128], strides = [1, 1, 1]} : vector<18x18x128xf32> to vector<16x16x128xf32>
    %36 = vector.extract_strided_slice %31 {offsets = [1, 1, 0], sizes = [16, 16, 128], strides = [1, 1, 1]} : vector<18x18x128xf32> to vector<16x16x128xf32>
    %37 = vector.extract_strided_slice %31 {offsets = [1, 2, 0], sizes = [16, 16, 128], strides = [1, 1, 1]} : vector<18x18x128xf32> to vector<16x16x128xf32>
    %38 = vector.extract_strided_slice %31 {offsets = [2, 0, 0], sizes = [16, 16, 128], strides = [1, 1, 1]} : vector<18x18x128xf32> to vector<16x16x128xf32>
    %39 = vector.extract_strided_slice %31 {offsets = [2, 1, 0], sizes = [16, 16, 128], strides = [1, 1, 1]} : vector<18x18x128xf32> to vector<16x16x128xf32>
    %40 = vector.extract_strided_slice %31 {offsets = [2, 2, 0], sizes = [16, 16, 128], strides = [1, 1, 1]} : vector<18x18x128xf32> to vector<16x16x128xf32>
    %41 = tpu.concatenate %32, %33, %34, %35, %36, %37, %38, %39, %40 in 2 : vector<16x16x128xf32>, vector<16x16x128xf32>, vector<16x16x128xf32>, vector<16x16x128xf32>, vector<16x16x128xf32>, vector<16x16x128xf32>, vector<16x16x128xf32>, vector<16x16x128xf32>, vector<16x16x128xf32> -> vector<16x16x1152xf32>
    %42 = vector.shape_cast %41 : vector<16x16x1152xf32> to vector<256x1152xf32>
    %c0_19 = arith.constant 0 : index
    %c0_20 = arith.constant 0 : index
    %43 = vector.load %arg5[%c0_19, %c0_20] : memref<1152x128xf32, #tpu.memory_space<vmem>>, vector<1152x128xf32>
    %cst_21 = arith.constant dense<0.000000e+00> : vector<256x128xf32>
    %44 = tpu.matmul %42, %43, %cst_21 {dimension_numbers = #tpu.dot_dimension_numbers<[1], [0], [0], [1], [0, 0, 1, 1], [], []>} : vector<256x1152xf32>, vector<1152x128xf32>, vector<256x128xf32> -> vector<256x128xf32>
    %c0_22 = arith.constant 0 : index
    %c0_23 = arith.constant 0 : index
    %45 = vector.load %arg6[%c0_22, %c0_23] : memref<1x128xf32, #tpu.memory_space<vmem>>, vector<1x128xf32>
    %46 = vector.broadcast %45 : vector<1x128xf32> to vector<256x128xf32>
    %47 = arith.mulf %44, %46 : vector<256x128xf32>
    %c0_24 = arith.constant 0 : index
    %c0_25 = arith.constant 0 : index
    %48 = vector.load %arg7[%c0_24, %c0_25] : memref<1x128xf32, #tpu.memory_space<vmem>>, vector<1x128xf32>
    %49 = vector.broadcast %48 : vector<1x128xf32> to vector<256x128xf32>
    %50 = arith.addf %47, %49 : vector<256x128xf32>
    %51 = arith.negf %50 : vector<256x128xf32>
    %52 = math.exp %51 : vector<256x128xf32>
    %cst_26 = arith.constant 1.000000e+00 : f32
    %53 = vector.broadcast %cst_26 : f32 to vector<256x128xf32>
    %54 = arith.addf %53, %52 : vector<256x128xf32>
    %55 = arith.divf %53, %54 : vector<256x128xf32>
    %56 = arith.mulf %50, %55 : vector<256x128xf32>
    %57 = vector.shape_cast %56 : vector<256x128xf32> to vector<1x16x16x128xf32>
    %c0_27 = arith.constant 0 : index
    %c0_28 = arith.constant 0 : index
    %c0_29 = arith.constant 0 : index
    %c0_30 = arith.constant 0 : index
    %58 = vector.load %arg8[%c0_27, %c0_28, %c0_29, %c0_30] : memref<1x16x16x128xf32, #tpu.memory_space<vmem>>, vector<1x16x16x128xf32>
    tpu.vector_store %arg8[%c0_27, %c0_28, %c0_29, %c0_30], %57 {strides = array<i32>} : memref<1x16x16x128xf32, #tpu.memory_space<vmem>>, vector<1x16x16x128xf32>,
    return
  }
  func.func @transform_0(%arg0: i32) -> (i32, i32, i32, i32) {
    %c0_i32 = arith.constant 0 : i32
    %c0_i32_0 = arith.constant 0 : i32
    %c0_i32_1 = arith.constant 0 : i32
    %c0_i32_2 = arith.constant 0 : i32
    return %arg0, %c0_i32, %c0_i32_0, %c0_i32_1 : i32, i32, i32, i32
  }
  func.func @transform_1(%arg0: i32) -> (i32, i32) {
    %c0_i32 = arith.constant 0 : i32
    %c0_i32_0 = arith.constant 0 : i32
    %c0_i32_1 = arith.constant 0 : i32
    return %c0_i32, %c0_i32_0 : i32, i32
  }
  func.func @transform_2(%arg0: i32) -> (i32, i32) {
    %c0_i32 = arith.constant 0 : i32
    %c0_i32_0 = arith.constant 0 : i32
    %c0_i32_1 = arith.constant 0 : i32
    return %c0_i32, %c0_i32_0 : i32, i32
  }
  func.func @transform_3(%arg0: i32) -> (i32, i32) {
    %c0_i32 = arith.constant 0 : i32
    %c0_i32_0 = arith.constant 0 : i32
    %c0_i32_1 = arith.constant 0 : i32
    return %c0_i32, %c0_i32_0 : i32, i32
  }
  func.func @transform_4(%arg0: i32) -> (i32, i32) {
    %c0_i32 = arith.constant 0 : i32
    %c0_i32_0 = arith.constant 0 : i32
    %c0_i32_1 = arith.constant 0 : i32
    return %c0_i32, %c0_i32_0 : i32, i32
  }
  func.func @transform_5(%arg0: i32) -> (i32, i32) {
    %c0_i32 = arith.constant 0 : i32
    %c0_i32_0 = arith.constant 0 : i32
    %c0_i32_1 = arith.constant 0 : i32
    return %c0_i32, %c0_i32_0 : i32, i32
  }
  func.func @transform_6(%arg0: i32) -> (i32, i32) {
    %c0_i32 = arith.constant 0 : i32
    %c0_i32_0 = arith.constant 0 : i32
    %c0_i32_1 = arith.constant 0 : i32
    return %c0_i32, %c0_i32_0 : i32, i32
  }
  func.func @transform_7(%arg0: i32) -> (i32, i32, i32, i32) {
    %c0_i32 = arith.constant 0 : i32
    %c0_i32_0 = arith.constant 0 : i32
    %c0_i32_1 = arith.constant 0 : i32
    %c0_i32_2 = arith.constant 0 : i32
    return %arg0, %c0_i32, %c0_i32_0, %c0_i32_1 : i32, i32, i32, i32
  }
}

</mosaic_0001>

<llo_original>
// kernel: c2f_forward.5
$region0: #{c2f_forward.5}
  #allocation0 [shape = 'u32[]', space=smem, size = 0x4, offset = 0x4, fixed_abs, tag = 'smem constant byte address 0x4 - core index']
  #allocation1 [shape = 'u32[72,128]{1,0:T(1,128)}', space=vmem, size = 0x9000, scoped, tag = 'internal scratch']
  %s0 = inlined_call_operand.vmem [shape: f32[512,128], index: 0, kind: input, shape index: {}]
  %s1 = inlined_call_operand.vmem [shape: f32[512,128], index: 1, kind: input, shape index: {}]
  %s2 = inlined_call_operand.vmem [shape: f32[512,128], index: 2, kind: input, shape index: {}]
  %s3 = inlined_call_operand.vmem [shape: f32[128,128], index: 3, kind: input, shape index: {}]
  %s4 = inlined_call_operand.vmem [shape: f32[128,128], index: 4, kind: input, shape index: {}]
  %s5 = inlined_call_operand.vmem [shape: f32[128,128], index: 5, kind: input, shape index: {}]
  %s6 = inlined_call_operand.vmem [shape: f32[1,128], index: 6, kind: input, shape index: {}]
  %s7 = inlined_call_operand.vmem [shape: f32[1,128], index: 7, kind: input, shape index: {}]
  %s8 = inlined_call_operand.vmem [shape: f32[512,128], index: 8, kind: output, shape index: {}]
  %s9 = sld [smem:[#allocation0]]
  $region65: #{c2f_forward.5} parent=0
    _
  %s11 = ssub.s32 1, %s9
  %s12 = scalar_select 0, %s11, %s9
  loop: start=0, step=1, limit=4
  $region2: #{c2f_forward.5} parent=0 // loop_pre_header
    _
  $region3: #{c2f_forward.5} parent=0 // loop_header
    %s14 = sphi 0, %s18
    %p15 = scmp.ge.s32.totalorder %s14, 4
    %s24 = sphi 0, %s26
    %s27 = sphi 0, %s24
    %s28 = sphi 0, %s27
    %s44 = sphi 0, %s28
    %s50 = sphi 0, %s52
    %s53 = sphi 0, %s50
    %s54 = sphi 0, %s53
    %s70 = sphi 0, %s54
    %s76 = sphi 0, %s78
    %s79 = sphi 0, %s76
    %s80 = sphi 0, %s79
    %s96 = sphi 0, %s80
    %s100 = sphi 0, %s100
    %s102 = sphi 0, %s100
    %s103 = sphi 0, %s102
    %s117 = sphi 0, %s103
    %s121 = sphi 0, %s121
    %s123 = sphi 0, %s121
    %s124 = sphi 0, %s123
    %s138 = sphi 0, %s124
    %s142 = sphi 0, %s142
    %s144 = sphi 0, %s142
    %s145 = sphi 0, %s144
    %s159 = sphi 0, %s145
    %s163 = sphi 0, %s163
    %s165 = sphi 0, %s163
    %s166 = sphi 0, %s165
    %s180 = sphi 0, %s166
    %s184 = sphi 0, %s184
    %s186 = sphi 0, %s184
    %s187 = sphi 0, %s186
    %s201 = sphi 0, %s187
    %s207 = sphi 0, %s209
    %s210 = sphi 0, %s207
    %s211 = sphi 0, %s210
    %s227 = sphi 0, %s211
  $region4: #{c2f_forward.5} parent=0 // loop_header_branch
    %17 = sbr.rel (%p15) target = $region8
  $region5: #{c2f_forward.5} parent=0 // loop_body
    %s19 = ssub.s32 %s14, 1
    %s20 = ssub.s32 %s14, 2
    %s21 = sadd.s32 %s14, 1
    %s22 = ssub.s32 %s14, %s21
    %p23 = scmp.eq.s32.totalorder %s22, 0
    %s25 = sadd.s32 %s24, 1
    %s26 = scalar_select %p23, %s24, %s25
    %p29 = pneg %p23
    %p30 = scmp.eq.s32.totalorder %s14, 1
    %p31 = por %p29, %p30
    %p32 = scmp.ne.s32.totalorder %s24, %s27
    %p33 = scmp.eq.s32.totalorder %s14, 0
    %p34 = por %p32, %p33
    %p35 = scmp.ne.s32.totalorder %s24, %s27
    %p36 = scmp.eq.s32.totalorder %s19, 1
    %p37 = por %p35, %p36
    %p38 = scmp.ne.s32.totalorder %s27, %s28
    %p39 = scmp.eq.s32.totalorder %s19, 0
    %p40 = por %p38, %p39
    %p41 = scmp.ne.s32.totalorder %s27, %s28
    %p42 = scmp.eq.s32.totalorder %s20, 1
    %p43 = por %p41, %p42
    %p45 = scmp.ne.s32.totalorder %s28, %s44
    %p46 = scmp.eq.s32.totalorder %s20, 0
    %p47 = por %p45, %p46
    %s48 = ssub.s32 %s14, %s21
    %p49 = scmp.eq.s32.totalorder %s48, 0
    %s51 = sadd.s32 %s50, 1
    %s52 = scalar_select %p49, %s50, %s51
    %p55 = pneg %p49
    %p56 = scmp.eq.s32.totalorder %s14, 1
    %p57 = por %p55, %p56
    %p58 = scmp.ne.s32.totalorder %s50, %s53
    %p59 = scmp.eq.s32.totalorder %s14, 0
    %p60 = por %p58, %p59
    %p61 = scmp.ne.s32.totalorder %s50, %s53
    %p62 = scmp.eq.s32.totalorder %s19, 1
    %p63 = por %p61, %p62
    %p64 = scmp.ne.s32.totalorder %s53, %s54
    %p65 = scmp.eq.s32.totalorder %s19, 0
    %p66 = por %p64, %p65
    %p67 = scmp.ne.s32.totalorder %s53, %s54
    %p68 = scmp.eq.s32.totalorder %s20, 1
    %p69 = por %p67, %p68
    %p71 = scmp.ne.s32.totalorder %s54, %s70
    %p72 = scmp.eq.s32.totalorder %s20, 0
    %p73 = por %p71, %p72
    %s74 = ssub.s32 %s14, %s21
    %p75 = scmp.eq.s32.totalorder %s74, 0
    %s77 = sadd.s32 %s76, 1
    %s78 = scalar_select %p75, %s76, %s77
    %p81 = pneg %p75
    %p82 = scmp.eq.s32.totalorder %s14, 1
    %p83 = por %p81, %p82
    %p84 = scmp.ne.s32.totalorder %s76, %s79
    %p85 = scmp.eq.s32.totalorder %s14, 0
    %p86 = por %p84, %p85
    %p87 = scmp.ne.s32.totalorder %s76, %s79
    %p88 = scmp.eq.s32.totalorder %s19, 1
    %p89 = por %p87, %p88
    %p90 = scmp.ne.s32.totalorder %s79, %s80
    %p91 = scmp.eq.s32.totalorder %s19, 0
    %p92 = por %p90, %p91
    %p93 = scmp.ne.s32.totalorder %s79, %s80
    %p94 = scmp.eq.s32.totalorder %s20, 1
    %p95 = por %p93, %p94
    %p97 = scmp.ne.s32.totalorder %s80, %s96
    %p98 = scmp.eq.s32.totalorder %s20, 0
    %p99 = por %p97, %p98
    %s101 = sadd.s32 %s100, 1
    %p104 = scmp.eq.s32.totalorder %s14, 1
    %p105 = scmp.ne.s32.totalorder %s100, %s102
    %p106 = scmp.eq.s32.totalorder %s14, 0
    %p107 = por %p105, %p106
    %p108 = scmp.ne.s32.totalorder %s100, %s102
    %p109 = scmp.eq.s32.totalorder %s19, 1
    %p110 = por %p108, %p109
    %p111 = scmp.ne.s32.totalorder %s102, %s103
    %p112 = scmp.eq.s32.totalorder %s19, 0
    %p113 = por %p111, %p112
    %p114 = scmp.ne.s32.totalorder %s102, %s103
    %p115 = scmp.eq.s32.totalorder %s20, 1
    %p116 = por %p114, %p115
    %p118 = scmp.ne.s32.totalorder %s103, %s117
    %p119 = scmp.eq.s32.totalorder %s20, 0
    %p120 = por %p118, %p119
    %s122 = sadd.s32 %s121, 1
    %p125 = scmp.eq.s32.totalorder %s14, 1
    %p126 = scmp.ne.s32.totalorder %s121, %s123
    %p127 = scmp.eq.s32.totalorder %s14, 0
    %p128 = por %p126, %p127
    %p129 = scmp.ne.s32.totalorder %s121, %s123
    %p130 = scmp.eq.s32.totalorder %s19, 1
    %p131 = por %p129, %p130
    %p132 = scmp.ne.s32.totalorder %s123, %s124
    %p133 = scmp.eq.s32.totalorder %s19, 0
    %p134 = por %p132, %p133
    %p135 = scmp.ne.s32.totalorder %s123, %s124
    %p136 = scmp.eq.s32.totalorder %s20, 1
    %p137 = por %p135, %p136
    %p139 = scmp.ne.s32.totalorder %s124, %s138
    %p140 = scmp.eq.s32.totalorder %s20, 0
    %p141 = por %p139, %p140
    %s143 = sadd.s32 %s142, 1
    %p146 = scmp.eq.s32.totalorder %s14, 1
    %p147 = scmp.ne.s32.totalorder %s142, %s144
    %p148 = scmp.eq.s32.totalorder %s14, 0
    %p149 = por %p147, %p148
    %p150 = scmp.ne.s32.totalorder %s142, %s144
    %p151 = scmp.eq.s32.totalorder %s19, 1
    %p152 = por %p150, %p151
    %p153 = scmp.ne.s32.totalorder %s144, %s145
    %p154 = scmp.eq.s32.totalorder %s19, 0
    %p155 = por %p153, %p154
    %p156 = scmp.ne.s32.totalorder %s144, %s145
    %p157 = scmp.eq.s32.totalorder %s20, 1
    %p158 = por %p156, %p157
    %p160 = scmp.ne.s32.totalorder %s145, %s159
    %p161 = scmp.eq.s32.totalorder %s20, 0
    %p162 = por %p160, %p161
    %s164 = sadd.s32 %s163, 1
    %p167 = scmp.eq.s32.totalorder %s14, 1
    %p168 = scmp.ne.s32.totalorder %s163, %s165
    %p169 = scmp.eq.s32.totalorder %s14, 0
    %p170 = por %p168, %p169
    %p171 = scmp.ne.s32.totalorder %s163, %s165
    %p172 = scmp.eq.s32.totalorder %s19, 1
    %p173 = por %p171, %p172
    %p174 = scmp.ne.s32.totalorder %s165, %s166
    %p175 = scmp.eq.s32.totalorder %s19, 0
    %p176 = por %p174, %p175
    %p177 = scmp.ne.s32.totalorder %s165, %s166
    %p178 = scmp.eq.s32.totalorder %s20, 1
    %p179 = por %p177, %p178
    %p181 = scmp.ne.s32.totalorder %s166, %s180
    %p182 = scmp.eq.s32.totalorder %s20, 0
    %p183 = por %p181, %p182
    %s185 = sadd.s32 %s184, 1
    %p188 = scmp.eq.s32.totalorder %s14, 1
    %p189 = scmp.ne.s32.totalorder %s184, %s186
    %p190 = scmp.eq.s32.totalorder %s14, 0
    %p191 = por %p189, %p190
    %p192 = scmp.ne.s32.totalorder %s184, %s186
    %p193 = scmp.eq.s32.totalorder %s19, 1
    %p194 = por %p192, %p193
    %p195 = scmp.ne.s32.totalorder %s186, %s187
    %p196 = scmp.eq.s32.totalorder %s19, 0
    %p197 = por %p195, %p196
    %p198 = scmp.ne.s32.totalorder %s186, %s187
    %p199 = scmp.eq.s32.totalorder %s20, 1
    %p200 = por %p198, %p199
    %p202 = scmp.ne.s32.totalorder %s187, %s201
    %p203 = scmp.eq.s32.totalorder %s20, 0
    %p204 = por %p202, %p203
    %s205 = ssub.s32 %s14, %s21
    %p206 = scmp.eq.s32.totalorder %s205, 0
    %s208 = sadd.s32 %s207, 1
    %s209 = scalar_select %p206, %s207, %s208
    %p212 = pneg %p206
    %p213 = scmp.eq.s32.totalorder %s14, 1
    %p214 = por %p212, %p213
    %p215 = scmp.ne.s32.totalorder %s207, %s210
    %p216 = scmp.eq.s32.totalorder %s14, 0
    %p217 = por %p215, %p216
    %p218 = scmp.ne.s32.totalorder %s207, %s210
    %p219 = scmp.eq.s32.totalorder %s19, 1
    %p220 = por %p218, %p219
    %p221 = scmp.ne.s32.totalorder %s210, %s211
    %p222 = scmp.eq.s32.totalorder %s19, 0
    %p223 = por %p221, %p222
    %p224 = scmp.ne.s32.totalorder %s210, %s211
    %p225 = scmp.eq.s32.totalorder %s20, 1
    %p226 = por %p224, %p225
    %p228 = scmp.ne.s32.totalorder %s211, %s227
    %p229 = scmp.eq.s32.totalorder %s20, 0
    %p230 = por %p228, %p229
    %p231 = scmp.le.s32.totalorder 1, %s14
    %p232 = scmp.lt.s32.totalorder %s14, 3
    %p233 = pnand %p231, %p232
    %p234 = pneg %p233
    // Predicated region
    $region9: #{c2f_forward.5} parent=5 // pred_check
      _
    $region10: #{c2f_forward.5} parent=5 // pred_check_branch
      %236 = sbr.rel (%p233) target = $region12
    $region11: #{c2f_forward.5} parent=5 // pred_region
      %s237 = ssub.s32 %s14, 1
      // Predicated region
      $region13: #{c2f_forward.5} parent=11 // pred_check
        %p238 = pneg %p113
      $region14: #{c2f_forward.5} parent=11 // pred_check_branch
        %240 = sbr.rel (%p238) target = $region16
      $region15: #{c2f_forward.5} parent=11 // pred_region
        _
      $region16: #{c2f_forward.5} parent=11 // pred_fallthru
        _
      // Predicated region
      $region17: #{c2f_forward.5} parent=11 // pred_check
        %p241 = pneg %p134
      $region18: #{c2f_forward.5} parent=11 // pred_check_branch
        %243 = sbr.rel (%p241) target = $region20
      $region19: #{c2f_forward.5} parent=11 // pred_region
        _
      $region20: #{c2f_forward.5} parent=11 // pred_fallthru
        _
      // Predicated region
      $region21: #{c2f_forward.5} parent=11 // pred_check
        %p244 = pneg %p155
      $region22: #{c2f_forward.5} parent=11 // pred_check_branch
        %246 = sbr.rel (%p244) target = $region24
      $region23: #{c2f_forward.5} parent=11 // pred_region
        _
      $region24: #{c2f_forward.5} parent=11 // pred_fallthru
        _
      // Predicated region
      $region25: #{c2f_forward.5} parent=11 // pred_check
        %p247 = pneg %p176
      $region26: #{c2f_forward.5} parent=11 // pred_check_branch
        %249 = sbr.rel (%p247) target = $region28
      $region27: #{c2f_forward.5} parent=11 // pred_region
        _
      $region28: #{c2f_forward.5} parent=11 // pred_fallthru
        _
      // Predicated region
      $region29: #{c2f_forward.5} parent=11 // pred_check
        %p250 = pneg %p197
      $region30: #{c2f_forward.5} parent=11 // pred_check_branch
        %252 = sbr.rel (%p250) target = $region32
      $region31: #{c2f_forward.5} parent=11 // pred_region
        _
      $region32: #{c2f_forward.5} parent=11 // pred_fallthru
        _
    $region12: #{c2f_forward.5} parent=5 // pred_fallthru
      _
    %p253 = scmp.lt.s32.totalorder %s14, 2
    // Predicated region
    $region33: #{c2f_forward.5} parent=5 // pred_check
      %p254 = pneg %p253
    $region34: #{c2f_forward.5} parent=5 // pred_check_branch
      %256 = sbr.rel (%p254) target = $region36
    $region35: #{c2f_forward.5} parent=5 // pred_region
      // Predicated region
      $region37: #{c2f_forward.5} parent=35 // pred_check
        %p257 = pneg %p34
      $region38: #{c2f_forward.5} parent=35 // pred_check_branch
        %259 = sbr.rel (%p257) target = $region40
      $region39: #{c2f_forward.5} parent=35 // pred_region
        %s260 = smul.u32 32, %s14
        %p261 = scmp.lt.s32.totalorder %s260, 63
        %s262 = scalar_select %p261, %s260, 63
        %s263 = smul.addr %s262, 8
        %s264 = scalar_lea.vmem %s0, %s263
        %s265 = smul.u32 32, %s14
      $region40: #{c2f_forward.5} parent=35 // pred_fallthru
        _
      // Predicated region
      $region41: #{c2f_forward.5} parent=35 // pred_check
        %p266 = pneg %p60
      $region42: #{c2f_forward.5} parent=35 // pred_check_branch
        %268 = sbr.rel (%p266) target = $region44
      $region43: #{c2f_forward.5} parent=35 // pred_region
        %s269 = smul.u32 32, %s14
        %p270 = scmp.lt.s32.totalorder %s269, 63
        %s271 = scalar_select %p270, %s269, 63
        %s272 = smul.addr %s271, 8
        %s273 = scalar_lea.vmem %s1, %s272
        %s274 = smul.u32 32, %s14
      $region44: #{c2f_forward.5} parent=35 // pred_fallthru
        _
      // Predicated region
      $region45: #{c2f_forward.5} parent=35 // pred_check
        %p275 = pneg %p86
      $region46: #{c2f_forward.5} parent=35 // pred_check_branch
        %277 = sbr.rel (%p275) target = $region48
      $region47: #{c2f_forward.5} parent=35 // pred_region
        %s278 = smul.u32 32, %s14
        %p279 = scmp.lt.s32.totalorder %s278, 63
        %s280 = scalar_select %p279, %s278, 63
        %s281 = smul.addr %s280, 8
        %s282 = scalar_lea.vmem %s2, %s281
        %s283 = smul.u32 32, %s14
      $region48: #{c2f_forward.5} parent=35 // pred_fallthru
        _
    $region36: #{c2f_forward.5} parent=5 // pred_fallthru
      _
    %p284 = scmp.le.s32.totalorder 1, %s14
    %p285 = scmp.lt.s32.totalorder %s14, 3
    %p286 = pnand %p284, %p285
    %p287 = pneg %p286
    // Predicated region
    $region49: #{c2f_forward.5} parent=5 // pred_check
      _
    $region50: #{c2f_forward.5} parent=5 // pred_check_branch
      %289 = sbr.rel (%p286) target = $region52
    $region51: #{c2f_forward.5} parent=5 // pred_region
      %s290 = ssub.s32 %s14, 1
      %s291 = smul.u32 32, %s19
      %p292 = scmp.lt.s32.totalorder %s291, 63
      %s293 = scalar_select %p292, %s291, 63
      %s294 = smul.addr %s293, 8
      %s295 = scalar_lea.vmem %s0, %s294
      %p296 = pneg %p40
      %p297 = pneg %p37
      %s298 = smul.u32 32, %s19
      %p299 = scmp.lt.s32.totalorder %s298, 63
      %s300 = scalar_select %p299, %s298, 63
      %s301 = smul.addr %s300, 8
      %s302 = scalar_lea.vmem %s1, %s301
      %p303 = pneg %p66
      %p304 = pneg %p63
      %s305 = smul.u32 32, %s19
      %p306 = scmp.lt.s32.totalorder %s305, 63
      %s307 = scalar_select %p306, %s305, 63
      %s308 = smul.addr %s307, 8
      %s309 = scalar_lea.vmem %s2, %s308
      %p310 = pneg %p92
      %p311 = pneg %p89
      %p312 = pneg %p113
      %p313 = pneg %p110
      %p314 = pneg %p134
      %p315 = pneg %p131
      %p316 = pneg %p155
      %p317 = pneg %p152
      %p318 = pneg %p176
      %p319 = pneg %p173
      %p320 = pneg %p197
      %p321 = pneg %p194
      %p322 = pneg %p223
      %p323 = pneg %p220
      %s324 = smul.u32 32, %s19
      %p325 = scmp.lt.s32.totalorder %s324, 63
      %s326 = scalar_select %p325, %s324, 63
      %s327 = smul.addr %s326, 8
      %s328 = scalar_lea.vmem %s8, %s327
      %s329 = smul.u32 32, %s19
      %p330 = scmp.lt.s32.totalorder %s329, 63
      %s331 = scalar_select %p330, %s329, 63
      %s332 = smul.addr %s331, 8
      %s333 = scalar_lea.vmem %s0, %s332
      %s334 = smul.u32 32, %s19
      %s335 = smul.u32 32, %s19
      %p336 = scmp.lt.s32.totalorder %s335, 63
      %s337 = scalar_select %p336, %s335, 63
      %s338 = smul.addr %s337, 8
      %s339 = scalar_lea.vmem %s1, %s338
      %s340 = smul.u32 32, %s19
      %s341 = smul.u32 32, %s19
      %p342 = scmp.lt.s32.totalorder %s341, 63
      %s343 = scalar_select %p342, %s341, 63
      %s344 = smul.addr %s343, 8
      %s345 = scalar_lea.vmem %s2, %s344
      %s346 = smul.u32 32, %s19
      %s347 = smul.u32 32, %s19
      %p348 = scmp.lt.s32.totalorder %s347, 63
      %s349 = scalar_select %p348, %s347, 63
      %s350 = smul.addr %s349, 8
      %s351 = scalar_lea.vmem %s8, %s350
      %s352 = smul.u32 32, %s19
      %v353 = vld [vmem:[%s333] sm:$0xff]
      %v354 = vld [vmem:[%s333 + $0x8] sm:$0xff]
      %v355 = vld [vmem:[%s333 + $0x10] sm:$0xff]
      %v356 = vld [vmem:[%s333 + $0x18] sm:$0xff]
      %v357 = vld [vmem:[%s333 + $0x20] sm:$0xff]
      %v358 = vld [vmem:[%s333 + $0x28] sm:$0xff]
      %v359 = vld [vmem:[%s333 + $0x30] sm:$0xff]
      %v360 = vld [vmem:[%s333 + $0x38] sm:$0xff]
      %v361 = vld [vmem:[%s333 + $0x40] sm:$0xff]
      %v362 = vld [vmem:[%s333 + $0x48] sm:$0xff]
      %v363 = vld [vmem:[%s333 + $0x50] sm:$0xff]
      %v364 = vld [vmem:[%s333 + $0x58] sm:$0xff]
      %v365 = vld [vmem:[%s333 + $0x60] sm:$0xff]
      %v366 = vld [vmem:[%s333 + $0x68] sm:$0xff]
      %v367 = vld [vmem:[%s333 + $0x70] sm:$0xff]
      %v368 = vld [vmem:[%s333 + $0x78] sm:$0xff]
      %v369 = vld [vmem:[%s333 + $0x80] sm:$0xff]
      %v370 = vld [vmem:[%s333 + $0x88] sm:$0xff]
      %v371 = vld [vmem:[%s333 + $0x90] sm:$0xff]
      %v372 = vld [vmem:[%s333 + $0x98] sm:$0xff]
      %v373 = vld [vmem:[%s333 + $0xa0] sm:$0xff]
      %v374 = vld [vmem:[%s333 + $0xa8] sm:$0xff]
      %v375 = vld [vmem:[%s333 + $0xb0] sm:$0xff]
      %v376 = vld [vmem:[%s333 + $0xb8] sm:$0xff]
      %v377 = vld [vmem:[%s333 + $0xc0] sm:$0xff]
      %v378 = vld [vmem:[%s333 + $0xc8] sm:$0xff]
      %v379 = vld [vmem:[%s333 + $0xd0] sm:$0xff]
      %v380 = vld [vmem:[%s333 + $0xd8] sm:$0xff]
      %v381 = vld [vmem:[%s333 + $0xe0] sm:$0xff]
      %v382 = vld [vmem:[%s333 + $0xe8] sm:$0xff]
      %v383 = vld [vmem:[%s333 + $0xf0] sm:$0xff]
      %v384 = vld [vmem:[%s333 + $0xf8] sm:$0xff]
      %v385 = vld [vmem:[%s3] sm:$0xff]
      %v386 = vld [vmem:[%s3 + $0x8] sm:$0xff]
      %v387 = vld [vmem:[%s3 + $0x10] sm:$0xff]
      %v388 = vld [vmem:[%s3 + $0x18] sm:$0xff]
      %v389 = vld [vmem:[%s3 + $0x20] sm:$0xff]
      %v390 = vld [vmem:[%s3 + $0x28] sm:$0xff]
      %v391 = vld [vmem:[%s3 + $0x30] sm:$0xff]
      %v392 = vld [vmem:[%s3 + $0x38] sm:$0xff]
      %v393 = vld [vmem:[%s3 + $0x40] sm:$0xff]
      %v394 = vld [vmem:[%s3 + $0x48] sm:$0xff]
      %v395 = vld [vmem:[%s3 + $0x50] sm:$0xff]
      %v396 = vld [vmem:[%s3 + $0x58] sm:$0xff]
      %v397 = vld [vmem:[%s3 + $0x60] sm:$0xff]
      %v398 = vld [vmem:[%s3 + $0x68] sm:$0xff]
      %v399 = vld [vmem:[%s3 + $0x70] sm:$0xff]
      %v400 = vld [vmem:[%s3 + $0x78] sm:$0xff]
      %v401 = vld [vmem:[%s339] sm:$0xff]
      %v402 = vld [vmem:[%s339 + $0x8] sm:$0xff]
      %v403 = vld [vmem:[%s339 + $0x10] sm:$0xff]
      %v404 = vld [vmem:[%s339 + $0x18] sm:$0xff]
      %v405 = vld [vmem:[%s339 + $0x20] sm:$0xff]
      %v406 = vld [vmem:[%s339 + $0x28] sm:$0xff]
      %v407 = vld [vmem:[%s339 + $0x30] sm:$0xff]
      %v408 = vld [vmem:[%s339 + $0x38] sm:$0xff]
      %v409 = vld [vmem:[%s339 + $0x40] sm:$0xff]
      %v410 = vld [vmem:[%s339 + $0x48] sm:$0xff]
      %v411 = vld [vmem:[%s339 + $0x50] sm:$0xff]
      %v412 = vld [vmem:[%s339 + $0x58] sm:$0xff]
      %v413 = vld [vmem:[%s339 + $0x60] sm:$0xff]
      %v414 = vld [vmem:[%s339 + $0x68] sm:$0xff]
      %v415 = vld [vmem:[%s339 + $0x70] sm:$0xff]
      %v416 = vld [vmem:[%s339 + $0x78] sm:$0xff]
      %v417 = vld [vmem:[%s339 + $0x80] sm:$0xff]
      %v418 = vld [vmem:[%s339 + $0x88] sm:$0xff]
      %v419 = vld [vmem:[%s339 + $0x90] sm:$0xff]
      %v420 = vld [vmem:[%s339 + $0x98] sm:$0xff]
      %v421 = vld [vmem:[%s339 + $0xa0] sm:$0xff]
      %v422 = vld [vmem:[%s339 + $0xa8] sm:$0xff]
      %v423 = vld [vmem:[%s339 + $0xb0] sm:$0xff]
      %v424 = vld [vmem:[%s339 + $0xb8] sm:$0xff]
      %v425 = vld [vmem:[%s339 + $0xc0] sm:$0xff]
      %v426 = vld [vmem:[%s339 + $0xc8] sm:$0xff]
      %v427 = vld [vmem:[%s339 + $0xd0] sm:$0xff]
      %v428 = vld [vmem:[%s339 + $0xd8] sm:$0xff]
      %v429 = vld [vmem:[%s339 + $0xe0] sm:$0xff]
      %v430 = vld [vmem:[%s339 + $0xe8] sm:$0xff]
      %v431 = vld [vmem:[%s339 + $0xf0] sm:$0xff]
      %v432 = vld [vmem:[%s339 + $0xf8] sm:$0xff]
      %v433 = vld [vmem:[%s4] sm:$0xff]
      %v434 = vld [vmem:[%s4 + $0x8] sm:$0xff]
      %v435 = vld [vmem:[%s4 + $0x10] sm:$0xff]
      %v436 = vld [vmem:[%s4 + $0x18] sm:$0xff]
      %v437 = vld [vmem:[%s4 + $0x20] sm:$0xff]
      %v438 = vld [vmem:[%s4 + $0x28] sm:$0xff]
      %v439 = vld [vmem:[%s4 + $0x30] sm:$0xff]
      %v440 = vld [vmem:[%s4 + $0x38] sm:$0xff]
      %v441 = vld [vmem:[%s4 + $0x40] sm:$0xff]
      %v442 = vld [vmem:[%s4 + $0x48] sm:$0xff]
      %v443 = vld [vmem:[%s4 + $0x50] sm:$0xff]
      %v444 = vld [vmem:[%s4 + $0x58] sm:$0xff]
      %v445 = vld [vmem:[%s4 + $0x60] sm:$0xff]
      %v446 = vld [vmem:[%s4 + $0x68] sm:$0xff]
      %v447 = vld [vmem:[%s4 + $0x70] sm:$0xff]
      %v448 = vld [vmem:[%s4 + $0x78] sm:$0xff]
      %449 = vmatpush.msra.mxu0 %v448
      %450 = vmatpush.msra.mxu0 %v447
      %451 = vmatpush.msra.mxu0 %v446
      %452 = vmatpush.msra.mxu0 %v445
      %453 = vmatpush.msra.mxu0 %v444
      %454 = vmatpush.msra.mxu0 %v443
      %455 = vmatpush.msra.mxu0 %v442
      %456 = vmatpush.msra.mxu0 %v441
      %457 = vmatpush.msra.mxu0 %v440
      %458 = vmatpush.msra.mxu0 %v439
      %459 = vmatpush.msra.mxu0 %v438
      %460 = vmatpush.msra.mxu0 %v437
      %461 = vmatpush.msra.mxu0 %v436
      %462 = vmatpush.msra.mxu0 %v435
      %463 = vmatpush.msra.mxu0 %v434
      %464 = vmatpush.msra.mxu0 %v433
      %465 = vmatmul.f32.gmra.mxu0 %v401
      %v466 = vpop.f32.mrf.mxu0
      %v467 = vadd.f32 0.0, %v466
      %468 = vmatmul.f32.gmra.mxu0 %v402
      %v469 = vpop.f32.mrf.mxu0
      %v470 = vadd.f32 0.0, %v469
      %471 = vmatmul.f32.gmra.mxu0 %v403
      %v472 = vpop.f32.mrf.mxu0
      %v473 = vadd.f32 0.0, %v472
      %474 = vmatmul.f32.gmra.mxu0 %v404
      %v475 = vpop.f32.mrf.mxu0
      %v476 = vadd.f32 0.0, %v475
      %477 = vmatmul.f32.gmra.mxu0 %v405
      %v478 = vpop.f32.mrf.mxu0
      %v479 = vadd.f32 0.0, %v478
      %480 = vmatmul.f32.gmra.mxu0 %v406
      %v481 = vpop.f32.mrf.mxu0
      %v482 = vadd.f32 0.0, %v481
      %483 = vmatmul.f32.gmra.mxu0 %v407
      %v484 = vpop.f32.mrf.mxu0
      %v485 = vadd.f32 0.0, %v484
      %486 = vmatmul.f32.gmra.mxu0 %v408
      %v487 = vpop.f32.mrf.mxu0
      %v488 = vadd.f32 0.0, %v487
      %489 = vmatmul.f32.gmra.mxu0 %v409
      %v490 = vpop.f32.mrf.mxu0
      %v491 = vadd.f32 0.0, %v490
      %492 = vmatmul.f32.gmra.mxu0 %v410
      %v493 = vpop.f32.mrf.mxu0
      %v494 = vadd.f32 0.0, %v493
      %495 = vmatmul.f32.gmra.mxu0 %v411
      %v496 = vpop.f32.mrf.mxu0
      %v497 = vadd.f32 0.0, %v496
      %498 = vmatmul.f32.gmra.mxu0 %v412
      %v499 = vpop.f32.mrf.mxu0
      %v500 = vadd.f32 0.0, %v499
      %501 = vmatmul.f32.gmra.mxu0 %v413
      %v502 = vpop.f32.mrf.mxu0
      %v503 = vadd.f32 0.0, %v502
      %504 = vmatmul.f32.gmra.mxu0 %v414
      %v505 = vpop.f32.mrf.mxu0
      %v506 = vadd.f32 0.0, %v505
      %507 = vmatmul.f32.gmra.mxu0 %v415
      %v508 = vpop.f32.mrf.mxu0
      %v509 = vadd.f32 0.0, %v508
      %510 = vmatmul.f32.gmra.mxu0 %v416
      %v511 = vpop.f32.mrf.mxu0
      %v512 = vadd.f32 0.0, %v511
      %513 = vmatmul.f32.gmra.mxu0 %v417
      %v514 = vpop.f32.mrf.mxu0
      %v515 = vadd.f32 0.0, %v514
      %516 = vmatmul.f32.gmra.mxu0 %v418
      %v517 = vpop.f32.mrf.mxu0
      %v518 = vadd.f32 0.0, %v517
      %519 = vmatmul.f32.gmra.mxu0 %v419
      %v520 = vpop.f32.mrf.mxu0
      %v521 = vadd.f32 0.0, %v520
      %522 = vmatmul.f32.gmra.mxu0 %v420
      %v523 = vpop.f32.mrf.mxu0
      %v524 = vadd.f32 0.0, %v523
      %525 = vmatmul.f32.gmra.mxu0 %v421
      %v526 = vpop.f32.mrf.mxu0
      %v527 = vadd.f32 0.0, %v526
      %528 = vmatmul.f32.gmra.mxu0 %v422
      %v529 = vpop.f32.mrf.mxu0
      %v530 = vadd.f32 0.0, %v529
      %531 = vmatmul.f32.gmra.mxu0 %v423
      %v532 = vpop.f32.mrf.mxu0
      %v533 = vadd.f32 0.0, %v532
      %534 = vmatmul.f32.gmra.mxu0 %v424
      %v535 = vpop.f32.mrf.mxu0
      %v536 = vadd.f32 0.0, %v535
      %537 = vmatmul.f32.gmra.mxu0 %v425
      %v538 = vpop.f32.mrf.mxu0
      %v539 = vadd.f32 0.0, %v538
      %540 = vmatmul.f32.gmra.mxu0 %v426
      %v541 = vpop.f32.mrf.mxu0
      %v542 = vadd.f32 0.0, %v541
      %543 = vmatmul.f32.gmra.mxu0 %v427
      %v544 = vpop.f32.mrf.mxu0
      %v545 = vadd.f32 0.0, %v544
      %546 = vmatmul.f32.gmra.mxu0 %v428
      %v547 = vpop.f32.mrf.mxu0
      %v548 = vadd.f32 0.0, %v547
      %549 = vmatmul.f32.gmra.mxu0 %v429
      %v550 = vpop.f32.mrf.mxu0
      %v551 = vadd.f32 0.0, %v550
      %552 = vmatmul.f32.gmra.mxu0 %v430
      %v553 = vpop.f32.mrf.mxu0
      %v554 = vadd.f32 0.0, %v553
      %555 = vmatmul.f32.gmra.mxu0 %v431
      %v556 = vpop.f32.mrf.mxu0
      %v557 = vadd.f32 0.0, %v556
      %558 = vmatmul.f32.gmra.mxu0 %v432
      %v559 = vpop.f32.mrf.mxu0
      %v560 = vadd.f32 0.0, %v559
      %561 = vdwg.mxu0
      %562 = vmatpush.msra.mxu0 %v400
      %563 = vmatpush.msra.mxu0 %v399
      %564 = vmatpush.msra.mxu0 %v398
      %565 = vmatpush.msra.mxu0 %v397
      %566 = vmatpush.msra.mxu0 %v396
      %567 = vmatpush.msra.mxu0 %v395
      %568 = vmatpush.msra.mxu0 %v394
      %569 = vmatpush.msra.mxu0 %v393
      %570 = vmatpush.msra.mxu0 %v392
      %571 = vmatpush.msra.mxu0 %v391
      %572 = vmatpush.msra.mxu0 %v390
      %573 = vmatpush.msra.mxu0 %v389
      %574 = vmatpush.msra.mxu0 %v388
      %575 = vmatpush.msra.mxu0 %v387
      %576 = vmatpush.msra.mxu0 %v386
      %577 = vmatpush.msra.mxu0 %v385
      %578 = vmatmul.f32.gmra.mxu0 %v353
      %v579 = vpop.f32.mrf.mxu0
      %v580 = vadd.f32 %v467, %v579
      %581 = vmatmul.f32.gmra.mxu0 %v354
      %v582 = vpop.f32.mrf.mxu0
      %v583 = vadd.f32 %v470, %v582
      %584 = vmatmul.f32.gmra.mxu0 %v355
      %v585 = vpop.f32.mrf.mxu0
      %v586 = vadd.f32 %v473, %v585
      %587 = vmatmul.f32.gmra.mxu0 %v356
      %v588 = vpop.f32.mrf.mxu0
      %v589 = vadd.f32 %v476, %v588
      %590 = vmatmul.f32.gmra.mxu0 %v357
      %v591 = vpop.f32.mrf.mxu0
      %v592 = vadd.f32 %v479, %v591
      %593 = vmatmul.f32.gmra.mxu0 %v358
      %v594 = vpop.f32.mrf.mxu0
      %v595 = vadd.f32 %v482, %v594
      %596 = vmatmul.f32.gmra.mxu0 %v359
      %v597 = vpop.f32.mrf.mxu0
      %v598 = vadd.f32 %v485, %v597
      %599 = vmatmul.f32.gmra.mxu0 %v360
      %v600 = vpop.f32.mrf.mxu0
      %v601 = vadd.f32 %v488, %v600
      %602 = vmatmul.f32.gmra.mxu0 %v361
      %v603 = vpop.f32.mrf.mxu0
      %v604 = vadd.f32 %v491, %v603
      %605 = vmatmul.f32.gmra.mxu0 %v362
      %v606 = vpop.f32.mrf.mxu0
      %v607 = vadd.f32 %v494, %v606
      %608 = vmatmul.f32.gmra.mxu0 %v363
      %v609 = vpop.f32.mrf.mxu0
      %v610 = vadd.f32 %v497, %v609
      %611 = vmatmul.f32.gmra.mxu0 %v364
      %v612 = vpop.f32.mrf.mxu0
      %v613 = vadd.f32 %v500, %v612
      %614 = vmatmul.f32.gmra.mxu0 %v365
      %v615 = vpop.f32.mrf.mxu0
      %v616 = vadd.f32 %v503, %v615
      %617 = vmatmul.f32.gmra.mxu0 %v366
      %v618 = vpop.f32.mrf.mxu0
      %v619 = vadd.f32 %v506, %v618
      %620 = vmatmul.f32.gmra.mxu0 %v367
      %v621 = vpop.f32.mrf.mxu0
      %v622 = vadd.f32 %v509, %v621
      %623 = vmatmul.f32.gmra.mxu0 %v368
      %v624 = vpop.f32.mrf.mxu0
      %v625 = vadd.f32 %v512, %v624
      %626 = vmatmul.f32.gmra.mxu0 %v369
      %v627 = vpop.f32.mrf.mxu0
      %v628 = vadd.f32 %v515, %v627
      %629 = vmatmul.f32.gmra.mxu0 %v370
      %v630 = vpop.f32.mrf.mxu0
      %v631 = vadd.f32 %v518, %v630
      %632 = vmatmul.f32.gmra.mxu0 %v371
      %v633 = vpop.f32.mrf.mxu0
      %v634 = vadd.f32 %v521, %v633
      %635 = vmatmul.f32.gmra.mxu0 %v372
      %v636 = vpop.f32.mrf.mxu0
      %v637 = vadd.f32 %v524, %v636
      %638 = vmatmul.f32.gmra.mxu0 %v373
      %v639 = vpop.f32.mrf.mxu0
      %v640 = vadd.f32 %v527, %v639
      %641 = vmatmul.f32.gmra.mxu0 %v374
      %v642 = vpop.f32.mrf.mxu0
      %v643 = vadd.f32 %v530, %v642
      %644 = vmatmul.f32.gmra.mxu0 %v375
      %v645 = vpop.f32.mrf.mxu0
      %v646 = vadd.f32 %v533, %v645
      %647 = vmatmul.f32.gmra.mxu0 %v376
      %v648 = vpop.f32.mrf.mxu0
      %v649 = vadd.f32 %v536, %v648
      %650 = vmatmul.f32.gmra.mxu0 %v377
      %v651 = vpop.f32.mrf.mxu0
      %v652 = vadd.f32 %v539, %v651
      %653 = vmatmul.f32.gmra.mxu0 %v378
      %v654 = vpop.f32.mrf.mxu0
      %v655 = vadd.f32 %v542, %v654
      %656 = vmatmul.f32.gmra.mxu0 %v379
      %v657 = vpop.f32.mrf.mxu0
      %v658 = vadd.f32 %v545, %v657
      %659 = vmatmul.f32.gmra.mxu0 %v380
      %v660 = vpop.f32.mrf.mxu0
      %v661 = vadd.f32 %v548, %v660
      %662 = vmatmul.f32.gmra.mxu0 %v381
      %v663 = vpop.f32.mrf.mxu0
      %v664 = vadd.f32 %v551, %v663
      %665 = vmatmul.f32.gmra.mxu0 %v382
      %v666 = vpop.f32.mrf.mxu0
      %v667 = vadd.f32 %v554, %v666
      %668 = vmatmul.f32.gmra.mxu0 %v383
      %v669 = vpop.f32.mrf.mxu0
      %v670 = vadd.f32 %v557, %v669
      %671 = vmatmul.f32.gmra.mxu0 %v384
      %v672 = vpop.f32.mrf.mxu0
      %v673 = vadd.f32 %v560, %v672
      %674 = vdwg.mxu0
      %v675 = vld [vmem:[%s345] sm:$0xff]
      %v676 = vld [vmem:[%s345 + $0x8] sm:$0xff]
      %v677 = vld [vmem:[%s345 + $0x10] sm:$0xff]
      %v678 = vld [vmem:[%s345 + $0x18] sm:$0xff]
      %v679 = vld [vmem:[%s345 + $0x20] sm:$0xff]
      %v680 = vld [vmem:[%s345 + $0x28] sm:$0xff]
      %v681 = vld [vmem:[%s345 + $0x30] sm:$0xff]
      %v682 = vld [vmem:[%s345 + $0x38] sm:$0xff]
      %v683 = vld [vmem:[%s345 + $0x40] sm:$0xff]
      %v684 = vld [vmem:[%s345 + $0x48] sm:$0xff]
      %v685 = vld [vmem:[%s345 + $0x50] sm:$0xff]
      %v686 = vld [vmem:[%s345 + $0x58] sm:$0xff]
      %v687 = vld [vmem:[%s345 + $0x60] sm:$0xff]
      %v688 = vld [vmem:[%s345 + $0x68] sm:$0xff]
      %v689 = vld [vmem:[%s345 + $0x70] sm:$0xff]
      %v690 = vld [vmem:[%s345 + $0x78] sm:$0xff]
      %v691 = vld [vmem:[%s345 + $0x80] sm:$0xff]
      %v692 = vld [vmem:[%s345 + $0x88] sm:$0xff]
      %v693 = vld [vmem:[%s345 + $0x90] sm:$0xff]
      %v694 = vld [vmem:[%s345 + $0x98] sm:$0xff]
      %v695 = vld [vmem:[%s345 + $0xa0] sm:$0xff]
      %v696 = vld [vmem:[%s345 + $0xa8] sm:$0xff]
      %v697 = vld [vmem:[%s345 + $0xb0] sm:$0xff]
      %v698 = vld [vmem:[%s345 + $0xb8] sm:$0xff]
      %v699 = vld [vmem:[%s345 + $0xc0] sm:$0xff]
      %v700 = vld [vmem:[%s345 + $0xc8] sm:$0xff]
      %v701 = vld [vmem:[%s345 + $0xd0] sm:$0xff]
      %v702 = vld [vmem:[%s345 + $0xd8] sm:$0xff]
      %v703 = vld [vmem:[%s345 + $0xe0] sm:$0xff]
      %v704 = vld [vmem:[%s345 + $0xe8] sm:$0xff]
      %v705 = vld [vmem:[%s345 + $0xf0] sm:$0xff]
      %v706 = vld [vmem:[%s345 + $0xf8] sm:$0xff]
      %v707 = vld [vmem:[%s5] sm:$0xff]
      %v708 = vld [vmem:[%s5 + $0x8] sm:$0xff]
      %v709 = vld [vmem:[%s5 + $0x10] sm:$0xff]
      %v710 = vld [vmem:[%s5 + $0x18] sm:$0xff]
      %v711 = vld [vmem:[%s5 + $0x20] sm:$0xff]
      %v712 = vld [vmem:[%s5 + $0x28] sm:$0xff]
      %v713 = vld [vmem:[%s5 + $0x30] sm:$0xff]
      %v714 = vld [vmem:[%s5 + $0x38] sm:$0xff]
      %v715 = vld [vmem:[%s5 + $0x40] sm:$0xff]
      %v716 = vld [vmem:[%s5 + $0x48] sm:$0xff]
      %v717 = vld [vmem:[%s5 + $0x50] sm:$0xff]
      %v718 = vld [vmem:[%s5 + $0x58] sm:$0xff]
      %v719 = vld [vmem:[%s5 + $0x60] sm:$0xff]
      %v720 = vld [vmem:[%s5 + $0x68] sm:$0xff]
      %v721 = vld [vmem:[%s5 + $0x70] sm:$0xff]
      %v722 = vld [vmem:[%s5 + $0x78] sm:$0xff]
      %723 = vmatpush.msra.mxu0 %v722
      %724 = vmatpush.msra.mxu0 %v721
      %725 = vmatpush.msra.mxu0 %v720
      %726 = vmatpush.msra.mxu0 %v719
      %727 = vmatpush.msra.mxu0 %v718
      %728 = vmatpush.msra.mxu0 %v717
      %729 = vmatpush.msra.mxu0 %v716
      %730 = vmatpush.msra.mxu0 %v715
      %731 = vmatpush.msra.mxu0 %v714
      %732 = vmatpush.msra.mxu0 %v713
      %733 = vmatpush.msra.mxu0 %v712
      %734 = vmatpush.msra.mxu0 %v711
      %735 = vmatpush.msra.mxu0 %v710
      %736 = vmatpush.msra.mxu0 %v709
      %737 = vmatpush.msra.mxu0 %v708
      %738 = vmatpush.msra.mxu0 %v707
      %739 = vmatmul.f32.gmra.mxu0 %v675
      %v740 = vpop.f32.mrf.mxu0
      %v741 = vadd.f32 0.0, %v740
      %742 = vmatmul.f32.gmra.mxu0 %v676
      %v743 = vpop.f32.mrf.mxu0
      %v744 = vadd.f32 0.0, %v743
      %745 = vmatmul.f32.gmra.mxu0 %v677
      %v746 = vpop.f32.mrf.mxu0
      %v747 = vadd.f32 0.0, %v746
      %748 = vmatmul.f32.gmra.mxu0 %v678
      %v749 = vpop.f32.mrf.mxu0
      %v750 = vadd.f32 0.0, %v749
      %751 = vmatmul.f32.gmra.mxu0 %v679
      %v752 = vpop.f32.mrf.mxu0
      %v753 = vadd.f32 0.0, %v752
      %754 = vmatmul.f32.gmra.mxu0 %v680
      %v755 = vpop.f32.mrf.mxu0
      %v756 = vadd.f32 0.0, %v755
      %757 = vmatmul.f32.gmra.mxu0 %v681
      %v758 = vpop.f32.mrf.mxu0
      %v759 = vadd.f32 0.0, %v758
      %760 = vmatmul.f32.gmra.mxu0 %v682
      %v761 = vpop.f32.mrf.mxu0
      %v762 = vadd.f32 0.0, %v761
      %763 = vmatmul.f32.gmra.mxu0 %v683
      %v764 = vpop.f32.mrf.mxu0
      %v765 = vadd.f32 0.0, %v764
      %766 = vmatmul.f32.gmra.mxu0 %v684
      %v767 = vpop.f32.mrf.mxu0
      %v768 = vadd.f32 0.0, %v767
      %769 = vmatmul.f32.gmra.mxu0 %v685
      %v770 = vpop.f32.mrf.mxu0
      %v771 = vadd.f32 0.0, %v770
      %772 = vmatmul.f32.gmra.mxu0 %v686
      %v773 = vpop.f32.mrf.mxu0
      %v774 = vadd.f32 0.0, %v773
      %775 = vmatmul.f32.gmra.mxu0 %v687
      %v776 = vpop.f32.mrf.mxu0
      %v777 = vadd.f32 0.0, %v776
      %778 = vmatmul.f32.gmra.mxu0 %v688
      %v779 = vpop.f32.mrf.mxu0
      %v780 = vadd.f32 0.0, %v779
      %781 = vmatmul.f32.gmra.mxu0 %v689
      %v782 = vpop.f32.mrf.mxu0
      %v783 = vadd.f32 0.0, %v782
      %784 = vmatmul.f32.gmra.mxu0 %v690
      %v785 = vpop.f32.mrf.mxu0
      %v786 = vadd.f32 0.0, %v785
      %787 = vmatmul.f32.gmra.mxu0 %v691
      %v788 = vpop.f32.mrf.mxu0
      %v789 = vadd.f32 0.0, %v788
      %790 = vmatmul.f32.gmra.mxu0 %v692
      %v791 = vpop.f32.mrf.mxu0
      %v792 = vadd.f32 0.0, %v791
      %793 = vmatmul.f32.gmra.mxu0 %v693
      %v794 = vpop.f32.mrf.mxu0
      %v795 = vadd.f32 0.0, %v794
      %796 = vmatmul.f32.gmra.mxu0 %v694
      %v797 = vpop.f32.mrf.mxu0
      %v798 = vadd.f32 0.0, %v797
      %799 = vmatmul.f32.gmra.mxu0 %v695
      %v800 = vpop.f32.mrf.mxu0
      %v801 = vadd.f32 0.0, %v800
      %802 = vmatmul.f32.gmra.mxu0 %v696
      %v803 = vpop.f32.mrf.mxu0
      %v804 = vadd.f32 0.0, %v803
      %805 = vmatmul.f32.gmra.mxu0 %v697
      %v806 = vpop.f32.mrf.mxu0
      %v807 = vadd.f32 0.0, %v806
      %808 = vmatmul.f32.gmra.mxu0 %v698
      %v809 = vpop.f32.mrf.mxu0
      %v810 = vadd.f32 0.0, %v809
      %811 = vmatmul.f32.gmra.mxu0 %v699
      %v812 = vpop.f32.mrf.mxu0
      %v813 = vadd.f32 0.0, %v812
      %814 = vmatmul.f32.gmra.mxu0 %v700
      %v815 = vpop.f32.mrf.mxu0
      %v816 = vadd.f32 0.0, %v815
      %817 = vmatmul.f32.gmra.mxu0 %v701
      %v818 = vpop.f32.mrf.mxu0
      %v819 = vadd.f32 0.0, %v818
      %820 = vmatmul.f32.gmra.mxu0 %v702
      %v821 = vpop.f32.mrf.mxu0
      %v822 = vadd.f32 0.0, %v821
      %823 = vmatmul.f32.gmra.mxu0 %v703
      %v824 = vpop.f32.mrf.mxu0
      %v825 = vadd.f32 0.0, %v824
      %826 = vmatmul.f32.gmra.mxu0 %v704
      %v827 = vpop.f32.mrf.mxu0
      %v828 = vadd.f32 0.0, %v827
      %829 = vmatmul.f32.gmra.mxu0 %v705
      %v830 = vpop.f32.mrf.mxu0
      %v831 = vadd.f32 0.0, %v830
      %832 = vmatmul.f32.gmra.mxu0 %v706
      %v833 = vpop.f32.mrf.mxu0
      %v834 = vadd.f32 0.0, %v833
      %835 = vdwg.mxu0
      %v836 = vadd.f32 %v580, %v741
      %v837 = vadd.f32 %v583, %v744
      %v838 = vadd.f32 %v586, %v747
      %v839 = vadd.f32 %v589, %v750
      %v840 = vadd.f32 %v592, %v753
      %v841 = vadd.f32 %v595, %v756
      %v842 = vadd.f32 %v598, %v759
      %v843 = vadd.f32 %v601, %v762
      %v844 = vadd.f32 %v604, %v765
      %v845 = vadd.f32 %v607, %v768
      %v846 = vadd.f32 %v610, %v771
      %v847 = vadd.f32 %v613, %v774
      %v848 = vadd.f32 %v616, %v777
      %v849 = vadd.f32 %v619, %v780
      %v850 = vadd.f32 %v622, %v783
      %v851 = vadd.f32 %v625, %v786
      %v852 = vadd.f32 %v628, %v789
      %v853 = vadd.f32 %v631, %v792
      %v854 = vadd.f32 %v634, %v795
      %v855 = vadd.f32 %v637, %v798
      %v856 = vadd.f32 %v640, %v801
      %v857 = vadd.f32 %v643, %v804
      %v858 = vadd.f32 %v646, %v807
      %v859 = vadd.f32 %v649, %v810
      %v860 = vadd.f32 %v652, %v813
      %v861 = vadd.f32 %v655, %v816
      %v862 = vadd.f32 %v658, %v819
      %v863 = vadd.f32 %v661, %v822
      %v864 = vadd.f32 %v664, %v825
      %v865 = vadd.f32 %v667, %v828
      %v866 = vadd.f32 %v670, %v831
      %v867 = vadd.f32 %v673, %v834
      %v868 = vld [vmem:[%s6] sm:$0x1]
      %v870 = vperm.slane %v868, 0
      %v872 = vmul.f32 %v836, %v870
      %v873 = vmul.f32 %v837, %v870
      %v874 = vmul.f32 %v838, %v870
      %v875 = vmul.f32 %v839, %v870
      %v876 = vmul.f32 %v840, %v870
      %v877 = vmul.f32 %v841, %v870
      %v878 = vmul.f32 %v842, %v870
      %v879 = vmul.f32 %v843, %v870
      %v880 = vmul.f32 %v844, %v870
      %v881 = vmul.f32 %v845, %v870
      %v882 = vmul.f32 %v846, %v870
      %v883 = vmul.f32 %v847, %v870
      %v884 = vmul.f32 %v848, %v870
      %v885 = vmul.f32 %v849, %v870
      %v886 = vmul.f32 %v850, %v870
      %v887 = vmul.f32 %v851, %v870
      %v888 = vmul.f32 %v852, %v870
      %v889 = vmul.f32 %v853, %v870
      %v890 = vmul.f32 %v854, %v870
      %v891 = vmul.f32 %v855, %v870
      %v892 = vmul.f32 %v856, %v870
      %v893 = vmul.f32 %v857, %v870
      %v894 = vmul.f32 %v858, %v870
      %v895 = vmul.f32 %v859, %v870
      %v896 = vmul.f32 %v860, %v870
      %v897 = vmul.f32 %v861, %v870
      %v898 = vmul.f32 %v862, %v870
      %v899 = vmul.f32 %v863, %v870
      %v900 = vmul.f32 %v864, %v870
      %v901 = vmul.f32 %v865, %v870
      %v902 = vmul.f32 %v866, %v870
      %v903 = vmul.f32 %v867, %v870
      %v904 = vld [vmem:[%s7] sm:$0x1]
      %v906 = vperm.slane %v904, 0
      %v908 = vadd.f32 %v872, %v906
      %v909 = vadd.f32 %v873, %v906
      %v910 = vadd.f32 %v874, %v906
      %v911 = vadd.f32 %v875, %v906
      %v912 = vadd.f32 %v876, %v906
      %v913 = vadd.f32 %v877, %v906
      %v914 = vadd.f32 %v878, %v906
      %v915 = vadd.f32 %v879, %v906
      %v916 = vadd.f32 %v880, %v906
      %v917 = vadd.f32 %v881, %v906
      %v918 = vadd.f32 %v882, %v906
      %v919 = vadd.f32 %v883, %v906
      %v920 = vadd.f32 %v884, %v906
      %v921 = vadd.f32 %v885, %v906
      %v922 = vadd.f32 %v886, %v906
      %v923 = vadd.f32 %v887, %v906
      %v924 = vadd.f32 %v888, %v906
      %v925 = vadd.f32 %v889, %v906
      %v926 = vadd.f32 %v890, %v906
      %v927 = vadd.f32 %v891, %v906
      %v928 = vadd.f32 %v892, %v906
      %v929 = vadd.f32 %v893, %v906
      %v930 = vadd.f32 %v894, %v906
      %v931 = vadd.f32 %v895, %v906
      %v932 = vadd.f32 %v896, %v906
      %v933 = vadd.f32 %v897, %v906
      %v934 = vadd.f32 %v898, %v906
      %v935 = vadd.f32 %v899, %v906
      %v936 = vadd.f32 %v900, %v906
      %v937 = vadd.f32 %v901, %v906
      %v938 = vadd.f32 %v902, %v906
      %v939 = vadd.f32 %v903, %v906
      %v940 = vxor.u32 %v908, 2147483648
      %v941 = vxor.u32 %v909, 2147483648
      %v942 = vxor.u32 %v910, 2147483648
      %v943 = vxor.u32 %v911, 2147483648
      %v944 = vxor.u32 %v912, 2147483648
      %v945 = vxor.u32 %v913, 2147483648
      %v946 = vxor.u32 %v914, 2147483648
      %v947 = vxor.u32 %v915, 2147483648
      %v948 = vxor.u32 %v916, 2147483648
      %v949 = vxor.u32 %v917, 2147483648
      %v950 = vxor.u32 %v918, 2147483648
      %v951 = vxor.u32 %v919, 2147483648
      %v952 = vxor.u32 %v920, 2147483648
      %v953 = vxor.u32 %v921, 2147483648
      %v954 = vxor.u32 %v922, 2147483648
      %v955 = vxor.u32 %v923, 2147483648
      %v956 = vxor.u32 %v924, 2147483648
      %v957 = vxor.u32 %v925, 2147483648
      %v958 = vxor.u32 %v926, 2147483648
      %v959 = vxor.u32 %v927, 2147483648
      %v960 = vxor.u32 %v928, 2147483648
      %v961 = vxor.u32 %v929, 2147483648
      %v962 = vxor.u32 %v930, 2147483648
      %v963 = vxor.u32 %v931, 2147483648
      %v964 = vxor.u32 %v932, 2147483648
      %v965 = vxor.u32 %v933, 2147483648
      %v966 = vxor.u32 %v934, 2147483648
      %v967 = vxor.u32 %v935, 2147483648
      %v968 = vxor.u32 %v936, 2147483648
      %v969 = vxor.u32 %v937, 2147483648
      %v970 = vxor.u32 %v938, 2147483648
      %v971 = vxor.u32 %v939, 2147483648
      %v972 = vmul.f32 %v940, 1.442695
      %v973 = vpow.pop %v972
      %v974 = vmul.f32 %v941, 1.442695
      %v975 = vpow.pop %v974
      %v976 = vmul.f32 %v942, 1.442695
      %v977 = vpow.pop %v976
      %v978 = vmul.f32 %v943, 1.442695
      %v979 = vpow.pop %v978
      %v980 = vmul.f32 %v944, 1.442695
      %v981 = vpow.pop %v980
      %v982 = vmul.f32 %v945, 1.442695
      %v983 = vpow.pop %v982
      %v984 = vmul.f32 %v946, 1.442695
      %v985 = vpow.pop %v984
      %v986 = vmul.f32 %v947, 1.442695
      %v987 = vpow.pop %v986
      %v988 = vmul.f32 %v948, 1.442695
      %v989 = vpow.pop %v988
      %v990 = vmul.f32 %v949, 1.442695
      %v991 = vpow.pop %v990
      %v992 = vmul.f32 %v950, 1.442695
      %v993 = vpow.pop %v992
      %v994 = vmul.f32 %v951, 1.442695
      %v995 = vpow.pop %v994
      %v996 = vmul.f32 %v952, 1.442695
      %v997 = vpow.pop %v996
      %v998 = vmul.f32 %v953, 1.442695
      %v999 = vpow.pop %v998
      %v1000 = vmul.f32 %v954, 1.442695
      %v1001 = vpow.pop %v1000
      %v1002 = vmul.f32 %v955, 1.442695
      %v1003 = vpow.pop %v1002
      %v1004 = vmul.f32 %v956, 1.442695
      %v1005 = vpow.pop %v1004
      %v1006 = vmul.f32 %v957, 1.442695
      %v1007 = vpow.pop %v1006
      %v1008 = vmul.f32 %v958, 1.442695
      %v1009 = vpow.pop %v1008
      %v1010 = vmul.f32 %v959, 1.442695
      %v1011 = vpow.pop %v1010
      %v1012 = vmul.f32 %v960, 1.442695
      %v1013 = vpow.pop %v1012
      %v1014 = vmul.f32 %v961, 1.442695
      %v1015 = vpow.pop %v1014
      %v1016 = vmul.f32 %v962, 1.442695
      %v1017 = vpow.pop %v1016
      %v1018 = vmul.f32 %v963, 1.442695
      %v1019 = vpow.pop %v1018
      %v1020 = vmul.f32 %v964, 1.442695
      %v1021 = vpow.pop %v1020
      %v1022 = vmul.f32 %v965, 1.442695
      %v1023 = vpow.pop %v1022
      %v1024 = vmul.f32 %v966, 1.442695
      %v1025 = vpow.pop %v1024
      %v1026 = vmul.f32 %v967, 1.442695
      %v1027 = vpow.pop %v1026
      %v1028 = vmul.f32 %v968, 1.442695
      %v1029 = vpow.pop %v1028
      %v1030 = vmul.f32 %v969, 1.442695
      %v1031 = vpow.pop %v1030
      %v1032 = vmul.f32 %v970, 1.442695
      %v1033 = vpow.pop %v1032
      %v1034 = vmul.f32 %v971, 1.442695
      %v1035 = vpow.pop %v1034
      %v1036 = vadd.f32 %v973, 1.0
      %v1037 = vadd.f32 %v975, 1.0
      %v1038 = vadd.f32 %v977, 1.0
      %v1039 = vadd.f32 %v979, 1.0
      %v1040 = vadd.f32 %v981, 1.0
      %v1041 = vadd.f32 %v983, 1.0
      %v1042 = vadd.f32 %v985, 1.0
      %v1043 = vadd.f32 %v987, 1.0
      %v1044 = vadd.f32 %v989, 1.0
      %v1045 = vadd.f32 %v991, 1.0
      %v1046 = vadd.f32 %v993, 1.0
      %v1047 = vadd.f32 %v995, 1.0
      %v1048 = vadd.f32 %v997, 1.0
      %v1049 = vadd.f32 %v999, 1.0
      %v1050 = vadd.f32 %v1001, 1.0
      %v1051 = vadd.f32 %v1003, 1.0
      %v1052 = vadd.f32 %v1005, 1.0
      %v1053 = vadd.f32 %v1007, 1.0
      %v1054 = vadd.f32 %v1009, 1.0
      %v1055 = vadd.f32 %v1011, 1.0
      %v1056 = vadd.f32 %v1013, 1.0
      %v1057 = vadd.f32 %v1015, 1.0
      %v1058 = vadd.f32 %v1017, 1.0
      %v1059 = vadd.f32 %v1019, 1.0
      %v1060 = vadd.f32 %v1021, 1.0
      %v1061 = vadd.f32 %v1023, 1.0
      %v1062 = vadd.f32 %v1025, 1.0
      %v1063 = vadd.f32 %v1027, 1.0
      %v1064 = vadd.f32 %v1029, 1.0
      %v1065 = vadd.f32 %v1031, 1.0
      %v1066 = vadd.f32 %v1033, 1.0
      %v1067 = vadd.f32 %v1035, 1.0
      %v1068 = vrcp.pop %v1036
      %v1069 = vmul.f32 %v1036, %v1068
      %v1070 = vsub.f32 1.0, %v1069
      %v1071 = vmul.f32 %v1068, %v1070
      %v1072 = vadd.f32 %v1068, %v1071
      %vm1073 = vweird.f32 %v1036
      %vm1074 = vweird.f32 %v1068
      %vm1075 = vmor %vm1073, %vm1074
      %v1076 = vsel %vm1075, %v1068, %v1072
      %v1077 = vand.u32 2147483647, %v1036
      %vm1078 = vcmp.eq.f32.partialorder %v1077, 8.507059e+37
      %v1079 = vand.u32 %v1036, 2147483648
      %v1080 = vor.u32 1.1754944e-38, %v1079
      %v1081 = vsel %vm1078, %v1080, %v1076
      %v1082 = vmul.f32 1.0, %v1081
      %v1083 = vrcp.pop %v1037
      %v1084 = vmul.f32 %v1037, %v1083
      %v1085 = vsub.f32 1.0, %v1084
      %v1086 = vmul.f32 %v1083, %v1085
      %v1087 = vadd.f32 %v1083, %v1086
      %vm1088 = vweird.f32 %v1037
      %vm1089 = vweird.f32 %v1083
      %vm1090 = vmor %vm1088, %vm1089
      %v1091 = vsel %vm1090, %v1083, %v1087
      %v1092 = vand.u32 2147483647, %v1037
      %vm1093 = vcmp.eq.f32.partialorder %v1092, 8.507059e+37
      %v1094 = vand.u32 %v1037, 2147483648
      %v1095 = vor.u32 1.1754944e-38, %v1094
      %v1096 = vsel %vm1093, %v1095, %v1091
      %v1097 = vmul.f32 1.0, %v1096
      %v1098 = vrcp.pop %v1038
      %v1099 = vmul.f32 %v1038, %v1098
      %v1100 = vsub.f32 1.0, %v1099
      %v1101 = vmul.f32 %v1098, %v1100
      %v1102 = vadd.f32 %v1098, %v1101
      %vm1103 = vweird.f32 %v1038
      %vm1104 = vweird.f32 %v1098
      %vm1105 = vmor %vm1103, %vm1104
      %v1106 = vsel %vm1105, %v1098, %v1102
      %v1107 = vand.u32 2147483647, %v1038
      %vm1108 = vcmp.eq.f32.partialorder %v1107, 8.507059e+37
      %v1109 = vand.u32 %v1038, 2147483648
      %v1110 = vor.u32 1.1754944e-38, %v1109
      %v1111 = vsel %vm1108, %v1110, %v1106
      %v1112 = vmul.f32 1.0, %v1111
      %v1113 = vrcp.pop %v1039
      %v1114 = vmul.f32 %v1039, %v1113
      %v1115 = vsub.f32 1.0, %v1114
      %v1116 = vmul.f32 %v1113, %v1115
      %v1117 = vadd.f32 %v1113, %v1116
      %vm1118 = vweird.f32 %v1039
      %vm1119 = vweird.f32 %v1113
      %vm1120 = vmor %vm1118, %vm1119
      %v1121 = vsel %vm1120, %v1113, %v1117
      %v1122 = vand.u32 2147483647, %v1039
      %vm1123 = vcmp.eq.f32.partialorder %v1122, 8.507059e+37
      %v1124 = vand.u32 %v1039, 2147483648
      %v1125 = vor.u32 1.1754944e-38, %v1124
      %v1126 = vsel %vm1123, %v1125, %v1121
      %v1127 = vmul.f32 1.0, %v1126
      %v1128 = vrcp.pop %v1040
      %v1129 = vmul.f32 %v1040, %v1128
      %v1130 = vsub.f32 1.0, %v1129
      %v1131 = vmul.f32 %v1128, %v1130
      %v1132 = vadd.f32 %v1128, %v1131
      %vm1133 = vweird.f32 %v1040
      %vm1134 = vweird.f32 %v1128
      %vm1135 = vmor %vm1133, %vm1134
      %v1136 = vsel %vm1135, %v1128, %v1132
      %v1137 = vand.u32 2147483647, %v1040
      %vm1138 = vcmp.eq.f32.partialorder %v1137, 8.507059e+37
      %v1139 = vand.u32 %v1040, 2147483648
      %v1140 = vor.u32 1.1754944e-38, %v1139
      %v1141 = vsel %vm1138, %v1140, %v1136
      %v1142 = vmul.f32 1.0, %v1141
      %v1143 = vrcp.pop %v1041
      %v1144 = vmul.f32 %v1041, %v1143
      %v1145 = vsub.f32 1.0, %v1144
      %v1146 = vmul.f32 %v1143, %v1145
      %v1147 = vadd.f32 %v1143, %v1146
      %vm1148 = vweird.f32 %v1041
      %vm1149 = vweird.f32 %v1143
      %vm1150 = vmor %vm1148, %vm1149
      %v1151 = vsel %vm1150, %v1143, %v1147
      %v1152 = vand.u32 2147483647, %v1041
      %vm1153 = vcmp.eq.f32.partialorder %v1152, 8.507059e+37
      %v1154 = vand.u32 %v1041, 2147483648
      %v1155 = vor.u32 1.1754944e-38, %v1154
      %v1156 = vsel %vm1153, %v1155, %v1151
      %v1157 = vmul.f32 1.0, %v1156
      %v1158 = vrcp.pop %v1042
      %v1159 = vmul.f32 %v1042, %v1158
      %v1160 = vsub.f32 1.0, %v1159
      %v1161 = vmul.f32 %v1158, %v1160
      %v1162 = vadd.f32 %v1158, %v1161
      %vm1163 = vweird.f32 %v1042
      %vm1164 = vweird.f32 %v1158
      %vm1165 = vmor %vm1163, %vm1164
      %v1166 = vsel %vm1165, %v1158, %v1162
      %v1167 = vand.u32 2147483647, %v1042
      %vm1168 = vcmp.eq.f32.partialorder %v1167, 8.507059e+37
      %v1169 = vand.u32 %v1042, 2147483648
      %v1170 = vor.u32 1.1754944e-38, %v1169
      %v1171 = vsel %vm1168, %v1170, %v1166
      %v1172 = vmul.f32 1.0, %v1171
      %v1173 = vrcp.pop %v1043
      %v1174 = vmul.f32 %v1043, %v1173
      %v1175 = vsub.f32 1.0, %v1174
      %v1176 = vmul.f32 %v1173, %v1175
      %v1177 = vadd.f32 %v1173, %v1176
      %vm1178 = vweird.f32 %v1043
      %vm1179 = vweird.f32 %v1173
      %vm1180 = vmor %vm1178, %vm1179
      %v1181 = vsel %vm1180, %v1173, %v1177
      %v1182 = vand.u32 2147483647, %v1043
      %vm1183 = vcmp.eq.f32.partialorder %v1182, 8.507059e+37
      %v1184 = vand.u32 %v1043, 2147483648
      %v1185 = vor.u32 1.1754944e-38, %v1184
      %v1186 = vsel %vm1183, %v1185, %v1181
      %v1187 = vmul.f32 1.0, %v1186
      %v1188 = vrcp.pop %v1044
      %v1189 = vmul.f32 %v1044, %v1188
      %v1190 = vsub.f32 1.0, %v1189
      %v1191 = vmul.f32 %v1188, %v1190
      %v1192 = vadd.f32 %v1188, %v1191
      %vm1193 = vweird.f32 %v1044
      %vm1194 = vweird.f32 %v1188
      %vm1195 = vmor %vm1193, %vm1194
      %v1196 = vsel %vm1195, %v1188, %v1192
      %v1197 = vand.u32 2147483647, %v1044
      %vm1198 = vcmp.eq.f32.partialorder %v1197, 8.507059e+37
      %v1199 = vand.u32 %v1044, 2147483648
      %v1200 = vor.u32 1.1754944e-38, %v1199
      %v1201 = vsel %vm1198, %v1200, %v1196
      %v1202 = vmul.f32 1.0, %v1201
      %v1203 = vrcp.pop %v1045
      %v1204 = vmul.f32 %v1045, %v1203
      %v1205 = vsub.f32 1.0, %v1204
      %v1206 = vmul.f32 %v1203, %v1205
      %v1207 = vadd.f32 %v1203, %v1206
      %vm1208 = vweird.f32 %v1045
      %vm1209 = vweird.f32 %v1203
      %vm1210 = vmor %vm1208, %vm1209
      %v1211 = vsel %vm1210, %v1203, %v1207
      %v1212 = vand.u32 2147483647, %v1045
      %vm1213 = vcmp.eq.f32.partialorder %v1212, 8.507059e+37
      %v1214 = vand.u32 %v1045, 2147483648
      %v1215 = vor.u32 1.1754944e-38, %v1214
      %v1216 = vsel %vm1213, %v1215, %v1211
      %v1217 = vmul.f32 1.0, %v1216
      %v1218 = vrcp.pop %v1046
      %v1219 = vmul.f32 %v1046, %v1218
      %v1220 = vsub.f32 1.0, %v1219
      %v1221 = vmul.f32 %v1218, %v1220
      %v1222 = vadd.f32 %v1218, %v1221
      %vm1223 = vweird.f32 %v1046
      %vm1224 = vweird.f32 %v1218
      %vm1225 = vmor %vm1223, %vm1224
      %v1226 = vsel %vm1225, %v1218, %v1222
      %v1227 = vand.u32 2147483647, %v1046
      %vm1228 = vcmp.eq.f32.partialorder %v1227, 8.507059e+37
      %v1229 = vand.u32 %v1046, 2147483648
      %v1230 = vor.u32 1.1754944e-38, %v1229
      %v1231 = vsel %vm1228, %v1230, %v1226
      %v1232 = vmul.f32 1.0, %v1231
      %v1233 = vrcp.pop %v1047
      %v1234 = vmul.f32 %v1047, %v1233
      %v1235 = vsub.f32 1.0, %v1234
      %v1236 = vmul.f32 %v1233, %v1235
      %v1237 = vadd.f32 %v1233, %v1236
      %vm1238 = vweird.f32 %v1047
      %vm1239 = vweird.f32 %v1233
      %vm1240 = vmor %vm1238, %vm1239
      %v1241 = vsel %vm1240, %v1233, %v1237
      %v1242 = vand.u32 2147483647, %v1047
      %vm1243 = vcmp.eq.f32.partialorder %v1242, 8.507059e+37
      %v1244 = vand.u32 %v1047, 2147483648
      %v1245 = vor.u32 1.1754944e-38, %v1244
      %v1246 = vsel %vm1243, %v1245, %v1241
      %v1247 = vmul.f32 1.0, %v1246
      %v1248 = vrcp.pop %v1048
      %v1249 = vmul.f32 %v1048, %v1248
      %v1250 = vsub.f32 1.0, %v1249
      %v1251 = vmul.f32 %v1248, %v1250
      %v1252 = vadd.f32 %v1248, %v1251
      %vm1253 = vweird.f32 %v1048
      %vm1254 = vweird.f32 %v1248
      %vm1255 = vmor %vm1253, %vm1254
      %v1256 = vsel %vm1255, %v1248, %v1252
      %v1257 = vand.u32 2147483647, %v1048
      %vm1258 = vcmp.eq.f32.partialorder %v1257, 8.507059e+37
      %v1259 = vand.u32 %v1048, 2147483648
      %v1260 = vor.u32 1.1754944e-38, %v1259
      %v1261 = vsel %vm1258, %v1260, %v1256
      %v1262 = vmul.f32 1.0, %v1261
      %v1263 = vrcp.pop %v1049
      %v1264 = vmul.f32 %v1049, %v1263
      %v1265 = vsub.f32 1.0, %v1264
      %v1266 = vmul.f32 %v1263, %v1265
      %v1267 = vadd.f32 %v1263, %v1266
      %vm1268 = vweird.f32 %v1049
      %vm1269 = vweird.f32 %v1263
      %vm1270 = vmor %vm1268, %vm1269
      %v1271 = vsel %vm1270, %v1263, %v1267
      %v1272 = vand.u32 2147483647, %v1049
      %vm1273 = vcmp.eq.f32.partialorder %v1272, 8.507059e+37
      %v1274 = vand.u32 %v1049, 2147483648
      %v1275 = vor.u32 1.1754944e-38, %v1274
      %v1276 = vsel %vm1273, %v1275, %v1271
      %v1277 = vmul.f32 1.0, %v1276
      %v1278 = vrcp.pop %v1050
      %v1279 = vmul.f32 %v1050, %v1278
      %v1280 = vsub.f32 1.0, %v1279
      %v1281 = vmul.f32 %v1278, %v1280
      %v1282 = vadd.f32 %v1278, %v1281
      %vm1283 = vweird.f32 %v1050
      %vm1284 = vweird.f32 %v1278
      %vm1285 = vmor %vm1283, %vm1284
      %v1286 = vsel %vm1285, %v1278, %v1282
      %v1287 = vand.u32 2147483647, %v1050
      %vm1288 = vcmp.eq.f32.partialorder %v1287, 8.507059e+37
      %v1289 = vand.u32 %v1050, 2147483648
      %v1290 = vor.u32 1.1754944e-38, %v1289
      %v1291 = vsel %vm1288, %v1290, %v1286
      %v1292 = vmul.f32 1.0, %v1291
      %v1293 = vrcp.pop %v1051
      %v1294 = vmul.f32 %v1051, %v1293
      %v1295 = vsub.f32 1.0, %v1294
      %v1296 = vmul.f32 %v1293, %v1295
      %v1297 = vadd.f32 %v1293, %v1296
      %vm1298 = vweird.f32 %v1051
      %vm1299 = vweird.f32 %v1293
      %vm1300 = vmor %vm1298, %vm1299
      %v1301 = vsel %vm1300, %v1293, %v1297
      %v1302 = vand.u32 2147483647, %v1051
      %vm1303 = vcmp.eq.f32.partialorder %v1302, 8.507059e+37
      %v1304 = vand.u32 %v1051, 2147483648
      %v1305 = vor.u32 1.1754944e-38, %v1304
      %v1306 = vsel %vm1303, %v1305, %v1301
      %v1307 = vmul.f32 1.0, %v1306
      %v1308 = vrcp.pop %v1052
      %v1309 = vmul.f32 %v1052, %v1308
      %v1310 = vsub.f32 1.0, %v1309
      %v1311 = vmul.f32 %v1308, %v1310
      %v1312 = vadd.f32 %v1308, %v1311
      %vm1313 = vweird.f32 %v1052
      %vm1314 = vweird.f32 %v1308
      %vm1315 = vmor %vm1313, %vm1314
      %v1316 = vsel %vm1315, %v1308, %v1312
      %v1317 = vand.u32 2147483647, %v1052
      %vm1318 = vcmp.eq.f32.partialorder %v1317, 8.507059e+37
      %v1319 = vand.u32 %v1052, 2147483648
      %v1320 = vor.u32 1.1754944e-38, %v1319
      %v1321 = vsel %vm1318, %v1320, %v1316
      %v1322 = vmul.f32 1.0, %v1321
      %v1323 = vrcp.pop %v1053
      %v1324 = vmul.f32 %v1053, %v1323
      %v1325 = vsub.f32 1.0, %v1324
      %v1326 = vmul.f32 %v1323, %v1325
      %v1327 = vadd.f32 %v1323, %v1326
      %vm1328 = vweird.f32 %v1053
      %vm1329 = vweird.f32 %v1323
      %vm1330 = vmor %vm1328, %vm1329
      %v1331 = vsel %vm1330, %v1323, %v1327
      %v1332 = vand.u32 2147483647, %v1053
      %vm1333 = vcmp.eq.f32.partialorder %v1332, 8.507059e+37
      %v1334 = vand.u32 %v1053, 2147483648
      %v1335 = vor.u32 1.1754944e-38, %v1334
      %v1336 = vsel %vm1333, %v1335, %v1331
      %v1337 = vmul.f32 1.0, %v1336
      %v1338 = vrcp.pop %v1054
      %v1339 = vmul.f32 %v1054, %v1338
      %v1340 = vsub.f32 1.0, %v1339
      %v1341 = vmul.f32 %v1338, %v1340
      %v1342 = vadd.f32 %v1338, %v1341
      %vm1343 = vweird.f32 %v1054
      %vm1344 = vweird.f32 %v1338
      %vm1345 = vmor %vm1343, %vm1344
      %v1346 = vsel %vm1345, %v1338, %v1342
      %v1347 = vand.u32 2147483647, %v1054
      %vm1348 = vcmp.eq.f32.partialorder %v1347, 8.507059e+37
      %v1349 = vand.u32 %v1054, 2147483648
      %v1350 = vor.u32 1.1754944e-38, %v1349
      %v1351 = vsel %vm1348, %v1350, %v1346
      %v1352 = vmul.f32 1.0, %v1351
      %v1353 = vrcp.pop %v1055
      %v1354 = vmul.f32 %v1055, %v1353
      %v1355 = vsub.f32 1.0, %v1354
      %v1356 = vmul.f32 %v1353, %v1355
      %v1357 = vadd.f32 %v1353, %v1356
      %vm1358 = vweird.f32 %v1055
      %vm1359 = vweird.f32 %v1353
      %vm1360 = vmor %vm1358, %vm1359
      %v1361 = vsel %vm1360, %v1353, %v1357
      %v1362 = vand.u32 2147483647, %v1055
      %vm1363 = vcmp.eq.f32.partialorder %v1362, 8.507059e+37
      %v1364 = vand.u32 %v1055, 2147483648
      %v1365 = vor.u32 1.1754944e-38, %v1364
      %v1366 = vsel %vm1363, %v1365, %v1361
      %v1367 = vmul.f32 1.0, %v1366
      %v1368 = vrcp.pop %v1056
      %v1369 = vmul.f32 %v1056, %v1368
      %v1370 = vsub.f32 1.0, %v1369
      %v1371 = vmul.f32 %v1368, %v1370
      %v1372 = vadd.f32 %v1368, %v1371
      %vm1373 = vweird.f32 %v1056
      %vm1374 = vweird.f32 %v1368
      %vm1375 = vmor %vm1373, %vm1374
      %v1376 = vsel %vm1375, %v1368, %v1372
      %v1377 = vand.u32 2147483647, %v1056
      %vm1378 = vcmp.eq.f32.partialorder %v1377, 8.507059e+37
      %v1379 = vand.u32 %v1056, 2147483648
      %v1380 = vor.u32 1.1754944e-38, %v1379
      %v1381 = vsel %vm1378, %v1380, %v1376
      %v1382 = vmul.f32 1.0, %v1381
      %v1383 = vrcp.pop %v1057
      %v1384 = vmul.f32 %v1057, %v1383
      %v1385 = vsub.f32 1.0, %v1384
      %v1386 = vmul.f32 %v1383, %v1385
      %v1387 = vadd.f32 %v1383, %v1386
      %vm1388 = vweird.f32 %v1057
      %vm1389 = vweird.f32 %v1383
      %vm1390 = vmor %vm1388, %vm1389
      %v1391 = vsel %vm1390, %v1383, %v1387
      %v1392 = vand.u32 2147483647, %v1057
      %vm1393 = vcmp.eq.f32.partialorder %v1392, 8.507059e+37
      %v1394 = vand.u32 %v1057, 2147483648
      %v1395 = vor.u32 1.1754944e-38, %v1394
      %v1396 = vsel %vm1393, %v1395, %v1391
      %v1397 = vmul.f32 1.0, %v1396
      %v1398 = vrcp.pop %v1058
      %v1399 = vmul.f32 %v1058, %v1398
      %v1400 = vsub.f32 1.0, %v1399
      %v1401 = vmul.f32 %v1398, %v1400
      %v1402 = vadd.f32 %v1398, %v1401
      %vm1403 = vweird.f32 %v1058
      %vm1404 = vweird.f32 %v1398
      %vm1405 = vmor %vm1403, %vm1404
      %v1406 = vsel %vm1405, %v1398, %v1402
      %v1407 = vand.u32 2147483647, %v1058
      %vm1408 = vcmp.eq.f32.partialorder %v1407, 8.507059e+37
      %v1409 = vand.u32 %v1058, 2147483648
      %v1410 = vor.u32 1.1754944e-38, %v1409
      %v1411 = vsel %vm1408, %v1410, %v1406
      %v1412 = vmul.f32 1.0, %v1411
      %v1413 = vrcp.pop %v1059
      %v1414 = vmul.f32 %v1059, %v1413
      %v1415 = vsub.f32 1.0, %v1414
      %v1416 = vmul.f32 %v1413, %v1415
      %v1417 = vadd.f32 %v1413, %v1416
      %vm1418 = vweird.f32 %v1059
      %vm1419 = vweird.f32 %v1413
      %vm1420 = vmor %vm1418, %vm1419
      %v1421 = vsel %vm1420, %v1413, %v1417
      %v1422 = vand.u32 2147483647, %v1059
      %vm1423 = vcmp.eq.f32.partialorder %v1422, 8.507059e+37
      %v1424 = vand.u32 %v1059, 2147483648
      %v1425 = vor.u32 1.1754944e-38, %v1424
      %v1426 = vsel %vm1423, %v1425, %v1421
      %v1427 = vmul.f32 1.0, %v1426
      %v1428 = vrcp.pop %v1060
      %v1429 = vmul.f32 %v1060, %v1428
      %v1430 = vsub.f32 1.0, %v1429
      %v1431 = vmul.f32 %v1428, %v1430
      %v1432 = vadd.f32 %v1428, %v1431
      %vm1433 = vweird.f32 %v1060
      %vm1434 = vweird.f32 %v1428
      %vm1435 = vmor %vm1433, %vm1434
      %v1436 = vsel %vm1435, %v1428, %v1432
      %v1437 = vand.u32 2147483647, %v1060
      %vm1438 = vcmp.eq.f32.partialorder %v1437, 8.507059e+37
      %v1439 = vand.u32 %v1060, 2147483648
      %v1440 = vor.u32 1.1754944e-38, %v1439
      %v1441 = vsel %vm1438, %v1440, %v1436
      %v1442 = vmul.f32 1.0, %v1441
      %v1443 = vrcp.pop %v1061
      %v1444 = vmul.f32 %v1061, %v1443
      %v1445 = vsub.f32 1.0, %v1444
      %v1446 = vmul.f32 %v1443, %v1445
      %v1447 = vadd.f32 %v1443, %v1446
      %vm1448 = vweird.f32 %v1061
      %vm1449 = vweird.f32 %v1443
      %vm1450 = vmor %vm1448, %vm1449
      %v1451 = vsel %vm1450, %v1443, %v1447
      %v1452 = vand.u32 2147483647, %v1061
      %vm1453 = vcmp.eq.f32.partialorder %v1452, 8.507059e+37
      %v1454 = vand.u32 %v1061, 2147483648
      %v1455 = vor.u32 1.1754944e-38, %v1454
      %v1456 = vsel %vm1453, %v1455, %v1451
      %v1457 = vmul.f32 1.0, %v1456
      %v1458 = vrcp.pop %v1062
      %v1459 = vmul.f32 %v1062, %v1458
      %v1460 = vsub.f32 1.0, %v1459
      %v1461 = vmul.f32 %v1458, %v1460
      %v1462 = vadd.f32 %v1458, %v1461
      %vm1463 = vweird.f32 %v1062
      %vm1464 = vweird.f32 %v1458
      %vm1465 = vmor %vm1463, %vm1464
      %v1466 = vsel %vm1465, %v1458, %v1462
      %v1467 = vand.u32 2147483647, %v1062
      %vm1468 = vcmp.eq.f32.partialorder %v1467, 8.507059e+37
      %v1469 = vand.u32 %v1062, 2147483648
      %v1470 = vor.u32 1.1754944e-38, %v1469
      %v1471 = vsel %vm1468, %v1470, %v1466
      %v1472 = vmul.f32 1.0, %v1471
      %v1473 = vrcp.pop %v1063
      %v1474 = vmul.f32 %v1063, %v1473
      %v1475 = vsub.f32 1.0, %v1474
      %v1476 = vmul.f32 %v1473, %v1475
      %v1477 = vadd.f32 %v1473, %v1476
      %vm1478 = vweird.f32 %v1063
      %vm1479 = vweird.f32 %v1473
      %vm1480 = vmor %vm1478, %vm1479
      %v1481 = vsel %vm1480, %v1473, %v1477
      %v1482 = vand.u32 2147483647, %v1063
      %vm1483 = vcmp.eq.f32.partialorder %v1482, 8.507059e+37
      %v1484 = vand.u32 %v1063, 2147483648
      %v1485 = vor.u32 1.1754944e-38, %v1484
      %v1486 = vsel %vm1483, %v1485, %v1481
      %v1487 = vmul.f32 1.0, %v1486
      %v1488 = vrcp.pop %v1064
      %v1489 = vmul.f32 %v1064, %v1488
      %v1490 = vsub.f32 1.0, %v1489
      %v1491 = vmul.f32 %v1488, %v1490
      %v1492 = vadd.f32 %v1488, %v1491
      %vm1493 = vweird.f32 %v1064
      %vm1494 = vweird.f32 %v1488
      %vm1495 = vmor %vm1493, %vm1494
      %v1496 = vsel %vm1495, %v1488, %v1492
      %v1497 = vand.u32 2147483647, %v1064
      %vm1498 = vcmp.eq.f32.partialorder %v1497, 8.507059e+37
      %v1499 = vand.u32 %v1064, 2147483648
      %v1500 = vor.u32 1.1754944e-38, %v1499
      %v1501 = vsel %vm1498, %v1500, %v1496
      %v1502 = vmul.f32 1.0, %v1501
      %v1503 = vrcp.pop %v1065
      %v1504 = vmul.f32 %v1065, %v1503
      %v1505 = vsub.f32 1.0, %v1504
      %v1506 = vmul.f32 %v1503, %v1505
      %v1507 = vadd.f32 %v1503, %v1506
      %vm1508 = vweird.f32 %v1065
      %vm1509 = vweird.f32 %v1503
      %vm1510 = vmor %vm1508, %vm1509
      %v1511 = vsel %vm1510, %v1503, %v1507
      %v1512 = vand.u32 2147483647, %v1065
      %vm1513 = vcmp.eq.f32.partialorder %v1512, 8.507059e+37
      %v1514 = vand.u32 %v1065, 2147483648
      %v1515 = vor.u32 1.1754944e-38, %v1514
      %v1516 = vsel %vm1513, %v1515, %v1511
      %v1517 = vmul.f32 1.0, %v1516
      %v1518 = vrcp.pop %v1066
      %v1519 = vmul.f32 %v1066, %v1518
      %v1520 = vsub.f32 1.0, %v1519
      %v1521 = vmul.f32 %v1518, %v1520
      %v1522 = vadd.f32 %v1518, %v1521
      %vm1523 = vweird.f32 %v1066
      %vm1524 = vweird.f32 %v1518
      %vm1525 = vmor %vm1523, %vm1524
      %v1526 = vsel %vm1525, %v1518, %v1522
      %v1527 = vand.u32 2147483647, %v1066
      %vm1528 = vcmp.eq.f32.partialorder %v1527, 8.507059e+37
      %v1529 = vand.u32 %v1066, 2147483648
      %v1530 = vor.u32 1.1754944e-38, %v1529
      %v1531 = vsel %vm1528, %v1530, %v1526
      %v1532 = vmul.f32 1.0, %v1531
      %v1533 = vrcp.pop %v1067
      %v1534 = vmul.f32 %v1067, %v1533
      %v1535 = vsub.f32 1.0, %v1534
      %v1536 = vmul.f32 %v1533, %v1535
      %v1537 = vadd.f32 %v1533, %v1536
      %vm1538 = vweird.f32 %v1067
      %vm1539 = vweird.f32 %v1533
      %vm1540 = vmor %vm1538, %vm1539
      %v1541 = vsel %vm1540, %v1533, %v1537
      %v1542 = vand.u32 2147483647, %v1067
      %vm1543 = vcmp.eq.f32.partialorder %v1542, 8.507059e+37
      %v1544 = vand.u32 %v1067, 2147483648
      %v1545 = vor.u32 1.1754944e-38, %v1544
      %v1546 = vsel %vm1543, %v1545, %v1541
      %v1547 = vmul.f32 1.0, %v1546
      %v1548 = vmul.f32 %v908, %v1082
      %v1549 = vmul.f32 %v909, %v1097
      %v1550 = vmul.f32 %v910, %v1112
      %v1551 = vmul.f32 %v911, %v1127
      %v1552 = vmul.f32 %v912, %v1142
      %v1553 = vmul.f32 %v913, %v1157
      %v1554 = vmul.f32 %v914, %v1172
      %v1555 = vmul.f32 %v915, %v1187
      %v1556 = vmul.f32 %v916, %v1202
      %v1557 = vmul.f32 %v917, %v1217
      %v1558 = vmul.f32 %v918, %v1232
      %v1559 = vmul.f32 %v919, %v1247
      %v1560 = vmul.f32 %v920, %v1262
      %v1561 = vmul.f32 %v921, %v1277
      %v1562 = vmul.f32 %v922, %v1292
      %v1563 = vmul.f32 %v923, %v1307
      %v1564 = vmul.f32 %v924, %v1322
      %v1565 = vmul.f32 %v925, %v1337
      %v1566 = vmul.f32 %v926, %v1352
      %v1567 = vmul.f32 %v927, %v1367
      %v1568 = vmul.f32 %v928, %v1382
      %v1569 = vmul.f32 %v929, %v1397
      %v1570 = vmul.f32 %v930, %v1412
      %v1571 = vmul.f32 %v931, %v1427
      %v1572 = vmul.f32 %v932, %v1442
      %v1573 = vmul.f32 %v933, %v1457
      %v1574 = vmul.f32 %v934, %v1472
      %v1575 = vmul.f32 %v935, %v1487
      %v1576 = vmul.f32 %v936, %v1502
      %v1577 = vmul.f32 %v937, %v1517
      %v1578 = vmul.f32 %v938, %v1532
      %v1579 = vmul.f32 %v939, %v1547
      %1580 = vst [vmem:[%s351] sm:$0xff] %v1548
      %1581 = vst [vmem:[%s351 + $0x8] sm:$0xff] %v1549
      %1582 = vst [vmem:[%s351 + $0x10] sm:$0xff] %v1550
      %1583 = vst [vmem:[%s351 + $0x18] sm:$0xff] %v1551
      %1584 = vst [vmem:[%s351 + $0x20] sm:$0xff] %v1552
      %1585 = vst [vmem:[%s351 + $0x28] sm:$0xff] %v1553
      %1586 = vst [vmem:[%s351 + $0x30] sm:$0xff] %v1554
      %1587 = vst [vmem:[%s351 + $0x38] sm:$0xff] %v1555
      %1588 = vst [vmem:[%s351 + $0x40] sm:$0xff] %v1556
      %1589 = vst [vmem:[%s351 + $0x48] sm:$0xff] %v1557
      %1590 = vst [vmem:[%s351 + $0x50] sm:$0xff] %v1558
      %1591 = vst [vmem:[%s351 + $0x58] sm:$0xff] %v1559
      %1592 = vst [vmem:[%s351 + $0x60] sm:$0xff] %v1560
      %1593 = vst [vmem:[%s351 + $0x68] sm:$0xff] %v1561
      %1594 = vst [vmem:[%s351 + $0x70] sm:$0xff] %v1562
      %1595 = vst [vmem:[%s351 + $0x78] sm:$0xff] %v1563
      %1596 = vst [vmem:[%s351 + $0x80] sm:$0xff] %v1564
      %1597 = vst [vmem:[%s351 + $0x88] sm:$0xff] %v1565
      %1598 = vst [vmem:[%s351 + $0x90] sm:$0xff] %v1566
      %1599 = vst [vmem:[%s351 + $0x98] sm:$0xff] %v1567
      %1600 = vst [vmem:[%s351 + $0xa0] sm:$0xff] %v1568
      %1601 = vst [vmem:[%s351 + $0xa8] sm:$0xff] %v1569
      %1602 = vst [vmem:[%s351 + $0xb0] sm:$0xff] %v1570
      %1603 = vst [vmem:[%s351 + $0xb8] sm:$0xff] %v1571
      %1604 = vst [vmem:[%s351 + $0xc0] sm:$0xff] %v1572
      %1605 = vst [vmem:[%s351 + $0xc8] sm:$0xff] %v1573
      %1606 = vst [vmem:[%s351 + $0xd0] sm:$0xff] %v1574
      %1607 = vst [vmem:[%s351 + $0xd8] sm:$0xff] %v1575
      %1608 = vst [vmem:[%s351 + $0xe0] sm:$0xff] %v1576
      %1609 = vst [vmem:[%s351 + $0xe8] sm:$0xff] %v1577
      %1610 = vst [vmem:[%s351 + $0xf0] sm:$0xff] %v1578
      %1611 = vst [vmem:[%s351 + $0xf8] sm:$0xff] %v1579
      %s1612 = smul.u32 32, %s19
      %p1613 = scmp.lt.s32.totalorder %s1612, 63
      %s1614 = scalar_select %p1613, %s1612, 63
      %s1615 = smul.addr %s1614, 8
      %s1616 = scalar_lea.vmem %s8, %s1615
      // Predicated region
      $region53: #{c2f_forward.5} parent=51 // pred_check
        %p1617 = pneg %p220
      $region54: #{c2f_forward.5} parent=51 // pred_check_branch
        %1619 = sbr.rel (%p1617) target = $region56
      $region55: #{c2f_forward.5} parent=51 // pred_region
        %s1620 = smul.u32 32, %s19
      $region56: #{c2f_forward.5} parent=51 // pred_fallthru
        _
    $region52: #{c2f_forward.5} parent=5 // pred_fallthru
      _
    %p1621 = scmp.le.s32.totalorder 2, %s14
    // Predicated region
    $region57: #{c2f_forward.5} parent=5 // pred_check
      %p1622 = pneg %p1621
    $region58: #{c2f_forward.5} parent=5 // pred_check_branch
      %1624 = sbr.rel (%p1622) target = $region60
    $region59: #{c2f_forward.5} parent=5 // pred_region
      %s1625 = ssub.s32 %s14, 2
      // Predicated region
      $region61: #{c2f_forward.5} parent=59 // pred_check
        %p1626 = pneg %p226
      $region62: #{c2f_forward.5} parent=59 // pred_check_branch
        %1628 = sbr.rel (%p1626) target = $region64
      $region63: #{c2f_forward.5} parent=59 // pred_region
        %s1629 = smul.u32 32, %s20
        %p1630 = scmp.lt.s32.totalorder %s1629, 63
        %s1631 = scalar_select %p1630, %s1629, 63
        %s1632 = smul.addr %s1631, 8
        %s1633 = scalar_lea.vmem %s8, %s1632
      $region64: #{c2f_forward.5} parent=59 // pred_fallthru
        _
    $region60: #{c2f_forward.5} parent=5 // pred_fallthru
      _
  $region6: #{c2f_forward.5} parent=0 // loop_footer
    %s18 = sadd.s32 1, %s14
  $region7: #{c2f_forward.5} parent=0 // loop_footer_branch
    %13 = sbr.rel target = $region3
  $region8: #{c2f_forward.5} parent=0 // loop_exit
    _

// kernel: c2f_forward.3
$region0: #{c2f_forward.3}
  #allocation0 [shape = 'u32[]', space=smem, size = 0x4, offset = 0x4, fixed_abs, tag = 'smem constant byte address 0x4 - core index']
  #allocation1 [shape = 'u32[72,128]{1,0:T(1,128)}', space=vmem, size = 0x9000, scoped, tag = 'internal scratch']
  %s0 = inlined_call_operand.vmem [shape: f32[512,128], index: 0, kind: input, shape index: {}]
  %s1 = inlined_call_operand.vmem [shape: f32[128,256], index: 1, kind: input, shape index: {}]
  %s2 = inlined_call_operand.vmem [shape: f32[1,256], index: 2, kind: input, shape index: {}]
  %s3 = inlined_call_operand.vmem [shape: f32[1,256], index: 3, kind: input, shape index: {}]
  %s4 = inlined_call_operand.vmem [shape: f32[512,256], index: 4, kind: output, shape index: {}]
  %s5 = sld [smem:[#allocation0]]
  $region49: #{c2f_forward.3} parent=0
    _
  %s7 = ssub.s32 1, %s5
  %s8 = scalar_select 0, %s7, %s5
  loop: start=0, step=1, limit=4
  $region2: #{c2f_forward.3} parent=0 // loop_pre_header
    _
  $region3: #{c2f_forward.3} parent=0 // loop_header
    %s10 = sphi 0, %s14
    %p11 = scmp.ge.s32.totalorder %s10, 4
    %s20 = sphi 0, %s22
    %s23 = sphi 0, %s20
    %s24 = sphi 0, %s23
    %s40 = sphi 0, %s24
    %s44 = sphi 0, %s44
    %s46 = sphi 0, %s44
    %s47 = sphi 0, %s46
    %s61 = sphi 0, %s47
    %s65 = sphi 0, %s65
    %s67 = sphi 0, %s65
    %s68 = sphi 0, %s67
    %s82 = sphi 0, %s68
    %s86 = sphi 0, %s86
    %s88 = sphi 0, %s86
    %s89 = sphi 0, %s88
    %s103 = sphi 0, %s89
    %s109 = sphi 0, %s111
    %s112 = sphi 0, %s109
    %s113 = sphi 0, %s112
    %s129 = sphi 0, %s113
  $region4: #{c2f_forward.3} parent=0 // loop_header_branch
    %13 = sbr.rel (%p11) target = $region8
  $region5: #{c2f_forward.3} parent=0 // loop_body
    %s15 = ssub.s32 %s10, 1
    %s16 = ssub.s32 %s10, 2
    %s17 = sadd.s32 %s10, 1
    %s18 = ssub.s32 %s10, %s17
    %p19 = scmp.eq.s32.totalorder %s18, 0
    %s21 = sadd.s32 %s20, 1
    %s22 = scalar_select %p19, %s20, %s21
    %p25 = pneg %p19
    %p26 = scmp.eq.s32.totalorder %s10, 1
    %p27 = por %p25, %p26
    %p28 = scmp.ne.s32.totalorder %s20, %s23
    %p29 = scmp.eq.s32.totalorder %s10, 0
    %p30 = por %p28, %p29
    %p31 = scmp.ne.s32.totalorder %s20, %s23
    %p32 = scmp.eq.s32.totalorder %s15, 1
    %p33 = por %p31, %p32
    %p34 = scmp.ne.s32.totalorder %s23, %s24
    %p35 = scmp.eq.s32.totalorder %s15, 0
    %p36 = por %p34, %p35
    %p37 = scmp.ne.s32.totalorder %s23, %s24
    %p38 = scmp.eq.s32.totalorder %s16, 1
    %p39 = por %p37, %p38
    %p41 = scmp.ne.s32.totalorder %s24, %s40
    %p42 = scmp.eq.s32.totalorder %s16, 0
    %p43 = por %p41, %p42
    %s45 = sadd.s32 %s44, 1
    %p48 = scmp.eq.s32.totalorder %s10, 1
    %p49 = scmp.ne.s32.totalorder %s44, %s46
    %p50 = scmp.eq.s32.totalorder %s10, 0
    %p51 = por %p49, %p50
    %p52 = scmp.ne.s32.totalorder %s44, %s46
    %p53 = scmp.eq.s32.totalorder %s15, 1
    %p54 = por %p52, %p53
    %p55 = scmp.ne.s32.totalorder %s46, %s47
    %p56 = scmp.eq.s32.totalorder %s15, 0
    %p57 = por %p55, %p56
    %p58 = scmp.ne.s32.totalorder %s46, %s47
    %p59 = scmp.eq.s32.totalorder %s16, 1
    %p60 = por %p58, %p59
    %p62 = scmp.ne.s32.totalorder %s47, %s61
    %p63 = scmp.eq.s32.totalorder %s16, 0
    %p64 = por %p62, %p63
    %s66 = sadd.s32 %s65, 1
    %p69 = scmp.eq.s32.totalorder %s10, 1
    %p70 = scmp.ne.s32.totalorder %s65, %s67
    %p71 = scmp.eq.s32.totalorder %s10, 0
    %p72 = por %p70, %p71
    %p73 = scmp.ne.s32.totalorder %s65, %s67
    %p74 = scmp.eq.s32.totalorder %s15, 1
    %p75 = por %p73, %p74
    %p76 = scmp.ne.s32.totalorder %s67, %s68
    %p77 = scmp.eq.s32.totalorder %s15, 0
    %p78 = por %p76, %p77
    %p79 = scmp.ne.s32.totalorder %s67, %s68
    %p80 = scmp.eq.s32.totalorder %s16, 1
    %p81 = por %p79, %p80
    %p83 = scmp.ne.s32.totalorder %s68, %s82
    %p84 = scmp.eq.s32.totalorder %s16, 0
    %p85 = por %p83, %p84
    %s87 = sadd.s32 %s86, 1
    %p90 = scmp.eq.s32.totalorder %s10, 1
    %p91 = scmp.ne.s32.totalorder %s86, %s88
    %p92 = scmp.eq.s32.totalorder %s10, 0
    %p93 = por %p91, %p92
    %p94 = scmp.ne.s32.totalorder %s86, %s88
    %p95 = scmp.eq.s32.totalorder %s15, 1
    %p96 = por %p94, %p95
    %p97 = scmp.ne.s32.totalorder %s88, %s89
    %p98 = scmp.eq.s32.totalorder %s15, 0
    %p99 = por %p97, %p98
    %p100 = scmp.ne.s32.totalorder %s88, %s89
    %p101 = scmp.eq.s32.totalorder %s16, 1
    %p102 = por %p100, %p101
    %p104 = scmp.ne.s32.totalorder %s89, %s103
    %p105 = scmp.eq.s32.totalorder %s16, 0
    %p106 = por %p104, %p105
    %s107 = ssub.s32 %s10, %s17
    %p108 = scmp.eq.s32.totalorder %s107, 0
    %s110 = sadd.s32 %s109, 1
    %s111 = scalar_select %p108, %s109, %s110
    %p114 = pneg %p108
    %p115 = scmp.eq.s32.totalorder %s10, 1
    %p116 = por %p114, %p115
    %p117 = scmp.ne.s32.totalorder %s109, %s112
    %p118 = scmp.eq.s32.totalorder %s10, 0
    %p119 = por %p117, %p118
    %p120 = scmp.ne.s32.totalorder %s109, %s112
    %p121 = scmp.eq.s32.totalorder %s15, 1
    %p122 = por %p120, %p121
    %p123 = scmp.ne.s32.totalorder %s112, %s113
    %p124 = scmp.eq.s32.totalorder %s15, 0
    %p125 = por %p123, %p124
    %p126 = scmp.ne.s32.totalorder %s112, %s113
    %p127 = scmp.eq.s32.totalorder %s16, 1
    %p128 = por %p126, %p127
    %p130 = scmp.ne.s32.totalorder %s113, %s129
    %p131 = scmp.eq.s32.totalorder %s16, 0
    %p132 = por %p130, %p131
    %p133 = scmp.le.s32.totalorder 1, %s10
    %p134 = scmp.lt.s32.totalorder %s10, 3
    %p135 = pnand %p133, %p134
    %p136 = pneg %p135
    // Predicated region
    $region9: #{c2f_forward.3} parent=5 // pred_check
      _
    $region10: #{c2f_forward.3} parent=5 // pred_check_branch
      %138 = sbr.rel (%p135) target = $region12
    $region11: #{c2f_forward.3} parent=5 // pred_region
      %s139 = ssub.s32 %s10, 1
      // Predicated region
      $region13: #{c2f_forward.3} parent=11 // pred_check
        %p140 = pneg %p57
      $region14: #{c2f_forward.3} parent=11 // pred_check_branch
        %142 = sbr.rel (%p140) target = $region16
      $region15: #{c2f_forward.3} parent=11 // pred_region
        _
      $region16: #{c2f_forward.3} parent=11 // pred_fallthru
        _
      // Predicated region
      $region17: #{c2f_forward.3} parent=11 // pred_check
        %p143 = pneg %p78
      $region18: #{c2f_forward.3} parent=11 // pred_check_branch
        %145 = sbr.rel (%p143) target = $region20
      $region19: #{c2f_forward.3} parent=11 // pred_region
        _
      $region20: #{c2f_forward.3} parent=11 // pred_fallthru
        _
      // Predicated region
      $region21: #{c2f_forward.3} parent=11 // pred_check
        %p146 = pneg %p99
      $region22: #{c2f_forward.3} parent=11 // pred_check_branch
        %148 = sbr.rel (%p146) target = $region24
      $region23: #{c2f_forward.3} parent=11 // pred_region
        _
      $region24: #{c2f_forward.3} parent=11 // pred_fallthru
        _
    $region12: #{c2f_forward.3} parent=5 // pred_fallthru
      _
    %p149 = scmp.lt.s32.totalorder %s10, 2
    // Predicated region
    $region25: #{c2f_forward.3} parent=5 // pred_check
      %p150 = pneg %p149
    $region26: #{c2f_forward.3} parent=5 // pred_check_branch
      %152 = sbr.rel (%p150) target = $region28
    $region27: #{c2f_forward.3} parent=5 // pred_region
      // Predicated region
      $region29: #{c2f_forward.3} parent=27 // pred_check
        %p153 = pneg %p30
      $region30: #{c2f_forward.3} parent=27 // pred_check_branch
        %155 = sbr.rel (%p153) target = $region32
      $region31: #{c2f_forward.3} parent=27 // pred_region
        %s156 = smul.u32 32, %s10
        %p157 = scmp.lt.s32.totalorder %s156, 63
        %s158 = scalar_select %p157, %s156, 63
        %s159 = smul.addr %s158, 8
        %s160 = scalar_lea.vmem %s0, %s159
        %s161 = smul.u32 32, %s10
      $region32: #{c2f_forward.3} parent=27 // pred_fallthru
        _
    $region28: #{c2f_forward.3} parent=5 // pred_fallthru
      _
    %p162 = scmp.le.s32.totalorder 1, %s10
    %p163 = scmp.lt.s32.totalorder %s10, 3
    %p164 = pnand %p162, %p163
    %p165 = pneg %p164
    // Predicated region
    $region33: #{c2f_forward.3} parent=5 // pred_check
      _
    $region34: #{c2f_forward.3} parent=5 // pred_check_branch
      %167 = sbr.rel (%p164) target = $region36
    $region35: #{c2f_forward.3} parent=5 // pred_region
      %s168 = ssub.s32 %s10, 1
      %s169 = smul.u32 32, %s15
      %p170 = scmp.lt.s32.totalorder %s169, 63
      %s171 = scalar_select %p170, %s169, 63
      %s172 = smul.addr %s171, 8
      %s173 = scalar_lea.vmem %s0, %s172
      %p174 = pneg %p36
      %p175 = pneg %p33
      %p176 = pneg %p57
      %p177 = pneg %p54
      %p178 = pneg %p78
      %p179 = pneg %p75
      %p180 = pneg %p99
      %p181 = pneg %p96
      %p182 = pneg %p125
      %p183 = pneg %p122
      %s184 = smul.u32 32, %s15
      %p185 = scmp.lt.s32.totalorder %s184, 63
      %s186 = scalar_select %p185, %s184, 63
      %s187 = smul.addr %s186, 2
      %s188 = smul.addr %s187, 8
      %s189 = scalar_lea.vmem %s4, %s188
      %s190 = smul.u32 32, %s15
      %p191 = scmp.lt.s32.totalorder %s190, 63
      %s192 = scalar_select %p191, %s190, 63
      %s193 = smul.addr %s192, 8
      %s194 = scalar_lea.vmem %s0, %s193
      %s195 = smul.u32 32, %s15
      %s196 = smul.u32 32, %s15
      %p197 = scmp.lt.s32.totalorder %s196, 63
      %s198 = scalar_select %p197, %s196, 63
      %s199 = smul.addr %s198, 2
      %s200 = smul.addr %s199, 8
      %s201 = scalar_lea.vmem %s4, %s200
      %s202 = smul.u32 32, %s15
      %v203 = vld [vmem:[%s194] sm:$0xff]
      %v204 = vld [vmem:[%s194 + $0x8] sm:$0xff]
      %v205 = vld [vmem:[%s194 + $0x10] sm:$0xff]
      %v206 = vld [vmem:[%s194 + $0x18] sm:$0xff]
      %v207 = vld [vmem:[%s194 + $0x20] sm:$0xff]
      %v208 = vld [vmem:[%s194 + $0x28] sm:$0xff]
      %v209 = vld [vmem:[%s194 + $0x30] sm:$0xff]
      %v210 = vld [vmem:[%s194 + $0x38] sm:$0xff]
      %v211 = vld [vmem:[%s194 + $0x40] sm:$0xff]
      %v212 = vld [vmem:[%s194 + $0x48] sm:$0xff]
      %v213 = vld [vmem:[%s194 + $0x50] sm:$0xff]
      %v214 = vld [vmem:[%s194 + $0x58] sm:$0xff]
      %v215 = vld [vmem:[%s194 + $0x60] sm:$0xff]
      %v216 = vld [vmem:[%s194 + $0x68] sm:$0xff]
      %v217 = vld [vmem:[%s194 + $0x70] sm:$0xff]
      %v218 = vld [vmem:[%s194 + $0x78] sm:$0xff]
      %v219 = vld [vmem:[%s194 + $0x80] sm:$0xff]
      %v220 = vld [vmem:[%s194 + $0x88] sm:$0xff]
      %v221 = vld [vmem:[%s194 + $0x90] sm:$0xff]
      %v222 = vld [vmem:[%s194 + $0x98] sm:$0xff]
      %v223 = vld [vmem:[%s194 + $0xa0] sm:$0xff]
      %v224 = vld [vmem:[%s194 + $0xa8] sm:$0xff]
      %v225 = vld [vmem:[%s194 + $0xb0] sm:$0xff]
      %v226 = vld [vmem:[%s194 + $0xb8] sm:$0xff]
      %v227 = vld [vmem:[%s194 + $0xc0] sm:$0xff]
      %v228 = vld [vmem:[%s194 + $0xc8] sm:$0xff]
      %v229 = vld [vmem:[%s194 + $0xd0] sm:$0xff]
      %v230 = vld [vmem:[%s194 + $0xd8] sm:$0xff]
      %v231 = vld [vmem:[%s194 + $0xe0] sm:$0xff]
      %v232 = vld [vmem:[%s194 + $0xe8] sm:$0xff]
      %v233 = vld [vmem:[%s194 + $0xf0] sm:$0xff]
      %v234 = vld [vmem:[%s194 + $0xf8] sm:$0xff]
      %v235 = vld [vmem:[%s1] sm:$0xff]
      %v236 = vld [vmem:[%s1 + $0x8] sm:$0xff]
      %v237 = vld [vmem:[%s1 + $0x10] sm:$0xff]
      %v238 = vld [vmem:[%s1 + $0x18] sm:$0xff]
      %v239 = vld [vmem:[%s1 + $0x20] sm:$0xff]
      %v240 = vld [vmem:[%s1 + $0x28] sm:$0xff]
      %v241 = vld [vmem:[%s1 + $0x30] sm:$0xff]
      %v242 = vld [vmem:[%s1 + $0x38] sm:$0xff]
      %v243 = vld [vmem:[%s1 + $0x40] sm:$0xff]
      %v244 = vld [vmem:[%s1 + $0x48] sm:$0xff]
      %v245 = vld [vmem:[%s1 + $0x50] sm:$0xff]
      %v246 = vld [vmem:[%s1 + $0x58] sm:$0xff]
      %v247 = vld [vmem:[%s1 + $0x60] sm:$0xff]
      %v248 = vld [vmem:[%s1 + $0x68] sm:$0xff]
      %v249 = vld [vmem:[%s1 + $0x70] sm:$0xff]
      %v250 = vld [vmem:[%s1 + $0x78] sm:$0xff]
      %v251 = vld [vmem:[%s1 + $0x80] sm:$0xff]
      %v252 = vld [vmem:[%s1 + $0x88] sm:$0xff]
      %v253 = vld [vmem:[%s1 + $0x90] sm:$0xff]
      %v254 = vld [vmem:[%s1 + $0x98] sm:$0xff]
      %v255 = vld [vmem:[%s1 + $0xa0] sm:$0xff]
      %v256 = vld [vmem:[%s1 + $0xa8] sm:$0xff]
      %v257 = vld [vmem:[%s1 + $0xb0] sm:$0xff]
      %v258 = vld [vmem:[%s1 + $0xb8] sm:$0xff]
      %v259 = vld [vmem:[%s1 + $0xc0] sm:$0xff]
      %v260 = vld [vmem:[%s1 + $0xc8] sm:$0xff]
      %v261 = vld [vmem:[%s1 + $0xd0] sm:$0xff]
      %v262 = vld [vmem:[%s1 + $0xd8] sm:$0xff]
      %v263 = vld [vmem:[%s1 + $0xe0] sm:$0xff]
      %v264 = vld [vmem:[%s1 + $0xe8] sm:$0xff]
      %v265 = vld [vmem:[%s1 + $0xf0] sm:$0xff]
      %v266 = vld [vmem:[%s1 + $0xf8] sm:$0xff]
      %267 = vmatpush.msra.mxu0 %v265
      %268 = vmatpush.msra.mxu0 %v263
      %269 = vmatpush.msra.mxu0 %v261
      %270 = vmatpush.msra.mxu0 %v259
      %271 = vmatpush.msra.mxu0 %v257
      %272 = vmatpush.msra.mxu0 %v255
      %273 = vmatpush.msra.mxu0 %v253
      %274 = vmatpush.msra.mxu0 %v251
      %275 = vmatpush.msra.mxu0 %v249
      %276 = vmatpush.msra.mxu0 %v247
      %277 = vmatpush.msra.mxu0 %v245
      %278 = vmatpush.msra.mxu0 %v243
      %279 = vmatpush.msra.mxu0 %v241
      %280 = vmatpush.msra.mxu0 %v239
      %281 = vmatpush.msra.mxu0 %v237
      %282 = vmatpush.msra.mxu0 %v235
      %283 = vmatmul.f32.gmra.mxu0 %v203
      %v284 = vpop.f32.mrf.mxu0
      %v285 = vadd.f32 0.0, %v284
      %286 = vmatmul.f32.gmra.mxu0 %v204
      %v287 = vpop.f32.mrf.mxu0
      %v288 = vadd.f32 0.0, %v287
      %289 = vmatmul.f32.gmra.mxu0 %v205
      %v290 = vpop.f32.mrf.mxu0
      %v291 = vadd.f32 0.0, %v290
      %292 = vmatmul.f32.gmra.mxu0 %v206
      %v293 = vpop.f32.mrf.mxu0
      %v294 = vadd.f32 0.0, %v293
      %295 = vmatmul.f32.gmra.mxu0 %v207
      %v296 = vpop.f32.mrf.mxu0
      %v297 = vadd.f32 0.0, %v296
      %298 = vmatmul.f32.gmra.mxu0 %v208
      %v299 = vpop.f32.mrf.mxu0
      %v300 = vadd.f32 0.0, %v299
      %301 = vmatmul.f32.gmra.mxu0 %v209
      %v302 = vpop.f32.mrf.mxu0
      %v303 = vadd.f32 0.0, %v302
      %304 = vmatmul.f32.gmra.mxu0 %v210
      %v305 = vpop.f32.mrf.mxu0
      %v306 = vadd.f32 0.0, %v305
      %307 = vmatmul.f32.gmra.mxu0 %v211
      %v308 = vpop.f32.mrf.mxu0
      %v309 = vadd.f32 0.0, %v308
      %310 = vmatmul.f32.gmra.mxu0 %v212
      %v311 = vpop.f32.mrf.mxu0
      %v312 = vadd.f32 0.0, %v311
      %313 = vmatmul.f32.gmra.mxu0 %v213
      %v314 = vpop.f32.mrf.mxu0
      %v315 = vadd.f32 0.0, %v314
      %316 = vmatmul.f32.gmra.mxu0 %v214
      %v317 = vpop.f32.mrf.mxu0
      %v318 = vadd.f32 0.0, %v317
      %319 = vmatmul.f32.gmra.mxu0 %v215
      %v320 = vpop.f32.mrf.mxu0
      %v321 = vadd.f32 0.0, %v320
      %322 = vmatmul.f32.gmra.mxu0 %v216
      %v323 = vpop.f32.mrf.mxu0
      %v324 = vadd.f32 0.0, %v323
      %325 = vmatmul.f32.gmra.mxu0 %v217
      %v326 = vpop.f32.mrf.mxu0
      %v327 = vadd.f32 0.0, %v326
      %328 = vmatmul.f32.gmra.mxu0 %v218
      %v329 = vpop.f32.mrf.mxu0
      %v330 = vadd.f32 0.0, %v329
      %331 = vmatmul.f32.gmra.mxu0 %v219
      %v332 = vpop.f32.mrf.mxu0
      %v333 = vadd.f32 0.0, %v332
      %334 = vmatmul.f32.gmra.mxu0 %v220
      %v335 = vpop.f32.mrf.mxu0
      %v336 = vadd.f32 0.0, %v335
      %337 = vmatmul.f32.gmra.mxu0 %v221
      %v338 = vpop.f32.mrf.mxu0
      %v339 = vadd.f32 0.0, %v338
      %340 = vmatmul.f32.gmra.mxu0 %v222
      %v341 = vpop.f32.mrf.mxu0
      %v342 = vadd.f32 0.0, %v341
      %343 = vmatmul.f32.gmra.mxu0 %v223
      %v344 = vpop.f32.mrf.mxu0
      %v345 = vadd.f32 0.0, %v344
      %346 = vmatmul.f32.gmra.mxu0 %v224
      %v347 = vpop.f32.mrf.mxu0
      %v348 = vadd.f32 0.0, %v347
      %349 = vmatmul.f32.gmra.mxu0 %v225
      %v350 = vpop.f32.mrf.mxu0
      %v351 = vadd.f32 0.0, %v350
      %352 = vmatmul.f32.gmra.mxu0 %v226
      %v353 = vpop.f32.mrf.mxu0
      %v354 = vadd.f32 0.0, %v353
      %355 = vmatmul.f32.gmra.mxu0 %v227
      %v356 = vpop.f32.mrf.mxu0
      %v357 = vadd.f32 0.0, %v356
      %358 = vmatmul.f32.gmra.mxu0 %v228
      %v359 = vpop.f32.mrf.mxu0
      %v360 = vadd.f32 0.0, %v359
      %361 = vmatmul.f32.gmra.mxu0 %v229
      %v362 = vpop.f32.mrf.mxu0
      %v363 = vadd.f32 0.0, %v362
      %364 = vmatmul.f32.gmra.mxu0 %v230
      %v365 = vpop.f32.mrf.mxu0
      %v366 = vadd.f32 0.0, %v365
      %367 = vmatmul.f32.gmra.mxu0 %v231
      %v368 = vpop.f32.mrf.mxu0
      %v369 = vadd.f32 0.0, %v368
      %370 = vmatmul.f32.gmra.mxu0 %v232
      %v371 = vpop.f32.mrf.mxu0
      %v372 = vadd.f32 0.0, %v371
      %373 = vmatmul.f32.gmra.mxu0 %v233
      %v374 = vpop.f32.mrf.mxu0
      %v375 = vadd.f32 0.0, %v374
      %376 = vmatmul.f32.gmra.mxu0 %v234
      %v377 = vpop.f32.mrf.mxu0
      %v378 = vadd.f32 0.0, %v377
      %379 = vdwg.mxu0
      %380 = vmatpush.msra.mxu0 %v266
      %381 = vmatpush.msra.mxu0 %v264
      %382 = vmatpush.msra.mxu0 %v262
      %383 = vmatpush.msra.mxu0 %v260
      %384 = vmatpush.msra.mxu0 %v258
      %385 = vmatpush.msra.mxu0 %v256
      %386 = vmatpush.msra.mxu0 %v254
      %387 = vmatpush.msra.mxu0 %v252
      %388 = vmatpush.msra.mxu0 %v250
      %389 = vmatpush.msra.mxu0 %v248
      %390 = vmatpush.msra.mxu0 %v246
      %391 = vmatpush.msra.mxu0 %v244
      %392 = vmatpush.msra.mxu0 %v242
      %393 = vmatpush.msra.mxu0 %v240
      %394 = vmatpush.msra.mxu0 %v238
      %395 = vmatpush.msra.mxu0 %v236
      %396 = vmatmul.f32.gmra.mxu0 %v203
      %v397 = vpop.f32.mrf.mxu0
      %v398 = vadd.f32 0.0, %v397
      %399 = vmatmul.f32.gmra.mxu0 %v204
      %v400 = vpop.f32.mrf.mxu0
      %v401 = vadd.f32 0.0, %v400
      %402 = vmatmul.f32.gmra.mxu0 %v205
      %v403 = vpop.f32.mrf.mxu0
      %v404 = vadd.f32 0.0, %v403
      %405 = vmatmul.f32.gmra.mxu0 %v206
      %v406 = vpop.f32.mrf.mxu0
      %v407 = vadd.f32 0.0, %v406
      %408 = vmatmul.f32.gmra.mxu0 %v207
      %v409 = vpop.f32.mrf.mxu0
      %v410 = vadd.f32 0.0, %v409
      %411 = vmatmul.f32.gmra.mxu0 %v208
      %v412 = vpop.f32.mrf.mxu0
      %v413 = vadd.f32 0.0, %v412
      %414 = vmatmul.f32.gmra.mxu0 %v209
      %v415 = vpop.f32.mrf.mxu0
      %v416 = vadd.f32 0.0, %v415
      %417 = vmatmul.f32.gmra.mxu0 %v210
      %v418 = vpop.f32.mrf.mxu0
      %v419 = vadd.f32 0.0, %v418
      %420 = vmatmul.f32.gmra.mxu0 %v211
      %v421 = vpop.f32.mrf.mxu0
      %v422 = vadd.f32 0.0, %v421
      %423 = vmatmul.f32.gmra.mxu0 %v212
      %v424 = vpop.f32.mrf.mxu0
      %v425 = vadd.f32 0.0, %v424
      %426 = vmatmul.f32.gmra.mxu0 %v213
      %v427 = vpop.f32.mrf.mxu0
      %v428 = vadd.f32 0.0, %v427
      %429 = vmatmul.f32.gmra.mxu0 %v214
      %v430 = vpop.f32.mrf.mxu0
      %v431 = vadd.f32 0.0, %v430
      %432 = vmatmul.f32.gmra.mxu0 %v215
      %v433 = vpop.f32.mrf.mxu0
      %v434 = vadd.f32 0.0, %v433
      %435 = vmatmul.f32.gmra.mxu0 %v216
      %v436 = vpop.f32.mrf.mxu0
      %v437 = vadd.f32 0.0, %v436
      %438 = vmatmul.f32.gmra.mxu0 %v217
      %v439 = vpop.f32.mrf.mxu0
      %v440 = vadd.f32 0.0, %v439
      %441 = vmatmul.f32.gmra.mxu0 %v218
      %v442 = vpop.f32.mrf.mxu0
      %v443 = vadd.f32 0.0, %v442
      %444 = vmatmul.f32.gmra.mxu0 %v219
      %v445 = vpop.f32.mrf.mxu0
      %v446 = vadd.f32 0.0, %v445
      %447 = vmatmul.f32.gmra.mxu0 %v220
      %v448 = vpop.f32.mrf.mxu0
      %v449 = vadd.f32 0.0, %v448
      %450 = vmatmul.f32.gmra.mxu0 %v221
      %v451 = vpop.f32.mrf.mxu0
      %v452 = vadd.f32 0.0, %v451
      %453 = vmatmul.f32.gmra.mxu0 %v222
      %v454 = vpop.f32.mrf.mxu0
      %v455 = vadd.f32 0.0, %v454
      %456 = vmatmul.f32.gmra.mxu0 %v223
      %v457 = vpop.f32.mrf.mxu0
      %v458 = vadd.f32 0.0, %v457
      %459 = vmatmul.f32.gmra.mxu0 %v224
      %v460 = vpop.f32.mrf.mxu0
      %v461 = vadd.f32 0.0, %v460
      %462 = vmatmul.f32.gmra.mxu0 %v225
      %v463 = vpop.f32.mrf.mxu0
      %v464 = vadd.f32 0.0, %v463
      %465 = vmatmul.f32.gmra.mxu0 %v226
      %v466 = vpop.f32.mrf.mxu0
      %v467 = vadd.f32 0.0, %v466
      %468 = vmatmul.f32.gmra.mxu0 %v227
      %v469 = vpop.f32.mrf.mxu0
      %v470 = vadd.f32 0.0, %v469
      %471 = vmatmul.f32.gmra.mxu0 %v228
      %v472 = vpop.f32.mrf.mxu0
      %v473 = vadd.f32 0.0, %v472
      %474 = vmatmul.f32.gmra.mxu0 %v229
      %v475 = vpop.f32.mrf.mxu0
      %v476 = vadd.f32 0.0, %v475
      %477 = vmatmul.f32.gmra.mxu0 %v230
      %v478 = vpop.f32.mrf.mxu0
      %v479 = vadd.f32 0.0, %v478
      %480 = vmatmul.f32.gmra.mxu0 %v231
      %v481 = vpop.f32.mrf.mxu0
      %v482 = vadd.f32 0.0, %v481
      %483 = vmatmul.f32.gmra.mxu0 %v232
      %v484 = vpop.f32.mrf.mxu0
      %v485 = vadd.f32 0.0, %v484
      %486 = vmatmul.f32.gmra.mxu0 %v233
      %v487 = vpop.f32.mrf.mxu0
      %v488 = vadd.f32 0.0, %v487
      %489 = vmatmul.f32.gmra.mxu0 %v234
      %v490 = vpop.f32.mrf.mxu0
      %v491 = vadd.f32 0.0, %v490
      %492 = vdwg.mxu0
      %v493 = vld [vmem:[%s2] sm:$0x3]
      %v495 = vperm.slane %v493, 0
      %v496 = vperm.slane %v493, 1
      %v499 = vmul.f32 %v285, %v495
      %v500 = vmul.f32 %v398, %v496
      %v501 = vmul.f32 %v288, %v495
      %v502 = vmul.f32 %v401, %v496
      %v503 = vmul.f32 %v291, %v495
      %v504 = vmul.f32 %v404, %v496
      %v505 = vmul.f32 %v294, %v495
      %v506 = vmul.f32 %v407, %v496
      %v507 = vmul.f32 %v297, %v495
      %v508 = vmul.f32 %v410, %v496
      %v509 = vmul.f32 %v300, %v495
      %v510 = vmul.f32 %v413, %v496
      %v511 = vmul.f32 %v303, %v495
      %v512 = vmul.f32 %v416, %v496
      %v513 = vmul.f32 %v306, %v495
      %v514 = vmul.f32 %v419, %v496
      %v515 = vmul.f32 %v309, %v495
      %v516 = vmul.f32 %v422, %v496
      %v517 = vmul.f32 %v312, %v495
      %v518 = vmul.f32 %v425, %v496
      %v519 = vmul.f32 %v315, %v495
      %v520 = vmul.f32 %v428, %v496
      %v521 = vmul.f32 %v318, %v495
      %v522 = vmul.f32 %v431, %v496
      %v523 = vmul.f32 %v321, %v495
      %v524 = vmul.f32 %v434, %v496
      %v525 = vmul.f32 %v324, %v495
      %v526 = vmul.f32 %v437, %v496
      %v527 = vmul.f32 %v327, %v495
      %v528 = vmul.f32 %v440, %v496
      %v529 = vmul.f32 %v330, %v495
      %v530 = vmul.f32 %v443, %v496
      %v531 = vmul.f32 %v333, %v495
      %v532 = vmul.f32 %v446, %v496
      %v533 = vmul.f32 %v336, %v495
      %v534 = vmul.f32 %v449, %v496
      %v535 = vmul.f32 %v339, %v495
      %v536 = vmul.f32 %v452, %v496
      %v537 = vmul.f32 %v342, %v495
      %v538 = vmul.f32 %v455, %v496
      %v539 = vmul.f32 %v345, %v495
      %v540 = vmul.f32 %v458, %v496
      %v541 = vmul.f32 %v348, %v495
      %v542 = vmul.f32 %v461, %v496
      %v543 = vmul.f32 %v351, %v495
      %v544 = vmul.f32 %v464, %v496
      %v545 = vmul.f32 %v354, %v495
      %v546 = vmul.f32 %v467, %v496
      %v547 = vmul.f32 %v357, %v495
      %v548 = vmul.f32 %v470, %v496
      %v549 = vmul.f32 %v360, %v495
      %v550 = vmul.f32 %v473, %v496
      %v551 = vmul.f32 %v363, %v495
      %v552 = vmul.f32 %v476, %v496
      %v553 = vmul.f32 %v366, %v495
      %v554 = vmul.f32 %v479, %v496
      %v555 = vmul.f32 %v369, %v495
      %v556 = vmul.f32 %v482, %v496
      %v557 = vmul.f32 %v372, %v495
      %v558 = vmul.f32 %v485, %v496
      %v559 = vmul.f32 %v375, %v495
      %v560 = vmul.f32 %v488, %v496
      %v561 = vmul.f32 %v378, %v495
      %v562 = vmul.f32 %v491, %v496
      %v563 = vld [vmem:[%s3] sm:$0x3]
      %v565 = vperm.slane %v563, 0
      %v566 = vperm.slane %v563, 1
      %v569 = vadd.f32 %v499, %v565
      %v570 = vadd.f32 %v500, %v566
      %v571 = vadd.f32 %v501, %v565
      %v572 = vadd.f32 %v502, %v566
      %v573 = vadd.f32 %v503, %v565
      %v574 = vadd.f32 %v504, %v566
      %v575 = vadd.f32 %v505, %v565
      %v576 = vadd.f32 %v506, %v566
      %v577 = vadd.f32 %v507, %v565
      %v578 = vadd.f32 %v508, %v566
      %v579 = vadd.f32 %v509, %v565
      %v580 = vadd.f32 %v510, %v566
      %v581 = vadd.f32 %v511, %v565
      %v582 = vadd.f32 %v512, %v566
      %v583 = vadd.f32 %v513, %v565
      %v584 = vadd.f32 %v514, %v566
      %v585 = vadd.f32 %v515, %v565
      %v586 = vadd.f32 %v516, %v566
      %v587 = vadd.f32 %v517, %v565
      %v588 = vadd.f32 %v518, %v566
      %v589 = vadd.f32 %v519, %v565
      %v590 = vadd.f32 %v520, %v566
      %v591 = vadd.f32 %v521, %v565
      %v592 = vadd.f32 %v522, %v566
      %v593 = vadd.f32 %v523, %v565
      %v594 = vadd.f32 %v524, %v566
      %v595 = vadd.f32 %v525, %v565
      %v596 = vadd.f32 %v526, %v566
      %v597 = vadd.f32 %v527, %v565
      %v598 = vadd.f32 %v528, %v566
      %v599 = vadd.f32 %v529, %v565
      %v600 = vadd.f32 %v530, %v566
      %v601 = vadd.f32 %v531, %v565
      %v602 = vadd.f32 %v532, %v566
      %v603 = vadd.f32 %v533, %v565
      %v604 = vadd.f32 %v534, %v566
      %v605 = vadd.f32 %v535, %v565
      %v606 = vadd.f32 %v536, %v566
      %v607 = vadd.f32 %v537, %v565
      %v608 = vadd.f32 %v538, %v566
      %v609 = vadd.f32 %v539, %v565
      %v610 = vadd.f32 %v540, %v566
      %v611 = vadd.f32 %v541, %v565
      %v612 = vadd.f32 %v542, %v566
      %v613 = vadd.f32 %v543, %v565
      %v614 = vadd.f32 %v544, %v566
      %v615 = vadd.f32 %v545, %v565
      %v616 = vadd.f32 %v546, %v566
      %v617 = vadd.f32 %v547, %v565
      %v618 = vadd.f32 %v548, %v566
      %v619 = vadd.f32 %v549, %v565
      %v620 = vadd.f32 %v550, %v566
      %v621 = vadd.f32 %v551, %v565
      %v622 = vadd.f32 %v552, %v566
      %v623 = vadd.f32 %v553, %v565
      %v624 = vadd.f32 %v554, %v566
      %v625 = vadd.f32 %v555, %v565
      %v626 = vadd.f32 %v556, %v566
      %v627 = vadd.f32 %v557, %v565
      %v628 = vadd.f32 %v558, %v566
      %v629 = vadd.f32 %v559, %v565
      %v630 = vadd.f32 %v560, %v566
      %v631 = vadd.f32 %v561, %v565
      %v632 = vadd.f32 %v562, %v566
      %v633 = vxor.u32 %v569, 2147483648
      %v634 = vxor.u32 %v570, 2147483648
      %v635 = vxor.u32 %v571, 2147483648
      %v636 = vxor.u32 %v572, 2147483648
      %v637 = vxor.u32 %v573, 2147483648
      %v638 = vxor.u32 %v574, 2147483648
      %v639 = vxor.u32 %v575, 2147483648
      %v640 = vxor.u32 %v576, 2147483648
      %v641 = vxor.u32 %v577, 2147483648
      %v642 = vxor.u32 %v578, 2147483648
      %v643 = vxor.u32 %v579, 2147483648
      %v644 = vxor.u32 %v580, 2147483648
      %v645 = vxor.u32 %v581, 2147483648
      %v646 = vxor.u32 %v582, 2147483648
      %v647 = vxor.u32 %v583, 2147483648
      %v648 = vxor.u32 %v584, 2147483648
      %v649 = vxor.u32 %v585, 2147483648
      %v650 = vxor.u32 %v586, 2147483648
      %v651 = vxor.u32 %v587, 2147483648
      %v652 = vxor.u32 %v588, 2147483648
      %v653 = vxor.u32 %v589, 2147483648
      %v654 = vxor.u32 %v590, 2147483648
      %v655 = vxor.u32 %v591, 2147483648
      %v656 = vxor.u32 %v592, 2147483648
      %v657 = vxor.u32 %v593, 2147483648
      %v658 = vxor.u32 %v594, 2147483648
      %v659 = vxor.u32 %v595, 2147483648
      %v660 = vxor.u32 %v596, 2147483648
      %v661 = vxor.u32 %v597, 2147483648
      %v662 = vxor.u32 %v598, 2147483648
      %v663 = vxor.u32 %v599, 2147483648
      %v664 = vxor.u32 %v600, 2147483648
      %v665 = vxor.u32 %v601, 2147483648
      %v666 = vxor.u32 %v602, 2147483648
      %v667 = vxor.u32 %v603, 2147483648
      %v668 = vxor.u32 %v604, 2147483648
      %v669 = vxor.u32 %v605, 2147483648
      %v670 = vxor.u32 %v606, 2147483648
      %v671 = vxor.u32 %v607, 2147483648
      %v672 = vxor.u32 %v608, 2147483648
      %v673 = vxor.u32 %v609, 2147483648
      %v674 = vxor.u32 %v610, 2147483648
      %v675 = vxor.u32 %v611, 2147483648
      %v676 = vxor.u32 %v612, 2147483648
      %v677 = vxor.u32 %v613, 2147483648
      %v678 = vxor.u32 %v614, 2147483648
      %v679 = vxor.u32 %v615, 2147483648
      %v680 = vxor.u32 %v616, 2147483648
      %v681 = vxor.u32 %v617, 2147483648
      %v682 = vxor.u32 %v618, 2147483648
      %v683 = vxor.u32 %v619, 2147483648
      %v684 = vxor.u32 %v620, 2147483648
      %v685 = vxor.u32 %v621, 2147483648
      %v686 = vxor.u32 %v622, 2147483648
      %v687 = vxor.u32 %v623, 2147483648
      %v688 = vxor.u32 %v624, 2147483648
      %v689 = vxor.u32 %v625, 2147483648
      %v690 = vxor.u32 %v626, 2147483648
      %v691 = vxor.u32 %v627, 2147483648
      %v692 = vxor.u32 %v628, 2147483648
      %v693 = vxor.u32 %v629, 2147483648
      %v694 = vxor.u32 %v630, 2147483648
      %v695 = vxor.u32 %v631, 2147483648
      %v696 = vxor.u32 %v632, 2147483648
      %v697 = vmul.f32 %v633, 1.442695
      %v698 = vpow.pop %v697
      %v699 = vmul.f32 %v634, 1.442695
      %v700 = vpow.pop %v699
      %v701 = vmul.f32 %v635, 1.442695
      %v702 = vpow.pop %v701
      %v703 = vmul.f32 %v636, 1.442695
      %v704 = vpow.pop %v703
      %v705 = vmul.f32 %v637, 1.442695
      %v706 = vpow.pop %v705
      %v707 = vmul.f32 %v638, 1.442695
      %v708 = vpow.pop %v707
      %v709 = vmul.f32 %v639, 1.442695
      %v710 = vpow.pop %v709
      %v711 = vmul.f32 %v640, 1.442695
      %v712 = vpow.pop %v711
      %v713 = vmul.f32 %v641, 1.442695
      %v714 = vpow.pop %v713
      %v715 = vmul.f32 %v642, 1.442695
      %v716 = vpow.pop %v715
      %v717 = vmul.f32 %v643, 1.442695
      %v718 = vpow.pop %v717
      %v719 = vmul.f32 %v644, 1.442695
      %v720 = vpow.pop %v719
      %v721 = vmul.f32 %v645, 1.442695
      %v722 = vpow.pop %v721
      %v723 = vmul.f32 %v646, 1.442695
      %v724 = vpow.pop %v723
      %v725 = vmul.f32 %v647, 1.442695
      %v726 = vpow.pop %v725
      %v727 = vmul.f32 %v648, 1.442695
      %v728 = vpow.pop %v727
      %v729 = vmul.f32 %v649, 1.442695
      %v730 = vpow.pop %v729
      %v731 = vmul.f32 %v650, 1.442695
      %v732 = vpow.pop %v731
      %v733 = vmul.f32 %v651, 1.442695
      %v734 = vpow.pop %v733
      %v735 = vmul.f32 %v652, 1.442695
      %v736 = vpow.pop %v735
      %v737 = vmul.f32 %v653, 1.442695
      %v738 = vpow.pop %v737
      %v739 = vmul.f32 %v654, 1.442695
      %v740 = vpow.pop %v739
      %v741 = vmul.f32 %v655, 1.442695
      %v742 = vpow.pop %v741
      %v743 = vmul.f32 %v656, 1.442695
      %v744 = vpow.pop %v743
      %v745 = vmul.f32 %v657, 1.442695
      %v746 = vpow.pop %v745
      %v747 = vmul.f32 %v658, 1.442695
      %v748 = vpow.pop %v747
      %v749 = vmul.f32 %v659, 1.442695
      %v750 = vpow.pop %v749
      %v751 = vmul.f32 %v660, 1.442695
      %v752 = vpow.pop %v751
      %v753 = vmul.f32 %v661, 1.442695
      %v754 = vpow.pop %v753
      %v755 = vmul.f32 %v662, 1.442695
      %v756 = vpow.pop %v755
      %v757 = vmul.f32 %v663, 1.442695
      %v758 = vpow.pop %v757
      %v759 = vmul.f32 %v664, 1.442695
      %v760 = vpow.pop %v759
      %v761 = vmul.f32 %v665, 1.442695
      %v762 = vpow.pop %v761
      %v763 = vmul.f32 %v666, 1.442695
      %v764 = vpow.pop %v763
      %v765 = vmul.f32 %v667, 1.442695
      %v766 = vpow.pop %v765
      %v767 = vmul.f32 %v668, 1.442695
      %v768 = vpow.pop %v767
      %v769 = vmul.f32 %v669, 1.442695
      %v770 = vpow.pop %v769
      %v771 = vmul.f32 %v670, 1.442695
      %v772 = vpow.pop %v771
      %v773 = vmul.f32 %v671, 1.442695
      %v774 = vpow.pop %v773
      %v775 = vmul.f32 %v672, 1.442695
      %v776 = vpow.pop %v775
      %v777 = vmul.f32 %v673, 1.442695
      %v778 = vpow.pop %v777
      %v779 = vmul.f32 %v674, 1.442695
      %v780 = vpow.pop %v779
      %v781 = vmul.f32 %v675, 1.442695
      %v782 = vpow.pop %v781
      %v783 = vmul.f32 %v676, 1.442695
      %v784 = vpow.pop %v783
      %v785 = vmul.f32 %v677, 1.442695
      %v786 = vpow.pop %v785
      %v787 = vmul.f32 %v678, 1.442695
      %v788 = vpow.pop %v787
      %v789 = vmul.f32 %v679, 1.442695
      %v790 = vpow.pop %v789
      %v791 = vmul.f32 %v680, 1.442695
      %v792 = vpow.pop %v791
      %v793 = vmul.f32 %v681, 1.442695
      %v794 = vpow.pop %v793
      %v795 = vmul.f32 %v682, 1.442695
      %v796 = vpow.pop %v795
      %v797 = vmul.f32 %v683, 1.442695
      %v798 = vpow.pop %v797
      %v799 = vmul.f32 %v684, 1.442695
      %v800 = vpow.pop %v799
      %v801 = vmul.f32 %v685, 1.442695
      %v802 = vpow.pop %v801
      %v803 = vmul.f32 %v686, 1.442695
      %v804 = vpow.pop %v803
      %v805 = vmul.f32 %v687, 1.442695
      %v806 = vpow.pop %v805
      %v807 = vmul.f32 %v688, 1.442695
      %v808 = vpow.pop %v807
      %v809 = vmul.f32 %v689, 1.442695
      %v810 = vpow.pop %v809
      %v811 = vmul.f32 %v690, 1.442695
      %v812 = vpow.pop %v811
      %v813 = vmul.f32 %v691, 1.442695
      %v814 = vpow.pop %v813
      %v815 = vmul.f32 %v692, 1.442695
      %v816 = vpow.pop %v815
      %v817 = vmul.f32 %v693, 1.442695
      %v818 = vpow.pop %v817
      %v819 = vmul.f32 %v694, 1.442695
      %v820 = vpow.pop %v819
      %v821 = vmul.f32 %v695, 1.442695
      %v822 = vpow.pop %v821
      %v823 = vmul.f32 %v696, 1.442695
      %v824 = vpow.pop %v823
      %v825 = vadd.f32 %v698, 1.0
      %v826 = vadd.f32 %v700, 1.0
      %v827 = vadd.f32 %v702, 1.0
      %v828 = vadd.f32 %v704, 1.0
      %v829 = vadd.f32 %v706, 1.0
      %v830 = vadd.f32 %v708, 1.0
      %v831 = vadd.f32 %v710, 1.0
      %v832 = vadd.f32 %v712, 1.0
      %v833 = vadd.f32 %v714, 1.0
      %v834 = vadd.f32 %v716, 1.0
      %v835 = vadd.f32 %v718, 1.0
      %v836 = vadd.f32 %v720, 1.0
      %v837 = vadd.f32 %v722, 1.0
      %v838 = vadd.f32 %v724, 1.0
      %v839 = vadd.f32 %v726, 1.0
      %v840 = vadd.f32 %v728, 1.0
      %v841 = vadd.f32 %v730, 1.0
      %v842 = vadd.f32 %v732, 1.0
      %v843 = vadd.f32 %v734, 1.0
      %v844 = vadd.f32 %v736, 1.0
      %v845 = vadd.f32 %v738, 1.0
      %v846 = vadd.f32 %v740, 1.0
      %v847 = vadd.f32 %v742, 1.0
      %v848 = vadd.f32 %v744, 1.0
      %v849 = vadd.f32 %v746, 1.0
      %v850 = vadd.f32 %v748, 1.0
      %v851 = vadd.f32 %v750, 1.0
      %v852 = vadd.f32 %v752, 1.0
      %v853 = vadd.f32 %v754, 1.0
      %v854 = vadd.f32 %v756, 1.0
      %v855 = vadd.f32 %v758, 1.0
      %v856 = vadd.f32 %v760, 1.0
      %v857 = vadd.f32 %v762, 1.0
      %v858 = vadd.f32 %v764, 1.0
      %v859 = vadd.f32 %v766, 1.0
      %v860 = vadd.f32 %v768, 1.0
      %v861 = vadd.f32 %v770, 1.0
      %v862 = vadd.f32 %v772, 1.0
      %v863 = vadd.f32 %v774, 1.0
      %v864 = vadd.f32 %v776, 1.0
      %v865 = vadd.f32 %v778, 1.0
      %v866 = vadd.f32 %v780, 1.0
      %v867 = vadd.f32 %v782, 1.0
      %v868 = vadd.f32 %v784, 1.0
      %v869 = vadd.f32 %v786, 1.0
      %v870 = vadd.f32 %v788, 1.0
      %v871 = vadd.f32 %v790, 1.0
      %v872 = vadd.f32 %v792, 1.0
      %v873 = vadd.f32 %v794, 1.0
      %v874 = vadd.f32 %v796, 1.0
      %v875 = vadd.f32 %v798, 1.0
      %v876 = vadd.f32 %v800, 1.0
      %v877 = vadd.f32 %v802, 1.0
      %v878 = vadd.f32 %v804, 1.0
      %v879 = vadd.f32 %v806, 1.0
      %v880 = vadd.f32 %v808, 1.0
      %v881 = vadd.f32 %v810, 1.0
      %v882 = vadd.f32 %v812, 1.0
      %v883 = vadd.f32 %v814, 1.0
      %v884 = vadd.f32 %v816, 1.0
      %v885 = vadd.f32 %v818, 1.0
      %v886 = vadd.f32 %v820, 1.0
      %v887 = vadd.f32 %v822, 1.0
      %v888 = vadd.f32 %v824, 1.0
      %v889 = vrcp.pop %v825
      %v890 = vmul.f32 %v825, %v889
      %v891 = vsub.f32 1.0, %v890
      %v892 = vmul.f32 %v889, %v891
      %v893 = vadd.f32 %v889, %v892
      %vm894 = vweird.f32 %v825
      %vm895 = vweird.f32 %v889
      %vm896 = vmor %vm894, %vm895
      %v897 = vsel %vm896, %v889, %v893
      %v898 = vand.u32 2147483647, %v825
      %vm899 = vcmp.eq.f32.partialorder %v898, 8.507059e+37
      %v900 = vand.u32 %v825, 2147483648
      %v901 = vor.u32 1.1754944e-38, %v900
      %v902 = vsel %vm899, %v901, %v897
      %v903 = vmul.f32 1.0, %v902
      %v904 = vrcp.pop %v826
      %v905 = vmul.f32 %v826, %v904
      %v906 = vsub.f32 1.0, %v905
      %v907 = vmul.f32 %v904, %v906
      %v908 = vadd.f32 %v904, %v907
      %vm909 = vweird.f32 %v826
      %vm910 = vweird.f32 %v904
      %vm911 = vmor %vm909, %vm910
      %v912 = vsel %vm911, %v904, %v908
      %v913 = vand.u32 2147483647, %v826
      %vm914 = vcmp.eq.f32.partialorder %v913, 8.507059e+37
      %v915 = vand.u32 %v826, 2147483648
      %v916 = vor.u32 1.1754944e-38, %v915
      %v917 = vsel %vm914, %v916, %v912
      %v918 = vmul.f32 1.0, %v917
      %v919 = vrcp.pop %v827
      %v920 = vmul.f32 %v827, %v919
      %v921 = vsub.f32 1.0, %v920
      %v922 = vmul.f32 %v919, %v921
      %v923 = vadd.f32 %v919, %v922
      %vm924 = vweird.f32 %v827
      %vm925 = vweird.f32 %v919
      %vm926 = vmor %vm924, %vm925
      %v927 = vsel %vm926, %v919, %v923
      %v928 = vand.u32 2147483647, %v827
      %vm929 = vcmp.eq.f32.partialorder %v928, 8.507059e+37
      %v930 = vand.u32 %v827, 2147483648
      %v931 = vor.u32 1.1754944e-38, %v930
      %v932 = vsel %vm929, %v931, %v927
      %v933 = vmul.f32 1.0, %v932
      %v934 = vrcp.pop %v828
      %v935 = vmul.f32 %v828, %v934
      %v936 = vsub.f32 1.0, %v935
      %v937 = vmul.f32 %v934, %v936
      %v938 = vadd.f32 %v934, %v937
      %vm939 = vweird.f32 %v828
      %vm940 = vweird.f32 %v934
      %vm941 = vmor %vm939, %vm940
      %v942 = vsel %vm941, %v934, %v938
      %v943 = vand.u32 2147483647, %v828
      %vm944 = vcmp.eq.f32.partialorder %v943, 8.507059e+37
      %v945 = vand.u32 %v828, 2147483648
      %v946 = vor.u32 1.1754944e-38, %v945
      %v947 = vsel %vm944, %v946, %v942
      %v948 = vmul.f32 1.0, %v947
      %v949 = vrcp.pop %v829
      %v950 = vmul.f32 %v829, %v949
      %v951 = vsub.f32 1.0, %v950
      %v952 = vmul.f32 %v949, %v951
      %v953 = vadd.f32 %v949, %v952
      %vm954 = vweird.f32 %v829
      %vm955 = vweird.f32 %v949
      %vm956 = vmor %vm954, %vm955
      %v957 = vsel %vm956, %v949, %v953
      %v958 = vand.u32 2147483647, %v829
      %vm959 = vcmp.eq.f32.partialorder %v958, 8.507059e+37
      %v960 = vand.u32 %v829, 2147483648
      %v961 = vor.u32 1.1754944e-38, %v960
      %v962 = vsel %vm959, %v961, %v957
      %v963 = vmul.f32 1.0, %v962
      %v964 = vrcp.pop %v830
      %v965 = vmul.f32 %v830, %v964
      %v966 = vsub.f32 1.0, %v965
      %v967 = vmul.f32 %v964, %v966
      %v968 = vadd.f32 %v964, %v967
      %vm969 = vweird.f32 %v830
      %vm970 = vweird.f32 %v964
      %vm971 = vmor %vm969, %vm970
      %v972 = vsel %vm971, %v964, %v968
      %v973 = vand.u32 2147483647, %v830
      %vm974 = vcmp.eq.f32.partialorder %v973, 8.507059e+37
      %v975 = vand.u32 %v830, 2147483648
      %v976 = vor.u32 1.1754944e-38, %v975
      %v977 = vsel %vm974, %v976, %v972
      %v978 = vmul.f32 1.0, %v977
      %v979 = vrcp.pop %v831
      %v980 = vmul.f32 %v831, %v979
      %v981 = vsub.f32 1.0, %v980
      %v982 = vmul.f32 %v979, %v981
      %v983 = vadd.f32 %v979, %v982
      %vm984 = vweird.f32 %v831
      %vm985 = vweird.f32 %v979
      %vm986 = vmor %vm984, %vm985
      %v987 = vsel %vm986, %v979, %v983
      %v988 = vand.u32 2147483647, %v831
      %vm989 = vcmp.eq.f32.partialorder %v988, 8.507059e+37
      %v990 = vand.u32 %v831, 2147483648
      %v991 = vor.u32 1.1754944e-38, %v990
      %v992 = vsel %vm989, %v991, %v987
      %v993 = vmul.f32 1.0, %v992
      %v994 = vrcp.pop %v832
      %v995 = vmul.f32 %v832, %v994
      %v996 = vsub.f32 1.0, %v995
      %v997 = vmul.f32 %v994, %v996
      %v998 = vadd.f32 %v994, %v997
      %vm999 = vweird.f32 %v832
      %vm1000 = vweird.f32 %v994
      %vm1001 = vmor %vm999, %vm1000
      %v1002 = vsel %vm1001, %v994, %v998
      %v1003 = vand.u32 2147483647, %v832
      %vm1004 = vcmp.eq.f32.partialorder %v1003, 8.507059e+37
      %v1005 = vand.u32 %v832, 2147483648
      %v1006 = vor.u32 1.1754944e-38, %v1005
      %v1007 = vsel %vm1004, %v1006, %v1002
      %v1008 = vmul.f32 1.0, %v1007
      %v1009 = vrcp.pop %v833
      %v1010 = vmul.f32 %v833, %v1009
      %v1011 = vsub.f32 1.0, %v1010
      %v1012 = vmul.f32 %v1009, %v1011
      %v1013 = vadd.f32 %v1009, %v1012
      %vm1014 = vweird.f32 %v833
      %vm1015 = vweird.f32 %v1009
      %vm1016 = vmor %vm1014, %vm1015
      %v1017 = vsel %vm1016, %v1009, %v1013
      %v1018 = vand.u32 2147483647, %v833
      %vm1019 = vcmp.eq.f32.partialorder %v1018, 8.507059e+37
      %v1020 = vand.u32 %v833, 2147483648
      %v1021 = vor.u32 1.1754944e-38, %v1020
      %v1022 = vsel %vm1019, %v1021, %v1017
      %v1023 = vmul.f32 1.0, %v1022
      %v1024 = vrcp.pop %v834
      %v1025 = vmul.f32 %v834, %v1024
      %v1026 = vsub.f32 1.0, %v1025
      %v1027 = vmul.f32 %v1024, %v1026
      %v1028 = vadd.f32 %v1024, %v1027
      %vm1029 = vweird.f32 %v834
      %vm1030 = vweird.f32 %v1024
      %vm1031 = vmor %vm1029, %vm1030
      %v1032 = vsel %vm1031, %v1024, %v1028
      %v1033 = vand.u32 2147483647, %v834
      %vm1034 = vcmp.eq.f32.partialorder %v1033, 8.507059e+37
      %v1035 = vand.u32 %v834, 2147483648
      %v1036 = vor.u32 1.1754944e-38, %v1035
      %v1037 = vsel %vm1034, %v1036, %v1032
      %v1038 = vmul.f32 1.0, %v1037
      %v1039 = vrcp.pop %v835
      %v1040 = vmul.f32 %v835, %v1039
      %v1041 = vsub.f32 1.0, %v1040
      %v1042 = vmul.f32 %v1039, %v1041
      %v1043 = vadd.f32 %v1039, %v1042
      %vm1044 = vweird.f32 %v835
      %vm1045 = vweird.f32 %v1039
      %vm1046 = vmor %vm1044, %vm1045
      %v1047 = vsel %vm1046, %v1039, %v1043
      %v1048 = vand.u32 2147483647, %v835
      %vm1049 = vcmp.eq.f32.partialorder %v1048, 8.507059e+37
      %v1050 = vand.u32 %v835, 2147483648
      %v1051 = vor.u32 1.1754944e-38, %v1050
      %v1052 = vsel %vm1049, %v1051, %v1047
      %v1053 = vmul.f32 1.0, %v1052
      %v1054 = vrcp.pop %v836
      %v1055 = vmul.f32 %v836, %v1054
      %v1056 = vsub.f32 1.0, %v1055
      %v1057 = vmul.f32 %v1054, %v1056
      %v1058 = vadd.f32 %v1054, %v1057
      %vm1059 = vweird.f32 %v836
      %vm1060 = vweird.f32 %v1054
      %vm1061 = vmor %vm1059, %vm1060
      %v1062 = vsel %vm1061, %v1054, %v1058
      %v1063 = vand.u32 2147483647, %v836
      %vm1064 = vcmp.eq.f32.partialorder %v1063, 8.507059e+37
      %v1065 = vand.u32 %v836, 2147483648
      %v1066 = vor.u32 1.1754944e-38, %v1065
      %v1067 = vsel %vm1064, %v1066, %v1062
      %v1068 = vmul.f32 1.0, %v1067
      %v1069 = vrcp.pop %v837
      %v1070 = vmul.f32 %v837, %v1069
      %v1071 = vsub.f32 1.0, %v1070
      %v1072 = vmul.f32 %v1069, %v1071
      %v1073 = vadd.f32 %v1069, %v1072
      %vm1074 = vweird.f32 %v837
      %vm1075 = vweird.f32 %v1069
      %vm1076 = vmor %vm1074, %vm1075
      %v1077 = vsel %vm1076, %v1069, %v1073
      %v1078 = vand.u32 2147483647, %v837
      %vm1079 = vcmp.eq.f32.partialorder %v1078, 8.507059e+37
      %v1080 = vand.u32 %v837, 2147483648
      %v1081 = vor.u32 1.1754944e-38, %v1080
      %v1082 = vsel %vm1079, %v1081, %v1077
      %v1083 = vmul.f32 1.0, %v1082
      %v1084 = vrcp.pop %v838
      %v1085 = vmul.f32 %v838, %v1084
      %v1086 = vsub.f32 1.0, %v1085
      %v1087 = vmul.f32 %v1084, %v1086
      %v1088 = vadd.f32 %v1084, %v1087
      %vm1089 = vweird.f32 %v838
      %vm1090 = vweird.f32 %v1084
      %vm1091 = vmor %vm1089, %vm1090
      %v1092 = vsel %vm1091, %v1084, %v1088
      %v1093 = vand.u32 2147483647, %v838
      %vm1094 = vcmp.eq.f32.partialorder %v1093, 8.507059e+37
      %v1095 = vand.u32 %v838, 2147483648
      %v1096 = vor.u32 1.1754944e-38, %v1095
      %v1097 = vsel %vm1094, %v1096, %v1092
      %v1098 = vmul.f32 1.0, %v1097
      %v1099 = vrcp.pop %v839
      %v1100 = vmul.f32 %v839, %v1099
      %v1101 = vsub.f32 1.0, %v1100
      %v1102 = vmul.f32 %v1099, %v1101
      %v1103 = vadd.f32 %v1099, %v1102
      %vm1104 = vweird.f32 %v839
      %vm1105 = vweird.f32 %v1099
      %vm1106 = vmor %vm1104, %vm1105
      %v1107 = vsel %vm1106, %v1099, %v1103
      %v1108 = vand.u32 2147483647, %v839
      %vm1109 = vcmp.eq.f32.partialorder %v1108, 8.507059e+37
      %v1110 = vand.u32 %v839, 2147483648
      %v1111 = vor.u32 1.1754944e-38, %v1110
      %v1112 = vsel %vm1109, %v1111, %v1107
      %v1113 = vmul.f32 1.0, %v1112
      %v1114 = vrcp.pop %v840
      %v1115 = vmul.f32 %v840, %v1114
      %v1116 = vsub.f32 1.0, %v1115
      %v1117 = vmul.f32 %v1114, %v1116
      %v1118 = vadd.f32 %v1114, %v1117
      %vm1119 = vweird.f32 %v840
      %vm1120 = vweird.f32 %v1114
      %vm1121 = vmor %vm1119, %vm1120
      %v1122 = vsel %vm1121, %v1114, %v1118
      %v1123 = vand.u32 2147483647, %v840
      %vm1124 = vcmp.eq.f32.partialorder %v1123, 8.507059e+37
      %v1125 = vand.u32 %v840, 2147483648
      %v1126 = vor.u32 1.1754944e-38, %v1125
      %v1127 = vsel %vm1124, %v1126, %v1122
      %v1128 = vmul.f32 1.0, %v1127
      %v1129 = vrcp.pop %v841
      %v1130 = vmul.f32 %v841, %v1129
      %v1131 = vsub.f32 1.0, %v1130
      %v1132 = vmul.f32 %v1129, %v1131
      %v1133 = vadd.f32 %v1129, %v1132
      %vm1134 = vweird.f32 %v841
      %vm1135 = vweird.f32 %v1129
      %vm1136 = vmor %vm1134, %vm1135
      %v1137 = vsel %vm1136, %v1129, %v1133
      %v1138 = vand.u32 2147483647, %v841
      %vm1139 = vcmp.eq.f32.partialorder %v1138, 8.507059e+37
      %v1140 = vand.u32 %v841, 2147483648
      %v1141 = vor.u32 1.1754944e-38, %v1140
      %v1142 = vsel %vm1139, %v1141, %v1137
      %v1143 = vmul.f32 1.0, %v1142
      %v1144 = vrcp.pop %v842
      %v1145 = vmul.f32 %v842, %v1144
      %v1146 = vsub.f32 1.0, %v1145
      %v1147 = vmul.f32 %v1144, %v1146
      %v1148 = vadd.f32 %v1144, %v1147
      %vm1149 = vweird.f32 %v842
      %vm1150 = vweird.f32 %v1144
      %vm1151 = vmor %vm1149, %vm1150
      %v1152 = vsel %vm1151, %v1144, %v1148
      %v1153 = vand.u32 2147483647, %v842
      %vm1154 = vcmp.eq.f32.partialorder %v1153, 8.507059e+37
      %v1155 = vand.u32 %v842, 2147483648
      %v1156 = vor.u32 1.1754944e-38, %v1155
      %v1157 = vsel %vm1154, %v1156, %v1152
      %v1158 = vmul.f32 1.0, %v1157
      %v1159 = vrcp.pop %v843
      %v1160 = vmul.f32 %v843, %v1159
      %v1161 = vsub.f32 1.0, %v1160
      %v1162 = vmul.f32 %v1159, %v1161
      %v1163 = vadd.f32 %v1159, %v1162
      %vm1164 = vweird.f32 %v843
      %vm1165 = vweird.f32 %v1159
      %vm1166 = vmor %vm1164, %vm1165
      %v1167 = vsel %vm1166, %v1159, %v1163
      %v1168 = vand.u32 2147483647, %v843
      %vm1169 = vcmp.eq.f32.partialorder %v1168, 8.507059e+37
      %v1170 = vand.u32 %v843, 2147483648
      %v1171 = vor.u32 1.1754944e-38, %v1170
      %v1172 = vsel %vm1169, %v1171, %v1167
      %v1173 = vmul.f32 1.0, %v1172
      %v1174 = vrcp.pop %v844
      %v1175 = vmul.f32 %v844, %v1174
      %v1176 = vsub.f32 1.0, %v1175
      %v1177 = vmul.f32 %v1174, %v1176
      %v1178 = vadd.f32 %v1174, %v1177
      %vm1179 = vweird.f32 %v844
      %vm1180 = vweird.f32 %v1174
      %vm1181 = vmor %vm1179, %vm1180
      %v1182 = vsel %vm1181, %v1174, %v1178
      %v1183 = vand.u32 2147483647, %v844
      %vm1184 = vcmp.eq.f32.partialorder %v1183, 8.507059e+37
      %v1185 = vand.u32 %v844, 2147483648
      %v1186 = vor.u32 1.1754944e-38, %v1185
      %v1187 = vsel %vm1184, %v1186, %v1182
      %v1188 = vmul.f32 1.0, %v1187
      %v1189 = vrcp.pop %v845
      %v1190 = vmul.f32 %v845, %v1189
      %v1191 = vsub.f32 1.0, %v1190
      %v1192 = vmul.f32 %v1189, %v1191
      %v1193 = vadd.f32 %v1189, %v1192
      %vm1194 = vweird.f32 %v845
      %vm1195 = vweird.f32 %v1189
      %vm1196 = vmor %vm1194, %vm1195
      %v1197 = vsel %vm1196, %v1189, %v1193
      %v1198 = vand.u32 2147483647, %v845
      %vm1199 = vcmp.eq.f32.partialorder %v1198, 8.507059e+37
      %v1200 = vand.u32 %v845, 2147483648
      %v1201 = vor.u32 1.1754944e-38, %v1200
      %v1202 = vsel %vm1199, %v1201, %v1197
      %v1203 = vmul.f32 1.0, %v1202
      %v1204 = vrcp.pop %v846
      %v1205 = vmul.f32 %v846, %v1204
      %v1206 = vsub.f32 1.0, %v1205
      %v1207 = vmul.f32 %v1204, %v1206
      %v1208 = vadd.f32 %v1204, %v1207
      %vm1209 = vweird.f32 %v846
      %vm1210 = vweird.f32 %v1204
      %vm1211 = vmor %vm1209, %vm1210
      %v1212 = vsel %vm1211, %v1204, %v1208
      %v1213 = vand.u32 2147483647, %v846
      %vm1214 = vcmp.eq.f32.partialorder %v1213, 8.507059e+37
      %v1215 = vand.u32 %v846, 2147483648
      %v1216 = vor.u32 1.1754944e-38, %v1215
      %v1217 = vsel %vm1214, %v1216, %v1212
      %v1218 = vmul.f32 1.0, %v1217
      %v1219 = vrcp.pop %v847
      %v1220 = vmul.f32 %v847, %v1219
      %v1221 = vsub.f32 1.0, %v1220
      %v1222 = vmul.f32 %v1219, %v1221
      %v1223 = vadd.f32 %v1219, %v1222
      %vm1224 = vweird.f32 %v847
      %vm1225 = vweird.f32 %v1219
      %vm1226 = vmor %vm1224, %vm1225
      %v1227 = vsel %vm1226, %v1219, %v1223
      %v1228 = vand.u32 2147483647, %v847
      %vm1229 = vcmp.eq.f32.partialorder %v1228, 8.507059e+37
      %v1230 = vand.u32 %v847, 2147483648
      %v1231 = vor.u32 1.1754944e-38, %v1230
      %v1232 = vsel %vm1229, %v1231, %v1227
      %v1233 = vmul.f32 1.0, %v1232
      %v1234 = vrcp.pop %v848
      %v1235 = vmul.f32 %v848, %v1234
      %v1236 = vsub.f32 1.0, %v1235
      %v1237 = vmul.f32 %v1234, %v1236
      %v1238 = vadd.f32 %v1234, %v1237
      %vm1239 = vweird.f32 %v848
      %vm1240 = vweird.f32 %v1234
      %vm1241 = vmor %vm1239, %vm1240
      %v1242 = vsel %vm1241, %v1234, %v1238
      %v1243 = vand.u32 2147483647, %v848
      %vm1244 = vcmp.eq.f32.partialorder %v1243, 8.507059e+37
      %v1245 = vand.u32 %v848, 2147483648
      %v1246 = vor.u32 1.1754944e-38, %v1245
      %v1247 = vsel %vm1244, %v1246, %v1242
      %v1248 = vmul.f32 1.0, %v1247
      %v1249 = vrcp.pop %v849
      %v1250 = vmul.f32 %v849, %v1249
      %v1251 = vsub.f32 1.0, %v1250
      %v1252 = vmul.f32 %v1249, %v1251
      %v1253 = vadd.f32 %v1249, %v1252
      %vm1254 = vweird.f32 %v849
      %vm1255 = vweird.f32 %v1249
      %vm1256 = vmor %vm1254, %vm1255
      %v1257 = vsel %vm1256, %v1249, %v1253
      %v1258 = vand.u32 2147483647, %v849
      %vm1259 = vcmp.eq.f32.partialorder %v1258, 8.507059e+37
      %v1260 = vand.u32 %v849, 2147483648
      %v1261 = vor.u32 1.1754944e-38, %v1260
      %v1262 = vsel %vm1259, %v1261, %v1257
      %v1263 = vmul.f32 1.0, %v1262
      %v1264 = vrcp.pop %v850
      %v1265 = vmul.f32 %v850, %v1264
      %v1266 = vsub.f32 1.0, %v1265
      %v1267 = vmul.f32 %v1264, %v1266
      %v1268 = vadd.f32 %v1264, %v1267
      %vm1269 = vweird.f32 %v850
      %vm1270 = vweird.f32 %v1264
      %vm1271 = vmor %vm1269, %vm1270
      %v1272 = vsel %vm1271, %v1264, %v1268
      %v1273 = vand.u32 2147483647, %v850
      %vm1274 = vcmp.eq.f32.partialorder %v1273, 8.507059e+37
      %v1275 = vand.u32 %v850, 2147483648
      %v1276 = vor.u32 1.1754944e-38, %v1275
      %v1277 = vsel %vm1274, %v1276, %v1272
      %v1278 = vmul.f32 1.0, %v1277
      %v1279 = vrcp.pop %v851
      %v1280 = vmul.f32 %v851, %v1279
      %v1281 = vsub.f32 1.0, %v1280
      %v1282 = vmul.f32 %v1279, %v1281
      %v1283 = vadd.f32 %v1279, %v1282
      %vm1284 = vweird.f32 %v851
      %vm1285 = vweird.f32 %v1279
      %vm1286 = vmor %vm1284, %vm1285
      %v1287 = vsel %vm1286, %v1279, %v1283
      %v1288 = vand.u32 2147483647, %v851
      %vm1289 = vcmp.eq.f32.partialorder %v1288, 8.507059e+37
      %v1290 = vand.u32 %v851, 2147483648
      %v1291 = vor.u32 1.1754944e-38, %v1290
      %v1292 = vsel %vm1289, %v1291, %v1287
      %v1293 = vmul.f32 1.0, %v1292
      %v1294 = vrcp.pop %v852
      %v1295 = vmul.f32 %v852, %v1294
      %v1296 = vsub.f32 1.0, %v1295
      %v1297 = vmul.f32 %v1294, %v1296
      %v1298 = vadd.f32 %v1294, %v1297
      %vm1299 = vweird.f32 %v852
      %vm1300 = vweird.f32 %v1294
      %vm1301 = vmor %vm1299, %vm1300
      %v1302 = vsel %vm1301, %v1294, %v1298
      %v1303 = vand.u32 2147483647, %v852
      %vm1304 = vcmp.eq.f32.partialorder %v1303, 8.507059e+37
      %v1305 = vand.u32 %v852, 2147483648
      %v1306 = vor.u32 1.1754944e-38, %v1305
      %v1307 = vsel %vm1304, %v1306, %v1302
      %v1308 = vmul.f32 1.0, %v1307
      %v1309 = vrcp.pop %v853
      %v1310 = vmul.f32 %v853, %v1309
      %v1311 = vsub.f32 1.0, %v1310
      %v1312 = vmul.f32 %v1309, %v1311
      %v1313 = vadd.f32 %v1309, %v1312
      %vm1314 = vweird.f32 %v853
      %vm1315 = vweird.f32 %v1309
      %vm1316 = vmor %vm1314, %vm1315
      %v1317 = vsel %vm1316, %v1309, %v1313
      %v1318 = vand.u32 2147483647, %v853
      %vm1319 = vcmp.eq.f32.partialorder %v1318, 8.507059e+37
      %v1320 = vand.u32 %v853, 2147483648
      %v1321 = vor.u32 1.1754944e-38, %v1320
      %v1322 = vsel %vm1319, %v1321, %v1317
      %v1323 = vmul.f32 1.0, %v1322
      %v1324 = vrcp.pop %v854
      %v1325 = vmul.f32 %v854, %v1324
      %v1326 = vsub.f32 1.0, %v1325
      %v1327 = vmul.f32 %v1324, %v1326
      %v1328 = vadd.f32 %v1324, %v1327
      %vm1329 = vweird.f32 %v854
      %vm1330 = vweird.f32 %v1324
      %vm1331 = vmor %vm1329, %vm1330
      %v1332 = vsel %vm1331, %v1324, %v1328
      %v1333 = vand.u32 2147483647, %v854
      %vm1334 = vcmp.eq.f32.partialorder %v1333, 8.507059e+37
      %v1335 = vand.u32 %v854, 2147483648
      %v1336 = vor.u32 1.1754944e-38, %v1335
      %v1337 = vsel %vm1334, %v1336, %v1332
      %v1338 = vmul.f32 1.0, %v1337
      %v1339 = vrcp.pop %v855
      %v1340 = vmul.f32 %v855, %v1339
      %v1341 = vsub.f32 1.0, %v1340
      %v1342 = vmul.f32 %v1339, %v1341
      %v1343 = vadd.f32 %v1339, %v1342
      %vm1344 = vweird.f32 %v855
      %vm1345 = vweird.f32 %v1339
      %vm1346 = vmor %vm1344, %vm1345
      %v1347 = vsel %vm1346, %v1339, %v1343
      %v1348 = vand.u32 2147483647, %v855
      %vm1349 = vcmp.eq.f32.partialorder %v1348, 8.507059e+37
      %v1350 = vand.u32 %v855, 2147483648
      %v1351 = vor.u32 1.1754944e-38, %v1350
      %v1352 = vsel %vm1349, %v1351, %v1347
      %v1353 = vmul.f32 1.0, %v1352
      %v1354 = vrcp.pop %v856
      %v1355 = vmul.f32 %v856, %v1354
      %v1356 = vsub.f32 1.0, %v1355
      %v1357 = vmul.f32 %v1354, %v1356
      %v1358 = vadd.f32 %v1354, %v1357
      %vm1359 = vweird.f32 %v856
      %vm1360 = vweird.f32 %v1354
      %vm1361 = vmor %vm1359, %vm1360
      %v1362 = vsel %vm1361, %v1354, %v1358
      %v1363 = vand.u32 2147483647, %v856
      %vm1364 = vcmp.eq.f32.partialorder %v1363, 8.507059e+37
      %v1365 = vand.u32 %v856, 2147483648
      %v1366 = vor.u32 1.1754944e-38, %v1365
      %v1367 = vsel %vm1364, %v1366, %v1362
      %v1368 = vmul.f32 1.0, %v1367
      %v1369 = vrcp.pop %v857
      %v1370 = vmul.f32 %v857, %v1369
      %v1371 = vsub.f32 1.0, %v1370
      %v1372 = vmul.f32 %v1369, %v1371
      %v1373 = vadd.f32 %v1369, %v1372
      %vm1374 = vweird.f32 %v857
      %vm1375 = vweird.f32 %v1369
      %vm1376 = vmor %vm1374, %vm1375
      %v1377 = vsel %vm1376, %v1369, %v1373
      %v1378 = vand.u32 2147483647, %v857
      %vm1379 = vcmp.eq.f32.partialorder %v1378, 8.507059e+37
      %v1380 = vand.u32 %v857, 2147483648
      %v1381 = vor.u32 1.1754944e-38, %v1380
      %v1382 = vsel %vm1379, %v1381, %v1377
      %v1383 = vmul.f32 1.0, %v1382
      %v1384 = vrcp.pop %v858
      %v1385 = vmul.f32 %v858, %v1384
      %v1386 = vsub.f32 1.0, %v1385
      %v1387 = vmul.f32 %v1384, %v1386
      %v1388 = vadd.f32 %v1384, %v1387
      %vm1389 = vweird.f32 %v858
      %vm1390 = vweird.f32 %v1384
      %vm1391 = vmor %vm1389, %vm1390
      %v1392 = vsel %vm1391, %v1384, %v1388
      %v1393 = vand.u32 2147483647, %v858
      %vm1394 = vcmp.eq.f32.partialorder %v1393, 8.507059e+37
      %v1395 = vand.u32 %v858, 2147483648
      %v1396 = vor.u32 1.1754944e-38, %v1395
      %v1397 = vsel %vm1394, %v1396, %v1392
      %v1398 = vmul.f32 1.0, %v1397
      %v1399 = vrcp.pop %v859
      %v1400 = vmul.f32 %v859, %v1399
      %v1401 = vsub.f32 1.0, %v1400
      %v1402 = vmul.f32 %v1399, %v1401
      %v1403 = vadd.f32 %v1399, %v1402
      %vm1404 = vweird.f32 %v859
      %vm1405 = vweird.f32 %v1399
      %vm1406 = vmor %vm1404, %vm1405
      %v1407 = vsel %vm1406, %v1399, %v1403
      %v1408 = vand.u32 2147483647, %v859
      %vm1409 = vcmp.eq.f32.partialorder %v1408, 8.507059e+37
      %v1410 = vand.u32 %v859, 2147483648
      %v1411 = vor.u32 1.1754944e-38, %v1410
      %v1412 = vsel %vm1409, %v1411, %v1407
      %v1413 = vmul.f32 1.0, %v1412
      %v1414 = vrcp.pop %v860
      %v1415 = vmul.f32 %v860, %v1414
      %v1416 = vsub.f32 1.0, %v1415
      %v1417 = vmul.f32 %v1414, %v1416
      %v1418 = vadd.f32 %v1414, %v1417
      %vm1419 = vweird.f32 %v860
      %vm1420 = vweird.f32 %v1414
      %vm1421 = vmor %vm1419, %vm1420
      %v1422 = vsel %vm1421, %v1414, %v1418
      %v1423 = vand.u32 2147483647, %v860
      %vm1424 = vcmp.eq.f32.partialorder %v1423, 8.507059e+37
      %v1425 = vand.u32 %v860, 2147483648
      %v1426 = vor.u32 1.1754944e-38, %v1425
      %v1427 = vsel %vm1424, %v1426, %v1422
      %v1428 = vmul.f32 1.0, %v1427
      %v1429 = vrcp.pop %v861
      %v1430 = vmul.f32 %v861, %v1429
      %v1431 = vsub.f32 1.0, %v1430
      %v1432 = vmul.f32 %v1429, %v1431
      %v1433 = vadd.f32 %v1429, %v1432
      %vm1434 = vweird.f32 %v861
      %vm1435 = vweird.f32 %v1429
      %vm1436 = vmor %vm1434, %vm1435
      %v1437 = vsel %vm1436, %v1429, %v1433
      %v1438 = vand.u32 2147483647, %v861
      %vm1439 = vcmp.eq.f32.partialorder %v1438, 8.507059e+37
      %v1440 = vand.u32 %v861, 2147483648
      %v1441 = vor.u32 1.1754944e-38, %v1440
      %v1442 = vsel %vm1439, %v1441, %v1437
      %v1443 = vmul.f32 1.0, %v1442
      %v1444 = vrcp.pop %v862
      %v1445 = vmul.f32 %v862, %v1444
      %v1446 = vsub.f32 1.0, %v1445
      %v1447 = vmul.f32 %v1444, %v1446
      %v1448 = vadd.f32 %v1444, %v1447
      %vm1449 = vweird.f32 %v862
      %vm1450 = vweird.f32 %v1444
      %vm1451 = vmor %vm1449, %vm1450
      %v1452 = vsel %vm1451, %v1444, %v1448
      %v1453 = vand.u32 2147483647, %v862
      %vm1454 = vcmp.eq.f32.partialorder %v1453, 8.507059e+37
      %v1455 = vand.u32 %v862, 2147483648
      %v1456 = vor.u32 1.1754944e-38, %v1455
      %v1457 = vsel %vm1454, %v1456, %v1452
      %v1458 = vmul.f32 1.0, %v1457
      %v1459 = vrcp.pop %v863
      %v1460 = vmul.f32 %v863, %v1459
      %v1461 = vsub.f32 1.0, %v1460
      %v1462 = vmul.f32 %v1459, %v1461
      %v1463 = vadd.f32 %v1459, %v1462
      %vm1464 = vweird.f32 %v863
      %vm1465 = vweird.f32 %v1459
      %vm1466 = vmor %vm1464, %vm1465
      %v1467 = vsel %vm1466, %v1459, %v1463
      %v1468 = vand.u32 2147483647, %v863
      %vm1469 = vcmp.eq.f32.partialorder %v1468, 8.507059e+37
      %v1470 = vand.u32 %v863, 2147483648
      %v1471 = vor.u32 1.1754944e-38, %v1470
      %v1472 = vsel %vm1469, %v1471, %v1467
      %v1473 = vmul.f32 1.0, %v1472
      %v1474 = vrcp.pop %v864
      %v1475 = vmul.f32 %v864, %v1474
      %v1476 = vsub.f32 1.0, %v1475
      %v1477 = vmul.f32 %v1474, %v1476
      %v1478 = vadd.f32 %v1474, %v1477
      %vm1479 = vweird.f32 %v864
      %vm1480 = vweird.f32 %v1474
      %vm1481 = vmor %vm1479, %vm1480
      %v1482 = vsel %vm1481, %v1474, %v1478
      %v1483 = vand.u32 2147483647, %v864
      %vm1484 = vcmp.eq.f32.partialorder %v1483, 8.507059e+37
      %v1485 = vand.u32 %v864, 2147483648
      %v1486 = vor.u32 1.1754944e-38, %v1485
      %v1487 = vsel %vm1484, %v1486, %v1482
      %v1488 = vmul.f32 1.0, %v1487
      %v1489 = vrcp.pop %v865
      %v1490 = vmul.f32 %v865, %v1489
      %v1491 = vsub.f32 1.0, %v1490
      %v1492 = vmul.f32 %v1489, %v1491
      %v1493 = vadd.f32 %v1489, %v1492
      %vm1494 = vweird.f32 %v865
      %vm1495 = vweird.f32 %v1489
      %vm1496 = vmor %vm1494, %vm1495
      %v1497 = vsel %vm1496, %v1489, %v1493
      %v1498 = vand.u32 2147483647, %v865
      %vm1499 = vcmp.eq.f32.partialorder %v1498, 8.507059e+37
      %v1500 = vand.u32 %v865, 2147483648
      %v1501 = vor.u32 1.1754944e-38, %v1500
      %v1502 = vsel %vm1499, %v1501, %v1497
      %v1503 = vmul.f32 1.0, %v1502
      %v1504 = vrcp.pop %v866
      %v1505 = vmul.f32 %v866, %v1504
      %v1506 = vsub.f32 1.0, %v1505
      %v1507 = vmul.f32 %v1504, %v1506
      %v1508 = vadd.f32 %v1504, %v1507
      %vm1509 = vweird.f32 %v866
      %vm1510 = vweird.f32 %v1504
      %vm1511 = vmor %vm1509, %vm1510
      %v1512 = vsel %vm1511, %v1504, %v1508
      %v1513 = vand.u32 2147483647, %v866
      %vm1514 = vcmp.eq.f32.partialorder %v1513, 8.507059e+37
      %v1515 = vand.u32 %v866, 2147483648
      %v1516 = vor.u32 1.1754944e-38, %v1515
      %v1517 = vsel %vm1514, %v1516, %v1512
      %v1518 = vmul.f32 1.0, %v1517
      %v1519 = vrcp.pop %v867
      %v1520 = vmul.f32 %v867, %v1519
      %v1521 = vsub.f32 1.0, %v1520
      %v1522 = vmul.f32 %v1519, %v1521
      %v1523 = vadd.f32 %v1519, %v1522
      %vm1524 = vweird.f32 %v867
      %vm1525 = vweird.f32 %v1519
      %vm1526 = vmor %vm1524, %vm1525
      %v1527 = vsel %vm1526, %v1519, %v1523
      %v1528 = vand.u32 2147483647, %v867
      %vm1529 = vcmp.eq.f32.partialorder %v1528, 8.507059e+37
      %v1530 = vand.u32 %v867, 2147483648
      %v1531 = vor.u32 1.1754944e-38, %v1530
      %v1532 = vsel %vm1529, %v1531, %v1527
      %v1533 = vmul.f32 1.0, %v1532
      %v1534 = vrcp.pop %v868
      %v1535 = vmul.f32 %v868, %v1534
      %v1536 = vsub.f32 1.0, %v1535
      %v1537 = vmul.f32 %v1534, %v1536
      %v1538 = vadd.f32 %v1534, %v1537
      %vm1539 = vweird.f32 %v868
      %vm1540 = vweird.f32 %v1534
      %vm1541 = vmor %vm1539, %vm1540
      %v1542 = vsel %vm1541, %v1534, %v1538
      %v1543 = vand.u32 2147483647, %v868
      %vm1544 = vcmp.eq.f32.partialorder %v1543, 8.507059e+37
      %v1545 = vand.u32 %v868, 2147483648
      %v1546 = vor.u32 1.1754944e-38, %v1545
      %v1547 = vsel %vm1544, %v1546, %v1542
      %v1548 = vmul.f32 1.0, %v1547
      %v1549 = vrcp.pop %v869
      %v1550 = vmul.f32 %v869, %v1549
      %v1551 = vsub.f32 1.0, %v1550
      %v1552 = vmul.f32 %v1549, %v1551
      %v1553 = vadd.f32 %v1549, %v1552
      %vm1554 = vweird.f32 %v869
      %vm1555 = vweird.f32 %v1549
      %vm1556 = vmor %vm1554, %vm1555
      %v1557 = vsel %vm1556, %v1549, %v1553
      %v1558 = vand.u32 2147483647, %v869
      %vm1559 = vcmp.eq.f32.partialorder %v1558, 8.507059e+37
      %v1560 = vand.u32 %v869, 2147483648
      %v1561 = vor.u32 1.1754944e-38, %v1560
      %v1562 = vsel %vm1559, %v1561, %v1557
      %v1563 = vmul.f32 1.0, %v1562
      %v1564 = vrcp.pop %v870
      %v1565 = vmul.f32 %v870, %v1564
      %v1566 = vsub.f32 1.0, %v1565
      %v1567 = vmul.f32 %v1564, %v1566
      %v1568 = vadd.f32 %v1564, %v1567
      %vm1569 = vweird.f32 %v870
      %vm1570 = vweird.f32 %v1564
      %vm1571 = vmor %vm1569, %vm1570
      %v1572 = vsel %vm1571, %v1564, %v1568
      %v1573 = vand.u32 2147483647, %v870
      %vm1574 = vcmp.eq.f32.partialorder %v1573, 8.507059e+37
      %v1575 = vand.u32 %v870, 2147483648
      %v1576 = vor.u32 1.1754944e-38, %v1575
      %v1577 = vsel %vm1574, %v1576, %v1572
      %v1578 = vmul.f32 1.0, %v1577
      %v1579 = vrcp.pop %v871
      %v1580 = vmul.f32 %v871, %v1579
      %v1581 = vsub.f32 1.0, %v1580
      %v1582 = vmul.f32 %v1579, %v1581
      %v1583 = vadd.f32 %v1579, %v1582
      %vm1584 = vweird.f32 %v871
      %vm1585 = vweird.f32 %v1579
      %vm1586 = vmor %vm1584, %vm1585
      %v1587 = vsel %vm1586, %v1579, %v1583
      %v1588 = vand.u32 2147483647, %v871
      %vm1589 = vcmp.eq.f32.partialorder %v1588, 8.507059e+37
      %v1590 = vand.u32 %v871, 2147483648
      %v1591 = vor.u32 1.1754944e-38, %v1590
      %v1592 = vsel %vm1589, %v1591, %v1587
      %v1593 = vmul.f32 1.0, %v1592
      %v1594 = vrcp.pop %v872
      %v1595 = vmul.f32 %v872, %v1594
      %v1596 = vsub.f32 1.0, %v1595
      %v1597 = vmul.f32 %v1594, %v1596
      %v1598 = vadd.f32 %v1594, %v1597
      %vm1599 = vweird.f32 %v872
      %vm1600 = vweird.f32 %v1594
      %vm1601 = vmor %vm1599, %vm1600
      %v1602 = vsel %vm1601, %v1594, %v1598
      %v1603 = vand.u32 2147483647, %v872
      %vm1604 = vcmp.eq.f32.partialorder %v1603, 8.507059e+37
      %v1605 = vand.u32 %v872, 2147483648
      %v1606 = vor.u32 1.1754944e-38, %v1605
      %v1607 = vsel %vm1604, %v1606, %v1602
      %v1608 = vmul.f32 1.0, %v1607
      %v1609 = vrcp.pop %v873
      %v1610 = vmul.f32 %v873, %v1609
      %v1611 = vsub.f32 1.0, %v1610
      %v1612 = vmul.f32 %v1609, %v1611
      %v1613 = vadd.f32 %v1609, %v1612
      %vm1614 = vweird.f32 %v873
      %vm1615 = vweird.f32 %v1609
      %vm1616 = vmor %vm1614, %vm1615
      %v1617 = vsel %vm1616, %v1609, %v1613
      %v1618 = vand.u32 2147483647, %v873
      %vm1619 = vcmp.eq.f32.partialorder %v1618, 8.507059e+37
      %v1620 = vand.u32 %v873, 2147483648
      %v1621 = vor.u32 1.1754944e-38, %v1620
      %v1622 = vsel %vm1619, %v1621, %v1617
      %v1623 = vmul.f32 1.0, %v1622
      %v1624 = vrcp.pop %v874
      %v1625 = vmul.f32 %v874, %v1624
      %v1626 = vsub.f32 1.0, %v1625
      %v1627 = vmul.f32 %v1624, %v1626
      %v1628 = vadd.f32 %v1624, %v1627
      %vm1629 = vweird.f32 %v874
      %vm1630 = vweird.f32 %v1624
      %vm1631 = vmor %vm1629, %vm1630
      %v1632 = vsel %vm1631, %v1624, %v1628
      %v1633 = vand.u32 2147483647, %v874
      %vm1634 = vcmp.eq.f32.partialorder %v1633, 8.507059e+37
      %v1635 = vand.u32 %v874, 2147483648
      %v1636 = vor.u32 1.1754944e-38, %v1635
      %v1637 = vsel %vm1634, %v1636, %v1632
      %v1638 = vmul.f32 1.0, %v1637
      %v1639 = vrcp.pop %v875
      %v1640 = vmul.f32 %v875, %v1639
      %v1641 = vsub.f32 1.0, %v1640
      %v1642 = vmul.f32 %v1639, %v1641
      %v1643 = vadd.f32 %v1639, %v1642
      %vm1644 = vweird.f32 %v875
      %vm1645 = vweird.f32 %v1639
      %vm1646 = vmor %vm1644, %vm1645
      %v1647 = vsel %vm1646, %v1639, %v1643
      %v1648 = vand.u32 2147483647, %v875
      %vm1649 = vcmp.eq.f32.partialorder %v1648, 8.507059e+37
      %v1650 = vand.u32 %v875, 2147483648
      %v1651 = vor.u32 1.1754944e-38, %v1650
      %v1652 = vsel %vm1649, %v1651, %v1647
      %v1653 = vmul.f32 1.0, %v1652
      %v1654 = vrcp.pop %v876
      %v1655 = vmul.f32 %v876, %v1654
      %v1656 = vsub.f32 1.0, %v1655
      %v1657 = vmul.f32 %v1654, %v1656
      %v1658 = vadd.f32 %v1654, %v1657
      %vm1659 = vweird.f32 %v876
      %vm1660 = vweird.f32 %v1654
      %vm1661 = vmor %vm1659, %vm1660
      %v1662 = vsel %vm1661, %v1654, %v1658
      %v1663 = vand.u32 2147483647, %v876
      %vm1664 = vcmp.eq.f32.partialorder %v1663, 8.507059e+37
      %v1665 = vand.u32 %v876, 2147483648
      %v1666 = vor.u32 1.1754944e-38, %v1665
      %v1667 = vsel %vm1664, %v1666, %v1662
      %v1668 = vmul.f32 1.0, %v1667
      %v1669 = vrcp.pop %v877
      %v1670 = vmul.f32 %v877, %v1669
      %v1671 = vsub.f32 1.0, %v1670
      %v1672 = vmul.f32 %v1669, %v1671
      %v1673 = vadd.f32 %v1669, %v1672
      %vm1674 = vweird.f32 %v877
      %vm1675 = vweird.f32 %v1669
      %vm1676 = vmor %vm1674, %vm1675
      %v1677 = vsel %vm1676, %v1669, %v1673
      %v1678 = vand.u32 2147483647, %v877
      %vm1679 = vcmp.eq.f32.partialorder %v1678, 8.507059e+37
      %v1680 = vand.u32 %v877, 2147483648
      %v1681 = vor.u32 1.1754944e-38, %v1680
      %v1682 = vsel %vm1679, %v1681, %v1677
      %v1683 = vmul.f32 1.0, %v1682
      %v1684 = vrcp.pop %v878
      %v1685 = vmul.f32 %v878, %v1684
      %v1686 = vsub.f32 1.0, %v1685
      %v1687 = vmul.f32 %v1684, %v1686
      %v1688 = vadd.f32 %v1684, %v1687
      %vm1689 = vweird.f32 %v878
      %vm1690 = vweird.f32 %v1684
      %vm1691 = vmor %vm1689, %vm1690
      %v1692 = vsel %vm1691, %v1684, %v1688
      %v1693 = vand.u32 2147483647, %v878
      %vm1694 = vcmp.eq.f32.partialorder %v1693, 8.507059e+37
      %v1695 = vand.u32 %v878, 2147483648
      %v1696 = vor.u32 1.1754944e-38, %v1695
      %v1697 = vsel %vm1694, %v1696, %v1692
      %v1698 = vmul.f32 1.0, %v1697
      %v1699 = vrcp.pop %v879
      %v1700 = vmul.f32 %v879, %v1699
      %v1701 = vsub.f32 1.0, %v1700
      %v1702 = vmul.f32 %v1699, %v1701
      %v1703 = vadd.f32 %v1699, %v1702
      %vm1704 = vweird.f32 %v879
      %vm1705 = vweird.f32 %v1699
      %vm1706 = vmor %vm1704, %vm1705
      %v1707 = vsel %vm1706, %v1699, %v1703
      %v1708 = vand.u32 2147483647, %v879
      %vm1709 = vcmp.eq.f32.partialorder %v1708, 8.507059e+37
      %v1710 = vand.u32 %v879, 2147483648
      %v1711 = vor.u32 1.1754944e-38, %v1710
      %v1712 = vsel %vm1709, %v1711, %v1707
      %v1713 = vmul.f32 1.0, %v1712
      %v1714 = vrcp.pop %v880
      %v1715 = vmul.f32 %v880, %v1714
      %v1716 = vsub.f32 1.0, %v1715
      %v1717 = vmul.f32 %v1714, %v1716
      %v1718 = vadd.f32 %v1714, %v1717
      %vm1719 = vweird.f32 %v880
      %vm1720 = vweird.f32 %v1714
      %vm1721 = vmor %vm1719, %vm1720
      %v1722 = vsel %vm1721, %v1714, %v1718
      %v1723 = vand.u32 2147483647, %v880
      %vm1724 = vcmp.eq.f32.partialorder %v1723, 8.507059e+37
      %v1725 = vand.u32 %v880, 2147483648
      %v1726 = vor.u32 1.1754944e-38, %v1725
      %v1727 = vsel %vm1724, %v1726, %v1722
      %v1728 = vmul.f32 1.0, %v1727
      %v1729 = vrcp.pop %v881
      %v1730 = vmul.f32 %v881, %v1729
      %v1731 = vsub.f32 1.0, %v1730
      %v1732 = vmul.f32 %v1729, %v1731
      %v1733 = vadd.f32 %v1729, %v1732
      %vm1734 = vweird.f32 %v881
      %vm1735 = vweird.f32 %v1729
      %vm1736 = vmor %vm1734, %vm1735
      %v1737 = vsel %vm1736, %v1729, %v1733
      %v1738 = vand.u32 2147483647, %v881
      %vm1739 = vcmp.eq.f32.partialorder %v1738, 8.507059e+37
      %v1740 = vand.u32 %v881, 2147483648
      %v1741 = vor.u32 1.1754944e-38, %v1740
      %v1742 = vsel %vm1739, %v1741, %v1737
      %v1743 = vmul.f32 1.0, %v1742
      %v1744 = vrcp.pop %v882
      %v1745 = vmul.f32 %v882, %v1744
      %v1746 = vsub.f32 1.0, %v1745
      %v1747 = vmul.f32 %v1744, %v1746
      %v1748 = vadd.f32 %v1744, %v1747
      %vm1749 = vweird.f32 %v882
      %vm1750 = vweird.f32 %v1744
      %vm1751 = vmor %vm1749, %vm1750
      %v1752 = vsel %vm1751, %v1744, %v1748
      %v1753 = vand.u32 2147483647, %v882
      %vm1754 = vcmp.eq.f32.partialorder %v1753, 8.507059e+37
      %v1755 = vand.u32 %v882, 2147483648
      %v1756 = vor.u32 1.1754944e-38, %v1755
      %v1757 = vsel %vm1754, %v1756, %v1752
      %v1758 = vmul.f32 1.0, %v1757
      %v1759 = vrcp.pop %v883
      %v1760 = vmul.f32 %v883, %v1759
      %v1761 = vsub.f32 1.0, %v1760
      %v1762 = vmul.f32 %v1759, %v1761
      %v1763 = vadd.f32 %v1759, %v1762
      %vm1764 = vweird.f32 %v883
      %vm1765 = vweird.f32 %v1759
      %vm1766 = vmor %vm1764, %vm1765
      %v1767 = vsel %vm1766, %v1759, %v1763
      %v1768 = vand.u32 2147483647, %v883
      %vm1769 = vcmp.eq.f32.partialorder %v1768, 8.507059e+37
      %v1770 = vand.u32 %v883, 2147483648
      %v1771 = vor.u32 1.1754944e-38, %v1770
      %v1772 = vsel %vm1769, %v1771, %v1767
      %v1773 = vmul.f32 1.0, %v1772
      %v1774 = vrcp.pop %v884
      %v1775 = vmul.f32 %v884, %v1774
      %v1776 = vsub.f32 1.0, %v1775
      %v1777 = vmul.f32 %v1774, %v1776
      %v1778 = vadd.f32 %v1774, %v1777
      %vm1779 = vweird.f32 %v884
      %vm1780 = vweird.f32 %v1774
      %vm1781 = vmor %vm1779, %vm1780
      %v1782 = vsel %vm1781, %v1774, %v1778
      %v1783 = vand.u32 2147483647, %v884
      %vm1784 = vcmp.eq.f32.partialorder %v1783, 8.507059e+37
      %v1785 = vand.u32 %v884, 2147483648
      %v1786 = vor.u32 1.1754944e-38, %v1785
      %v1787 = vsel %vm1784, %v1786, %v1782
      %v1788 = vmul.f32 1.0, %v1787
      %v1789 = vrcp.pop %v885
      %v1790 = vmul.f32 %v885, %v1789
      %v1791 = vsub.f32 1.0, %v1790
      %v1792 = vmul.f32 %v1789, %v1791
      %v1793 = vadd.f32 %v1789, %v1792
      %vm1794 = vweird.f32 %v885
      %vm1795 = vweird.f32 %v1789
      %vm1796 = vmor %vm1794, %vm1795
      %v1797 = vsel %vm1796, %v1789, %v1793
      %v1798 = vand.u32 2147483647, %v885
      %vm1799 = vcmp.eq.f32.partialorder %v1798, 8.507059e+37
      %v1800 = vand.u32 %v885, 2147483648
      %v1801 = vor.u32 1.1754944e-38, %v1800
      %v1802 = vsel %vm1799, %v1801, %v1797
      %v1803 = vmul.f32 1.0, %v1802
      %v1804 = vrcp.pop %v886
      %v1805 = vmul.f32 %v886, %v1804
      %v1806 = vsub.f32 1.0, %v1805
      %v1807 = vmul.f32 %v1804, %v1806
      %v1808 = vadd.f32 %v1804, %v1807
      %vm1809 = vweird.f32 %v886
      %vm1810 = vweird.f32 %v1804
      %vm1811 = vmor %vm1809, %vm1810
      %v1812 = vsel %vm1811, %v1804, %v1808
      %v1813 = vand.u32 2147483647, %v886
      %vm1814 = vcmp.eq.f32.partialorder %v1813, 8.507059e+37
      %v1815 = vand.u32 %v886, 2147483648
      %v1816 = vor.u32 1.1754944e-38, %v1815
      %v1817 = vsel %vm1814, %v1816, %v1812
      %v1818 = vmul.f32 1.0, %v1817
      %v1819 = vrcp.pop %v887
      %v1820 = vmul.f32 %v887, %v1819
      %v1821 = vsub.f32 1.0, %v1820
      %v1822 = vmul.f32 %v1819, %v1821
      %v1823 = vadd.f32 %v1819, %v1822
      %vm1824 = vweird.f32 %v887
      %vm1825 = vweird.f32 %v1819
      %vm1826 = vmor %vm1824, %vm1825
      %v1827 = vsel %vm1826, %v1819, %v1823
      %v1828 = vand.u32 2147483647, %v887
      %vm1829 = vcmp.eq.f32.partialorder %v1828, 8.507059e+37
      %v1830 = vand.u32 %v887, 2147483648
      %v1831 = vor.u32 1.1754944e-38, %v1830
      %v1832 = vsel %vm1829, %v1831, %v1827
      %v1833 = vmul.f32 1.0, %v1832
      %v1834 = vrcp.pop %v888
      %v1835 = vmul.f32 %v888, %v1834
      %v1836 = vsub.f32 1.0, %v1835
      %v1837 = vmul.f32 %v1834, %v1836
      %v1838 = vadd.f32 %v1834, %v1837
      %vm1839 = vweird.f32 %v888
      %vm1840 = vweird.f32 %v1834
      %vm1841 = vmor %vm1839, %vm1840
      %v1842 = vsel %vm1841, %v1834, %v1838
      %v1843 = vand.u32 2147483647, %v888
      %vm1844 = vcmp.eq.f32.partialorder %v1843, 8.507059e+37
      %v1845 = vand.u32 %v888, 2147483648
      %v1846 = vor.u32 1.1754944e-38, %v1845
      %v1847 = vsel %vm1844, %v1846, %v1842
      %v1848 = vmul.f32 1.0, %v1847
      %v1849 = vmul.f32 %v569, %v903
      %v1850 = vmul.f32 %v570, %v918
      %v1851 = vmul.f32 %v571, %v933
      %v1852 = vmul.f32 %v572, %v948
      %v1853 = vmul.f32 %v573, %v963
      %v1854 = vmul.f32 %v574, %v978
      %v1855 = vmul.f32 %v575, %v993
      %v1856 = vmul.f32 %v576, %v1008
      %v1857 = vmul.f32 %v577, %v1023
      %v1858 = vmul.f32 %v578, %v1038
      %v1859 = vmul.f32 %v579, %v1053
      %v1860 = vmul.f32 %v580, %v1068
      %v1861 = vmul.f32 %v581, %v1083
      %v1862 = vmul.f32 %v582, %v1098
      %v1863 = vmul.f32 %v583, %v1113
      %v1864 = vmul.f32 %v584, %v1128
      %v1865 = vmul.f32 %v585, %v1143
      %v1866 = vmul.f32 %v586, %v1158
      %v1867 = vmul.f32 %v587, %v1173
      %v1868 = vmul.f32 %v588, %v1188
      %v1869 = vmul.f32 %v589, %v1203
      %v1870 = vmul.f32 %v590, %v1218
      %v1871 = vmul.f32 %v591, %v1233
      %v1872 = vmul.f32 %v592, %v1248
      %v1873 = vmul.f32 %v593, %v1263
      %v1874 = vmul.f32 %v594, %v1278
      %v1875 = vmul.f32 %v595, %v1293
      %v1876 = vmul.f32 %v596, %v1308
      %v1877 = vmul.f32 %v597, %v1323
      %v1878 = vmul.f32 %v598, %v1338
      %v1879 = vmul.f32 %v599, %v1353
      %v1880 = vmul.f32 %v600, %v1368
      %v1881 = vmul.f32 %v601, %v1383
      %v1882 = vmul.f32 %v602, %v1398
      %v1883 = vmul.f32 %v603, %v1413
      %v1884 = vmul.f32 %v604, %v1428
      %v1885 = vmul.f32 %v605, %v1443
      %v1886 = vmul.f32 %v606, %v1458
      %v1887 = vmul.f32 %v607, %v1473
      %v1888 = vmul.f32 %v608, %v1488
      %v1889 = vmul.f32 %v609, %v1503
      %v1890 = vmul.f32 %v610, %v1518
      %v1891 = vmul.f32 %v611, %v1533
      %v1892 = vmul.f32 %v612, %v1548
      %v1893 = vmul.f32 %v613, %v1563
      %v1894 = vmul.f32 %v614, %v1578
      %v1895 = vmul.f32 %v615, %v1593
      %v1896 = vmul.f32 %v616, %v1608
      %v1897 = vmul.f32 %v617, %v1623
      %v1898 = vmul.f32 %v618, %v1638
      %v1899 = vmul.f32 %v619, %v1653
      %v1900 = vmul.f32 %v620, %v1668
      %v1901 = vmul.f32 %v621, %v1683
      %v1902 = vmul.f32 %v622, %v1698
      %v1903 = vmul.f32 %v623, %v1713
      %v1904 = vmul.f32 %v624, %v1728
      %v1905 = vmul.f32 %v625, %v1743
      %v1906 = vmul.f32 %v626, %v1758
      %v1907 = vmul.f32 %v627, %v1773
      %v1908 = vmul.f32 %v628, %v1788
      %v1909 = vmul.f32 %v629, %v1803
      %v1910 = vmul.f32 %v630, %v1818
      %v1911 = vmul.f32 %v631, %v1833
      %v1912 = vmul.f32 %v632, %v1848
      %1913 = vst [vmem:[%s201] sm:$0xff] %v1849
      %1914 = vst [vmem:[%s201 + $0x8] sm:$0xff] %v1850
      %1915 = vst [vmem:[%s201 + $0x10] sm:$0xff] %v1851
      %1916 = vst [vmem:[%s201 + $0x18] sm:$0xff] %v1852
      %1917 = vst [vmem:[%s201 + $0x20] sm:$0xff] %v1853
      %1918 = vst [vmem:[%s201 + $0x28] sm:$0xff] %v1854
      %1919 = vst [vmem:[%s201 + $0x30] sm:$0xff] %v1855
      %1920 = vst [vmem:[%s201 + $0x38] sm:$0xff] %v1856
      %1921 = vst [vmem:[%s201 + $0x40] sm:$0xff] %v1857
      %1922 = vst [vmem:[%s201 + $0x48] sm:$0xff] %v1858
      %1923 = vst [vmem:[%s201 + $0x50] sm:$0xff] %v1859
      %1924 = vst [vmem:[%s201 + $0x58] sm:$0xff] %v1860
      %1925 = vst [vmem:[%s201 + $0x60] sm:$0xff] %v1861
      %1926 = vst [vmem:[%s201 + $0x68] sm:$0xff] %v1862
      %1927 = vst [vmem:[%s201 + $0x70] sm:$0xff] %v1863
      %1928 = vst [vmem:[%s201 + $0x78] sm:$0xff] %v1864
      %1929 = vst [vmem:[%s201 + $0x80] sm:$0xff] %v1865
      %1930 = vst [vmem:[%s201 + $0x88] sm:$0xff] %v1866
      %1931 = vst [vmem:[%s201 + $0x90] sm:$0xff] %v1867
      %1932 = vst [vmem:[%s201 + $0x98] sm:$0xff] %v1868
      %1933 = vst [vmem:[%s201 + $0xa0] sm:$0xff] %v1869
      %1934 = vst [vmem:[%s201 + $0xa8] sm:$0xff] %v1870
      %1935 = vst [vmem:[%s201 + $0xb0] sm:$0xff] %v1871
      %1936 = vst [vmem:[%s201 + $0xb8] sm:$0xff] %v1872
      %1937 = vst [vmem:[%s201 + $0xc0] sm:$0xff] %v1873
      %1938 = vst [vmem:[%s201 + $0xc8] sm:$0xff] %v1874
      %1939 = vst [vmem:[%s201 + $0xd0] sm:$0xff] %v1875
      %1940 = vst [vmem:[%s201 + $0xd8] sm:$0xff] %v1876
      %1941 = vst [vmem:[%s201 + $0xe0] sm:$0xff] %v1877
      %1942 = vst [vmem:[%s201 + $0xe8] sm:$0xff] %v1878
      %1943 = vst [vmem:[%s201 + $0xf0] sm:$0xff] %v1879
      %1944 = vst [vmem:[%s201 + $0xf8] sm:$0xff] %v1880
      %1945 = vst [vmem:[%s201 + $0x100] sm:$0xff] %v1881
      %1946 = vst [vmem:[%s201 + $0x108] sm:$0xff] %v1882
      %1947 = vst [vmem:[%s201 + $0x110] sm:$0xff] %v1883
      %1948 = vst [vmem:[%s201 + $0x118] sm:$0xff] %v1884
      %1949 = vst [vmem:[%s201 + $0x120] sm:$0xff] %v1885
      %1950 = vst [vmem:[%s201 + $0x128] sm:$0xff] %v1886
      %1951 = vst [vmem:[%s201 + $0x130] sm:$0xff] %v1887
      %1952 = vst [vmem:[%s201 + $0x138] sm:$0xff] %v1888
      %1953 = vst [vmem:[%s201 + $0x140] sm:$0xff] %v1889
      %1954 = vst [vmem:[%s201 + $0x148] sm:$0xff] %v1890
      %1955 = vst [vmem:[%s201 + $0x150] sm:$0xff] %v1891
      %1956 = vst [vmem:[%s201 + $0x158] sm:$0xff] %v1892
      %1957 = vst [vmem:[%s201 + $0x160] sm:$0xff] %v1893
      %1958 = vst [vmem:[%s201 + $0x168] sm:$0xff] %v1894
      %1959 = vst [vmem:[%s201 + $0x170] sm:$0xff] %v1895
      %1960 = vst [vmem:[%s201 + $0x178] sm:$0xff] %v1896
      %1961 = vst [vmem:[%s201 + $0x180] sm:$0xff] %v1897
      %1962 = vst [vmem:[%s201 + $0x188] sm:$0xff] %v1898
      %1963 = vst [vmem:[%s201 + $0x190] sm:$0xff] %v1899
      %1964 = vst [vmem:[%s201 + $0x198] sm:$0xff] %v1900
      %1965 = vst [vmem:[%s201 + $0x1a0] sm:$0xff] %v1901
      %1966 = vst [vmem:[%s201 + $0x1a8] sm:$0xff] %v1902
      %1967 = vst [vmem:[%s201 + $0x1b0] sm:$0xff] %v1903
      %1968 = vst [vmem:[%s201 + $0x1b8] sm:$0xff] %v1904
      %1969 = vst [vmem:[%s201 + $0x1c0] sm:$0xff] %v1905
      %1970 = vst [vmem:[%s201 + $0x1c8] sm:$0xff] %v1906
      %1971 = vst [vmem:[%s201 + $0x1d0] sm:$0xff] %v1907
      %1972 = vst [vmem:[%s201 + $0x1d8] sm:$0xff] %v1908
      %1973 = vst [vmem:[%s201 + $0x1e0] sm:$0xff] %v1909
      %1974 = vst [vmem:[%s201 + $0x1e8] sm:$0xff] %v1910
      %1975 = vst [vmem:[%s201 + $0x1f0] sm:$0xff] %v1911
      %1976 = vst [vmem:[%s201 + $0x1f8] sm:$0xff] %v1912
      %s1977 = smul.u32 32, %s15
      %p1978 = scmp.lt.s32.totalorder %s1977, 63
      %s1979 = scalar_select %p1978, %s1977, 63
      %s1980 = smul.addr %s1979, 2
      %s1981 = smul.addr %s1980, 8
      %s1982 = scalar_lea.vmem %s4, %s1981
      // Predicated region
      $region37: #{c2f_forward.3} parent=35 // pred_check
        %p1983 = pneg %p122
      $region38: #{c2f_forward.3} parent=35 // pred_check_branch
        %1985 = sbr.rel (%p1983) target = $region40
      $region39: #{c2f_forward.3} parent=35 // pred_region
        %s1986 = smul.u32 32, %s15
      $region40: #{c2f_forward.3} parent=35 // pred_fallthru
        _
    $region36: #{c2f_forward.3} parent=5 // pred_fallthru
      _
    %p1987 = scmp.le.s32.totalorder 2, %s10
    // Predicated region
    $region41: #{c2f_forward.3} parent=5 // pred_check
      %p1988 = pneg %p1987
    $region42: #{c2f_forward.3} parent=5 // pred_check_branch
      %1990 = sbr.rel (%p1988) target = $region44
    $region43: #{c2f_forward.3} parent=5 // pred_region
      %s1991 = ssub.s32 %s10, 2
      // Predicated region
      $region45: #{c2f_forward.3} parent=43 // pred_check
        %p1992 = pneg %p128
      $region46: #{c2f_forward.3} parent=43 // pred_check_branch
        %1994 = sbr.rel (%p1992) target = $region48
      $region47: #{c2f_forward.3} parent=43 // pred_region
        %s1995 = smul.u32 32, %s16
        %p1996 = scmp.lt.s32.totalorder %s1995, 63
        %s1997 = scalar_select %p1996, %s1995, 63
        %s1998 = smul.addr %s1997, 2
        %s1999 = smul.addr %s1998, 8
        %s2000 = scalar_lea.vmem %s4, %s1999
      $region48: #{c2f_forward.3} parent=43 // pred_fallthru
        _
    $region44: #{c2f_forward.3} parent=5 // pred_fallthru
      _
  $region6: #{c2f_forward.3} parent=0 // loop_footer
    %s14 = sadd.s32 1, %s10
  $region7: #{c2f_forward.3} parent=0 // loop_footer_branch
    %9 = sbr.rel target = $region3
  $region8: #{c2f_forward.3} parent=0 // loop_exit
    _

// kernel: c2f_forward.4
$region0: #{c2f_forward.4}
  #allocation0 [shape = 'u32[]', space=smem, size = 0x4, offset = 0x4, fixed_abs, tag = 'smem constant byte address 0x4 - core index']
  #allocation1 [shape = 'u32[72,128]{1,0:T(1,128)}', space=vmem, size = 0x9000, scoped, tag = 'internal scratch']
  #allocation2 [shape = 'f32[18,18,128]{2,1,0:T(8,128)}', space=vmem, size = 0x36000, scoped, tag = 'scratch operand']
  %s0 = inlined_call_operand.vmem [shape: f32[2,18,18,128], index: 0, kind: input, shape index: {}]
  %s1 = inlined_call_operand.vmem [shape: f32[1152,128], index: 1, kind: input, shape index: {}]
  %s2 = inlined_call_operand.vmem [shape: f32[1,128], index: 2, kind: input, shape index: {}]
  %s3 = inlined_call_operand.vmem [shape: f32[1,128], index: 3, kind: input, shape index: {}]
  %s4 = inlined_call_operand.vmem [shape: f32[1152,128], index: 4, kind: input, shape index: {}]
  %s5 = inlined_call_operand.vmem [shape: f32[1,128], index: 5, kind: input, shape index: {}]
  %s6 = inlined_call_operand.vmem [shape: f32[1,128], index: 6, kind: input, shape index: {}]
  %s7 = inlined_call_operand.vmem [shape: f32[2,16,16,128], index: 7, kind: output, shape index: {}]
  %s8 = sld [smem:[#allocation0]]
  $region61: #{c2f_forward.4} parent=0
    _
  %s10 = ssub.s32 1, %s8
  %s11 = scalar_select 0, %s10, %s8
  loop: start=0, step=1, limit=4
  $region2: #{c2f_forward.4} parent=0 // loop_pre_header
    _
  $region3: #{c2f_forward.4} parent=0 // loop_header
    %s13 = sphi 0, %s17
    %p14 = scmp.ge.s32.totalorder %s13, 4
    %s23 = sphi 0, %s25
    %s26 = sphi 0, %s23
    %s27 = sphi 0, %s26
    %s43 = sphi 0, %s27
    %s47 = sphi 0, %s47
    %s49 = sphi 0, %s47
    %s50 = sphi 0, %s49
    %s64 = sphi 0, %s50
    %s68 = sphi 0, %s68
    %s70 = sphi 0, %s68
    %s71 = sphi 0, %s70
    %s85 = sphi 0, %s71
    %s89 = sphi 0, %s89
    %s91 = sphi 0, %s89
    %s92 = sphi 0, %s91
    %s106 = sphi 0, %s92
    %s110 = sphi 0, %s110
    %s112 = sphi 0, %s110
    %s113 = sphi 0, %s112
    %s127 = sphi 0, %s113
    %s131 = sphi 0, %s131
    %s133 = sphi 0, %s131
    %s134 = sphi 0, %s133
    %s148 = sphi 0, %s134
    %s152 = sphi 0, %s152
    %s154 = sphi 0, %s152
    %s155 = sphi 0, %s154
    %s169 = sphi 0, %s155
    %s175 = sphi 0, %s177
    %s178 = sphi 0, %s175
    %s179 = sphi 0, %s178
    %s195 = sphi 0, %s179
  $region4: #{c2f_forward.4} parent=0 // loop_header_branch
    %16 = sbr.rel (%p14) target = $region8
  $region5: #{c2f_forward.4} parent=0 // loop_body
    %s18 = ssub.s32 %s13, 1
    %s19 = ssub.s32 %s13, 2
    %s20 = sadd.s32 %s13, 1
    %s21 = ssub.s32 %s13, %s20
    %p22 = scmp.eq.s32.totalorder %s21, 0
    %s24 = sadd.s32 %s23, 1
    %s25 = scalar_select %p22, %s23, %s24
    %p28 = pneg %p22
    %p29 = scmp.eq.s32.totalorder %s13, 1
    %p30 = por %p28, %p29
    %p31 = scmp.ne.s32.totalorder %s23, %s26
    %p32 = scmp.eq.s32.totalorder %s13, 0
    %p33 = por %p31, %p32
    %p34 = scmp.ne.s32.totalorder %s23, %s26
    %p35 = scmp.eq.s32.totalorder %s18, 1
    %p36 = por %p34, %p35
    %p37 = scmp.ne.s32.totalorder %s26, %s27
    %p38 = scmp.eq.s32.totalorder %s18, 0
    %p39 = por %p37, %p38
    %p40 = scmp.ne.s32.totalorder %s26, %s27
    %p41 = scmp.eq.s32.totalorder %s19, 1
    %p42 = por %p40, %p41
    %p44 = scmp.ne.s32.totalorder %s27, %s43
    %p45 = scmp.eq.s32.totalorder %s19, 0
    %p46 = por %p44, %p45
    %s48 = sadd.s32 %s47, 1
    %p51 = scmp.eq.s32.totalorder %s13, 1
    %p52 = scmp.ne.s32.totalorder %s47, %s49
    %p53 = scmp.eq.s32.totalorder %s13, 0
    %p54 = por %p52, %p53
    %p55 = scmp.ne.s32.totalorder %s47, %s49
    %p56 = scmp.eq.s32.totalorder %s18, 1
    %p57 = por %p55, %p56
    %p58 = scmp.ne.s32.totalorder %s49, %s50
    %p59 = scmp.eq.s32.totalorder %s18, 0
    %p60 = por %p58, %p59
    %p61 = scmp.ne.s32.totalorder %s49, %s50
    %p62 = scmp.eq.s32.totalorder %s19, 1
    %p63 = por %p61, %p62
    %p65 = scmp.ne.s32.totalorder %s50, %s64
    %p66 = scmp.eq.s32.totalorder %s19, 0
    %p67 = por %p65, %p66
    %s69 = sadd.s32 %s68, 1
    %p72 = scmp.eq.s32.totalorder %s13, 1
    %p73 = scmp.ne.s32.totalorder %s68, %s70
    %p74 = scmp.eq.s32.totalorder %s13, 0
    %p75 = por %p73, %p74
    %p76 = scmp.ne.s32.totalorder %s68, %s70
    %p77 = scmp.eq.s32.totalorder %s18, 1
    %p78 = por %p76, %p77
    %p79 = scmp.ne.s32.totalorder %s70, %s71
    %p80 = scmp.eq.s32.totalorder %s18, 0
    %p81 = por %p79, %p80
    %p82 = scmp.ne.s32.totalorder %s70, %s71
    %p83 = scmp.eq.s32.totalorder %s19, 1
    %p84 = por %p82, %p83
    %p86 = scmp.ne.s32.totalorder %s71, %s85
    %p87 = scmp.eq.s32.totalorder %s19, 0
    %p88 = por %p86, %p87
    %s90 = sadd.s32 %s89, 1
    %p93 = scmp.eq.s32.totalorder %s13, 1
    %p94 = scmp.ne.s32.totalorder %s89, %s91
    %p95 = scmp.eq.s32.totalorder %s13, 0
    %p96 = por %p94, %p95
    %p97 = scmp.ne.s32.totalorder %s89, %s91
    %p98 = scmp.eq.s32.totalorder %s18, 1
    %p99 = por %p97, %p98
    %p100 = scmp.ne.s32.totalorder %s91, %s92
    %p101 = scmp.eq.s32.totalorder %s18, 0
    %p102 = por %p100, %p101
    %p103 = scmp.ne.s32.totalorder %s91, %s92
    %p104 = scmp.eq.s32.totalorder %s19, 1
    %p105 = por %p103, %p104
    %p107 = scmp.ne.s32.totalorder %s92, %s106
    %p108 = scmp.eq.s32.totalorder %s19, 0
    %p109 = por %p107, %p108
    %s111 = sadd.s32 %s110, 1
    %p114 = scmp.eq.s32.totalorder %s13, 1
    %p115 = scmp.ne.s32.totalorder %s110, %s112
    %p116 = scmp.eq.s32.totalorder %s13, 0
    %p117 = por %p115, %p116
    %p118 = scmp.ne.s32.totalorder %s110, %s112
    %p119 = scmp.eq.s32.totalorder %s18, 1
    %p120 = por %p118, %p119
    %p121 = scmp.ne.s32.totalorder %s112, %s113
    %p122 = scmp.eq.s32.totalorder %s18, 0
    %p123 = por %p121, %p122
    %p124 = scmp.ne.s32.totalorder %s112, %s113
    %p125 = scmp.eq.s32.totalorder %s19, 1
    %p126 = por %p124, %p125
    %p128 = scmp.ne.s32.totalorder %s113, %s127
    %p129 = scmp.eq.s32.totalorder %s19, 0
    %p130 = por %p128, %p129
    %s132 = sadd.s32 %s131, 1
    %p135 = scmp.eq.s32.totalorder %s13, 1
    %p136 = scmp.ne.s32.totalorder %s131, %s133
    %p137 = scmp.eq.s32.totalorder %s13, 0
    %p138 = por %p136, %p137
    %p139 = scmp.ne.s32.totalorder %s131, %s133
    %p140 = scmp.eq.s32.totalorder %s18, 1
    %p141 = por %p139, %p140
    %p142 = scmp.ne.s32.totalorder %s133, %s134
    %p143 = scmp.eq.s32.totalorder %s18, 0
    %p144 = por %p142, %p143
    %p145 = scmp.ne.s32.totalorder %s133, %s134
    %p146 = scmp.eq.s32.totalorder %s19, 1
    %p147 = por %p145, %p146
    %p149 = scmp.ne.s32.totalorder %s134, %s148
    %p150 = scmp.eq.s32.totalorder %s19, 0
    %p151 = por %p149, %p150
    %s153 = sadd.s32 %s152, 1
    %p156 = scmp.eq.s32.totalorder %s13, 1
    %p157 = scmp.ne.s32.totalorder %s152, %s154
    %p158 = scmp.eq.s32.totalorder %s13, 0
    %p159 = por %p157, %p158
    %p160 = scmp.ne.s32.totalorder %s152, %s154
    %p161 = scmp.eq.s32.totalorder %s18, 1
    %p162 = por %p160, %p161
    %p163 = scmp.ne.s32.totalorder %s154, %s155
    %p164 = scmp.eq.s32.totalorder %s18, 0
    %p165 = por %p163, %p164
    %p166 = scmp.ne.s32.totalorder %s154, %s155
    %p167 = scmp.eq.s32.totalorder %s19, 1
    %p168 = por %p166, %p167
    %p170 = scmp.ne.s32.totalorder %s155, %s169
    %p171 = scmp.eq.s32.totalorder %s19, 0
    %p172 = por %p170, %p171
    %s173 = ssub.s32 %s13, %s20
    %p174 = scmp.eq.s32.totalorder %s173, 0
    %s176 = sadd.s32 %s175, 1
    %s177 = scalar_select %p174, %s175, %s176
    %p180 = pneg %p174
    %p181 = scmp.eq.s32.totalorder %s13, 1
    %p182 = por %p180, %p181
    %p183 = scmp.ne.s32.totalorder %s175, %s178
    %p184 = scmp.eq.s32.totalorder %s13, 0
    %p185 = por %p183, %p184
    %p186 = scmp.ne.s32.totalorder %s175, %s178
    %p187 = scmp.eq.s32.totalorder %s18, 1
    %p188 = por %p186, %p187
    %p189 = scmp.ne.s32.totalorder %s178, %s179
    %p190 = scmp.eq.s32.totalorder %s18, 0
    %p191 = por %p189, %p190
    %p192 = scmp.ne.s32.totalorder %s178, %s179
    %p193 = scmp.eq.s32.totalorder %s19, 1
    %p194 = por %p192, %p193
    %p196 = scmp.ne.s32.totalorder %s179, %s195
    %p197 = scmp.eq.s32.totalorder %s19, 0
    %p198 = por %p196, %p197
    %p199 = scmp.le.s32.totalorder 1, %s13
    %p200 = scmp.lt.s32.totalorder %s13, 3
    %p201 = pnand %p199, %p200
    %p202 = pneg %p201
    // Predicated region
    $region9: #{c2f_forward.4} parent=5 // pred_check
      _
    $region10: #{c2f_forward.4} parent=5 // pred_check_branch
      %204 = sbr.rel (%p201) target = $region12
    $region11: #{c2f_forward.4} parent=5 // pred_region
      %s205 = ssub.s32 %s13, 1
      // Predicated region
      $region13: #{c2f_forward.4} parent=11 // pred_check
        %p206 = pneg %p60
      $region14: #{c2f_forward.4} parent=11 // pred_check_branch
        %208 = sbr.rel (%p206) target = $region16
      $region15: #{c2f_forward.4} parent=11 // pred_region
        _
      $region16: #{c2f_forward.4} parent=11 // pred_fallthru
        _
      // Predicated region
      $region17: #{c2f_forward.4} parent=11 // pred_check
        %p209 = pneg %p81
      $region18: #{c2f_forward.4} parent=11 // pred_check_branch
        %211 = sbr.rel (%p209) target = $region20
      $region19: #{c2f_forward.4} parent=11 // pred_region
        _
      $region20: #{c2f_forward.4} parent=11 // pred_fallthru
        _
      // Predicated region
      $region21: #{c2f_forward.4} parent=11 // pred_check
        %p212 = pneg %p102
      $region22: #{c2f_forward.4} parent=11 // pred_check_branch
        %214 = sbr.rel (%p212) target = $region24
      $region23: #{c2f_forward.4} parent=11 // pred_region
        _
      $region24: #{c2f_forward.4} parent=11 // pred_fallthru
        _
      // Predicated region
      $region25: #{c2f_forward.4} parent=11 // pred_check
        %p215 = pneg %p123
      $region26: #{c2f_forward.4} parent=11 // pred_check_branch
        %217 = sbr.rel (%p215) target = $region28
      $region27: #{c2f_forward.4} parent=11 // pred_region
        _
      $region28: #{c2f_forward.4} parent=11 // pred_fallthru
        _
      // Predicated region
      $region29: #{c2f_forward.4} parent=11 // pred_check
        %p218 = pneg %p144
      $region30: #{c2f_forward.4} parent=11 // pred_check_branch
        %220 = sbr.rel (%p218) target = $region32
      $region31: #{c2f_forward.4} parent=11 // pred_region
        _
      $region32: #{c2f_forward.4} parent=11 // pred_fallthru
        _
      // Predicated region
      $region33: #{c2f_forward.4} parent=11 // pred_check
        %p221 = pneg %p165
      $region34: #{c2f_forward.4} parent=11 // pred_check_branch
        %223 = sbr.rel (%p221) target = $region36
      $region35: #{c2f_forward.4} parent=11 // pred_region
        _
      $region36: #{c2f_forward.4} parent=11 // pred_fallthru
        _
    $region12: #{c2f_forward.4} parent=5 // pred_fallthru
      _
    %p224 = scmp.lt.s32.totalorder %s13, 2
    // Predicated region
    $region37: #{c2f_forward.4} parent=5 // pred_check
      %p225 = pneg %p224
    $region38: #{c2f_forward.4} parent=5 // pred_check_branch
      %227 = sbr.rel (%p225) target = $region40
    $region39: #{c2f_forward.4} parent=5 // pred_region
      // Predicated region
      $region41: #{c2f_forward.4} parent=39 // pred_check
        %p228 = pneg %p33
      $region42: #{c2f_forward.4} parent=39 // pred_check_branch
        %230 = sbr.rel (%p228) target = $region44
      $region43: #{c2f_forward.4} parent=39 // pred_region
        %p231 = scmp.lt.s32.totalorder %s13, 1
        %s232 = scalar_select %p231, %s13, 1
        %s233 = smul.addr %s232, 54
        %s234 = smul.addr %s233, 8
        %s235 = scalar_lea.vmem %s0, %s234
      $region44: #{c2f_forward.4} parent=39 // pred_fallthru
        _
    $region40: #{c2f_forward.4} parent=5 // pred_fallthru
      _
    %p236 = scmp.le.s32.totalorder 1, %s13
    %p237 = scmp.lt.s32.totalorder %s13, 3
    %p238 = pnand %p236, %p237
    %p239 = pneg %p238
    // Predicated region
    $region45: #{c2f_forward.4} parent=5 // pred_check
      _
    $region46: #{c2f_forward.4} parent=5 // pred_check_branch
      %241 = sbr.rel (%p238) target = $region48
    $region47: #{c2f_forward.4} parent=5 // pred_region
      %s242 = ssub.s32 %s13, 1
      %p243 = scmp.lt.s32.totalorder %s18, 1
      %s244 = scalar_select %p243, %s18, 1
      %s245 = smul.addr %s244, 54
      %s246 = smul.addr %s245, 8
      %s247 = scalar_lea.vmem %s0, %s246
      %p248 = pneg %p39
      %p249 = pneg %p36
      %p250 = pneg %p60
      %p251 = pneg %p57
      %p252 = pneg %p81
      %p253 = pneg %p78
      %p254 = pneg %p102
      %p255 = pneg %p99
      %p256 = pneg %p123
      %p257 = pneg %p120
      %p258 = pneg %p144
      %p259 = pneg %p141
      %p260 = pneg %p165
      %p261 = pneg %p162
      %p262 = pneg %p191
      %p263 = pneg %p188
      %p264 = scmp.lt.s32.totalorder %s18, 1
      %s265 = scalar_select %p264, %s18, 1
      %s266 = smul.addr %s265, 32
      %s267 = smul.addr %s266, 8
      %s268 = scalar_lea.vmem %s7, %s267
      %p269 = scmp.lt.s32.totalorder %s18, 1
      %s270 = scalar_select %p269, %s18, 1
      %s271 = smul.addr %s270, 54
      %s272 = smul.addr %s271, 8
      %s273 = scalar_lea.vmem %s0, %s272
      %p274 = scmp.lt.s32.totalorder %s18, 1
      %s275 = scalar_select %p274, %s18, 1
      %s276 = smul.addr %s275, 32
      %s277 = smul.addr %s276, 8
      %s278 = scalar_lea.vmem %s7, %s277
      %v279 = vld [vmem:[%s273] sm:$0xff]
      %v280 = vld [vmem:[%s273 + $0x8] sm:$0xff]
      %v281 = vld [vmem:[%s273 + $0x10] sm:$0x3]
      %v282 = vld [vmem:[%s273 + $0x18] sm:$0xff]
      %v283 = vld [vmem:[%s273 + $0x20] sm:$0xff]
      %v284 = vld [vmem:[%s273 + $0x28] sm:$0x3]
      %v285 = vld [vmem:[%s273 + $0x30] sm:$0xff]
      %v286 = vld [vmem:[%s273 + $0x38] sm:$0xff]
      %v287 = vld [vmem:[%s273 + $0x40] sm:$0x3]
      %v288 = vld [vmem:[%s273 + $0x48] sm:$0xff]
      %v289 = vld [vmem:[%s273 + $0x50] sm:$0xff]
      %v290 = vld [vmem:[%s273 + $0x58] sm:$0x3]
      %v291 = vld [vmem:[%s273 + $0x60] sm:$0xff]
      %v292 = vld [vmem:[%s273 + $0x68] sm:$0xff]
      %v293 = vld [vmem:[%s273 + $0x70] sm:$0x3]
      %v294 = vld [vmem:[%s273 + $0x78] sm:$0xff]
      %v295 = vld [vmem:[%s273 + $0x80] sm:$0xff]
      %v296 = vld [vmem:[%s273 + $0x88] sm:$0x3]
      %v297 = vld [vmem:[%s273 + $0x90] sm:$0xff]
      %v298 = vld [vmem:[%s273 + $0x98] sm:$0xff]
      %v299 = vld [vmem:[%s273 + $0xa0] sm:$0x3]
      %v300 = vld [vmem:[%s273 + $0xa8] sm:$0xff]
      %v301 = vld [vmem:[%s273 + $0xb0] sm:$0xff]
      %v302 = vld [vmem:[%s273 + $0xb8] sm:$0x3]
      %v303 = vld [vmem:[%s273 + $0xc0] sm:$0xff]
      %v304 = vld [vmem:[%s273 + $0xc8] sm:$0xff]
      %v305 = vld [vmem:[%s273 + $0xd0] sm:$0x3]
      %v306 = vld [vmem:[%s273 + $0xd8] sm:$0xff]
      %v307 = vld [vmem:[%s273 + $0xe0] sm:$0xff]
      %v308 = vld [vmem:[%s273 + $0xe8] sm:$0x3]
      %v309 = vld [vmem:[%s273 + $0xf0] sm:$0xff]
      %v310 = vld [vmem:[%s273 + $0xf8] sm:$0xff]
      %v311 = vld [vmem:[%s273 + $0x100] sm:$0x3]
      %v312 = vld [vmem:[%s273 + $0x108] sm:$0xff]
      %v313 = vld [vmem:[%s273 + $0x110] sm:$0xff]
      %v314 = vld [vmem:[%s273 + $0x118] sm:$0x3]
      %v315 = vld [vmem:[%s273 + $0x120] sm:$0xff]
      %v316 = vld [vmem:[%s273 + $0x128] sm:$0xff]
      %v317 = vld [vmem:[%s273 + $0x130] sm:$0x3]
      %v318 = vld [vmem:[%s273 + $0x138] sm:$0xff]
      %v319 = vld [vmem:[%s273 + $0x140] sm:$0xff]
      %v320 = vld [vmem:[%s273 + $0x148] sm:$0x3]
      %v321 = vld [vmem:[%s273 + $0x150] sm:$0xff]
      %v322 = vld [vmem:[%s273 + $0x158] sm:$0xff]
      %v323 = vld [vmem:[%s273 + $0x160] sm:$0x3]
      %v324 = vld [vmem:[%s273 + $0x168] sm:$0xff]
      %v325 = vld [vmem:[%s273 + $0x170] sm:$0xff]
      %v326 = vld [vmem:[%s273 + $0x178] sm:$0x3]
      %v327 = vld [vmem:[%s273 + $0x180] sm:$0xff]
      %v328 = vld [vmem:[%s273 + $0x188] sm:$0xff]
      %v329 = vld [vmem:[%s273 + $0x190] sm:$0x3]
      %v330 = vld [vmem:[%s273 + $0x198] sm:$0xff]
      %v331 = vld [vmem:[%s273 + $0x1a0] sm:$0xff]
      %v332 = vld [vmem:[%s273 + $0x1a8] sm:$0x3]
      %vm381 = vcmask 1046528
      %v382 = vrot.slane %v279, 1
      %v383 = vrot.slane %v280, 1
      %v384 = vsel %vm381, %v382, %v383
      %v385 = vrot.slane %v281, 1
      %v386 = vsel %vm381, %v383, %v385
      %v387 = vrot.slane %v282, 1
      %v388 = vrot.slane %v283, 1
      %v389 = vsel %vm381, %v387, %v388
      %v390 = vrot.slane %v284, 1
      %v391 = vsel %vm381, %v388, %v390
      %v392 = vrot.slane %v285, 1
      %v393 = vrot.slane %v286, 1
      %v394 = vsel %vm381, %v392, %v393
      %v395 = vrot.slane %v287, 1
      %v396 = vsel %vm381, %v393, %v395
      %v397 = vrot.slane %v288, 1
      %v398 = vrot.slane %v289, 1
      %v399 = vsel %vm381, %v397, %v398
      %v400 = vrot.slane %v290, 1
      %v401 = vsel %vm381, %v398, %v400
      %v402 = vrot.slane %v291, 1
      %v403 = vrot.slane %v292, 1
      %v404 = vsel %vm381, %v402, %v403
      %v405 = vrot.slane %v293, 1
      %v406 = vsel %vm381, %v403, %v405
      %v407 = vrot.slane %v294, 1
      %v408 = vrot.slane %v295, 1
      %v409 = vsel %vm381, %v407, %v408
      %v410 = vrot.slane %v296, 1
      %v411 = vsel %vm381, %v408, %v410
      %v412 = vrot.slane %v297, 1
      %v413 = vrot.slane %v298, 1
      %v414 = vsel %vm381, %v412, %v413
      %v415 = vrot.slane %v299, 1
      %v416 = vsel %vm381, %v413, %v415
      %v417 = vrot.slane %v300, 1
      %v418 = vrot.slane %v301, 1
      %v419 = vsel %vm381, %v417, %v418
      %v420 = vrot.slane %v302, 1
      %v421 = vsel %vm381, %v418, %v420
      %v422 = vrot.slane %v303, 1
      %v423 = vrot.slane %v304, 1
      %v424 = vsel %vm381, %v422, %v423
      %v425 = vrot.slane %v305, 1
      %v426 = vsel %vm381, %v423, %v425
      %v427 = vrot.slane %v306, 1
      %v428 = vrot.slane %v307, 1
      %v429 = vsel %vm381, %v427, %v428
      %v430 = vrot.slane %v308, 1
      %v431 = vsel %vm381, %v428, %v430
      %v432 = vrot.slane %v309, 1
      %v433 = vrot.slane %v310, 1
      %v434 = vsel %vm381, %v432, %v433
      %v435 = vrot.slane %v311, 1
      %v436 = vsel %vm381, %v433, %v435
      %v437 = vrot.slane %v312, 1
      %v438 = vrot.slane %v313, 1
      %v439 = vsel %vm381, %v437, %v438
      %v440 = vrot.slane %v314, 1
      %v441 = vsel %vm381, %v438, %v440
      %v442 = vrot.slane %v315, 1
      %v443 = vrot.slane %v316, 1
      %v444 = vsel %vm381, %v442, %v443
      %v445 = vrot.slane %v317, 1
      %v446 = vsel %vm381, %v443, %v445
      %v447 = vrot.slane %v318, 1
      %v448 = vrot.slane %v319, 1
      %v449 = vsel %vm381, %v447, %v448
      %v450 = vrot.slane %v320, 1
      %v451 = vsel %vm381, %v448, %v450
      %v452 = vrot.slane %v321, 1
      %v453 = vrot.slane %v322, 1
      %v454 = vsel %vm381, %v452, %v453
      %v455 = vrot.slane %v323, 1
      %v456 = vsel %vm381, %v453, %v455
      %v457 = vrot.slane %v324, 1
      %v458 = vrot.slane %v325, 1
      %v459 = vsel %vm381, %v457, %v458
      %v460 = vrot.slane %v326, 1
      %v461 = vsel %vm381, %v458, %v460
      %vm494 = vcmask 1045504
      %v495 = vrot.slane %v279, 2
      %v496 = vrot.slane %v280, 2
      %v497 = vsel %vm494, %v495, %v496
      %v498 = vrot.slane %v281, 2
      %v499 = vsel %vm494, %v496, %v498
      %v500 = vrot.slane %v282, 2
      %v501 = vrot.slane %v283, 2
      %v502 = vsel %vm494, %v500, %v501
      %v503 = vrot.slane %v284, 2
      %v504 = vsel %vm494, %v501, %v503
      %v505 = vrot.slane %v285, 2
      %v506 = vrot.slane %v286, 2
      %v507 = vsel %vm494, %v505, %v506
      %v508 = vrot.slane %v287, 2
      %v509 = vsel %vm494, %v506, %v508
      %v510 = vrot.slane %v288, 2
      %v511 = vrot.slane %v289, 2
      %v512 = vsel %vm494, %v510, %v511
      %v513 = vrot.slane %v290, 2
      %v514 = vsel %vm494, %v511, %v513
      %v515 = vrot.slane %v291, 2
      %v516 = vrot.slane %v292, 2
      %v517 = vsel %vm494, %v515, %v516
      %v518 = vrot.slane %v293, 2
      %v519 = vsel %vm494, %v516, %v518
      %v520 = vrot.slane %v294, 2
      %v521 = vrot.slane %v295, 2
      %v522 = vsel %vm494, %v520, %v521
      %v523 = vrot.slane %v296, 2
      %v524 = vsel %vm494, %v521, %v523
      %v525 = vrot.slane %v297, 2
      %v526 = vrot.slane %v298, 2
      %v527 = vsel %vm494, %v525, %v526
      %v528 = vrot.slane %v299, 2
      %v529 = vsel %vm494, %v526, %v528
      %v530 = vrot.slane %v300, 2
      %v531 = vrot.slane %v301, 2
      %v532 = vsel %vm494, %v530, %v531
      %v533 = vrot.slane %v302, 2
      %v534 = vsel %vm494, %v531, %v533
      %v535 = vrot.slane %v303, 2
      %v536 = vrot.slane %v304, 2
      %v537 = vsel %vm494, %v535, %v536
      %v538 = vrot.slane %v305, 2
      %v539 = vsel %vm494, %v536, %v538
      %v540 = vrot.slane %v306, 2
      %v541 = vrot.slane %v307, 2
      %v542 = vsel %vm494, %v540, %v541
      %v543 = vrot.slane %v308, 2
      %v544 = vsel %vm494, %v541, %v543
      %v545 = vrot.slane %v309, 2
      %v546 = vrot.slane %v310, 2
      %v547 = vsel %vm494, %v545, %v546
      %v548 = vrot.slane %v311, 2
      %v549 = vsel %vm494, %v546, %v548
      %v550 = vrot.slane %v312, 2
      %v551 = vrot.slane %v313, 2
      %v552 = vsel %vm494, %v550, %v551
      %v553 = vrot.slane %v314, 2
      %v554 = vsel %vm494, %v551, %v553
      %v555 = vrot.slane %v315, 2
      %v556 = vrot.slane %v316, 2
      %v557 = vsel %vm494, %v555, %v556
      %v558 = vrot.slane %v317, 2
      %v559 = vsel %vm494, %v556, %v558
      %v560 = vrot.slane %v318, 2
      %v561 = vrot.slane %v319, 2
      %v562 = vsel %vm494, %v560, %v561
      %v563 = vrot.slane %v320, 2
      %v564 = vsel %vm494, %v561, %v563
      %v565 = vrot.slane %v321, 2
      %v566 = vrot.slane %v322, 2
      %v567 = vsel %vm494, %v565, %v566
      %v568 = vrot.slane %v323, 2
      %v569 = vsel %vm494, %v566, %v568
      %v570 = vrot.slane %v324, 2
      %v571 = vrot.slane %v325, 2
      %v572 = vsel %vm494, %v570, %v571
      %v573 = vrot.slane %v326, 2
      %v574 = vsel %vm494, %v571, %v573
      %v610 = vrot.slane %v327, 1
      %v611 = vrot.slane %v328, 1
      %v612 = vsel %vm381, %v610, %v611
      %v613 = vrot.slane %v329, 1
      %v614 = vsel %vm381, %v611, %v613
      %v617 = vrot.slane %v327, 2
      %v618 = vrot.slane %v328, 2
      %v619 = vsel %vm494, %v617, %v618
      %v620 = vrot.slane %v329, 2
      %v621 = vsel %vm494, %v618, %v620
      %v627 = vrot.slane %v330, 1
      %v628 = vrot.slane %v331, 1
      %v629 = vsel %vm381, %v627, %v628
      %v630 = vrot.slane %v332, 1
      %v631 = vsel %vm381, %v628, %v630
      %v634 = vrot.slane %v330, 2
      %v635 = vrot.slane %v331, 2
      %v636 = vsel %vm494, %v634, %v635
      %v637 = vrot.slane %v332, 2
      %v638 = vsel %vm494, %v635, %v637
      %v641 = vld [vmem:[%s1] sm:$0xff]
      %v642 = vld [vmem:[%s1 + $0x8] sm:$0xff]
      %v643 = vld [vmem:[%s1 + $0x10] sm:$0xff]
      %v644 = vld [vmem:[%s1 + $0x18] sm:$0xff]
      %v645 = vld [vmem:[%s1 + $0x20] sm:$0xff]
      %v646 = vld [vmem:[%s1 + $0x28] sm:$0xff]
      %v647 = vld [vmem:[%s1 + $0x30] sm:$0xff]
      %v648 = vld [vmem:[%s1 + $0x38] sm:$0xff]
      %v649 = vld [vmem:[%s1 + $0x40] sm:$0xff]
      %v650 = vld [vmem:[%s1 + $0x48] sm:$0xff]
      %v651 = vld [vmem:[%s1 + $0x50] sm:$0xff]
      %v652 = vld [vmem:[%s1 + $0x58] sm:$0xff]
      %v653 = vld [vmem:[%s1 + $0x60] sm:$0xff]
      %v654 = vld [vmem:[%s1 + $0x68] sm:$0xff]
      %v655 = vld [vmem:[%s1 + $0x70] sm:$0xff]
      %v656 = vld [vmem:[%s1 + $0x78] sm:$0xff]
      %v657 = vld [vmem:[%s1 + $0x80] sm:$0xff]
      %v658 = vld [vmem:[%s1 + $0x88] sm:$0xff]
      %v659 = vld [vmem:[%s1 + $0x90] sm:$0xff]
      %v660 = vld [vmem:[%s1 + $0x98] sm:$0xff]
      %v661 = vld [vmem:[%s1 + $0xa0] sm:$0xff]
      %v662 = vld [vmem:[%s1 + $0xa8] sm:$0xff]
      %v663 = vld [vmem:[%s1 + $0xb0] sm:$0xff]
      %v664 = vld [vmem:[%s1 + $0xb8] sm:$0xff]
      %v665 = vld [vmem:[%s1 + $0xc0] sm:$0xff]
      %v666 = vld [vmem:[%s1 + $0xc8] sm:$0xff]
      %v667 = vld [vmem:[%s1 + $0xd0] sm:$0xff]
      %v668 = vld [vmem:[%s1 + $0xd8] sm:$0xff]
      %v669 = vld [vmem:[%s1 + $0xe0] sm:$0xff]
      %v670 = vld [vmem:[%s1 + $0xe8] sm:$0xff]
      %v671 = vld [vmem:[%s1 + $0xf0] sm:$0xff]
      %v672 = vld [vmem:[%s1 + $0xf8] sm:$0xff]
      %v673 = vld [vmem:[%s1 + $0x100] sm:$0xff]
      %v674 = vld [vmem:[%s1 + $0x108] sm:$0xff]
      %v675 = vld [vmem:[%s1 + $0x110] sm:$0xff]
      %v676 = vld [vmem:[%s1 + $0x118] sm:$0xff]
      %v677 = vld [vmem:[%s1 + $0x120] sm:$0xff]
      %v678 = vld [vmem:[%s1 + $0x128] sm:$0xff]
      %v679 = vld [vmem:[%s1 + $0x130] sm:$0xff]
      %v680 = vld [vmem:[%s1 + $0x138] sm:$0xff]
      %v681 = vld [vmem:[%s1 + $0x140] sm:$0xff]
      %v682 = vld [vmem:[%s1 + $0x148] sm:$0xff]
      %v683 = vld [vmem:[%s1 + $0x150] sm:$0xff]
      %v684 = vld [vmem:[%s1 + $0x158] sm:$0xff]
      %v685 = vld [vmem:[%s1 + $0x160] sm:$0xff]
      %v686 = vld [vmem:[%s1 + $0x168] sm:$0xff]
      %v687 = vld [vmem:[%s1 + $0x170] sm:$0xff]
      %v688 = vld [vmem:[%s1 + $0x178] sm:$0xff]
      %v689 = vld [vmem:[%s1 + $0x180] sm:$0xff]
      %v690 = vld [vmem:[%s1 + $0x188] sm:$0xff]
      %v691 = vld [vmem:[%s1 + $0x190] sm:$0xff]
      %v692 = vld [vmem:[%s1 + $0x198] sm:$0xff]
      %v693 = vld [vmem:[%s1 + $0x1a0] sm:$0xff]
      %v694 = vld [vmem:[%s1 + $0x1a8] sm:$0xff]
      %v695 = vld [vmem:[%s1 + $0x1b0] sm:$0xff]
      %v696 = vld [vmem:[%s1 + $0x1b8] sm:$0xff]
      %v697 = vld [vmem:[%s1 + $0x1c0] sm:$0xff]
      %v698 = vld [vmem:[%s1 + $0x1c8] sm:$0xff]
      %v699 = vld [vmem:[%s1 + $0x1d0] sm:$0xff]
      %v700 = vld [vmem:[%s1 + $0x1d8] sm:$0xff]
      %v701 = vld [vmem:[%s1 + $0x1e0] sm:$0xff]
      %v702 = vld [vmem:[%s1 + $0x1e8] sm:$0xff]
      %v703 = vld [vmem:[%s1 + $0x1f0] sm:$0xff]
      %v704 = vld [vmem:[%s1 + $0x1f8] sm:$0xff]
      %v705 = vld [vmem:[%s1 + $0x200] sm:$0xff]
      %v706 = vld [vmem:[%s1 + $0x208] sm:$0xff]
      %v707 = vld [vmem:[%s1 + $0x210] sm:$0xff]
      %v708 = vld [vmem:[%s1 + $0x218] sm:$0xff]
      %v709 = vld [vmem:[%s1 + $0x220] sm:$0xff]
      %v710 = vld [vmem:[%s1 + $0x228] sm:$0xff]
      %v711 = vld [vmem:[%s1 + $0x230] sm:$0xff]
      %v712 = vld [vmem:[%s1 + $0x238] sm:$0xff]
      %v713 = vld [vmem:[%s1 + $0x240] sm:$0xff]
      %v714 = vld [vmem:[%s1 + $0x248] sm:$0xff]
      %v715 = vld [vmem:[%s1 + $0x250] sm:$0xff]
      %v716 = vld [vmem:[%s1 + $0x258] sm:$0xff]
      %v717 = vld [vmem:[%s1 + $0x260] sm:$0xff]
      %v718 = vld [vmem:[%s1 + $0x268] sm:$0xff]
      %v719 = vld [vmem:[%s1 + $0x270] sm:$0xff]
      %v720 = vld [vmem:[%s1 + $0x278] sm:$0xff]
      %v721 = vld [vmem:[%s1 + $0x280] sm:$0xff]
      %v722 = vld [vmem:[%s1 + $0x288] sm:$0xff]
      %v723 = vld [vmem:[%s1 + $0x290] sm:$0xff]
      %v724 = vld [vmem:[%s1 + $0x298] sm:$0xff]
      %v725 = vld [vmem:[%s1 + $0x2a0] sm:$0xff]
      %v726 = vld [vmem:[%s1 + $0x2a8] sm:$0xff]
      %v727 = vld [vmem:[%s1 + $0x2b0] sm:$0xff]
      %v728 = vld [vmem:[%s1 + $0x2b8] sm:$0xff]
      %v729 = vld [vmem:[%s1 + $0x2c0] sm:$0xff]
      %v730 = vld [vmem:[%s1 + $0x2c8] sm:$0xff]
      %v731 = vld [vmem:[%s1 + $0x2d0] sm:$0xff]
      %v732 = vld [vmem:[%s1 + $0x2d8] sm:$0xff]
      %v733 = vld [vmem:[%s1 + $0x2e0] sm:$0xff]
      %v734 = vld [vmem:[%s1 + $0x2e8] sm:$0xff]
      %v735 = vld [vmem:[%s1 + $0x2f0] sm:$0xff]
      %v736 = vld [vmem:[%s1 + $0x2f8] sm:$0xff]
      %v737 = vld [vmem:[%s1 + $0x300] sm:$0xff]
      %v738 = vld [vmem:[%s1 + $0x308] sm:$0xff]
      %v739 = vld [vmem:[%s1 + $0x310] sm:$0xff]
      %v740 = vld [vmem:[%s1 + $0x318] sm:$0xff]
      %v741 = vld [vmem:[%s1 + $0x320] sm:$0xff]
      %v742 = vld [vmem:[%s1 + $0x328] sm:$0xff]
      %v743 = vld [vmem:[%s1 + $0x330] sm:$0xff]
      %v744 = vld [vmem:[%s1 + $0x338] sm:$0xff]
      %v745 = vld [vmem:[%s1 + $0x340] sm:$0xff]
      %v746 = vld [vmem:[%s1 + $0x348] sm:$0xff]
      %v747 = vld [vmem:[%s1 + $0x350] sm:$0xff]
      %v748 = vld [vmem:[%s1 + $0x358] sm:$0xff]
      %v749 = vld [vmem:[%s1 + $0x360] sm:$0xff]
      %v750 = vld [vmem:[%s1 + $0x368] sm:$0xff]
      %v751 = vld [vmem:[%s1 + $0x370] sm:$0xff]
      %v752 = vld [vmem:[%s1 + $0x378] sm:$0xff]
      %v753 = vld [vmem:[%s1 + $0x380] sm:$0xff]
      %v754 = vld [vmem:[%s1 + $0x388] sm:$0xff]
      %v755 = vld [vmem:[%s1 + $0x390] sm:$0xff]
      %v756 = vld [vmem:[%s1 + $0x398] sm:$0xff]
      %v757 = vld [vmem:[%s1 + $0x3a0] sm:$0xff]
      %v758 = vld [vmem:[%s1 + $0x3a8] sm:$0xff]
      %v759 = vld [vmem:[%s1 + $0x3b0] sm:$0xff]
      %v760 = vld [vmem:[%s1 + $0x3b8] sm:$0xff]
      %v761 = vld [vmem:[%s1 + $0x3c0] sm:$0xff]
      %v762 = vld [vmem:[%s1 + $0x3c8] sm:$0xff]
      %v763 = vld [vmem:[%s1 + $0x3d0] sm:$0xff]
      %v764 = vld [vmem:[%s1 + $0x3d8] sm:$0xff]
      %v765 = vld [vmem:[%s1 + $0x3e0] sm:$0xff]
      %v766 = vld [vmem:[%s1 + $0x3e8] sm:$0xff]
      %v767 = vld [vmem:[%s1 + $0x3f0] sm:$0xff]
      %v768 = vld [vmem:[%s1 + $0x3f8] sm:$0xff]
      %v769 = vld [vmem:[%s1 + $0x400] sm:$0xff]
      %v770 = vld [vmem:[%s1 + $0x408] sm:$0xff]
      %v771 = vld [vmem:[%s1 + $0x410] sm:$0xff]
      %v772 = vld [vmem:[%s1 + $0x418] sm:$0xff]
      %v773 = vld [vmem:[%s1 + $0x420] sm:$0xff]
      %v774 = vld [vmem:[%s1 + $0x428] sm:$0xff]
      %v775 = vld [vmem:[%s1 + $0x430] sm:$0xff]
      %v776 = vld [vmem:[%s1 + $0x438] sm:$0xff]
      %v777 = vld [vmem:[%s1 + $0x440] sm:$0xff]
      %v778 = vld [vmem:[%s1 + $0x448] sm:$0xff]
      %v779 = vld [vmem:[%s1 + $0x450] sm:$0xff]
      %v780 = vld [vmem:[%s1 + $0x458] sm:$0xff]
      %v781 = vld [vmem:[%s1 + $0x460] sm:$0xff]
      %v782 = vld [vmem:[%s1 + $0x468] sm:$0xff]
      %v783 = vld [vmem:[%s1 + $0x470] sm:$0xff]
      %v784 = vld [vmem:[%s1 + $0x478] sm:$0xff]
      %785 = vmatpush.msra.mxu0 %v656
      %786 = vmatpush.msra.mxu0 %v655
      %787 = vmatpush.msra.mxu0 %v654
      %788 = vmatpush.msra.mxu0 %v653
      %789 = vmatpush.msra.mxu0 %v652
      %790 = vmatpush.msra.mxu0 %v651
      %791 = vmatpush.msra.mxu0 %v650
      %792 = vmatpush.msra.mxu0 %v649
      %793 = vmatpush.msra.mxu0 %v648
      %794 = vmatpush.msra.mxu0 %v647
      %795 = vmatpush.msra.mxu0 %v646
      %796 = vmatpush.msra.mxu0 %v645
      %797 = vmatpush.msra.mxu0 %v644
      %798 = vmatpush.msra.mxu0 %v643
      %799 = vmatpush.msra.mxu0 %v642
      %800 = vmatpush.msra.mxu0 %v641
      %801 = vmatmul.f32.gmra.mxu0 %v279
      %v802 = vpop.f32.mrf.mxu0
      %v803 = vadd.f32 0.0, %v802
      %804 = vmatmul.f32.gmra.mxu0 %v280
      %v805 = vpop.f32.mrf.mxu0
      %v806 = vadd.f32 0.0, %v805
      %807 = vmatmul.f32.gmra.mxu0 %v282
      %v808 = vpop.f32.mrf.mxu0
      %v809 = vadd.f32 0.0, %v808
      %810 = vmatmul.f32.gmra.mxu0 %v283
      %v811 = vpop.f32.mrf.mxu0
      %v812 = vadd.f32 0.0, %v811
      %813 = vmatmul.f32.gmra.mxu0 %v285
      %v814 = vpop.f32.mrf.mxu0
      %v815 = vadd.f32 0.0, %v814
      %816 = vmatmul.f32.gmra.mxu0 %v286
      %v817 = vpop.f32.mrf.mxu0
      %v818 = vadd.f32 0.0, %v817
      %819 = vmatmul.f32.gmra.mxu0 %v288
      %v820 = vpop.f32.mrf.mxu0
      %v821 = vadd.f32 0.0, %v820
      %822 = vmatmul.f32.gmra.mxu0 %v289
      %v823 = vpop.f32.mrf.mxu0
      %v824 = vadd.f32 0.0, %v823
      %825 = vmatmul.f32.gmra.mxu0 %v291
      %v826 = vpop.f32.mrf.mxu0
      %v827 = vadd.f32 0.0, %v826
      %828 = vmatmul.f32.gmra.mxu0 %v292
      %v829 = vpop.f32.mrf.mxu0
      %v830 = vadd.f32 0.0, %v829
      %831 = vmatmul.f32.gmra.mxu0 %v294
      %v832 = vpop.f32.mrf.mxu0
      %v833 = vadd.f32 0.0, %v832
      %834 = vmatmul.f32.gmra.mxu0 %v295
      %v835 = vpop.f32.mrf.mxu0
      %v836 = vadd.f32 0.0, %v835
      %837 = vmatmul.f32.gmra.mxu0 %v297
      %v838 = vpop.f32.mrf.mxu0
      %v839 = vadd.f32 0.0, %v838
      %840 = vmatmul.f32.gmra.mxu0 %v298
      %v841 = vpop.f32.mrf.mxu0
      %v842 = vadd.f32 0.0, %v841
      %843 = vmatmul.f32.gmra.mxu0 %v300
      %v844 = vpop.f32.mrf.mxu0
      %v845 = vadd.f32 0.0, %v844
      %846 = vmatmul.f32.gmra.mxu0 %v301
      %v847 = vpop.f32.mrf.mxu0
      %v848 = vadd.f32 0.0, %v847
      %849 = vmatmul.f32.gmra.mxu0 %v303
      %v850 = vpop.f32.mrf.mxu0
      %v851 = vadd.f32 0.0, %v850
      %852 = vmatmul.f32.gmra.mxu0 %v304
      %v853 = vpop.f32.mrf.mxu0
      %v854 = vadd.f32 0.0, %v853
      %855 = vmatmul.f32.gmra.mxu0 %v306
      %v856 = vpop.f32.mrf.mxu0
      %v857 = vadd.f32 0.0, %v856
      %858 = vmatmul.f32.gmra.mxu0 %v307
      %v859 = vpop.f32.mrf.mxu0
      %v860 = vadd.f32 0.0, %v859
      %861 = vmatmul.f32.gmra.mxu0 %v309
      %v862 = vpop.f32.mrf.mxu0
      %v863 = vadd.f32 0.0, %v862
      %864 = vmatmul.f32.gmra.mxu0 %v310
      %v865 = vpop.f32.mrf.mxu0
      %v866 = vadd.f32 0.0, %v865
      %867 = vmatmul.f32.gmra.mxu0 %v312
      %v868 = vpop.f32.mrf.mxu0
      %v869 = vadd.f32 0.0, %v868
      %870 = vmatmul.f32.gmra.mxu0 %v313
      %v871 = vpop.f32.mrf.mxu0
      %v872 = vadd.f32 0.0, %v871
      %873 = vmatmul.f32.gmra.mxu0 %v315
      %v874 = vpop.f32.mrf.mxu0
      %v875 = vadd.f32 0.0, %v874
      %876 = vmatmul.f32.gmra.mxu0 %v316
      %v877 = vpop.f32.mrf.mxu0
      %v878 = vadd.f32 0.0, %v877
      %879 = vmatmul.f32.gmra.mxu0 %v318
      %v880 = vpop.f32.mrf.mxu0
      %v881 = vadd.f32 0.0, %v880
      %882 = vmatmul.f32.gmra.mxu0 %v319
      %v883 = vpop.f32.mrf.mxu0
      %v884 = vadd.f32 0.0, %v883
      %885 = vmatmul.f32.gmra.mxu0 %v321
      %v886 = vpop.f32.mrf.mxu0
      %v887 = vadd.f32 0.0, %v886
      %888 = vmatmul.f32.gmra.mxu0 %v322
      %v889 = vpop.f32.mrf.mxu0
      %v890 = vadd.f32 0.0, %v889
      %891 = vmatmul.f32.gmra.mxu0 %v324
      %v892 = vpop.f32.mrf.mxu0
      %v893 = vadd.f32 0.0, %v892
      %894 = vmatmul.f32.gmra.mxu0 %v325
      %v895 = vpop.f32.mrf.mxu0
      %v896 = vadd.f32 0.0, %v895
      %897 = vdwg.mxu0
      %898 = vmatpush.msra.mxu0 %v672
      %899 = vmatpush.msra.mxu0 %v671
      %900 = vmatpush.msra.mxu0 %v670
      %901 = vmatpush.msra.mxu0 %v669
      %902 = vmatpush.msra.mxu0 %v668
      %903 = vmatpush.msra.mxu0 %v667
      %904 = vmatpush.msra.mxu0 %v666
      %905 = vmatpush.msra.mxu0 %v665
      %906 = vmatpush.msra.mxu0 %v664
      %907 = vmatpush.msra.mxu0 %v663
      %908 = vmatpush.msra.mxu0 %v662
      %909 = vmatpush.msra.mxu0 %v661
      %910 = vmatpush.msra.mxu0 %v660
      %911 = vmatpush.msra.mxu0 %v659
      %912 = vmatpush.msra.mxu0 %v658
      %913 = vmatpush.msra.mxu0 %v657
      %914 = vmatmul.f32.gmra.mxu0 %v384
      %v915 = vpop.f32.mrf.mxu0
      %v916 = vadd.f32 %v803, %v915
      %917 = vmatmul.f32.gmra.mxu0 %v386
      %v918 = vpop.f32.mrf.mxu0
      %v919 = vadd.f32 %v806, %v918
      %920 = vmatmul.f32.gmra.mxu0 %v389
      %v921 = vpop.f32.mrf.mxu0
      %v922 = vadd.f32 %v809, %v921
      %923 = vmatmul.f32.gmra.mxu0 %v391
      %v924 = vpop.f32.mrf.mxu0
      %v925 = vadd.f32 %v812, %v924
      %926 = vmatmul.f32.gmra.mxu0 %v394
      %v927 = vpop.f32.mrf.mxu0
      %v928 = vadd.f32 %v815, %v927
      %929 = vmatmul.f32.gmra.mxu0 %v396
      %v930 = vpop.f32.mrf.mxu0
      %v931 = vadd.f32 %v818, %v930
      %932 = vmatmul.f32.gmra.mxu0 %v399
      %v933 = vpop.f32.mrf.mxu0
      %v934 = vadd.f32 %v821, %v933
      %935 = vmatmul.f32.gmra.mxu0 %v401
      %v936 = vpop.f32.mrf.mxu0
      %v937 = vadd.f32 %v824, %v936
      %938 = vmatmul.f32.gmra.mxu0 %v404
      %v939 = vpop.f32.mrf.mxu0
      %v940 = vadd.f32 %v827, %v939
      %941 = vmatmul.f32.gmra.mxu0 %v406
      %v942 = vpop.f32.mrf.mxu0
      %v943 = vadd.f32 %v830, %v942
      %944 = vmatmul.f32.gmra.mxu0 %v409
      %v945 = vpop.f32.mrf.mxu0
      %v946 = vadd.f32 %v833, %v945
      %947 = vmatmul.f32.gmra.mxu0 %v411
      %v948 = vpop.f32.mrf.mxu0
      %v949 = vadd.f32 %v836, %v948
      %950 = vmatmul.f32.gmra.mxu0 %v414
      %v951 = vpop.f32.mrf.mxu0
      %v952 = vadd.f32 %v839, %v951
      %953 = vmatmul.f32.gmra.mxu0 %v416
      %v954 = vpop.f32.mrf.mxu0
      %v955 = vadd.f32 %v842, %v954
      %956 = vmatmul.f32.gmra.mxu0 %v419
      %v957 = vpop.f32.mrf.mxu0
      %v958 = vadd.f32 %v845, %v957
      %959 = vmatmul.f32.gmra.mxu0 %v421
      %v960 = vpop.f32.mrf.mxu0
      %v961 = vadd.f32 %v848, %v960
      %962 = vmatmul.f32.gmra.mxu0 %v424
      %v963 = vpop.f32.mrf.mxu0
      %v964 = vadd.f32 %v851, %v963
      %965 = vmatmul.f32.gmra.mxu0 %v426
      %v966 = vpop.f32.mrf.mxu0
      %v967 = vadd.f32 %v854, %v966
      %968 = vmatmul.f32.gmra.mxu0 %v429
      %v969 = vpop.f32.mrf.mxu0
      %v970 = vadd.f32 %v857, %v969
      %971 = vmatmul.f32.gmra.mxu0 %v431
      %v972 = vpop.f32.mrf.mxu0
      %v973 = vadd.f32 %v860, %v972
      %974 = vmatmul.f32.gmra.mxu0 %v434
      %v975 = vpop.f32.mrf.mxu0
      %v976 = vadd.f32 %v863, %v975
      %977 = vmatmul.f32.gmra.mxu0 %v436
      %v978 = vpop.f32.mrf.mxu0
      %v979 = vadd.f32 %v866, %v978
      %980 = vmatmul.f32.gmra.mxu0 %v439
      %v981 = vpop.f32.mrf.mxu0
      %v982 = vadd.f32 %v869, %v981
      %983 = vmatmul.f32.gmra.mxu0 %v441
      %v984 = vpop.f32.mrf.mxu0
      %v985 = vadd.f32 %v872, %v984
      %986 = vmatmul.f32.gmra.mxu0 %v444
      %v987 = vpop.f32.mrf.mxu0
      %v988 = vadd.f32 %v875, %v987
      %989 = vmatmul.f32.gmra.mxu0 %v446
      %v990 = vpop.f32.mrf.mxu0
      %v991 = vadd.f32 %v878, %v990
      %992 = vmatmul.f32.gmra.mxu0 %v449
      %v993 = vpop.f32.mrf.mxu0
      %v994 = vadd.f32 %v881, %v993
      %995 = vmatmul.f32.gmra.mxu0 %v451
      %v996 = vpop.f32.mrf.mxu0
      %v997 = vadd.f32 %v884, %v996
      %998 = vmatmul.f32.gmra.mxu0 %v454
      %v999 = vpop.f32.mrf.mxu0
      %v1000 = vadd.f32 %v887, %v999
      %1001 = vmatmul.f32.gmra.mxu0 %v456
      %v1002 = vpop.f32.mrf.mxu0
      %v1003 = vadd.f32 %v890, %v1002
      %1004 = vmatmul.f32.gmra.mxu0 %v459
      %v1005 = vpop.f32.mrf.mxu0
      %v1006 = vadd.f32 %v893, %v1005
      %1007 = vmatmul.f32.gmra.mxu0 %v461
      %v1008 = vpop.f32.mrf.mxu0
      %v1009 = vadd.f32 %v896, %v1008
      %1010 = vdwg.mxu0
      %1011 = vmatpush.msra.mxu0 %v688
      %1012 = vmatpush.msra.mxu0 %v687
      %1013 = vmatpush.msra.mxu0 %v686
      %1014 = vmatpush.msra.mxu0 %v685
      %1015 = vmatpush.msra.mxu0 %v684
      %1016 = vmatpush.msra.mxu0 %v683
      %1017 = vmatpush.msra.mxu0 %v682
      %1018 = vmatpush.msra.mxu0 %v681
      %1019 = vmatpush.msra.mxu0 %v680
      %1020 = vmatpush.msra.mxu0 %v679
      %1021 = vmatpush.msra.mxu0 %v678
      %1022 = vmatpush.msra.mxu0 %v677
      %1023 = vmatpush.msra.mxu0 %v676
      %1024 = vmatpush.msra.mxu0 %v675
      %1025 = vmatpush.msra.mxu0 %v674
      %1026 = vmatpush.msra.mxu0 %v673
      %1027 = vmatmul.f32.gmra.mxu0 %v497
      %v1028 = vpop.f32.mrf.mxu0
      %v1029 = vadd.f32 %v916, %v1028
      %1030 = vmatmul.f32.gmra.mxu0 %v499
      %v1031 = vpop.f32.mrf.mxu0
      %v1032 = vadd.f32 %v919, %v1031
      %1033 = vmatmul.f32.gmra.mxu0 %v502
      %v1034 = vpop.f32.mrf.mxu0
      %v1035 = vadd.f32 %v922, %v1034
      %1036 = vmatmul.f32.gmra.mxu0 %v504
      %v1037 = vpop.f32.mrf.mxu0
      %v1038 = vadd.f32 %v925, %v1037
      %1039 = vmatmul.f32.gmra.mxu0 %v507
      %v1040 = vpop.f32.mrf.mxu0
      %v1041 = vadd.f32 %v928, %v1040
      %1042 = vmatmul.f32.gmra.mxu0 %v509
      %v1043 = vpop.f32.mrf.mxu0
      %v1044 = vadd.f32 %v931, %v1043
      %1045 = vmatmul.f32.gmra.mxu0 %v512
      %v1046 = vpop.f32.mrf.mxu0
      %v1047 = vadd.f32 %v934, %v1046
      %1048 = vmatmul.f32.gmra.mxu0 %v514
      %v1049 = vpop.f32.mrf.mxu0
      %v1050 = vadd.f32 %v937, %v1049
      %1051 = vmatmul.f32.gmra.mxu0 %v517
      %v1052 = vpop.f32.mrf.mxu0
      %v1053 = vadd.f32 %v940, %v1052
      %1054 = vmatmul.f32.gmra.mxu0 %v519
      %v1055 = vpop.f32.mrf.mxu0
      %v1056 = vadd.f32 %v943, %v1055
      %1057 = vmatmul.f32.gmra.mxu0 %v522
      %v1058 = vpop.f32.mrf.mxu0
      %v1059 = vadd.f32 %v946, %v1058
      %1060 = vmatmul.f32.gmra.mxu0 %v524
      %v1061 = vpop.f32.mrf.mxu0
      %v1062 = vadd.f32 %v949, %v1061
      %1063 = vmatmul.f32.gmra.mxu0 %v527
      %v1064 = vpop.f32.mrf.mxu0
      %v1065 = vadd.f32 %v952, %v1064
      %1066 = vmatmul.f32.gmra.mxu0 %v529
      %v1067 = vpop.f32.mrf.mxu0
      %v1068 = vadd.f32 %v955, %v1067
      %1069 = vmatmul.f32.gmra.mxu0 %v532
      %v1070 = vpop.f32.mrf.mxu0
      %v1071 = vadd.f32 %v958, %v1070
      %1072 = vmatmul.f32.gmra.mxu0 %v534
      %v1073 = vpop.f32.mrf.mxu0
      %v1074 = vadd.f32 %v961, %v1073
      %1075 = vmatmul.f32.gmra.mxu0 %v537
      %v1076 = vpop.f32.mrf.mxu0
      %v1077 = vadd.f32 %v964, %v1076
      %1078 = vmatmul.f32.gmra.mxu0 %v539
      %v1079 = vpop.f32.mrf.mxu0
      %v1080 = vadd.f32 %v967, %v1079
      %1081 = vmatmul.f32.gmra.mxu0 %v542
      %v1082 = vpop.f32.mrf.mxu0
      %v1083 = vadd.f32 %v970, %v1082
      %1084 = vmatmul.f32.gmra.mxu0 %v544
      %v1085 = vpop.f32.mrf.mxu0
      %v1086 = vadd.f32 %v973, %v1085
      %1087 = vmatmul.f32.gmra.mxu0 %v547
      %v1088 = vpop.f32.mrf.mxu0
      %v1089 = vadd.f32 %v976, %v1088
      %1090 = vmatmul.f32.gmra.mxu0 %v549
      %v1091 = vpop.f32.mrf.mxu0
      %v1092 = vadd.f32 %v979, %v1091
      %1093 = vmatmul.f32.gmra.mxu0 %v552
      %v1094 = vpop.f32.mrf.mxu0
      %v1095 = vadd.f32 %v982, %v1094
      %1096 = vmatmul.f32.gmra.mxu0 %v554
      %v1097 = vpop.f32.mrf.mxu0
      %v1098 = vadd.f32 %v985, %v1097
      %1099 = vmatmul.f32.gmra.mxu0 %v557
      %v1100 = vpop.f32.mrf.mxu0
      %v1101 = vadd.f32 %v988, %v1100
      %1102 = vmatmul.f32.gmra.mxu0 %v559
      %v1103 = vpop.f32.mrf.mxu0
      %v1104 = vadd.f32 %v991, %v1103
      %1105 = vmatmul.f32.gmra.mxu0 %v562
      %v1106 = vpop.f32.mrf.mxu0
      %v1107 = vadd.f32 %v994, %v1106
      %1108 = vmatmul.f32.gmra.mxu0 %v564
      %v1109 = vpop.f32.mrf.mxu0
      %v1110 = vadd.f32 %v997, %v1109
      %1111 = vmatmul.f32.gmra.mxu0 %v567
      %v1112 = vpop.f32.mrf.mxu0
      %v1113 = vadd.f32 %v1000, %v1112
      %1114 = vmatmul.f32.gmra.mxu0 %v569
      %v1115 = vpop.f32.mrf.mxu0
      %v1116 = vadd.f32 %v1003, %v1115
      %1117 = vmatmul.f32.gmra.mxu0 %v572
      %v1118 = vpop.f32.mrf.mxu0
      %v1119 = vadd.f32 %v1006, %v1118
      %1120 = vmatmul.f32.gmra.mxu0 %v574
      %v1121 = vpop.f32.mrf.mxu0
      %v1122 = vadd.f32 %v1009, %v1121
      %1123 = vdwg.mxu0
      %1124 = vmatpush.msra.mxu0 %v704
      %1125 = vmatpush.msra.mxu0 %v703
      %1126 = vmatpush.msra.mxu0 %v702
      %1127 = vmatpush.msra.mxu0 %v701
      %1128 = vmatpush.msra.mxu0 %v700
      %1129 = vmatpush.msra.mxu0 %v699
      %1130 = vmatpush.msra.mxu0 %v698
      %1131 = vmatpush.msra.mxu0 %v697
      %1132 = vmatpush.msra.mxu0 %v696
      %1133 = vmatpush.msra.mxu0 %v695
      %1134 = vmatpush.msra.mxu0 %v694
      %1135 = vmatpush.msra.mxu0 %v693
      %1136 = vmatpush.msra.mxu0 %v692
      %1137 = vmatpush.msra.mxu0 %v691
      %1138 = vmatpush.msra.mxu0 %v690
      %1139 = vmatpush.msra.mxu0 %v689
      %1140 = vmatmul.f32.gmra.mxu0 %v282
      %v1141 = vpop.f32.mrf.mxu0
      %v1142 = vadd.f32 %v1029, %v1141
      %1143 = vmatmul.f32.gmra.mxu0 %v283
      %v1144 = vpop.f32.mrf.mxu0
      %v1145 = vadd.f32 %v1032, %v1144
      %1146 = vmatmul.f32.gmra.mxu0 %v285
      %v1147 = vpop.f32.mrf.mxu0
      %v1148 = vadd.f32 %v1035, %v1147
      %1149 = vmatmul.f32.gmra.mxu0 %v286
      %v1150 = vpop.f32.mrf.mxu0
      %v1151 = vadd.f32 %v1038, %v1150
      %1152 = vmatmul.f32.gmra.mxu0 %v288
      %v1153 = vpop.f32.mrf.mxu0
      %v1154 = vadd.f32 %v1041, %v1153
      %1155 = vmatmul.f32.gmra.mxu0 %v289
      %v1156 = vpop.f32.mrf.mxu0
      %v1157 = vadd.f32 %v1044, %v1156
      %1158 = vmatmul.f32.gmra.mxu0 %v291
      %v1159 = vpop.f32.mrf.mxu0
      %v1160 = vadd.f32 %v1047, %v1159
      %1161 = vmatmul.f32.gmra.mxu0 %v292
      %v1162 = vpop.f32.mrf.mxu0
      %v1163 = vadd.f32 %v1050, %v1162
      %1164 = vmatmul.f32.gmra.mxu0 %v294
      %v1165 = vpop.f32.mrf.mxu0
      %v1166 = vadd.f32 %v1053, %v1165
      %1167 = vmatmul.f32.gmra.mxu0 %v295
      %v1168 = vpop.f32.mrf.mxu0
      %v1169 = vadd.f32 %v1056, %v1168
      %1170 = vmatmul.f32.gmra.mxu0 %v297
      %v1171 = vpop.f32.mrf.mxu0
      %v1172 = vadd.f32 %v1059, %v1171
      %1173 = vmatmul.f32.gmra.mxu0 %v298
      %v1174 = vpop.f32.mrf.mxu0
      %v1175 = vadd.f32 %v1062, %v1174
      %1176 = vmatmul.f32.gmra.mxu0 %v300
      %v1177 = vpop.f32.mrf.mxu0
      %v1178 = vadd.f32 %v1065, %v1177
      %1179 = vmatmul.f32.gmra.mxu0 %v301
      %v1180 = vpop.f32.mrf.mxu0
      %v1181 = vadd.f32 %v1068, %v1180
      %1182 = vmatmul.f32.gmra.mxu0 %v303
      %v1183 = vpop.f32.mrf.mxu0
      %v1184 = vadd.f32 %v1071, %v1183
      %1185 = vmatmul.f32.gmra.mxu0 %v304
      %v1186 = vpop.f32.mrf.mxu0
      %v1187 = vadd.f32 %v1074, %v1186
      %1188 = vmatmul.f32.gmra.mxu0 %v306
      %v1189 = vpop.f32.mrf.mxu0
      %v1190 = vadd.f32 %v1077, %v1189
      %1191 = vmatmul.f32.gmra.mxu0 %v307
      %v1192 = vpop.f32.mrf.mxu0
      %v1193 = vadd.f32 %v1080, %v1192
      %1194 = vmatmul.f32.gmra.mxu0 %v309
      %v1195 = vpop.f32.mrf.mxu0
      %v1196 = vadd.f32 %v1083, %v1195
      %1197 = vmatmul.f32.gmra.mxu0 %v310
      %v1198 = vpop.f32.mrf.mxu0
      %v1199 = vadd.f32 %v1086, %v1198
      %1200 = vmatmul.f32.gmra.mxu0 %v312
      %v1201 = vpop.f32.mrf.mxu0
      %v1202 = vadd.f32 %v1089, %v1201
      %1203 = vmatmul.f32.gmra.mxu0 %v313
      %v1204 = vpop.f32.mrf.mxu0
      %v1205 = vadd.f32 %v1092, %v1204
      %1206 = vmatmul.f32.gmra.mxu0 %v315
      %v1207 = vpop.f32.mrf.mxu0
      %v1208 = vadd.f32 %v1095, %v1207
      %1209 = vmatmul.f32.gmra.mxu0 %v316
      %v1210 = vpop.f32.mrf.mxu0
      %v1211 = vadd.f32 %v1098, %v1210
      %1212 = vmatmul.f32.gmra.mxu0 %v318
      %v1213 = vpop.f32.mrf.mxu0
      %v1214 = vadd.f32 %v1101, %v1213
      %1215 = vmatmul.f32.gmra.mxu0 %v319
      %v1216 = vpop.f32.mrf.mxu0
      %v1217 = vadd.f32 %v1104, %v1216
      %1218 = vmatmul.f32.gmra.mxu0 %v321
      %v1219 = vpop.f32.mrf.mxu0
      %v1220 = vadd.f32 %v1107, %v1219
      %1221 = vmatmul.f32.gmra.mxu0 %v322
      %v1222 = vpop.f32.mrf.mxu0
      %v1223 = vadd.f32 %v1110, %v1222
      %1224 = vmatmul.f32.gmra.mxu0 %v324
      %v1225 = vpop.f32.mrf.mxu0
      %v1226 = vadd.f32 %v1113, %v1225
      %1227 = vmatmul.f32.gmra.mxu0 %v325
      %v1228 = vpop.f32.mrf.mxu0
      %v1229 = vadd.f32 %v1116, %v1228
      %1230 = vmatmul.f32.gmra.mxu0 %v327
      %v1231 = vpop.f32.mrf.mxu0
      %v1232 = vadd.f32 %v1119, %v1231
      %1233 = vmatmul.f32.gmra.mxu0 %v328
      %v1234 = vpop.f32.mrf.mxu0
      %v1235 = vadd.f32 %v1122, %v1234
      %1236 = vdwg.mxu0
      %1237 = vmatpush.msra.mxu0 %v720
      %1238 = vmatpush.msra.mxu0 %v719
      %1239 = vmatpush.msra.mxu0 %v718
      %1240 = vmatpush.msra.mxu0 %v717
      %1241 = vmatpush.msra.mxu0 %v716
      %1242 = vmatpush.msra.mxu0 %v715
      %1243 = vmatpush.msra.mxu0 %v714
      %1244 = vmatpush.msra.mxu0 %v713
      %1245 = vmatpush.msra.mxu0 %v712
      %1246 = vmatpush.msra.mxu0 %v711
      %1247 = vmatpush.msra.mxu0 %v710
      %1248 = vmatpush.msra.mxu0 %v709
      %1249 = vmatpush.msra.mxu0 %v708
      %1250 = vmatpush.msra.mxu0 %v707
      %1251 = vmatpush.msra.mxu0 %v706
      %1252 = vmatpush.msra.mxu0 %v705
      %1253 = vmatmul.f32.gmra.mxu0 %v389
      %v1254 = vpop.f32.mrf.mxu0
      %v1255 = vadd.f32 %v1142, %v1254
      %1256 = vmatmul.f32.gmra.mxu0 %v391
      %v1257 = vpop.f32.mrf.mxu0
      %v1258 = vadd.f32 %v1145, %v1257
      %1259 = vmatmul.f32.gmra.mxu0 %v394
      %v1260 = vpop.f32.mrf.mxu0
      %v1261 = vadd.f32 %v1148, %v1260
      %1262 = vmatmul.f32.gmra.mxu0 %v396
      %v1263 = vpop.f32.mrf.mxu0
      %v1264 = vadd.f32 %v1151, %v1263
      %1265 = vmatmul.f32.gmra.mxu0 %v399
      %v1266 = vpop.f32.mrf.mxu0
      %v1267 = vadd.f32 %v1154, %v1266
      %1268 = vmatmul.f32.gmra.mxu0 %v401
      %v1269 = vpop.f32.mrf.mxu0
      %v1270 = vadd.f32 %v1157, %v1269
      %1271 = vmatmul.f32.gmra.mxu0 %v404
      %v1272 = vpop.f32.mrf.mxu0
      %v1273 = vadd.f32 %v1160, %v1272
      %1274 = vmatmul.f32.gmra.mxu0 %v406
      %v1275 = vpop.f32.mrf.mxu0
      %v1276 = vadd.f32 %v1163, %v1275
      %1277 = vmatmul.f32.gmra.mxu0 %v409
      %v1278 = vpop.f32.mrf.mxu0
      %v1279 = vadd.f32 %v1166, %v1278
      %1280 = vmatmul.f32.gmra.mxu0 %v411
      %v1281 = vpop.f32.mrf.mxu0
      %v1282 = vadd.f32 %v1169, %v1281
      %1283 = vmatmul.f32.gmra.mxu0 %v414
      %v1284 = vpop.f32.mrf.mxu0
      %v1285 = vadd.f32 %v1172, %v1284
      %1286 = vmatmul.f32.gmra.mxu0 %v416
      %v1287 = vpop.f32.mrf.mxu0
      %v1288 = vadd.f32 %v1175, %v1287
      %1289 = vmatmul.f32.gmra.mxu0 %v419
      %v1290 = vpop.f32.mrf.mxu0
      %v1291 = vadd.f32 %v1178, %v1290
      %1292 = vmatmul.f32.gmra.mxu0 %v421
      %v1293 = vpop.f32.mrf.mxu0
      %v1294 = vadd.f32 %v1181, %v1293
      %1295 = vmatmul.f32.gmra.mxu0 %v424
      %v1296 = vpop.f32.mrf.mxu0
      %v1297 = vadd.f32 %v1184, %v1296
      %1298 = vmatmul.f32.gmra.mxu0 %v426
      %v1299 = vpop.f32.mrf.mxu0
      %v1300 = vadd.f32 %v1187, %v1299
      %1301 = vmatmul.f32.gmra.mxu0 %v429
      %v1302 = vpop.f32.mrf.mxu0
      %v1303 = vadd.f32 %v1190, %v1302
      %1304 = vmatmul.f32.gmra.mxu0 %v431
      %v1305 = vpop.f32.mrf.mxu0
      %v1306 = vadd.f32 %v1193, %v1305
      %1307 = vmatmul.f32.gmra.mxu0 %v434
      %v1308 = vpop.f32.mrf.mxu0
      %v1309 = vadd.f32 %v1196, %v1308
      %1310 = vmatmul.f32.gmra.mxu0 %v436
      %v1311 = vpop.f32.mrf.mxu0
      %v1312 = vadd.f32 %v1199, %v1311
      %1313 = vmatmul.f32.gmra.mxu0 %v439
      %v1314 = vpop.f32.mrf.mxu0
      %v1315 = vadd.f32 %v1202, %v1314
      %1316 = vmatmul.f32.gmra.mxu0 %v441
      %v1317 = vpop.f32.mrf.mxu0
      %v1318 = vadd.f32 %v1205, %v1317
      %1319 = vmatmul.f32.gmra.mxu0 %v444
      %v1320 = vpop.f32.mrf.mxu0
      %v1321 = vadd.f32 %v1208, %v1320
      %1322 = vmatmul.f32.gmra.mxu0 %v446
      %v1323 = vpop.f32.mrf.mxu0
      %v1324 = vadd.f32 %v1211, %v1323
      %1325 = vmatmul.f32.gmra.mxu0 %v449
      %v1326 = vpop.f32.mrf.mxu0
      %v1327 = vadd.f32 %v1214, %v1326
      %1328 = vmatmul.f32.gmra.mxu0 %v451
      %v1329 = vpop.f32.mrf.mxu0
      %v1330 = vadd.f32 %v1217, %v1329
      %1331 = vmatmul.f32.gmra.mxu0 %v454
      %v1332 = vpop.f32.mrf.mxu0
      %v1333 = vadd.f32 %v1220, %v1332
      %1334 = vmatmul.f32.gmra.mxu0 %v456
      %v1335 = vpop.f32.mrf.mxu0
      %v1336 = vadd.f32 %v1223, %v1335
      %1337 = vmatmul.f32.gmra.mxu0 %v459
      %v1338 = vpop.f32.mrf.mxu0
      %v1339 = vadd.f32 %v1226, %v1338
      %1340 = vmatmul.f32.gmra.mxu0 %v461
      %v1341 = vpop.f32.mrf.mxu0
      %v1342 = vadd.f32 %v1229, %v1341
      %1343 = vmatmul.f32.gmra.mxu0 %v612
      %v1344 = vpop.f32.mrf.mxu0
      %v1345 = vadd.f32 %v1232, %v1344
      %1346 = vmatmul.f32.gmra.mxu0 %v614
      %v1347 = vpop.f32.mrf.mxu0
      %v1348 = vadd.f32 %v1235, %v1347
      %1349 = vdwg.mxu0
      %1350 = vmatpush.msra.mxu0 %v736
      %1351 = vmatpush.msra.mxu0 %v735
      %1352 = vmatpush.msra.mxu0 %v734
      %1353 = vmatpush.msra.mxu0 %v733
      %1354 = vmatpush.msra.mxu0 %v732
      %1355 = vmatpush.msra.mxu0 %v731
      %1356 = vmatpush.msra.mxu0 %v730
      %1357 = vmatpush.msra.mxu0 %v729
      %1358 = vmatpush.msra.mxu0 %v728
      %1359 = vmatpush.msra.mxu0 %v727
      %1360 = vmatpush.msra.mxu0 %v726
      %1361 = vmatpush.msra.mxu0 %v725
      %1362 = vmatpush.msra.mxu0 %v724
      %1363 = vmatpush.msra.mxu0 %v723
      %1364 = vmatpush.msra.mxu0 %v722
      %1365 = vmatpush.msra.mxu0 %v721
      %1366 = vmatmul.f32.gmra.mxu0 %v502
      %v1367 = vpop.f32.mrf.mxu0
      %v1368 = vadd.f32 %v1255, %v1367
      %1369 = vmatmul.f32.gmra.mxu0 %v504
      %v1370 = vpop.f32.mrf.mxu0
      %v1371 = vadd.f32 %v1258, %v1370
      %1372 = vmatmul.f32.gmra.mxu0 %v507
      %v1373 = vpop.f32.mrf.mxu0
      %v1374 = vadd.f32 %v1261, %v1373
      %1375 = vmatmul.f32.gmra.mxu0 %v509
      %v1376 = vpop.f32.mrf.mxu0
      %v1377 = vadd.f32 %v1264, %v1376
      %1378 = vmatmul.f32.gmra.mxu0 %v512
      %v1379 = vpop.f32.mrf.mxu0
      %v1380 = vadd.f32 %v1267, %v1379
      %1381 = vmatmul.f32.gmra.mxu0 %v514
      %v1382 = vpop.f32.mrf.mxu0
      %v1383 = vadd.f32 %v1270, %v1382
      %1384 = vmatmul.f32.gmra.mxu0 %v517
      %v1385 = vpop.f32.mrf.mxu0
      %v1386 = vadd.f32 %v1273, %v1385
      %1387 = vmatmul.f32.gmra.mxu0 %v519
      %v1388 = vpop.f32.mrf.mxu0
      %v1389 = vadd.f32 %v1276, %v1388
      %1390 = vmatmul.f32.gmra.mxu0 %v522
      %v1391 = vpop.f32.mrf.mxu0
      %v1392 = vadd.f32 %v1279, %v1391
      %1393 = vmatmul.f32.gmra.mxu0 %v524
      %v1394 = vpop.f32.mrf.mxu0
      %v1395 = vadd.f32 %v1282, %v1394
      %1396 = vmatmul.f32.gmra.mxu0 %v527
      %v1397 = vpop.f32.mrf.mxu0
      %v1398 = vadd.f32 %v1285, %v1397
      %1399 = vmatmul.f32.gmra.mxu0 %v529
      %v1400 = vpop.f32.mrf.mxu0
      %v1401 = vadd.f32 %v1288, %v1400
      %1402 = vmatmul.f32.gmra.mxu0 %v532
      %v1403 = vpop.f32.mrf.mxu0
      %v1404 = vadd.f32 %v1291, %v1403
      %1405 = vmatmul.f32.gmra.mxu0 %v534
      %v1406 = vpop.f32.mrf.mxu0
      %v1407 = vadd.f32 %v1294, %v1406
      %1408 = vmatmul.f32.gmra.mxu0 %v537
      %v1409 = vpop.f32.mrf.mxu0
      %v1410 = vadd.f32 %v1297, %v1409
      %1411 = vmatmul.f32.gmra.mxu0 %v539
      %v1412 = vpop.f32.mrf.mxu0
      %v1413 = vadd.f32 %v1300, %v1412
      %1414 = vmatmul.f32.gmra.mxu0 %v542
      %v1415 = vpop.f32.mrf.mxu0
      %v1416 = vadd.f32 %v1303, %v1415
      %1417 = vmatmul.f32.gmra.mxu0 %v544
      %v1418 = vpop.f32.mrf.mxu0
      %v1419 = vadd.f32 %v1306, %v1418
      %1420 = vmatmul.f32.gmra.mxu0 %v547
      %v1421 = vpop.f32.mrf.mxu0
      %v1422 = vadd.f32 %v1309, %v1421
      %1423 = vmatmul.f32.gmra.mxu0 %v549
      %v1424 = vpop.f32.mrf.mxu0
      %v1425 = vadd.f32 %v1312, %v1424
      %1426 = vmatmul.f32.gmra.mxu0 %v552
      %v1427 = vpop.f32.mrf.mxu0
      %v1428 = vadd.f32 %v1315, %v1427
      %1429 = vmatmul.f32.gmra.mxu0 %v554
      %v1430 = vpop.f32.mrf.mxu0
      %v1431 = vadd.f32 %v1318, %v1430
      %1432 = vmatmul.f32.gmra.mxu0 %v557
      %v1433 = vpop.f32.mrf.mxu0
      %v1434 = vadd.f32 %v1321, %v1433
      %1435 = vmatmul.f32.gmra.mxu0 %v559
      %v1436 = vpop.f32.mrf.mxu0
      %v1437 = vadd.f32 %v1324, %v1436
      %1438 = vmatmul.f32.gmra.mxu0 %v562
      %v1439 = vpop.f32.mrf.mxu0
      %v1440 = vadd.f32 %v1327, %v1439
      %1441 = vmatmul.f32.gmra.mxu0 %v564
      %v1442 = vpop.f32.mrf.mxu0
      %v1443 = vadd.f32 %v1330, %v1442
      %1444 = vmatmul.f32.gmra.mxu0 %v567
      %v1445 = vpop.f32.mrf.mxu0
      %v1446 = vadd.f32 %v1333, %v1445
      %1447 = vmatmul.f32.gmra.mxu0 %v569
      %v1448 = vpop.f32.mrf.mxu0
      %v1449 = vadd.f32 %v1336, %v1448
      %1450 = vmatmul.f32.gmra.mxu0 %v572
      %v1451 = vpop.f32.mrf.mxu0
      %v1452 = vadd.f32 %v1339, %v1451
      %1453 = vmatmul.f32.gmra.mxu0 %v574
      %v1454 = vpop.f32.mrf.mxu0
      %v1455 = vadd.f32 %v1342, %v1454
      %1456 = vmatmul.f32.gmra.mxu0 %v619
      %v1457 = vpop.f32.mrf.mxu0
      %v1458 = vadd.f32 %v1345, %v1457
      %1459 = vmatmul.f32.gmra.mxu0 %v621
      %v1460 = vpop.f32.mrf.mxu0
      %v1461 = vadd.f32 %v1348, %v1460
      %1462 = vdwg.mxu0
      %1463 = vmatpush.msra.mxu0 %v752
      %1464 = vmatpush.msra.mxu0 %v751
      %1465 = vmatpush.msra.mxu0 %v750
      %1466 = vmatpush.msra.mxu0 %v749
      %1467 = vmatpush.msra.mxu0 %v748
      %1468 = vmatpush.msra.mxu0 %v747
      %1469 = vmatpush.msra.mxu0 %v746
      %1470 = vmatpush.msra.mxu0 %v745
      %1471 = vmatpush.msra.mxu0 %v744
      %1472 = vmatpush.msra.mxu0 %v743
      %1473 = vmatpush.msra.mxu0 %v742
      %1474 = vmatpush.msra.mxu0 %v741
      %1475 = vmatpush.msra.mxu0 %v740
      %1476 = vmatpush.msra.mxu0 %v739
      %1477 = vmatpush.msra.mxu0 %v738
      %1478 = vmatpush.msra.mxu0 %v737
      %1479 = vmatmul.f32.gmra.mxu0 %v285
      %v1480 = vpop.f32.mrf.mxu0
      %v1481 = vadd.f32 %v1368, %v1480
      %1482 = vmatmul.f32.gmra.mxu0 %v286
      %v1483 = vpop.f32.mrf.mxu0
      %v1484 = vadd.f32 %v1371, %v1483
      %1485 = vmatmul.f32.gmra.mxu0 %v288
      %v1486 = vpop.f32.mrf.mxu0
      %v1487 = vadd.f32 %v1374, %v1486
      %1488 = vmatmul.f32.gmra.mxu0 %v289
      %v1489 = vpop.f32.mrf.mxu0
      %v1490 = vadd.f32 %v1377, %v1489
      %1491 = vmatmul.f32.gmra.mxu0 %v291
      %v1492 = vpop.f32.mrf.mxu0
      %v1493 = vadd.f32 %v1380, %v1492
      %1494 = vmatmul.f32.gmra.mxu0 %v292
      %v1495 = vpop.f32.mrf.mxu0
      %v1496 = vadd.f32 %v1383, %v1495
      %1497 = vmatmul.f32.gmra.mxu0 %v294
      %v1498 = vpop.f32.mrf.mxu0
      %v1499 = vadd.f32 %v1386, %v1498
      %1500 = vmatmul.f32.gmra.mxu0 %v295
      %v1501 = vpop.f32.mrf.mxu0
      %v1502 = vadd.f32 %v1389, %v1501
      %1503 = vmatmul.f32.gmra.mxu0 %v297
      %v1504 = vpop.f32.mrf.mxu0
      %v1505 = vadd.f32 %v1392, %v1504
      %1506 = vmatmul.f32.gmra.mxu0 %v298
      %v1507 = vpop.f32.mrf.mxu0
      %v1508 = vadd.f32 %v1395, %v1507
      %1509 = vmatmul.f32.gmra.mxu0 %v300
      %v1510 = vpop.f32.mrf.mxu0
      %v1511 = vadd.f32 %v1398, %v1510
      %1512 = vmatmul.f32.gmra.mxu0 %v301
      %v1513 = vpop.f32.mrf.mxu0
      %v1514 = vadd.f32 %v1401, %v1513
      %1515 = vmatmul.f32.gmra.mxu0 %v303
      %v1516 = vpop.f32.mrf.mxu0
      %v1517 = vadd.f32 %v1404, %v1516
      %1518 = vmatmul.f32.gmra.mxu0 %v304
      %v1519 = vpop.f32.mrf.mxu0
      %v1520 = vadd.f32 %v1407, %v1519
      %1521 = vmatmul.f32.gmra.mxu0 %v306
      %v1522 = vpop.f32.mrf.mxu0
      %v1523 = vadd.f32 %v1410, %v1522
      %1524 = vmatmul.f32.gmra.mxu0 %v307
      %v1525 = vpop.f32.mrf.mxu0
      %v1526 = vadd.f32 %v1413, %v1525
      %1527 = vmatmul.f32.gmra.mxu0 %v309
      %v1528 = vpop.f32.mrf.mxu0
      %v1529 = vadd.f32 %v1416, %v1528
      %1530 = vmatmul.f32.gmra.mxu0 %v310
      %v1531 = vpop.f32.mrf.mxu0
      %v1532 = vadd.f32 %v1419, %v1531
      %1533 = vmatmul.f32.gmra.mxu0 %v312
      %v1534 = vpop.f32.mrf.mxu0
      %v1535 = vadd.f32 %v1422, %v1534
      %1536 = vmatmul.f32.gmra.mxu0 %v313
      %v1537 = vpop.f32.mrf.mxu0
      %v1538 = vadd.f32 %v1425, %v1537
      %1539 = vmatmul.f32.gmra.mxu0 %v315
      %v1540 = vpop.f32.mrf.mxu0
      %v1541 = vadd.f32 %v1428, %v1540
      %1542 = vmatmul.f32.gmra.mxu0 %v316
      %v1543 = vpop.f32.mrf.mxu0
      %v1544 = vadd.f32 %v1431, %v1543
      %1545 = vmatmul.f32.gmra.mxu0 %v318
      %v1546 = vpop.f32.mrf.mxu0
      %v1547 = vadd.f32 %v1434, %v1546
      %1548 = vmatmul.f32.gmra.mxu0 %v319
      %v1549 = vpop.f32.mrf.mxu0
      %v1550 = vadd.f32 %v1437, %v1549
      %1551 = vmatmul.f32.gmra.mxu0 %v321
      %v1552 = vpop.f32.mrf.mxu0
      %v1553 = vadd.f32 %v1440, %v1552
      %1554 = vmatmul.f32.gmra.mxu0 %v322
      %v1555 = vpop.f32.mrf.mxu0
      %v1556 = vadd.f32 %v1443, %v1555
      %1557 = vmatmul.f32.gmra.mxu0 %v324
      %v1558 = vpop.f32.mrf.mxu0
      %v1559 = vadd.f32 %v1446, %v1558
      %1560 = vmatmul.f32.gmra.mxu0 %v325
      %v1561 = vpop.f32.mrf.mxu0
      %v1562 = vadd.f32 %v1449, %v1561
      %1563 = vmatmul.f32.gmra.mxu0 %v327
      %v1564 = vpop.f32.mrf.mxu0
      %v1565 = vadd.f32 %v1452, %v1564
      %1566 = vmatmul.f32.gmra.mxu0 %v328
      %v1567 = vpop.f32.mrf.mxu0
      %v1568 = vadd.f32 %v1455, %v1567
      %1569 = vmatmul.f32.gmra.mxu0 %v330
      %v1570 = vpop.f32.mrf.mxu0
      %v1571 = vadd.f32 %v1458, %v1570
      %1572 = vmatmul.f32.gmra.mxu0 %v331
      %v1573 = vpop.f32.mrf.mxu0
      %v1574 = vadd.f32 %v1461, %v1573
      %1575 = vdwg.mxu0
      %1576 = vmatpush.msra.mxu0 %v768
      %1577 = vmatpush.msra.mxu0 %v767
      %1578 = vmatpush.msra.mxu0 %v766
      %1579 = vmatpush.msra.mxu0 %v765
      %1580 = vmatpush.msra.mxu0 %v764
      %1581 = vmatpush.msra.mxu0 %v763
      %1582 = vmatpush.msra.mxu0 %v762
      %1583 = vmatpush.msra.mxu0 %v761
      %1584 = vmatpush.msra.mxu0 %v760
      %1585 = vmatpush.msra.mxu0 %v759
      %1586 = vmatpush.msra.mxu0 %v758
      %1587 = vmatpush.msra.mxu0 %v757
      %1588 = vmatpush.msra.mxu0 %v756
      %1589 = vmatpush.msra.mxu0 %v755
      %1590 = vmatpush.msra.mxu0 %v754
      %1591 = vmatpush.msra.mxu0 %v753
      %1592 = vmatmul.f32.gmra.mxu0 %v394
      %v1593 = vpop.f32.mrf.mxu0
      %v1594 = vadd.f32 %v1481, %v1593
      %1595 = vmatmul.f32.gmra.mxu0 %v396
      %v1596 = vpop.f32.mrf.mxu0
      %v1597 = vadd.f32 %v1484, %v1596
      %1598 = vmatmul.f32.gmra.mxu0 %v399
      %v1599 = vpop.f32.mrf.mxu0
      %v1600 = vadd.f32 %v1487, %v1599
      %1601 = vmatmul.f32.gmra.mxu0 %v401
      %v1602 = vpop.f32.mrf.mxu0
      %v1603 = vadd.f32 %v1490, %v1602
      %1604 = vmatmul.f32.gmra.mxu0 %v404
      %v1605 = vpop.f32.mrf.mxu0
      %v1606 = vadd.f32 %v1493, %v1605
      %1607 = vmatmul.f32.gmra.mxu0 %v406
      %v1608 = vpop.f32.mrf.mxu0
      %v1609 = vadd.f32 %v1496, %v1608
      %1610 = vmatmul.f32.gmra.mxu0 %v409
      %v1611 = vpop.f32.mrf.mxu0
      %v1612 = vadd.f32 %v1499, %v1611
      %1613 = vmatmul.f32.gmra.mxu0 %v411
      %v1614 = vpop.f32.mrf.mxu0
      %v1615 = vadd.f32 %v1502, %v1614
      %1616 = vmatmul.f32.gmra.mxu0 %v414
      %v1617 = vpop.f32.mrf.mxu0
      %v1618 = vadd.f32 %v1505, %v1617
      %1619 = vmatmul.f32.gmra.mxu0 %v416
      %v1620 = vpop.f32.mrf.mxu0
      %v1621 = vadd.f32 %v1508, %v1620
      %1622 = vmatmul.f32.gmra.mxu0 %v419
      %v1623 = vpop.f32.mrf.mxu0
      %v1624 = vadd.f32 %v1511, %v1623
      %1625 = vmatmul.f32.gmra.mxu0 %v421
      %v1626 = vpop.f32.mrf.mxu0
      %v1627 = vadd.f32 %v1514, %v1626
      %1628 = vmatmul.f32.gmra.mxu0 %v424
      %v1629 = vpop.f32.mrf.mxu0
      %v1630 = vadd.f32 %v1517, %v1629
      %1631 = vmatmul.f32.gmra.mxu0 %v426
      %v1632 = vpop.f32.mrf.mxu0
      %v1633 = vadd.f32 %v1520, %v1632
      %1634 = vmatmul.f32.gmra.mxu0 %v429
      %v1635 = vpop.f32.mrf.mxu0
      %v1636 = vadd.f32 %v1523, %v1635
      %1637 = vmatmul.f32.gmra.mxu0 %v431
      %v1638 = vpop.f32.mrf.mxu0
      %v1639 = vadd.f32 %v1526, %v1638
      %1640 = vmatmul.f32.gmra.mxu0 %v434
      %v1641 = vpop.f32.mrf.mxu0
      %v1642 = vadd.f32 %v1529, %v1641
      %1643 = vmatmul.f32.gmra.mxu0 %v436
      %v1644 = vpop.f32.mrf.mxu0
      %v1645 = vadd.f32 %v1532, %v1644
      %1646 = vmatmul.f32.gmra.mxu0 %v439
      %v1647 = vpop.f32.mrf.mxu0
      %v1648 = vadd.f32 %v1535, %v1647
      %1649 = vmatmul.f32.gmra.mxu0 %v441
      %v1650 = vpop.f32.mrf.mxu0
      %v1651 = vadd.f32 %v1538, %v1650
      %1652 = vmatmul.f32.gmra.mxu0 %v444
      %v1653 = vpop.f32.mrf.mxu0
      %v1654 = vadd.f32 %v1541, %v1653
      %1655 = vmatmul.f32.gmra.mxu0 %v446
      %v1656 = vpop.f32.mrf.mxu0
      %v1657 = vadd.f32 %v1544, %v1656
      %1658 = vmatmul.f32.gmra.mxu0 %v449
      %v1659 = vpop.f32.mrf.mxu0
      %v1660 = vadd.f32 %v1547, %v1659
      %1661 = vmatmul.f32.gmra.mxu0 %v451
      %v1662 = vpop.f32.mrf.mxu0
      %v1663 = vadd.f32 %v1550, %v1662
      %1664 = vmatmul.f32.gmra.mxu0 %v454
      %v1665 = vpop.f32.mrf.mxu0
      %v1666 = vadd.f32 %v1553, %v1665
      %1667 = vmatmul.f32.gmra.mxu0 %v456
      %v1668 = vpop.f32.mrf.mxu0
      %v1669 = vadd.f32 %v1556, %v1668
      %1670 = vmatmul.f32.gmra.mxu0 %v459
      %v1671 = vpop.f32.mrf.mxu0
      %v1672 = vadd.f32 %v1559, %v1671
      %1673 = vmatmul.f32.gmra.mxu0 %v461
      %v1674 = vpop.f32.mrf.mxu0
      %v1675 = vadd.f32 %v1562, %v1674
      %1676 = vmatmul.f32.gmra.mxu0 %v612
      %v1677 = vpop.f32.mrf.mxu0
      %v1678 = vadd.f32 %v1565, %v1677
      %1679 = vmatmul.f32.gmra.mxu0 %v614
      %v1680 = vpop.f32.mrf.mxu0
      %v1681 = vadd.f32 %v1568, %v1680
      %1682 = vmatmul.f32.gmra.mxu0 %v629
      %v1683 = vpop.f32.mrf.mxu0
      %v1684 = vadd.f32 %v1571, %v1683
      %1685 = vmatmul.f32.gmra.mxu0 %v631
      %v1686 = vpop.f32.mrf.mxu0
      %v1687 = vadd.f32 %v1574, %v1686
      %1688 = vdwg.mxu0
      %1689 = vmatpush.msra.mxu0 %v784
      %1690 = vmatpush.msra.mxu0 %v783
      %1691 = vmatpush.msra.mxu0 %v782
      %1692 = vmatpush.msra.mxu0 %v781
      %1693 = vmatpush.msra.mxu0 %v780
      %1694 = vmatpush.msra.mxu0 %v779
      %1695 = vmatpush.msra.mxu0 %v778
      %1696 = vmatpush.msra.mxu0 %v777
      %1697 = vmatpush.msra.mxu0 %v776
      %1698 = vmatpush.msra.mxu0 %v775
      %1699 = vmatpush.msra.mxu0 %v774
      %1700 = vmatpush.msra.mxu0 %v773
      %1701 = vmatpush.msra.mxu0 %v772
      %1702 = vmatpush.msra.mxu0 %v771
      %1703 = vmatpush.msra.mxu0 %v770
      %1704 = vmatpush.msra.mxu0 %v769
      %1705 = vmatmul.f32.gmra.mxu0 %v507
      %v1706 = vpop.f32.mrf.mxu0
      %v1707 = vadd.f32 %v1594, %v1706
      %1708 = vmatmul.f32.gmra.mxu0 %v509
      %v1709 = vpop.f32.mrf.mxu0
      %v1710 = vadd.f32 %v1597, %v1709
      %1711 = vmatmul.f32.gmra.mxu0 %v512
      %v1712 = vpop.f32.mrf.mxu0
      %v1713 = vadd.f32 %v1600, %v1712
      %1714 = vmatmul.f32.gmra.mxu0 %v514
      %v1715 = vpop.f32.mrf.mxu0
      %v1716 = vadd.f32 %v1603, %v1715
      %1717 = vmatmul.f32.gmra.mxu0 %v517
      %v1718 = vpop.f32.mrf.mxu0
      %v1719 = vadd.f32 %v1606, %v1718
      %1720 = vmatmul.f32.gmra.mxu0 %v519
      %v1721 = vpop.f32.mrf.mxu0
      %v1722 = vadd.f32 %v1609, %v1721
      %1723 = vmatmul.f32.gmra.mxu0 %v522
      %v1724 = vpop.f32.mrf.mxu0
      %v1725 = vadd.f32 %v1612, %v1724
      %1726 = vmatmul.f32.gmra.mxu0 %v524
      %v1727 = vpop.f32.mrf.mxu0
      %v1728 = vadd.f32 %v1615, %v1727
      %1729 = vmatmul.f32.gmra.mxu0 %v527
      %v1730 = vpop.f32.mrf.mxu0
      %v1731 = vadd.f32 %v1618, %v1730
      %1732 = vmatmul.f32.gmra.mxu0 %v529
      %v1733 = vpop.f32.mrf.mxu0
      %v1734 = vadd.f32 %v1621, %v1733
      %1735 = vmatmul.f32.gmra.mxu0 %v532
      %v1736 = vpop.f32.mrf.mxu0
      %v1737 = vadd.f32 %v1624, %v1736
      %1738 = vmatmul.f32.gmra.mxu0 %v534
      %v1739 = vpop.f32.mrf.mxu0
      %v1740 = vadd.f32 %v1627, %v1739
      %1741 = vmatmul.f32.gmra.mxu0 %v537
      %v1742 = vpop.f32.mrf.mxu0
      %v1743 = vadd.f32 %v1630, %v1742
      %1744 = vmatmul.f32.gmra.mxu0 %v539
      %v1745 = vpop.f32.mrf.mxu0
      %v1746 = vadd.f32 %v1633, %v1745
      %1747 = vmatmul.f32.gmra.mxu0 %v542
      %v1748 = vpop.f32.mrf.mxu0
      %v1749 = vadd.f32 %v1636, %v1748
      %1750 = vmatmul.f32.gmra.mxu0 %v544
      %v1751 = vpop.f32.mrf.mxu0
      %v1752 = vadd.f32 %v1639, %v1751
      %1753 = vmatmul.f32.gmra.mxu0 %v547
      %v1754 = vpop.f32.mrf.mxu0
      %v1755 = vadd.f32 %v1642, %v1754
      %1756 = vmatmul.f32.gmra.mxu0 %v549
      %v1757 = vpop.f32.mrf.mxu0
      %v1758 = vadd.f32 %v1645, %v1757
      %1759 = vmatmul.f32.gmra.mxu0 %v552
      %v1760 = vpop.f32.mrf.mxu0
      %v1761 = vadd.f32 %v1648, %v1760
      %1762 = vmatmul.f32.gmra.mxu0 %v554
      %v1763 = vpop.f32.mrf.mxu0
      %v1764 = vadd.f32 %v1651, %v1763
      %1765 = vmatmul.f32.gmra.mxu0 %v557
      %v1766 = vpop.f32.mrf.mxu0
      %v1767 = vadd.f32 %v1654, %v1766
      %1768 = vmatmul.f32.gmra.mxu0 %v559
      %v1769 = vpop.f32.mrf.mxu0
      %v1770 = vadd.f32 %v1657, %v1769
      %1771 = vmatmul.f32.gmra.mxu0 %v562
      %v1772 = vpop.f32.mrf.mxu0
      %v1773 = vadd.f32 %v1660, %v1772
      %1774 = vmatmul.f32.gmra.mxu0 %v564
      %v1775 = vpop.f32.mrf.mxu0
      %v1776 = vadd.f32 %v1663, %v1775
      %1777 = vmatmul.f32.gmra.mxu0 %v567
      %v1778 = vpop.f32.mrf.mxu0
      %v1779 = vadd.f32 %v1666, %v1778
      %1780 = vmatmul.f32.gmra.mxu0 %v569
      %v1781 = vpop.f32.mrf.mxu0
      %v1782 = vadd.f32 %v1669, %v1781
      %1783 = vmatmul.f32.gmra.mxu0 %v572
      %v1784 = vpop.f32.mrf.mxu0
      %v1785 = vadd.f32 %v1672, %v1784
      %1786 = vmatmul.f32.gmra.mxu0 %v574
      %v1787 = vpop.f32.mrf.mxu0
      %v1788 = vadd.f32 %v1675, %v1787
      %1789 = vmatmul.f32.gmra.mxu0 %v619
      %v1790 = vpop.f32.mrf.mxu0
      %v1791 = vadd.f32 %v1678, %v1790
      %1792 = vmatmul.f32.gmra.mxu0 %v621
      %v1793 = vpop.f32.mrf.mxu0
      %v1794 = vadd.f32 %v1681, %v1793
      %1795 = vmatmul.f32.gmra.mxu0 %v636
      %v1796 = vpop.f32.mrf.mxu0
      %v1797 = vadd.f32 %v1684, %v1796
      %1798 = vmatmul.f32.gmra.mxu0 %v638
      %v1799 = vpop.f32.mrf.mxu0
      %v1800 = vadd.f32 %v1687, %v1799
      %1801 = vdwg.mxu0
      %v1802 = vld [vmem:[%s2] sm:$0x1]
      %v1804 = vperm.slane %v1802, 0
      %v1806 = vmul.f32 %v1707, %v1804
      %v1807 = vmul.f32 %v1710, %v1804
      %v1808 = vmul.f32 %v1713, %v1804
      %v1809 = vmul.f32 %v1716, %v1804
      %v1810 = vmul.f32 %v1719, %v1804
      %v1811 = vmul.f32 %v1722, %v1804
      %v1812 = vmul.f32 %v1725, %v1804
      %v1813 = vmul.f32 %v1728, %v1804
      %v1814 = vmul.f32 %v1731, %v1804
      %v1815 = vmul.f32 %v1734, %v1804
      %v1816 = vmul.f32 %v1737, %v1804
      %v1817 = vmul.f32 %v1740, %v1804
      %v1818 = vmul.f32 %v1743, %v1804
      %v1819 = vmul.f32 %v1746, %v1804
      %v1820 = vmul.f32 %v1749, %v1804
      %v1821 = vmul.f32 %v1752, %v1804
      %v1822 = vmul.f32 %v1755, %v1804
      %v1823 = vmul.f32 %v1758, %v1804
      %v1824 = vmul.f32 %v1761, %v1804
      %v1825 = vmul.f32 %v1764, %v1804
      %v1826 = vmul.f32 %v1767, %v1804
      %v1827 = vmul.f32 %v1770, %v1804
      %v1828 = vmul.f32 %v1773, %v1804
      %v1829 = vmul.f32 %v1776, %v1804
      %v1830 = vmul.f32 %v1779, %v1804
      %v1831 = vmul.f32 %v1782, %v1804
      %v1832 = vmul.f32 %v1785, %v1804
      %v1833 = vmul.f32 %v1788, %v1804
      %v1834 = vmul.f32 %v1791, %v1804
      %v1835 = vmul.f32 %v1794, %v1804
      %v1836 = vmul.f32 %v1797, %v1804
      %v1837 = vmul.f32 %v1800, %v1804
      %v1838 = vld [vmem:[%s3] sm:$0x1]
      %v1840 = vperm.slane %v1838, 0
      %v1842 = vadd.f32 %v1806, %v1840
      %v1843 = vadd.f32 %v1807, %v1840
      %v1844 = vadd.f32 %v1808, %v1840
      %v1845 = vadd.f32 %v1809, %v1840
      %v1846 = vadd.f32 %v1810, %v1840
      %v1847 = vadd.f32 %v1811, %v1840
      %v1848 = vadd.f32 %v1812, %v1840
      %v1849 = vadd.f32 %v1813, %v1840
      %v1850 = vadd.f32 %v1814, %v1840
      %v1851 = vadd.f32 %v1815, %v1840
      %v1852 = vadd.f32 %v1816, %v1840
      %v1853 = vadd.f32 %v1817, %v1840
      %v1854 = vadd.f32 %v1818, %v1840
      %v1855 = vadd.f32 %v1819, %v1840
      %v1856 = vadd.f32 %v1820, %v1840
      %v1857 = vadd.f32 %v1821, %v1840
      %v1858 = vadd.f32 %v1822, %v1840
      %v1859 = vadd.f32 %v1823, %v1840
      %v1860 = vadd.f32 %v1824, %v1840
      %v1861 = vadd.f32 %v1825, %v1840
      %v1862 = vadd.f32 %v1826, %v1840
      %v1863 = vadd.f32 %v1827, %v1840
      %v1864 = vadd.f32 %v1828, %v1840
      %v1865 = vadd.f32 %v1829, %v1840
      %v1866 = vadd.f32 %v1830, %v1840
      %v1867 = vadd.f32 %v1831, %v1840
      %v1868 = vadd.f32 %v1832, %v1840
      %v1869 = vadd.f32 %v1833, %v1840
      %v1870 = vadd.f32 %v1834, %v1840
      %v1871 = vadd.f32 %v1835, %v1840
      %v1872 = vadd.f32 %v1836, %v1840
      %v1873 = vadd.f32 %v1837, %v1840
      %v1874 = vxor.u32 %v1842, 2147483648
      %v1875 = vxor.u32 %v1843, 2147483648
      %v1876 = vxor.u32 %v1844, 2147483648
      %v1877 = vxor.u32 %v1845, 2147483648
      %v1878 = vxor.u32 %v1846, 2147483648
      %v1879 = vxor.u32 %v1847, 2147483648
      %v1880 = vxor.u32 %v1848, 2147483648
      %v1881 = vxor.u32 %v1849, 2147483648
      %v1882 = vxor.u32 %v1850, 2147483648
      %v1883 = vxor.u32 %v1851, 2147483648
      %v1884 = vxor.u32 %v1852, 2147483648
      %v1885 = vxor.u32 %v1853, 2147483648
      %v1886 = vxor.u32 %v1854, 2147483648
      %v1887 = vxor.u32 %v1855, 2147483648
      %v1888 = vxor.u32 %v1856, 2147483648
      %v1889 = vxor.u32 %v1857, 2147483648
      %v1890 = vxor.u32 %v1858, 2147483648
      %v1891 = vxor.u32 %v1859, 2147483648
      %v1892 = vxor.u32 %v1860, 2147483648
      %v1893 = vxor.u32 %v1861, 2147483648
      %v1894 = vxor.u32 %v1862, 2147483648
      %v1895 = vxor.u32 %v1863, 2147483648
      %v1896 = vxor.u32 %v1864, 2147483648
      %v1897 = vxor.u32 %v1865, 2147483648
      %v1898 = vxor.u32 %v1866, 2147483648
      %v1899 = vxor.u32 %v1867, 2147483648
      %v1900 = vxor.u32 %v1868, 2147483648
      %v1901 = vxor.u32 %v1869, 2147483648
      %v1902 = vxor.u32 %v1870, 2147483648
      %v1903 = vxor.u32 %v1871, 2147483648
      %v1904 = vxor.u32 %v1872, 2147483648
      %v1905 = vxor.u32 %v1873, 2147483648
      %v1906 = vmul.f32 %v1874, 1.442695
      %v1907 = vpow.pop %v1906
      %v1908 = vmul.f32 %v1875, 1.442695
      %v1909 = vpow.pop %v1908
      %v1910 = vmul.f32 %v1876, 1.442695
      %v1911 = vpow.pop %v1910
      %v1912 = vmul.f32 %v1877, 1.442695
      %v1913 = vpow.pop %v1912
      %v1914 = vmul.f32 %v1878, 1.442695
      %v1915 = vpow.pop %v1914
      %v1916 = vmul.f32 %v1879, 1.442695
      %v1917 = vpow.pop %v1916
      %v1918 = vmul.f32 %v1880, 1.442695
      %v1919 = vpow.pop %v1918
      %v1920 = vmul.f32 %v1881, 1.442695
      %v1921 = vpow.pop %v1920
      %v1922 = vmul.f32 %v1882, 1.442695
      %v1923 = vpow.pop %v1922
      %v1924 = vmul.f32 %v1883, 1.442695
      %v1925 = vpow.pop %v1924
      %v1926 = vmul.f32 %v1884, 1.442695
      %v1927 = vpow.pop %v1926
      %v1928 = vmul.f32 %v1885, 1.442695
      %v1929 = vpow.pop %v1928
      %v1930 = vmul.f32 %v1886, 1.442695
      %v1931 = vpow.pop %v1930
      %v1932 = vmul.f32 %v1887, 1.442695
      %v1933 = vpow.pop %v1932
      %v1934 = vmul.f32 %v1888, 1.442695
      %v1935 = vpow.pop %v1934
      %v1936 = vmul.f32 %v1889, 1.442695
      %v1937 = vpow.pop %v1936
      %v1938 = vmul.f32 %v1890, 1.442695
      %v1939 = vpow.pop %v1938
      %v1940 = vmul.f32 %v1891, 1.442695
      %v1941 = vpow.pop %v1940
      %v1942 = vmul.f32 %v1892, 1.442695
      %v1943 = vpow.pop %v1942
      %v1944 = vmul.f32 %v1893, 1.442695
      %v1945 = vpow.pop %v1944
      %v1946 = vmul.f32 %v1894, 1.442695
      %v1947 = vpow.pop %v1946
      %v1948 = vmul.f32 %v1895, 1.442695
      %v1949 = vpow.pop %v1948
      %v1950 = vmul.f32 %v1896, 1.442695
      %v1951 = vpow.pop %v1950
      %v1952 = vmul.f32 %v1897, 1.442695
      %v1953 = vpow.pop %v1952
      %v1954 = vmul.f32 %v1898, 1.442695
      %v1955 = vpow.pop %v1954
      %v1956 = vmul.f32 %v1899, 1.442695
      %v1957 = vpow.pop %v1956
      %v1958 = vmul.f32 %v1900, 1.442695
      %v1959 = vpow.pop %v1958
      %v1960 = vmul.f32 %v1901, 1.442695
      %v1961 = vpow.pop %v1960
      %v1962 = vmul.f32 %v1902, 1.442695
      %v1963 = vpow.pop %v1962
      %v1964 = vmul.f32 %v1903, 1.442695
      %v1965 = vpow.pop %v1964
      %v1966 = vmul.f32 %v1904, 1.442695
      %v1967 = vpow.pop %v1966
      %v1968 = vmul.f32 %v1905, 1.442695
      %v1969 = vpow.pop %v1968
      %v1970 = vadd.f32 %v1907, 1.0
      %v1971 = vadd.f32 %v1909, 1.0
      %v1972 = vadd.f32 %v1911, 1.0
      %v1973 = vadd.f32 %v1913, 1.0
      %v1974 = vadd.f32 %v1915, 1.0
      %v1975 = vadd.f32 %v1917, 1.0
      %v1976 = vadd.f32 %v1919, 1.0
      %v1977 = vadd.f32 %v1921, 1.0
      %v1978 = vadd.f32 %v1923, 1.0
      %v1979 = vadd.f32 %v1925, 1.0
      %v1980 = vadd.f32 %v1927, 1.0
      %v1981 = vadd.f32 %v1929, 1.0
      %v1982 = vadd.f32 %v1931, 1.0
      %v1983 = vadd.f32 %v1933, 1.0
      %v1984 = vadd.f32 %v1935, 1.0
      %v1985 = vadd.f32 %v1937, 1.0
      %v1986 = vadd.f32 %v1939, 1.0
      %v1987 = vadd.f32 %v1941, 1.0
      %v1988 = vadd.f32 %v1943, 1.0
      %v1989 = vadd.f32 %v1945, 1.0
      %v1990 = vadd.f32 %v1947, 1.0
      %v1991 = vadd.f32 %v1949, 1.0
      %v1992 = vadd.f32 %v1951, 1.0
      %v1993 = vadd.f32 %v1953, 1.0
      %v1994 = vadd.f32 %v1955, 1.0
      %v1995 = vadd.f32 %v1957, 1.0
      %v1996 = vadd.f32 %v1959, 1.0
      %v1997 = vadd.f32 %v1961, 1.0
      %v1998 = vadd.f32 %v1963, 1.0
      %v1999 = vadd.f32 %v1965, 1.0
      %v2000 = vadd.f32 %v1967, 1.0
      %v2001 = vadd.f32 %v1969, 1.0
      %v2002 = vrcp.pop %v1970
      %v2003 = vmul.f32 %v1970, %v2002
      %v2004 = vsub.f32 1.0, %v2003
      %v2005 = vmul.f32 %v2002, %v2004
      %v2006 = vadd.f32 %v2002, %v2005
      %vm2007 = vweird.f32 %v1970
      %vm2008 = vweird.f32 %v2002
      %vm2009 = vmor %vm2007, %vm2008
      %v2010 = vsel %vm2009, %v2002, %v2006
      %v2011 = vand.u32 2147483647, %v1970
      %vm2012 = vcmp.eq.f32.partialorder %v2011, 8.507059e+37
      %v2013 = vand.u32 %v1970, 2147483648
      %v2014 = vor.u32 1.1754944e-38, %v2013
      %v2015 = vsel %vm2012, %v2014, %v2010
      %v2016 = vmul.f32 1.0, %v2015
      %v2017 = vrcp.pop %v1971
      %v2018 = vmul.f32 %v1971, %v2017
      %v2019 = vsub.f32 1.0, %v2018
      %v2020 = vmul.f32 %v2017, %v2019
      %v2021 = vadd.f32 %v2017, %v2020
      %vm2022 = vweird.f32 %v1971
      %vm2023 = vweird.f32 %v2017
      %vm2024 = vmor %vm2022, %vm2023
      %v2025 = vsel %vm2024, %v2017, %v2021
      %v2026 = vand.u32 2147483647, %v1971
      %vm2027 = vcmp.eq.f32.partialorder %v2026, 8.507059e+37
      %v2028 = vand.u32 %v1971, 2147483648
      %v2029 = vor.u32 1.1754944e-38, %v2028
      %v2030 = vsel %vm2027, %v2029, %v2025
      %v2031 = vmul.f32 1.0, %v2030
      %v2032 = vrcp.pop %v1972
      %v2033 = vmul.f32 %v1972, %v2032
      %v2034 = vsub.f32 1.0, %v2033
      %v2035 = vmul.f32 %v2032, %v2034
      %v2036 = vadd.f32 %v2032, %v2035
      %vm2037 = vweird.f32 %v1972
      %vm2038 = vweird.f32 %v2032
      %vm2039 = vmor %vm2037, %vm2038
      %v2040 = vsel %vm2039, %v2032, %v2036
      %v2041 = vand.u32 2147483647, %v1972
      %vm2042 = vcmp.eq.f32.partialorder %v2041, 8.507059e+37
      %v2043 = vand.u32 %v1972, 2147483648
      %v2044 = vor.u32 1.1754944e-38, %v2043
      %v2045 = vsel %vm2042, %v2044, %v2040
      %v2046 = vmul.f32 1.0, %v2045
      %v2047 = vrcp.pop %v1973
      %v2048 = vmul.f32 %v1973, %v2047
      %v2049 = vsub.f32 1.0, %v2048
      %v2050 = vmul.f32 %v2047, %v2049
      %v2051 = vadd.f32 %v2047, %v2050
      %vm2052 = vweird.f32 %v1973
      %vm2053 = vweird.f32 %v2047
      %vm2054 = vmor %vm2052, %vm2053
      %v2055 = vsel %vm2054, %v2047, %v2051
      %v2056 = vand.u32 2147483647, %v1973
      %vm2057 = vcmp.eq.f32.partialorder %v2056, 8.507059e+37
      %v2058 = vand.u32 %v1973, 2147483648
      %v2059 = vor.u32 1.1754944e-38, %v2058
      %v2060 = vsel %vm2057, %v2059, %v2055
      %v2061 = vmul.f32 1.0, %v2060
      %v2062 = vrcp.pop %v1974
      %v2063 = vmul.f32 %v1974, %v2062
      %v2064 = vsub.f32 1.0, %v2063
      %v2065 = vmul.f32 %v2062, %v2064
      %v2066 = vadd.f32 %v2062, %v2065
      %vm2067 = vweird.f32 %v1974
      %vm2068 = vweird.f32 %v2062
      %vm2069 = vmor %vm2067, %vm2068
      %v2070 = vsel %vm2069, %v2062, %v2066
      %v2071 = vand.u32 2147483647, %v1974
      %vm2072 = vcmp.eq.f32.partialorder %v2071, 8.507059e+37
      %v2073 = vand.u32 %v1974, 2147483648
      %v2074 = vor.u32 1.1754944e-38, %v2073
      %v2075 = vsel %vm2072, %v2074, %v2070
      %v2076 = vmul.f32 1.0, %v2075
      %v2077 = vrcp.pop %v1975
      %v2078 = vmul.f32 %v1975, %v2077
      %v2079 = vsub.f32 1.0, %v2078
      %v2080 = vmul.f32 %v2077, %v2079
      %v2081 = vadd.f32 %v2077, %v2080
      %vm2082 = vweird.f32 %v1975
      %vm2083 = vweird.f32 %v2077
      %vm2084 = vmor %vm2082, %vm2083
      %v2085 = vsel %vm2084, %v2077, %v2081
      %v2086 = vand.u32 2147483647, %v1975
      %vm2087 = vcmp.eq.f32.partialorder %v2086, 8.507059e+37
      %v2088 = vand.u32 %v1975, 2147483648
      %v2089 = vor.u32 1.1754944e-38, %v2088
      %v2090 = vsel %vm2087, %v2089, %v2085
      %v2091 = vmul.f32 1.0, %v2090
      %v2092 = vrcp.pop %v1976
      %v2093 = vmul.f32 %v1976, %v2092
      %v2094 = vsub.f32 1.0, %v2093
      %v2095 = vmul.f32 %v2092, %v2094
      %v2096 = vadd.f32 %v2092, %v2095
      %vm2097 = vweird.f32 %v1976
      %vm2098 = vweird.f32 %v2092
      %vm2099 = vmor %vm2097, %vm2098
      %v2100 = vsel %vm2099, %v2092, %v2096
      %v2101 = vand.u32 2147483647, %v1976
      %vm2102 = vcmp.eq.f32.partialorder %v2101, 8.507059e+37
      %v2103 = vand.u32 %v1976, 2147483648
      %v2104 = vor.u32 1.1754944e-38, %v2103
      %v2105 = vsel %vm2102, %v2104, %v2100
      %v2106 = vmul.f32 1.0, %v2105
      %v2107 = vrcp.pop %v1977
      %v2108 = vmul.f32 %v1977, %v2107
      %v2109 = vsub.f32 1.0, %v2108
      %v2110 = vmul.f32 %v2107, %v2109
      %v2111 = vadd.f32 %v2107, %v2110
      %vm2112 = vweird.f32 %v1977
      %vm2113 = vweird.f32 %v2107
      %vm2114 = vmor %vm2112, %vm2113
      %v2115 = vsel %vm2114, %v2107, %v2111
      %v2116 = vand.u32 2147483647, %v1977
      %vm2117 = vcmp.eq.f32.partialorder %v2116, 8.507059e+37
      %v2118 = vand.u32 %v1977, 2147483648
      %v2119 = vor.u32 1.1754944e-38, %v2118
      %v2120 = vsel %vm2117, %v2119, %v2115
      %v2121 = vmul.f32 1.0, %v2120
      %v2122 = vrcp.pop %v1978
      %v2123 = vmul.f32 %v1978, %v2122
      %v2124 = vsub.f32 1.0, %v2123
      %v2125 = vmul.f32 %v2122, %v2124
      %v2126 = vadd.f32 %v2122, %v2125
      %vm2127 = vweird.f32 %v1978
      %vm2128 = vweird.f32 %v2122
      %vm2129 = vmor %vm2127, %vm2128
      %v2130 = vsel %vm2129, %v2122, %v2126
      %v2131 = vand.u32 2147483647, %v1978
      %vm2132 = vcmp.eq.f32.partialorder %v2131, 8.507059e+37
      %v2133 = vand.u32 %v1978, 2147483648
      %v2134 = vor.u32 1.1754944e-38, %v2133
      %v2135 = vsel %vm2132, %v2134, %v2130
      %v2136 = vmul.f32 1.0, %v2135
      %v2137 = vrcp.pop %v1979
      %v2138 = vmul.f32 %v1979, %v2137
      %v2139 = vsub.f32 1.0, %v2138
      %v2140 = vmul.f32 %v2137, %v2139
      %v2141 = vadd.f32 %v2137, %v2140
      %vm2142 = vweird.f32 %v1979
      %vm2143 = vweird.f32 %v2137
      %vm2144 = vmor %vm2142, %vm2143
      %v2145 = vsel %vm2144, %v2137, %v2141
      %v2146 = vand.u32 2147483647, %v1979
      %vm2147 = vcmp.eq.f32.partialorder %v2146, 8.507059e+37
      %v2148 = vand.u32 %v1979, 2147483648
      %v2149 = vor.u32 1.1754944e-38, %v2148
      %v2150 = vsel %vm2147, %v2149, %v2145
      %v2151 = vmul.f32 1.0, %v2150
      %v2152 = vrcp.pop %v1980
      %v2153 = vmul.f32 %v1980, %v2152
      %v2154 = vsub.f32 1.0, %v2153
      %v2155 = vmul.f32 %v2152, %v2154
      %v2156 = vadd.f32 %v2152, %v2155
      %vm2157 = vweird.f32 %v1980
      %vm2158 = vweird.f32 %v2152
      %vm2159 = vmor %vm2157, %vm2158
      %v2160 = vsel %vm2159, %v2152, %v2156
      %v2161 = vand.u32 2147483647, %v1980
      %vm2162 = vcmp.eq.f32.partialorder %v2161, 8.507059e+37
      %v2163 = vand.u32 %v1980, 2147483648
      %v2164 = vor.u32 1.1754944e-38, %v2163
      %v2165 = vsel %vm2162, %v2164, %v2160
      %v2166 = vmul.f32 1.0, %v2165
      %v2167 = vrcp.pop %v1981
      %v2168 = vmul.f32 %v1981, %v2167
      %v2169 = vsub.f32 1.0, %v2168
      %v2170 = vmul.f32 %v2167, %v2169
      %v2171 = vadd.f32 %v2167, %v2170
      %vm2172 = vweird.f32 %v1981
      %vm2173 = vweird.f32 %v2167
      %vm2174 = vmor %vm2172, %vm2173
      %v2175 = vsel %vm2174, %v2167, %v2171
      %v2176 = vand.u32 2147483647, %v1981
      %vm2177 = vcmp.eq.f32.partialorder %v2176, 8.507059e+37
      %v2178 = vand.u32 %v1981, 2147483648
      %v2179 = vor.u32 1.1754944e-38, %v2178
      %v2180 = vsel %vm2177, %v2179, %v2175
      %v2181 = vmul.f32 1.0, %v2180
      %v2182 = vrcp.pop %v1982
      %v2183 = vmul.f32 %v1982, %v2182
      %v2184 = vsub.f32 1.0, %v2183
      %v2185 = vmul.f32 %v2182, %v2184
      %v2186 = vadd.f32 %v2182, %v2185
      %vm2187 = vweird.f32 %v1982
      %vm2188 = vweird.f32 %v2182
      %vm2189 = vmor %vm2187, %vm2188
      %v2190 = vsel %vm2189, %v2182, %v2186
      %v2191 = vand.u32 2147483647, %v1982
      %vm2192 = vcmp.eq.f32.partialorder %v2191, 8.507059e+37
      %v2193 = vand.u32 %v1982, 2147483648
      %v2194 = vor.u32 1.1754944e-38, %v2193
      %v2195 = vsel %vm2192, %v2194, %v2190
      %v2196 = vmul.f32 1.0, %v2195
      %v2197 = vrcp.pop %v1983
      %v2198 = vmul.f32 %v1983, %v2197
      %v2199 = vsub.f32 1.0, %v2198
      %v2200 = vmul.f32 %v2197, %v2199
      %v2201 = vadd.f32 %v2197, %v2200
      %vm2202 = vweird.f32 %v1983
      %vm2203 = vweird.f32 %v2197
      %vm2204 = vmor %vm2202, %vm2203
      %v2205 = vsel %vm2204, %v2197, %v2201
      %v2206 = vand.u32 2147483647, %v1983
      %vm2207 = vcmp.eq.f32.partialorder %v2206, 8.507059e+37
      %v2208 = vand.u32 %v1983, 2147483648
      %v2209 = vor.u32 1.1754944e-38, %v2208
      %v2210 = vsel %vm2207, %v2209, %v2205
      %v2211 = vmul.f32 1.0, %v2210
      %v2212 = vrcp.pop %v1984
      %v2213 = vmul.f32 %v1984, %v2212
      %v2214 = vsub.f32 1.0, %v2213
      %v2215 = vmul.f32 %v2212, %v2214
      %v2216 = vadd.f32 %v2212, %v2215
      %vm2217 = vweird.f32 %v1984
      %vm2218 = vweird.f32 %v2212
      %vm2219 = vmor %vm2217, %vm2218
      %v2220 = vsel %vm2219, %v2212, %v2216
      %v2221 = vand.u32 2147483647, %v1984
      %vm2222 = vcmp.eq.f32.partialorder %v2221, 8.507059e+37
      %v2223 = vand.u32 %v1984, 2147483648
      %v2224 = vor.u32 1.1754944e-38, %v2223
      %v2225 = vsel %vm2222, %v2224, %v2220
      %v2226 = vmul.f32 1.0, %v2225
      %v2227 = vrcp.pop %v1985
      %v2228 = vmul.f32 %v1985, %v2227
      %v2229 = vsub.f32 1.0, %v2228
      %v2230 = vmul.f32 %v2227, %v2229
      %v2231 = vadd.f32 %v2227, %v2230
      %vm2232 = vweird.f32 %v1985
      %vm2233 = vweird.f32 %v2227
      %vm2234 = vmor %vm2232, %vm2233
      %v2235 = vsel %vm2234, %v2227, %v2231
      %v2236 = vand.u32 2147483647, %v1985
      %vm2237 = vcmp.eq.f32.partialorder %v2236, 8.507059e+37
      %v2238 = vand.u32 %v1985, 2147483648
      %v2239 = vor.u32 1.1754944e-38, %v2238
      %v2240 = vsel %vm2237, %v2239, %v2235
      %v2241 = vmul.f32 1.0, %v2240
      %v2242 = vrcp.pop %v1986
      %v2243 = vmul.f32 %v1986, %v2242
      %v2244 = vsub.f32 1.0, %v2243
      %v2245 = vmul.f32 %v2242, %v2244
      %v2246 = vadd.f32 %v2242, %v2245
      %vm2247 = vweird.f32 %v1986
      %vm2248 = vweird.f32 %v2242
      %vm2249 = vmor %vm2247, %vm2248
      %v2250 = vsel %vm2249, %v2242, %v2246
      %v2251 = vand.u32 2147483647, %v1986
      %vm2252 = vcmp.eq.f32.partialorder %v2251, 8.507059e+37
      %v2253 = vand.u32 %v1986, 2147483648
      %v2254 = vor.u32 1.1754944e-38, %v2253
      %v2255 = vsel %vm2252, %v2254, %v2250
      %v2256 = vmul.f32 1.0, %v2255
      %v2257 = vrcp.pop %v1987
      %v2258 = vmul.f32 %v1987, %v2257
      %v2259 = vsub.f32 1.0, %v2258
      %v2260 = vmul.f32 %v2257, %v2259
      %v2261 = vadd.f32 %v2257, %v2260
      %vm2262 = vweird.f32 %v1987
      %vm2263 = vweird.f32 %v2257
      %vm2264 = vmor %vm2262, %vm2263
      %v2265 = vsel %vm2264, %v2257, %v2261
      %v2266 = vand.u32 2147483647, %v1987
      %vm2267 = vcmp.eq.f32.partialorder %v2266, 8.507059e+37
      %v2268 = vand.u32 %v1987, 2147483648
      %v2269 = vor.u32 1.1754944e-38, %v2268
      %v2270 = vsel %vm2267, %v2269, %v2265
      %v2271 = vmul.f32 1.0, %v2270
      %v2272 = vrcp.pop %v1988
      %v2273 = vmul.f32 %v1988, %v2272
      %v2274 = vsub.f32 1.0, %v2273
      %v2275 = vmul.f32 %v2272, %v2274
      %v2276 = vadd.f32 %v2272, %v2275
      %vm2277 = vweird.f32 %v1988
      %vm2278 = vweird.f32 %v2272
      %vm2279 = vmor %vm2277, %vm2278
      %v2280 = vsel %vm2279, %v2272, %v2276
      %v2281 = vand.u32 2147483647, %v1988
      %vm2282 = vcmp.eq.f32.partialorder %v2281, 8.507059e+37
      %v2283 = vand.u32 %v1988, 2147483648
      %v2284 = vor.u32 1.1754944e-38, %v2283
      %v2285 = vsel %vm2282, %v2284, %v2280
      %v2286 = vmul.f32 1.0, %v2285
      %v2287 = vrcp.pop %v1989
      %v2288 = vmul.f32 %v1989, %v2287
      %v2289 = vsub.f32 1.0, %v2288
      %v2290 = vmul.f32 %v2287, %v2289
      %v2291 = vadd.f32 %v2287, %v2290
      %vm2292 = vweird.f32 %v1989
      %vm2293 = vweird.f32 %v2287
      %vm2294 = vmor %vm2292, %vm2293
      %v2295 = vsel %vm2294, %v2287, %v2291
      %v2296 = vand.u32 2147483647, %v1989
      %vm2297 = vcmp.eq.f32.partialorder %v2296, 8.507059e+37
      %v2298 = vand.u32 %v1989, 2147483648
      %v2299 = vor.u32 1.1754944e-38, %v2298
      %v2300 = vsel %vm2297, %v2299, %v2295
      %v2301 = vmul.f32 1.0, %v2300
      %v2302 = vrcp.pop %v1990
      %v2303 = vmul.f32 %v1990, %v2302
      %v2304 = vsub.f32 1.0, %v2303
      %v2305 = vmul.f32 %v2302, %v2304
      %v2306 = vadd.f32 %v2302, %v2305
      %vm2307 = vweird.f32 %v1990
      %vm2308 = vweird.f32 %v2302
      %vm2309 = vmor %vm2307, %vm2308
      %v2310 = vsel %vm2309, %v2302, %v2306
      %v2311 = vand.u32 2147483647, %v1990
      %vm2312 = vcmp.eq.f32.partialorder %v2311, 8.507059e+37
      %v2313 = vand.u32 %v1990, 2147483648
      %v2314 = vor.u32 1.1754944e-38, %v2313
      %v2315 = vsel %vm2312, %v2314, %v2310
      %v2316 = vmul.f32 1.0, %v2315
      %v2317 = vrcp.pop %v1991
      %v2318 = vmul.f32 %v1991, %v2317
      %v2319 = vsub.f32 1.0, %v2318
      %v2320 = vmul.f32 %v2317, %v2319
      %v2321 = vadd.f32 %v2317, %v2320
      %vm2322 = vweird.f32 %v1991
      %vm2323 = vweird.f32 %v2317
      %vm2324 = vmor %vm2322, %vm2323
      %v2325 = vsel %vm2324, %v2317, %v2321
      %v2326 = vand.u32 2147483647, %v1991
      %vm2327 = vcmp.eq.f32.partialorder %v2326, 8.507059e+37
      %v2328 = vand.u32 %v1991, 2147483648
      %v2329 = vor.u32 1.1754944e-38, %v2328
      %v2330 = vsel %vm2327, %v2329, %v2325
      %v2331 = vmul.f32 1.0, %v2330
      %v2332 = vrcp.pop %v1992
      %v2333 = vmul.f32 %v1992, %v2332
      %v2334 = vsub.f32 1.0, %v2333
      %v2335 = vmul.f32 %v2332, %v2334
      %v2336 = vadd.f32 %v2332, %v2335
      %vm2337 = vweird.f32 %v1992
      %vm2338 = vweird.f32 %v2332
      %vm2339 = vmor %vm2337, %vm2338
      %v2340 = vsel %vm2339, %v2332, %v2336
      %v2341 = vand.u32 2147483647, %v1992
      %vm2342 = vcmp.eq.f32.partialorder %v2341, 8.507059e+37
      %v2343 = vand.u32 %v1992, 2147483648
      %v2344 = vor.u32 1.1754944e-38, %v2343
      %v2345 = vsel %vm2342, %v2344, %v2340
      %v2346 = vmul.f32 1.0, %v2345
      %v2347 = vrcp.pop %v1993
      %v2348 = vmul.f32 %v1993, %v2347
      %v2349 = vsub.f32 1.0, %v2348
      %v2350 = vmul.f32 %v2347, %v2349
      %v2351 = vadd.f32 %v2347, %v2350
      %vm2352 = vweird.f32 %v1993
      %vm2353 = vweird.f32 %v2347
      %vm2354 = vmor %vm2352, %vm2353
      %v2355 = vsel %vm2354, %v2347, %v2351
      %v2356 = vand.u32 2147483647, %v1993
      %vm2357 = vcmp.eq.f32.partialorder %v2356, 8.507059e+37
      %v2358 = vand.u32 %v1993, 2147483648
      %v2359 = vor.u32 1.1754944e-38, %v2358
      %v2360 = vsel %vm2357, %v2359, %v2355
      %v2361 = vmul.f32 1.0, %v2360
      %v2362 = vrcp.pop %v1994
      %v2363 = vmul.f32 %v1994, %v2362
      %v2364 = vsub.f32 1.0, %v2363
      %v2365 = vmul.f32 %v2362, %v2364
      %v2366 = vadd.f32 %v2362, %v2365
      %vm2367 = vweird.f32 %v1994
      %vm2368 = vweird.f32 %v2362
      %vm2369 = vmor %vm2367, %vm2368
      %v2370 = vsel %vm2369, %v2362, %v2366
      %v2371 = vand.u32 2147483647, %v1994
      %vm2372 = vcmp.eq.f32.partialorder %v2371, 8.507059e+37
      %v2373 = vand.u32 %v1994, 2147483648
      %v2374 = vor.u32 1.1754944e-38, %v2373
      %v2375 = vsel %vm2372, %v2374, %v2370
      %v2376 = vmul.f32 1.0, %v2375
      %v2377 = vrcp.pop %v1995
      %v2378 = vmul.f32 %v1995, %v2377
      %v2379 = vsub.f32 1.0, %v2378
      %v2380 = vmul.f32 %v2377, %v2379
      %v2381 = vadd.f32 %v2377, %v2380
      %vm2382 = vweird.f32 %v1995
      %vm2383 = vweird.f32 %v2377
      %vm2384 = vmor %vm2382, %vm2383
      %v2385 = vsel %vm2384, %v2377, %v2381
      %v2386 = vand.u32 2147483647, %v1995
      %vm2387 = vcmp.eq.f32.partialorder %v2386, 8.507059e+37
      %v2388 = vand.u32 %v1995, 2147483648
      %v2389 = vor.u32 1.1754944e-38, %v2388
      %v2390 = vsel %vm2387, %v2389, %v2385
      %v2391 = vmul.f32 1.0, %v2390
      %v2392 = vrcp.pop %v1996
      %v2393 = vmul.f32 %v1996, %v2392
      %v2394 = vsub.f32 1.0, %v2393
      %v2395 = vmul.f32 %v2392, %v2394
      %v2396 = vadd.f32 %v2392, %v2395
      %vm2397 = vweird.f32 %v1996
      %vm2398 = vweird.f32 %v2392
      %vm2399 = vmor %vm2397, %vm2398
      %v2400 = vsel %vm2399, %v2392, %v2396
      %v2401 = vand.u32 2147483647, %v1996
      %vm2402 = vcmp.eq.f32.partialorder %v2401, 8.507059e+37
      %v2403 = vand.u32 %v1996, 2147483648
      %v2404 = vor.u32 1.1754944e-38, %v2403
      %v2405 = vsel %vm2402, %v2404, %v2400
      %v2406 = vmul.f32 1.0, %v2405
      %v2407 = vrcp.pop %v1997
      %v2408 = vmul.f32 %v1997, %v2407
      %v2409 = vsub.f32 1.0, %v2408
      %v2410 = vmul.f32 %v2407, %v2409
      %v2411 = vadd.f32 %v2407, %v2410
      %vm2412 = vweird.f32 %v1997
      %vm2413 = vweird.f32 %v2407
      %vm2414 = vmor %vm2412, %vm2413
      %v2415 = vsel %vm2414, %v2407, %v2411
      %v2416 = vand.u32 2147483647, %v1997
      %vm2417 = vcmp.eq.f32.partialorder %v2416, 8.507059e+37
      %v2418 = vand.u32 %v1997, 2147483648
      %v2419 = vor.u32 1.1754944e-38, %v2418
      %v2420 = vsel %vm2417, %v2419, %v2415
      %v2421 = vmul.f32 1.0, %v2420
      %v2422 = vrcp.pop %v1998
      %v2423 = vmul.f32 %v1998, %v2422
      %v2424 = vsub.f32 1.0, %v2423
      %v2425 = vmul.f32 %v2422, %v2424
      %v2426 = vadd.f32 %v2422, %v2425
      %vm2427 = vweird.f32 %v1998
      %vm2428 = vweird.f32 %v2422
      %vm2429 = vmor %vm2427, %vm2428
      %v2430 = vsel %vm2429, %v2422, %v2426
      %v2431 = vand.u32 2147483647, %v1998
      %vm2432 = vcmp.eq.f32.partialorder %v2431, 8.507059e+37
      %v2433 = vand.u32 %v1998, 2147483648
      %v2434 = vor.u32 1.1754944e-38, %v2433
      %v2435 = vsel %vm2432, %v2434, %v2430
      %v2436 = vmul.f32 1.0, %v2435
      %v2437 = vrcp.pop %v1999
      %v2438 = vmul.f32 %v1999, %v2437
      %v2439 = vsub.f32 1.0, %v2438
      %v2440 = vmul.f32 %v2437, %v2439
      %v2441 = vadd.f32 %v2437, %v2440
      %vm2442 = vweird.f32 %v1999
      %vm2443 = vweird.f32 %v2437
      %vm2444 = vmor %vm2442, %vm2443
      %v2445 = vsel %vm2444, %v2437, %v2441
      %v2446 = vand.u32 2147483647, %v1999
      %vm2447 = vcmp.eq.f32.partialorder %v2446, 8.507059e+37
      %v2448 = vand.u32 %v1999, 2147483648
      %v2449 = vor.u32 1.1754944e-38, %v2448
      %v2450 = vsel %vm2447, %v2449, %v2445
      %v2451 = vmul.f32 1.0, %v2450
      %v2452 = vrcp.pop %v2000
      %v2453 = vmul.f32 %v2000, %v2452
      %v2454 = vsub.f32 1.0, %v2453
      %v2455 = vmul.f32 %v2452, %v2454
      %v2456 = vadd.f32 %v2452, %v2455
      %vm2457 = vweird.f32 %v2000
      %vm2458 = vweird.f32 %v2452
      %vm2459 = vmor %vm2457, %vm2458
      %v2460 = vsel %vm2459, %v2452, %v2456
      %v2461 = vand.u32 2147483647, %v2000
      %vm2462 = vcmp.eq.f32.partialorder %v2461, 8.507059e+37
      %v2463 = vand.u32 %v2000, 2147483648
      %v2464 = vor.u32 1.1754944e-38, %v2463
      %v2465 = vsel %vm2462, %v2464, %v2460
      %v2466 = vmul.f32 1.0, %v2465
      %v2467 = vrcp.pop %v2001
      %v2468 = vmul.f32 %v2001, %v2467
      %v2469 = vsub.f32 1.0, %v2468
      %v2470 = vmul.f32 %v2467, %v2469
      %v2471 = vadd.f32 %v2467, %v2470
      %vm2472 = vweird.f32 %v2001
      %vm2473 = vweird.f32 %v2467
      %vm2474 = vmor %vm2472, %vm2473
      %v2475 = vsel %vm2474, %v2467, %v2471
      %v2476 = vand.u32 2147483647, %v2001
      %vm2477 = vcmp.eq.f32.partialorder %v2476, 8.507059e+37
      %v2478 = vand.u32 %v2001, 2147483648
      %v2479 = vor.u32 1.1754944e-38, %v2478
      %v2480 = vsel %vm2477, %v2479, %v2475
      %v2481 = vmul.f32 1.0, %v2480
      %v2482 = vmul.f32 %v1842, %v2016
      %v2483 = vmul.f32 %v1843, %v2031
      %v2484 = vmul.f32 %v1844, %v2046
      %v2485 = vmul.f32 %v1845, %v2061
      %v2486 = vmul.f32 %v1846, %v2076
      %v2487 = vmul.f32 %v1847, %v2091
      %v2488 = vmul.f32 %v1848, %v2106
      %v2489 = vmul.f32 %v1849, %v2121
      %v2490 = vmul.f32 %v1850, %v2136
      %v2491 = vmul.f32 %v1851, %v2151
      %v2492 = vmul.f32 %v1852, %v2166
      %v2493 = vmul.f32 %v1853, %v2181
      %v2494 = vmul.f32 %v1854, %v2196
      %v2495 = vmul.f32 %v1855, %v2211
      %v2496 = vmul.f32 %v1856, %v2226
      %v2497 = vmul.f32 %v1857, %v2241
      %v2498 = vmul.f32 %v1858, %v2256
      %v2499 = vmul.f32 %v1859, %v2271
      %v2500 = vmul.f32 %v1860, %v2286
      %v2501 = vmul.f32 %v1861, %v2301
      %v2502 = vmul.f32 %v1862, %v2316
      %v2503 = vmul.f32 %v1863, %v2331
      %v2504 = vmul.f32 %v1864, %v2346
      %v2505 = vmul.f32 %v1865, %v2361
      %v2506 = vmul.f32 %v1866, %v2376
      %v2507 = vmul.f32 %v1867, %v2391
      %v2508 = vmul.f32 %v1868, %v2406
      %v2509 = vmul.f32 %v1869, %v2421
      %v2510 = vmul.f32 %v1870, %v2436
      %v2511 = vmul.f32 %v1871, %v2451
      %v2512 = vmul.f32 %v1872, %v2466
      %v2513 = vmul.f32 %v1873, %v2481
      %2514 = vst [vmem:[#allocation2] sm:$0xff] 0.0
      %2515 = vst [vmem:[#allocation2 + $0x8] sm:$0xff] 0.0
      %2516 = vst [vmem:[#allocation2 + $0x10] sm:$0x3] 0.0
      %2517 = vst [vmem:[#allocation2 + $0x18] sm:$0xff] 0.0
      %2518 = vst [vmem:[#allocation2 + $0x20] sm:$0xff] 0.0
      %2519 = vst [vmem:[#allocation2 + $0x28] sm:$0x3] 0.0
      %2520 = vst [vmem:[#allocation2 + $0x30] sm:$0xff] 0.0
      %2521 = vst [vmem:[#allocation2 + $0x38] sm:$0xff] 0.0
      %2522 = vst [vmem:[#allocation2 + $0x40] sm:$0x3] 0.0
      %2523 = vst [vmem:[#allocation2 + $0x48] sm:$0xff] 0.0
      %2524 = vst [vmem:[#allocation2 + $0x50] sm:$0xff] 0.0
      %2525 = vst [vmem:[#allocation2 + $0x58] sm:$0x3] 0.0
      %2526 = vst [vmem:[#allocation2 + $0x60] sm:$0xff] 0.0
      %2527 = vst [vmem:[#allocation2 + $0x68] sm:$0xff] 0.0
      %2528 = vst [vmem:[#allocation2 + $0x70] sm:$0x3] 0.0
      %2529 = vst [vmem:[#allocation2 + $0x78] sm:$0xff] 0.0
      %2530 = vst [vmem:[#allocation2 + $0x80] sm:$0xff] 0.0
      %2531 = vst [vmem:[#allocation2 + $0x88] sm:$0x3] 0.0
      %2532 = vst [vmem:[#allocation2 + $0x90] sm:$0xff] 0.0
      %2533 = vst [vmem:[#allocation2 + $0x98] sm:$0xff] 0.0
      %2534 = vst [vmem:[#allocation2 + $0xa0] sm:$0x3] 0.0
      %2535 = vst [vmem:[#allocation2 + $0xa8] sm:$0xff] 0.0
      %2536 = vst [vmem:[#allocation2 + $0xb0] sm:$0xff] 0.0
      %2537 = vst [vmem:[#allocation2 + $0xb8] sm:$0x3] 0.0
      %2538 = vst [vmem:[#allocation2 + $0xc0] sm:$0xff] 0.0
      %2539 = vst [vmem:[#allocation2 + $0xc8] sm:$0xff] 0.0
      %2540 = vst [vmem:[#allocation2 + $0xd0] sm:$0x3] 0.0
      %2541 = vst [vmem:[#allocation2 + $0xd8] sm:$0xff] 0.0
      %2542 = vst [vmem:[#allocation2 + $0xe0] sm:$0xff] 0.0
      %2543 = vst [vmem:[#allocation2 + $0xe8] sm:$0x3] 0.0
      %2544 = vst [vmem:[#allocation2 + $0xf0] sm:$0xff] 0.0
      %2545 = vst [vmem:[#allocation2 + $0xf8] sm:$0xff] 0.0
      %2546 = vst [vmem:[#allocation2 + $0x100] sm:$0x3] 0.0
      %2547 = vst [vmem:[#allocation2 + $0x108] sm:$0xff] 0.0
      %2548 = vst [vmem:[#allocation2 + $0x110] sm:$0xff] 0.0
      %2549 = vst [vmem:[#allocation2 + $0x118] sm:$0x3] 0.0
      %2550 = vst [vmem:[#allocation2 + $0x120] sm:$0xff] 0.0
      %2551 = vst [vmem:[#allocation2 + $0x128] sm:$0xff] 0.0
      %2552 = vst [vmem:[#allocation2 + $0x130] sm:$0x3] 0.0
      %2553 = vst [vmem:[#allocation2 + $0x138] sm:$0xff] 0.0
      %2554 = vst [vmem:[#allocation2 + $0x140] sm:$0xff] 0.0
      %2555 = vst [vmem:[#allocation2 + $0x148] sm:$0x3] 0.0
      %2556 = vst [vmem:[#allocation2 + $0x150] sm:$0xff] 0.0
      %2557 = vst [vmem:[#allocation2 + $0x158] sm:$0xff] 0.0
      %2558 = vst [vmem:[#allocation2 + $0x160] sm:$0x3] 0.0
      %2559 = vst [vmem:[#allocation2 + $0x168] sm:$0xff] 0.0
      %2560 = vst [vmem:[#allocation2 + $0x170] sm:$0xff] 0.0
      %2561 = vst [vmem:[#allocation2 + $0x178] sm:$0x3] 0.0
      %2562 = vst [vmem:[#allocation2 + $0x180] sm:$0xff] 0.0
      %2563 = vst [vmem:[#allocation2 + $0x188] sm:$0xff] 0.0
      %2564 = vst [vmem:[#allocation2 + $0x190] sm:$0x3] 0.0
      %2565 = vst [vmem:[#allocation2 + $0x198] sm:$0xff] 0.0
      %2566 = vst [vmem:[#allocation2 + $0x1a0] sm:$0xff] 0.0
      %2567 = vst [vmem:[#allocation2 + $0x1a8] sm:$0x3] 0.0
      %s2568 = scalar_lea.vmem [#allocation2], 24
      %2569 = vst [vmem:[%s2568 + $0x1] sm:$0xff] %v2482
      %2570 = vst [vmem:[%s2568 + $0x9] sm:$0xff] %v2483
      %2571 = vst [vmem:[%s2568 + $0x19] sm:$0xff] %v2484
      %2572 = vst [vmem:[%s2568 + $0x21] sm:$0xff] %v2485
      %2573 = vst [vmem:[%s2568 + $0x31] sm:$0xff] %v2486
      %2574 = vst [vmem:[%s2568 + $0x39] sm:$0xff] %v2487
      %2575 = vst [vmem:[%s2568 + $0x49] sm:$0xff] %v2488
      %2576 = vst [vmem:[%s2568 + $0x51] sm:$0xff] %v2489
      %2577 = vst [vmem:[%s2568 + $0x61] sm:$0xff] %v2490
      %2578 = vst [vmem:[%s2568 + $0x69] sm:$0xff] %v2491
      %2579 = vst [vmem:[%s2568 + $0x79] sm:$0xff] %v2492
      %2580 = vst [vmem:[%s2568 + $0x81] sm:$0xff] %v2493
      %2581 = vst [vmem:[%s2568 + $0x91] sm:$0xff] %v2494
      %2582 = vst [vmem:[%s2568 + $0x99] sm:$0xff] %v2495
      %2583 = vst [vmem:[%s2568 + $0xa9] sm:$0xff] %v2496
      %2584 = vst [vmem:[%s2568 + $0xb1] sm:$0xff] %v2497
      %2585 = vst [vmem:[%s2568 + $0xc1] sm:$0xff] %v2498
      %2586 = vst [vmem:[%s2568 + $0xc9] sm:$0xff] %v2499
      %2587 = vst [vmem:[%s2568 + $0xd9] sm:$0xff] %v2500
      %2588 = vst [vmem:[%s2568 + $0xe1] sm:$0xff] %v2501
      %2589 = vst [vmem:[%s2568 + $0xf1] sm:$0xff] %v2502
      %2590 = vst [vmem:[%s2568 + $0xf9] sm:$0xff] %v2503
      %2591 = vst [vmem:[%s2568 + $0x109] sm:$0xff] %v2504
      %2592 = vst [vmem:[%s2568 + $0x111] sm:$0xff] %v2505
      %2593 = vst [vmem:[%s2568 + $0x121] sm:$0xff] %v2506
      %2594 = vst [vmem:[%s2568 + $0x129] sm:$0xff] %v2507
      %2595 = vst [vmem:[%s2568 + $0x139] sm:$0xff] %v2508
      %2596 = vst [vmem:[%s2568 + $0x141] sm:$0xff] %v2509
      %2597 = vst [vmem:[%s2568 + $0x151] sm:$0xff] %v2510
      %2598 = vst [vmem:[%s2568 + $0x159] sm:$0xff] %v2511
      %2599 = vst [vmem:[%s2568 + $0x169] sm:$0xff] %v2512
      %2600 = vst [vmem:[%s2568 + $0x171] sm:$0xff] %v2513
      %v2601 = vld [vmem:[#allocation2] sm:$0xff]
      %v2602 = vld [vmem:[#allocation2 + $0x8] sm:$0xff]
      %v2603 = vld [vmem:[#allocation2 + $0x10] sm:$0x3]
      %v2604 = vld [vmem:[#allocation2 + $0x18] sm:$0xff]
      %v2605 = vld [vmem:[#allocation2 + $0x20] sm:$0xff]
      %v2606 = vld [vmem:[#allocation2 + $0x28] sm:$0x3]
      %v2607 = vld [vmem:[#allocation2 + $0x30] sm:$0xff]
      %v2608 = vld [vmem:[#allocation2 + $0x38] sm:$0xff]
      %v2609 = vld [vmem:[#allocation2 + $0x40] sm:$0x3]
      %v2610 = vld [vmem:[#allocation2 + $0x48] sm:$0xff]
      %v2611 = vld [vmem:[#allocation2 + $0x50] sm:$0xff]
      %v2612 = vld [vmem:[#allocation2 + $0x58] sm:$0x3]
      %v2613 = vld [vmem:[#allocation2 + $0x60] sm:$0xff]
      %v2614 = vld [vmem:[#allocation2 + $0x68] sm:$0xff]
      %v2615 = vld [vmem:[#allocation2 + $0x70] sm:$0x3]
      %v2616 = vld [vmem:[#allocation2 + $0x78] sm:$0xff]
      %v2617 = vld [vmem:[#allocation2 + $0x80] sm:$0xff]
      %v2618 = vld [vmem:[#allocation2 + $0x88] sm:$0x3]
      %v2619 = vld [vmem:[#allocation2 + $0x90] sm:$0xff]
      %v2620 = vld [vmem:[#allocation2 + $0x98] sm:$0xff]
      %v2621 = vld [vmem:[#allocation2 + $0xa0] sm:$0x3]
      %v2622 = vld [vmem:[#allocation2 + $0xa8] sm:$0xff]
      %v2623 = vld [vmem:[#allocation2 + $0xb0] sm:$0xff]
      %v2624 = vld [vmem:[#allocation2 + $0xb8] sm:$0x3]
      %v2625 = vld [vmem:[#allocation2 + $0xc0] sm:$0xff]
      %v2626 = vld [vmem:[#allocation2 + $0xc8] sm:$0xff]
      %v2627 = vld [vmem:[#allocation2 + $0xd0] sm:$0x3]
      %v2628 = vld [vmem:[#allocation2 + $0xd8] sm:$0xff]
      %v2629 = vld [vmem:[#allocation2 + $0xe0] sm:$0xff]
      %v2630 = vld [vmem:[#allocation2 + $0xe8] sm:$0x3]
      %v2631 = vld [vmem:[#allocation2 + $0xf0] sm:$0xff]
      %v2632 = vld [vmem:[#allocation2 + $0xf8] sm:$0xff]
      %v2633 = vld [vmem:[#allocation2 + $0x100] sm:$0x3]
      %v2634 = vld [vmem:[#allocation2 + $0x108] sm:$0xff]
      %v2635 = vld [vmem:[#allocation2 + $0x110] sm:$0xff]
      %v2636 = vld [vmem:[#allocation2 + $0x118] sm:$0x3]
      %v2637 = vld [vmem:[#allocation2 + $0x120] sm:$0xff]
      %v2638 = vld [vmem:[#allocation2 + $0x128] sm:$0xff]
      %v2639 = vld [vmem:[#allocation2 + $0x130] sm:$0x3]
      %v2640 = vld [vmem:[#allocation2 + $0x138] sm:$0xff]
      %v2641 = vld [vmem:[#allocation2 + $0x140] sm:$0xff]
      %v2642 = vld [vmem:[#allocation2 + $0x148] sm:$0x3]
      %v2643 = vld [vmem:[#allocation2 + $0x150] sm:$0xff]
      %v2644 = vld [vmem:[#allocation2 + $0x158] sm:$0xff]
      %v2645 = vld [vmem:[#allocation2 + $0x160] sm:$0x3]
      %v2646 = vld [vmem:[#allocation2 + $0x168] sm:$0xff]
      %v2647 = vld [vmem:[#allocation2 + $0x170] sm:$0xff]
      %v2648 = vld [vmem:[#allocation2 + $0x178] sm:$0x3]
      %v2649 = vld [vmem:[#allocation2 + $0x180] sm:$0xff]
      %v2650 = vld [vmem:[#allocation2 + $0x188] sm:$0xff]
      %v2651 = vld [vmem:[#allocation2 + $0x190] sm:$0x3]
      %v2652 = vld [vmem:[#allocation2 + $0x198] sm:$0xff]
      %v2653 = vld [vmem:[#allocation2 + $0x1a0] sm:$0xff]
      %v2654 = vld [vmem:[#allocation2 + $0x1a8] sm:$0x3]
      %v2703 = vrot.slane %v2601, 1
      %v2704 = vrot.slane %v2602, 1
      %v2705 = vsel %vm381, %v2703, %v2704
      %v2706 = vrot.slane %v2603, 1
      %v2707 = vsel %vm381, %v2704, %v2706
      %v2708 = vrot.slane %v2604, 1
      %v2709 = vrot.slane %v2605, 1
      %v2710 = vsel %vm381, %v2708, %v2709
      %v2711 = vrot.slane %v2606, 1
      %v2712 = vsel %vm381, %v2709, %v2711
      %v2713 = vrot.slane %v2607, 1
      %v2714 = vrot.slane %v2608, 1
      %v2715 = vsel %vm381, %v2713, %v2714
      %v2716 = vrot.slane %v2609, 1
      %v2717 = vsel %vm381, %v2714, %v2716
      %v2718 = vrot.slane %v2610, 1
      %v2719 = vrot.slane %v2611, 1
      %v2720 = vsel %vm381, %v2718, %v2719
      %v2721 = vrot.slane %v2612, 1
      %v2722 = vsel %vm381, %v2719, %v2721
      %v2723 = vrot.slane %v2613, 1
      %v2724 = vrot.slane %v2614, 1
      %v2725 = vsel %vm381, %v2723, %v2724
      %v2726 = vrot.slane %v2615, 1
      %v2727 = vsel %vm381, %v2724, %v2726
      %v2728 = vrot.slane %v2616, 1
      %v2729 = vrot.slane %v2617, 1
      %v2730 = vsel %vm381, %v2728, %v2729
      %v2731 = vrot.slane %v2618, 1
      %v2732 = vsel %vm381, %v2729, %v2731
      %v2733 = vrot.slane %v2619, 1
      %v2734 = vrot.slane %v2620, 1
      %v2735 = vsel %vm381, %v2733, %v2734
      %v2736 = vrot.slane %v2621, 1
      %v2737 = vsel %vm381, %v2734, %v2736
      %v2738 = vrot.slane %v2622, 1
      %v2739 = vrot.slane %v2623, 1
      %v2740 = vsel %vm381, %v2738, %v2739
      %v2741 = vrot.slane %v2624, 1
      %v2742 = vsel %vm381, %v2739, %v2741
      %v2743 = vrot.slane %v2625, 1
      %v2744 = vrot.slane %v2626, 1
      %v2745 = vsel %vm381, %v2743, %v2744
      %v2746 = vrot.slane %v2627, 1
      %v2747 = vsel %vm381, %v2744, %v2746
      %v2748 = vrot.slane %v2628, 1
      %v2749 = vrot.slane %v2629, 1
      %v2750 = vsel %vm381, %v2748, %v2749
      %v2751 = vrot.slane %v2630, 1
      %v2752 = vsel %vm381, %v2749, %v2751
      %v2753 = vrot.slane %v2631, 1
      %v2754 = vrot.slane %v2632, 1
      %v2755 = vsel %vm381, %v2753, %v2754
      %v2756 = vrot.slane %v2633, 1
      %v2757 = vsel %vm381, %v2754, %v2756
      %v2758 = vrot.slane %v2634, 1
      %v2759 = vrot.slane %v2635, 1
      %v2760 = vsel %vm381, %v2758, %v2759
      %v2761 = vrot.slane %v2636, 1
      %v2762 = vsel %vm381, %v2759, %v2761
      %v2763 = vrot.slane %v2637, 1
      %v2764 = vrot.slane %v2638, 1
      %v2765 = vsel %vm381, %v2763, %v2764
      %v2766 = vrot.slane %v2639, 1
      %v2767 = vsel %vm381, %v2764, %v2766
      %v2768 = vrot.slane %v2640, 1
      %v2769 = vrot.slane %v2641, 1
      %v2770 = vsel %vm381, %v2768, %v2769
      %v2771 = vrot.slane %v2642, 1
      %v2772 = vsel %vm381, %v2769, %v2771
      %v2773 = vrot.slane %v2643, 1
      %v2774 = vrot.slane %v2644, 1
      %v2775 = vsel %vm381, %v2773, %v2774
      %v2776 = vrot.slane %v2645, 1
      %v2777 = vsel %vm381, %v2774, %v2776
      %v2778 = vrot.slane %v2646, 1
      %v2779 = vrot.slane %v2647, 1
      %v2780 = vsel %vm381, %v2778, %v2779
      %v2781 = vrot.slane %v2648, 1
      %v2782 = vsel %vm381, %v2779, %v2781
      %v2815 = vrot.slane %v2601, 2
      %v2816 = vrot.slane %v2602, 2
      %v2817 = vsel %vm494, %v2815, %v2816
      %v2818 = vrot.slane %v2603, 2
      %v2819 = vsel %vm494, %v2816, %v2818
      %v2820 = vrot.slane %v2604, 2
      %v2821 = vrot.slane %v2605, 2
      %v2822 = vsel %vm494, %v2820, %v2821
      %v2823 = vrot.slane %v2606, 2
      %v2824 = vsel %vm494, %v2821, %v2823
      %v2825 = vrot.slane %v2607, 2
      %v2826 = vrot.slane %v2608, 2
      %v2827 = vsel %vm494, %v2825, %v2826
      %v2828 = vrot.slane %v2609, 2
      %v2829 = vsel %vm494, %v2826, %v2828
      %v2830 = vrot.slane %v2610, 2
      %v2831 = vrot.slane %v2611, 2
      %v2832 = vsel %vm494, %v2830, %v2831
      %v2833 = vrot.slane %v2612, 2
      %v2834 = vsel %vm494, %v2831, %v2833
      %v2835 = vrot.slane %v2613, 2
      %v2836 = vrot.slane %v2614, 2
      %v2837 = vsel %vm494, %v2835, %v2836
      %v2838 = vrot.slane %v2615, 2
      %v2839 = vsel %vm494, %v2836, %v2838
      %v2840 = vrot.slane %v2616, 2
      %v2841 = vrot.slane %v2617, 2
      %v2842 = vsel %vm494, %v2840, %v2841
      %v2843 = vrot.slane %v2618, 2
      %v2844 = vsel %vm494, %v2841, %v2843
      %v2845 = vrot.slane %v2619, 2
      %v2846 = vrot.slane %v2620, 2
      %v2847 = vsel %vm494, %v2845, %v2846
      %v2848 = vrot.slane %v2621, 2
      %v2849 = vsel %vm494, %v2846, %v2848
      %v2850 = vrot.slane %v2622, 2
      %v2851 = vrot.slane %v2623, 2
      %v2852 = vsel %vm494, %v2850, %v2851
      %v2853 = vrot.slane %v2624, 2
      %v2854 = vsel %vm494, %v2851, %v2853
      %v2855 = vrot.slane %v2625, 2
      %v2856 = vrot.slane %v2626, 2
      %v2857 = vsel %vm494, %v2855, %v2856
      %v2858 = vrot.slane %v2627, 2
      %v2859 = vsel %vm494, %v2856, %v2858
      %v2860 = vrot.slane %v2628, 2
      %v2861 = vrot.slane %v2629, 2
      %v2862 = vsel %vm494, %v2860, %v2861
      %v2863 = vrot.slane %v2630, 2
      %v2864 = vsel %vm494, %v2861, %v2863
      %v2865 = vrot.slane %v2631, 2
      %v2866 = vrot.slane %v2632, 2
      %v2867 = vsel %vm494, %v2865, %v2866
      %v2868 = vrot.slane %v2633, 2
      %v2869 = vsel %vm494, %v2866, %v2868
      %v2870 = vrot.slane %v2634, 2
      %v2871 = vrot.slane %v2635, 2
      %v2872 = vsel %vm494, %v2870, %v2871
      %v2873 = vrot.slane %v2636, 2
      %v2874 = vsel %vm494, %v2871, %v2873
      %v2875 = vrot.slane %v2637, 2
      %v2876 = vrot.slane %v2638, 2
      %v2877 = vsel %vm494, %v2875, %v2876
      %v2878 = vrot.slane %v2639, 2
      %v2879 = vsel %vm494, %v2876, %v2878
      %v2880 = vrot.slane %v2640, 2
      %v2881 = vrot.slane %v2641, 2
      %v2882 = vsel %vm494, %v2880, %v2881
      %v2883 = vrot.slane %v2642, 2
      %v2884 = vsel %vm494, %v2881, %v2883
      %v2885 = vrot.slane %v2643, 2
      %v2886 = vrot.slane %v2644, 2
      %v2887 = vsel %vm494, %v2885, %v2886
      %v2888 = vrot.slane %v2645, 2
      %v2889 = vsel %vm494, %v2886, %v2888
      %v2890 = vrot.slane %v2646, 2
      %v2891 = vrot.slane %v2647, 2
      %v2892 = vsel %vm494, %v2890, %v2891
      %v2893 = vrot.slane %v2648, 2
      %v2894 = vsel %vm494, %v2891, %v2893
      %v2930 = vrot.slane %v2649, 1
      %v2931 = vrot.slane %v2650, 1
      %v2932 = vsel %vm381, %v2930, %v2931
      %v2933 = vrot.slane %v2651, 1
      %v2934 = vsel %vm381, %v2931, %v2933
      %v2937 = vrot.slane %v2649, 2
      %v2938 = vrot.slane %v2650, 2
      %v2939 = vsel %vm494, %v2937, %v2938
      %v2940 = vrot.slane %v2651, 2
      %v2941 = vsel %vm494, %v2938, %v2940
      %v2947 = vrot.slane %v2652, 1
      %v2948 = vrot.slane %v2653, 1
      %v2949 = vsel %vm381, %v2947, %v2948
      %v2950 = vrot.slane %v2654, 1
      %v2951 = vsel %vm381, %v2948, %v2950
      %v2954 = vrot.slane %v2652, 2
      %v2955 = vrot.slane %v2653, 2
      %v2956 = vsel %vm494, %v2954, %v2955
      %v2957 = vrot.slane %v2654, 2
      %v2958 = vsel %vm494, %v2955, %v2957
      %v2961 = vld [vmem:[%s4] sm:$0xff]
      %v2962 = vld [vmem:[%s4 + $0x8] sm:$0xff]
      %v2963 = vld [vmem:[%s4 + $0x10] sm:$0xff]
      %v2964 = vld [vmem:[%s4 + $0x18] sm:$0xff]
      %v2965 = vld [vmem:[%s4 + $0x20] sm:$0xff]
      %v2966 = vld [vmem:[%s4 + $0x28] sm:$0xff]
      %v2967 = vld [vmem:[%s4 + $0x30] sm:$0xff]
      %v2968 = vld [vmem:[%s4 + $0x38] sm:$0xff]
      %v2969 = vld [vmem:[%s4 + $0x40] sm:$0xff]
      %v2970 = vld [vmem:[%s4 + $0x48] sm:$0xff]
      %v2971 = vld [vmem:[%s4 + $0x50] sm:$0xff]
      %v2972 = vld [vmem:[%s4 + $0x58] sm:$0xff]
      %v2973 = vld [vmem:[%s4 + $0x60] sm:$0xff]
      %v2974 = vld [vmem:[%s4 + $0x68] sm:$0xff]
      %v2975 = vld [vmem:[%s4 + $0x70] sm:$0xff]
      %v2976 = vld [vmem:[%s4 + $0x78] sm:$0xff]
      %v2977 = vld [vmem:[%s4 + $0x80] sm:$0xff]
      %v2978 = vld [vmem:[%s4 + $0x88] sm:$0xff]
      %v2979 = vld [vmem:[%s4 + $0x90] sm:$0xff]
      %v2980 = vld [vmem:[%s4 + $0x98] sm:$0xff]
      %v2981 = vld [vmem:[%s4 + $0xa0] sm:$0xff]
      %v2982 = vld [vmem:[%s4 + $0xa8] sm:$0xff]
      %v2983 = vld [vmem:[%s4 + $0xb0] sm:$0xff]
      %v2984 = vld [vmem:[%s4 + $0xb8] sm:$0xff]
      %v2985 = vld [vmem:[%s4 + $0xc0] sm:$0xff]
      %v2986 = vld [vmem:[%s4 + $0xc8] sm:$0xff]
      %v2987 = vld [vmem:[%s4 + $0xd0] sm:$0xff]
      %v2988 = vld [vmem:[%s4 + $0xd8] sm:$0xff]
      %v2989 = vld [vmem:[%s4 + $0xe0] sm:$0xff]
      %v2990 = vld [vmem:[%s4 + $0xe8] sm:$0xff]
      %v2991 = vld [vmem:[%s4 + $0xf0] sm:$0xff]
      %v2992 = vld [vmem:[%s4 + $0xf8] sm:$0xff]
      %v2993 = vld [vmem:[%s4 + $0x100] sm:$0xff]
      %v2994 = vld [vmem:[%s4 + $0x108] sm:$0xff]
      %v2995 = vld [vmem:[%s4 + $0x110] sm:$0xff]
      %v2996 = vld [vmem:[%s4 + $0x118] sm:$0xff]
      %v2997 = vld [vmem:[%s4 + $0x120] sm:$0xff]
      %v2998 = vld [vmem:[%s4 + $0x128] sm:$0xff]
      %v2999 = vld [vmem:[%s4 + $0x130] sm:$0xff]
      %v3000 = vld [vmem:[%s4 + $0x138] sm:$0xff]
      %v3001 = vld [vmem:[%s4 + $0x140] sm:$0xff]
      %v3002 = vld [vmem:[%s4 + $0x148] sm:$0xff]
      %v3003 = vld [vmem:[%s4 + $0x150] sm:$0xff]
      %v3004 = vld [vmem:[%s4 + $0x158] sm:$0xff]
      %v3005 = vld [vmem:[%s4 + $0x160] sm:$0xff]
      %v3006 = vld [vmem:[%s4 + $0x168] sm:$0xff]
      %v3007 = vld [vmem:[%s4 + $0x170] sm:$0xff]
      %v3008 = vld [vmem:[%s4 + $0x178] sm:$0xff]
      %v3009 = vld [vmem:[%s4 + $0x180] sm:$0xff]
      %v3010 = vld [vmem:[%s4 + $0x188] sm:$0xff]
      %v3011 = vld [vmem:[%s4 + $0x190] sm:$0xff]
      %v3012 = vld [vmem:[%s4 + $0x198] sm:$0xff]
      %v3013 = vld [vmem:[%s4 + $0x1a0] sm:$0xff]
      %v3014 = vld [vmem:[%s4 + $0x1a8] sm:$0xff]
      %v3015 = vld [vmem:[%s4 + $0x1b0] sm:$0xff]
      %v3016 = vld [vmem:[%s4 + $0x1b8] sm:$0xff]
      %v3017 = vld [vmem:[%s4 + $0x1c0] sm:$0xff]
      %v3018 = vld [vmem:[%s4 + $0x1c8] sm:$0xff]
      %v3019 = vld [vmem:[%s4 + $0x1d0] sm:$0xff]
      %v3020 = vld [vmem:[%s4 + $0x1d8] sm:$0xff]
      %v3021 = vld [vmem:[%s4 + $0x1e0] sm:$0xff]
      %v3022 = vld [vmem:[%s4 + $0x1e8] sm:$0xff]
      %v3023 = vld [vmem:[%s4 + $0x1f0] sm:$0xff]
      %v3024 = vld [vmem:[%s4 + $0x1f8] sm:$0xff]
      %v3025 = vld [vmem:[%s4 + $0x200] sm:$0xff]
      %v3026 = vld [vmem:[%s4 + $0x208] sm:$0xff]
      %v3027 = vld [vmem:[%s4 + $0x210] sm:$0xff]
      %v3028 = vld [vmem:[%s4 + $0x218] sm:$0xff]
      %v3029 = vld [vmem:[%s4 + $0x220] sm:$0xff]
      %v3030 = vld [vmem:[%s4 + $0x228] sm:$0xff]
      %v3031 = vld [vmem:[%s4 + $0x230] sm:$0xff]
      %v3032 = vld [vmem:[%s4 + $0x238] sm:$0xff]
      %v3033 = vld [vmem:[%s4 + $0x240] sm:$0xff]
      %v3034 = vld [vmem:[%s4 + $0x248] sm:$0xff]
      %v3035 = vld [vmem:[%s4 + $0x250] sm:$0xff]
      %v3036 = vld [vmem:[%s4 + $0x258] sm:$0xff]
      %v3037 = vld [vmem:[%s4 + $0x260] sm:$0xff]
      %v3038 = vld [vmem:[%s4 + $0x268] sm:$0xff]
      %v3039 = vld [vmem:[%s4 + $0x270] sm:$0xff]
      %v3040 = vld [vmem:[%s4 + $0x278] sm:$0xff]
      %v3041 = vld [vmem:[%s4 + $0x280] sm:$0xff]
      %v3042 = vld [vmem:[%s4 + $0x288] sm:$0xff]
      %v3043 = vld [vmem:[%s4 + $0x290] sm:$0xff]
      %v3044 = vld [vmem:[%s4 + $0x298] sm:$0xff]
      %v3045 = vld [vmem:[%s4 + $0x2a0] sm:$0xff]
      %v3046 = vld [vmem:[%s4 + $0x2a8] sm:$0xff]
      %v3047 = vld [vmem:[%s4 + $0x2b0] sm:$0xff]
      %v3048 = vld [vmem:[%s4 + $0x2b8] sm:$0xff]
      %v3049 = vld [vmem:[%s4 + $0x2c0] sm:$0xff]
      %v3050 = vld [vmem:[%s4 + $0x2c8] sm:$0xff]
      %v3051 = vld [vmem:[%s4 + $0x2d0] sm:$0xff]
      %v3052 = vld [vmem:[%s4 + $0x2d8] sm:$0xff]
      %v3053 = vld [vmem:[%s4 + $0x2e0] sm:$0xff]
      %v3054 = vld [vmem:[%s4 + $0x2e8] sm:$0xff]
      %v3055 = vld [vmem:[%s4 + $0x2f0] sm:$0xff]
      %v3056 = vld [vmem:[%s4 + $0x2f8] sm:$0xff]
      %v3057 = vld [vmem:[%s4 + $0x300] sm:$0xff]
      %v3058 = vld [vmem:[%s4 + $0x308] sm:$0xff]
      %v3059 = vld [vmem:[%s4 + $0x310] sm:$0xff]
      %v3060 = vld [vmem:[%s4 + $0x318] sm:$0xff]
      %v3061 = vld [vmem:[%s4 + $0x320] sm:$0xff]
      %v3062 = vld [vmem:[%s4 + $0x328] sm:$0xff]
      %v3063 = vld [vmem:[%s4 + $0x330] sm:$0xff]
      %v3064 = vld [vmem:[%s4 + $0x338] sm:$0xff]
      %v3065 = vld [vmem:[%s4 + $0x340] sm:$0xff]
      %v3066 = vld [vmem:[%s4 + $0x348] sm:$0xff]
      %v3067 = vld [vmem:[%s4 + $0x350] sm:$0xff]
      %v3068 = vld [vmem:[%s4 + $0x358] sm:$0xff]
      %v3069 = vld [vmem:[%s4 + $0x360] sm:$0xff]
      %v3070 = vld [vmem:[%s4 + $0x368] sm:$0xff]
      %v3071 = vld [vmem:[%s4 + $0x370] sm:$0xff]
      %v3072 = vld [vmem:[%s4 + $0x378] sm:$0xff]
      %v3073 = vld [vmem:[%s4 + $0x380] sm:$0xff]
      %v3074 = vld [vmem:[%s4 + $0x388] sm:$0xff]
      %v3075 = vld [vmem:[%s4 + $0x390] sm:$0xff]
      %v3076 = vld [vmem:[%s4 + $0x398] sm:$0xff]
      %v3077 = vld [vmem:[%s4 + $0x3a0] sm:$0xff]
      %v3078 = vld [vmem:[%s4 + $0x3a8] sm:$0xff]
      %v3079 = vld [vmem:[%s4 + $0x3b0] sm:$0xff]
      %v3080 = vld [vmem:[%s4 + $0x3b8] sm:$0xff]
      %v3081 = vld [vmem:[%s4 + $0x3c0] sm:$0xff]
      %v3082 = vld [vmem:[%s4 + $0x3c8] sm:$0xff]
      %v3083 = vld [vmem:[%s4 + $0x3d0] sm:$0xff]
      %v3084 = vld [vmem:[%s4 + $0x3d8] sm:$0xff]
      %v3085 = vld [vmem:[%s4 + $0x3e0] sm:$0xff]
      %v3086 = vld [vmem:[%s4 + $0x3e8] sm:$0xff]
      %v3087 = vld [vmem:[%s4 + $0x3f0] sm:$0xff]
      %v3088 = vld [vmem:[%s4 + $0x3f8] sm:$0xff]
      %v3089 = vld [vmem:[%s4 + $0x400] sm:$0xff]
      %v3090 = vld [vmem:[%s4 + $0x408] sm:$0xff]
      %v3091 = vld [vmem:[%s4 + $0x410] sm:$0xff]
      %v3092 = vld [vmem:[%s4 + $0x418] sm:$0xff]
      %v3093 = vld [vmem:[%s4 + $0x420] sm:$0xff]
      %v3094 = vld [vmem:[%s4 + $0x428] sm:$0xff]
      %v3095 = vld [vmem:[%s4 + $0x430] sm:$0xff]
      %v3096 = vld [vmem:[%s4 + $0x438] sm:$0xff]
      %v3097 = vld [vmem:[%s4 + $0x440] sm:$0xff]
      %v3098 = vld [vmem:[%s4 + $0x448] sm:$0xff]
      %v3099 = vld [vmem:[%s4 + $0x450] sm:$0xff]
      %v3100 = vld [vmem:[%s4 + $0x458] sm:$0xff]
      %v3101 = vld [vmem:[%s4 + $0x460] sm:$0xff]
      %v3102 = vld [vmem:[%s4 + $0x468] sm:$0xff]
      %v3103 = vld [vmem:[%s4 + $0x470] sm:$0xff]
      %v3104 = vld [vmem:[%s4 + $0x478] sm:$0xff]
      %3105 = vmatpush.msra.mxu0 %v2976
      %3106 = vmatpush.msra.mxu0 %v2975
      %3107 = vmatpush.msra.mxu0 %v2974
      %3108 = vmatpush.msra.mxu0 %v2973
      %3109 = vmatpush.msra.mxu0 %v2972
      %3110 = vmatpush.msra.mxu0 %v2971
      %3111 = vmatpush.msra.mxu0 %v2970
      %3112 = vmatpush.msra.mxu0 %v2969
      %3113 = vmatpush.msra.mxu0 %v2968
      %3114 = vmatpush.msra.mxu0 %v2967
      %3115 = vmatpush.msra.mxu0 %v2966
      %3116 = vmatpush.msra.mxu0 %v2965
      %3117 = vmatpush.msra.mxu0 %v2964
      %3118 = vmatpush.msra.mxu0 %v2963
      %3119 = vmatpush.msra.mxu0 %v2962
      %3120 = vmatpush.msra.mxu0 %v2961
      %3121 = vmatmul.f32.gmra.mxu0 %v2601
      %v3122 = vpop.f32.mrf.mxu0
      %v3123 = vadd.f32 0.0, %v3122
      %3124 = vmatmul.f32.gmra.mxu0 %v2602
      %v3125 = vpop.f32.mrf.mxu0
      %v3126 = vadd.f32 0.0, %v3125
      %3127 = vmatmul.f32.gmra.mxu0 %v2604
      %v3128 = vpop.f32.mrf.mxu0
      %v3129 = vadd.f32 0.0, %v3128
      %3130 = vmatmul.f32.gmra.mxu0 %v2605
      %v3131 = vpop.f32.mrf.mxu0
      %v3132 = vadd.f32 0.0, %v3131
      %3133 = vmatmul.f32.gmra.mxu0 %v2607
      %v3134 = vpop.f32.mrf.mxu0
      %v3135 = vadd.f32 0.0, %v3134
      %3136 = vmatmul.f32.gmra.mxu0 %v2608
      %v3137 = vpop.f32.mrf.mxu0
      %v3138 = vadd.f32 0.0, %v3137
      %3139 = vmatmul.f32.gmra.mxu0 %v2610
      %v3140 = vpop.f32.mrf.mxu0
      %v3141 = vadd.f32 0.0, %v3140
      %3142 = vmatmul.f32.gmra.mxu0 %v2611
      %v3143 = vpop.f32.mrf.mxu0
      %v3144 = vadd.f32 0.0, %v3143
      %3145 = vmatmul.f32.gmra.mxu0 %v2613
      %v3146 = vpop.f32.mrf.mxu0
      %v3147 = vadd.f32 0.0, %v3146
      %3148 = vmatmul.f32.gmra.mxu0 %v2614
      %v3149 = vpop.f32.mrf.mxu0
      %v3150 = vadd.f32 0.0, %v3149
      %3151 = vmatmul.f32.gmra.mxu0 %v2616
      %v3152 = vpop.f32.mrf.mxu0
      %v3153 = vadd.f32 0.0, %v3152
      %3154 = vmatmul.f32.gmra.mxu0 %v2617
      %v3155 = vpop.f32.mrf.mxu0
      %v3156 = vadd.f32 0.0, %v3155
      %3157 = vmatmul.f32.gmra.mxu0 %v2619
      %v3158 = vpop.f32.mrf.mxu0
      %v3159 = vadd.f32 0.0, %v3158
      %3160 = vmatmul.f32.gmra.mxu0 %v2620
      %v3161 = vpop.f32.mrf.mxu0
      %v3162 = vadd.f32 0.0, %v3161
      %3163 = vmatmul.f32.gmra.mxu0 %v2622
      %v3164 = vpop.f32.mrf.mxu0
      %v3165 = vadd.f32 0.0, %v3164
      %3166 = vmatmul.f32.gmra.mxu0 %v2623
      %v3167 = vpop.f32.mrf.mxu0
      %v3168 = vadd.f32 0.0, %v3167
      %3169 = vmatmul.f32.gmra.mxu0 %v2625
      %v3170 = vpop.f32.mrf.mxu0
      %v3171 = vadd.f32 0.0, %v3170
      %3172 = vmatmul.f32.gmra.mxu0 %v2626
      %v3173 = vpop.f32.mrf.mxu0
      %v3174 = vadd.f32 0.0, %v3173
      %3175 = vmatmul.f32.gmra.mxu0 %v2628
      %v3176 = vpop.f32.mrf.mxu0
      %v3177 = vadd.f32 0.0, %v3176
      %3178 = vmatmul.f32.gmra.mxu0 %v2629
      %v3179 = vpop.f32.mrf.mxu0
      %v3180 = vadd.f32 0.0, %v3179
      %3181 = vmatmul.f32.gmra.mxu0 %v2631
      %v3182 = vpop.f32.mrf.mxu0
      %v3183 = vadd.f32 0.0, %v3182
      %3184 = vmatmul.f32.gmra.mxu0 %v2632
      %v3185 = vpop.f32.mrf.mxu0
      %v3186 = vadd.f32 0.0, %v3185
      %3187 = vmatmul.f32.gmra.mxu0 %v2634
      %v3188 = vpop.f32.mrf.mxu0
      %v3189 = vadd.f32 0.0, %v3188
      %3190 = vmatmul.f32.gmra.mxu0 %v2635
      %v3191 = vpop.f32.mrf.mxu0
      %v3192 = vadd.f32 0.0, %v3191
      %3193 = vmatmul.f32.gmra.mxu0 %v2637
      %v3194 = vpop.f32.mrf.mxu0
      %v3195 = vadd.f32 0.0, %v3194
      %3196 = vmatmul.f32.gmra.mxu0 %v2638
      %v3197 = vpop.f32.mrf.mxu0
      %v3198 = vadd.f32 0.0, %v3197
      %3199 = vmatmul.f32.gmra.mxu0 %v2640
      %v3200 = vpop.f32.mrf.mxu0
      %v3201 = vadd.f32 0.0, %v3200
      %3202 = vmatmul.f32.gmra.mxu0 %v2641
      %v3203 = vpop.f32.mrf.mxu0
      %v3204 = vadd.f32 0.0, %v3203
      %3205 = vmatmul.f32.gmra.mxu0 %v2643
      %v3206 = vpop.f32.mrf.mxu0
      %v3207 = vadd.f32 0.0, %v3206
      %3208 = vmatmul.f32.gmra.mxu0 %v2644
      %v3209 = vpop.f32.mrf.mxu0
      %v3210 = vadd.f32 0.0, %v3209
      %3211 = vmatmul.f32.gmra.mxu0 %v2646
      %v3212 = vpop.f32.mrf.mxu0
      %v3213 = vadd.f32 0.0, %v3212
      %3214 = vmatmul.f32.gmra.mxu0 %v2647
      %v3215 = vpop.f32.mrf.mxu0
      %v3216 = vadd.f32 0.0, %v3215
      %3217 = vdwg.mxu0
      %3218 = vmatpush.msra.mxu0 %v2992
      %3219 = vmatpush.msra.mxu0 %v2991
      %3220 = vmatpush.msra.mxu0 %v2990
      %3221 = vmatpush.msra.mxu0 %v2989
      %3222 = vmatpush.msra.mxu0 %v2988
      %3223 = vmatpush.msra.mxu0 %v2987
      %3224 = vmatpush.msra.mxu0 %v2986
      %3225 = vmatpush.msra.mxu0 %v2985
      %3226 = vmatpush.msra.mxu0 %v2984
      %3227 = vmatpush.msra.mxu0 %v2983
      %3228 = vmatpush.msra.mxu0 %v2982
      %3229 = vmatpush.msra.mxu0 %v2981
      %3230 = vmatpush.msra.mxu0 %v2980
      %3231 = vmatpush.msra.mxu0 %v2979
      %3232 = vmatpush.msra.mxu0 %v2978
      %3233 = vmatpush.msra.mxu0 %v2977
      %3234 = vmatmul.f32.gmra.mxu0 %v2705
      %v3235 = vpop.f32.mrf.mxu0
      %v3236 = vadd.f32 %v3123, %v3235
      %3237 = vmatmul.f32.gmra.mxu0 %v2707
      %v3238 = vpop.f32.mrf.mxu0
      %v3239 = vadd.f32 %v3126, %v3238
      %3240 = vmatmul.f32.gmra.mxu0 %v2710
      %v3241 = vpop.f32.mrf.mxu0
      %v3242 = vadd.f32 %v3129, %v3241
      %3243 = vmatmul.f32.gmra.mxu0 %v2712
      %v3244 = vpop.f32.mrf.mxu0
      %v3245 = vadd.f32 %v3132, %v3244
      %3246 = vmatmul.f32.gmra.mxu0 %v2715
      %v3247 = vpop.f32.mrf.mxu0
      %v3248 = vadd.f32 %v3135, %v3247
      %3249 = vmatmul.f32.gmra.mxu0 %v2717
      %v3250 = vpop.f32.mrf.mxu0
      %v3251 = vadd.f32 %v3138, %v3250
      %3252 = vmatmul.f32.gmra.mxu0 %v2720
      %v3253 = vpop.f32.mrf.mxu0
      %v3254 = vadd.f32 %v3141, %v3253
      %3255 = vmatmul.f32.gmra.mxu0 %v2722
      %v3256 = vpop.f32.mrf.mxu0
      %v3257 = vadd.f32 %v3144, %v3256
      %3258 = vmatmul.f32.gmra.mxu0 %v2725
      %v3259 = vpop.f32.mrf.mxu0
      %v3260 = vadd.f32 %v3147, %v3259
      %3261 = vmatmul.f32.gmra.mxu0 %v2727
      %v3262 = vpop.f32.mrf.mxu0
      %v3263 = vadd.f32 %v3150, %v3262
      %3264 = vmatmul.f32.gmra.mxu0 %v2730
      %v3265 = vpop.f32.mrf.mxu0
      %v3266 = vadd.f32 %v3153, %v3265
      %3267 = vmatmul.f32.gmra.mxu0 %v2732
      %v3268 = vpop.f32.mrf.mxu0
      %v3269 = vadd.f32 %v3156, %v3268
      %3270 = vmatmul.f32.gmra.mxu0 %v2735
      %v3271 = vpop.f32.mrf.mxu0
      %v3272 = vadd.f32 %v3159, %v3271
      %3273 = vmatmul.f32.gmra.mxu0 %v2737
      %v3274 = vpop.f32.mrf.mxu0
      %v3275 = vadd.f32 %v3162, %v3274
      %3276 = vmatmul.f32.gmra.mxu0 %v2740
      %v3277 = vpop.f32.mrf.mxu0
      %v3278 = vadd.f32 %v3165, %v3277
      %3279 = vmatmul.f32.gmra.mxu0 %v2742
      %v3280 = vpop.f32.mrf.mxu0
      %v3281 = vadd.f32 %v3168, %v3280
      %3282 = vmatmul.f32.gmra.mxu0 %v2745
      %v3283 = vpop.f32.mrf.mxu0
      %v3284 = vadd.f32 %v3171, %v3283
      %3285 = vmatmul.f32.gmra.mxu0 %v2747
      %v3286 = vpop.f32.mrf.mxu0
      %v3287 = vadd.f32 %v3174, %v3286
      %3288 = vmatmul.f32.gmra.mxu0 %v2750
      %v3289 = vpop.f32.mrf.mxu0
      %v3290 = vadd.f32 %v3177, %v3289
      %3291 = vmatmul.f32.gmra.mxu0 %v2752
      %v3292 = vpop.f32.mrf.mxu0
      %v3293 = vadd.f32 %v3180, %v3292
      %3294 = vmatmul.f32.gmra.mxu0 %v2755
      %v3295 = vpop.f32.mrf.mxu0
      %v3296 = vadd.f32 %v3183, %v3295
      %3297 = vmatmul.f32.gmra.mxu0 %v2757
      %v3298 = vpop.f32.mrf.mxu0
      %v3299 = vadd.f32 %v3186, %v3298
      %3300 = vmatmul.f32.gmra.mxu0 %v2760
      %v3301 = vpop.f32.mrf.mxu0
      %v3302 = vadd.f32 %v3189, %v3301
      %3303 = vmatmul.f32.gmra.mxu0 %v2762
      %v3304 = vpop.f32.mrf.mxu0
      %v3305 = vadd.f32 %v3192, %v3304
      %3306 = vmatmul.f32.gmra.mxu0 %v2765
      %v3307 = vpop.f32.mrf.mxu0
      %v3308 = vadd.f32 %v3195, %v3307
      %3309 = vmatmul.f32.gmra.mxu0 %v2767
      %v3310 = vpop.f32.mrf.mxu0
      %v3311 = vadd.f32 %v3198, %v3310
      %3312 = vmatmul.f32.gmra.mxu0 %v2770
      %v3313 = vpop.f32.mrf.mxu0
      %v3314 = vadd.f32 %v3201, %v3313
      %3315 = vmatmul.f32.gmra.mxu0 %v2772
      %v3316 = vpop.f32.mrf.mxu0
      %v3317 = vadd.f32 %v3204, %v3316
      %3318 = vmatmul.f32.gmra.mxu0 %v2775
      %v3319 = vpop.f32.mrf.mxu0
      %v3320 = vadd.f32 %v3207, %v3319
      %3321 = vmatmul.f32.gmra.mxu0 %v2777
      %v3322 = vpop.f32.mrf.mxu0
      %v3323 = vadd.f32 %v3210, %v3322
      %3324 = vmatmul.f32.gmra.mxu0 %v2780
      %v3325 = vpop.f32.mrf.mxu0
      %v3326 = vadd.f32 %v3213, %v3325
      %3327 = vmatmul.f32.gmra.mxu0 %v2782
      %v3328 = vpop.f32.mrf.mxu0
      %v3329 = vadd.f32 %v3216, %v3328
      %3330 = vdwg.mxu0
      %3331 = vmatpush.msra.mxu0 %v3008
      %3332 = vmatpush.msra.mxu0 %v3007
      %3333 = vmatpush.msra.mxu0 %v3006
      %3334 = vmatpush.msra.mxu0 %v3005
      %3335 = vmatpush.msra.mxu0 %v3004
      %3336 = vmatpush.msra.mxu0 %v3003
      %3337 = vmatpush.msra.mxu0 %v3002
      %3338 = vmatpush.msra.mxu0 %v3001
      %3339 = vmatpush.msra.mxu0 %v3000
      %3340 = vmatpush.msra.mxu0 %v2999
      %3341 = vmatpush.msra.mxu0 %v2998
      %3342 = vmatpush.msra.mxu0 %v2997
      %3343 = vmatpush.msra.mxu0 %v2996
      %3344 = vmatpush.msra.mxu0 %v2995
      %3345 = vmatpush.msra.mxu0 %v2994
      %3346 = vmatpush.msra.mxu0 %v2993
      %3347 = vmatmul.f32.gmra.mxu0 %v2817
      %v3348 = vpop.f32.mrf.mxu0
      %v3349 = vadd.f32 %v3236, %v3348
      %3350 = vmatmul.f32.gmra.mxu0 %v2819
      %v3351 = vpop.f32.mrf.mxu0
      %v3352 = vadd.f32 %v3239, %v3351
      %3353 = vmatmul.f32.gmra.mxu0 %v2822
      %v3354 = vpop.f32.mrf.mxu0
      %v3355 = vadd.f32 %v3242, %v3354
      %3356 = vmatmul.f32.gmra.mxu0 %v2824
      %v3357 = vpop.f32.mrf.mxu0
      %v3358 = vadd.f32 %v3245, %v3357
      %3359 = vmatmul.f32.gmra.mxu0 %v2827
      %v3360 = vpop.f32.mrf.mxu0
      %v3361 = vadd.f32 %v3248, %v3360
      %3362 = vmatmul.f32.gmra.mxu0 %v2829
      %v3363 = vpop.f32.mrf.mxu0
      %v3364 = vadd.f32 %v3251, %v3363
      %3365 = vmatmul.f32.gmra.mxu0 %v2832
      %v3366 = vpop.f32.mrf.mxu0
      %v3367 = vadd.f32 %v3254, %v3366
      %3368 = vmatmul.f32.gmra.mxu0 %v2834
      %v3369 = vpop.f32.mrf.mxu0
      %v3370 = vadd.f32 %v3257, %v3369
      %3371 = vmatmul.f32.gmra.mxu0 %v2837
      %v3372 = vpop.f32.mrf.mxu0
      %v3373 = vadd.f32 %v3260, %v3372
      %3374 = vmatmul.f32.gmra.mxu0 %v2839
      %v3375 = vpop.f32.mrf.mxu0
      %v3376 = vadd.f32 %v3263, %v3375
      %3377 = vmatmul.f32.gmra.mxu0 %v2842
      %v3378 = vpop.f32.mrf.mxu0
      %v3379 = vadd.f32 %v3266, %v3378
      %3380 = vmatmul.f32.gmra.mxu0 %v2844
      %v3381 = vpop.f32.mrf.mxu0
      %v3382 = vadd.f32 %v3269, %v3381
      %3383 = vmatmul.f32.gmra.mxu0 %v2847
      %v3384 = vpop.f32.mrf.mxu0
      %v3385 = vadd.f32 %v3272, %v3384
      %3386 = vmatmul.f32.gmra.mxu0 %v2849
      %v3387 = vpop.f32.mrf.mxu0
      %v3388 = vadd.f32 %v3275, %v3387
      %3389 = vmatmul.f32.gmra.mxu0 %v2852
      %v3390 = vpop.f32.mrf.mxu0
      %v3391 = vadd.f32 %v3278, %v3390
      %3392 = vmatmul.f32.gmra.mxu0 %v2854
      %v3393 = vpop.f32.mrf.mxu0
      %v3394 = vadd.f32 %v3281, %v3393
      %3395 = vmatmul.f32.gmra.mxu0 %v2857
      %v3396 = vpop.f32.mrf.mxu0
      %v3397 = vadd.f32 %v3284, %v3396
      %3398 = vmatmul.f32.gmra.mxu0 %v2859
      %v3399 = vpop.f32.mrf.mxu0
      %v3400 = vadd.f32 %v3287, %v3399
      %3401 = vmatmul.f32.gmra.mxu0 %v2862
      %v3402 = vpop.f32.mrf.mxu0
      %v3403 = vadd.f32 %v3290, %v3402
      %3404 = vmatmul.f32.gmra.mxu0 %v2864
      %v3405 = vpop.f32.mrf.mxu0
      %v3406 = vadd.f32 %v3293, %v3405
      %3407 = vmatmul.f32.gmra.mxu0 %v2867
      %v3408 = vpop.f32.mrf.mxu0
      %v3409 = vadd.f32 %v3296, %v3408
      %3410 = vmatmul.f32.gmra.mxu0 %v2869
      %v3411 = vpop.f32.mrf.mxu0
      %v3412 = vadd.f32 %v3299, %v3411
      %3413 = vmatmul.f32.gmra.mxu0 %v2872
      %v3414 = vpop.f32.mrf.mxu0
      %v3415 = vadd.f32 %v3302, %v3414
      %3416 = vmatmul.f32.gmra.mxu0 %v2874
      %v3417 = vpop.f32.mrf.mxu0
      %v3418 = vadd.f32 %v3305, %v3417
      %3419 = vmatmul.f32.gmra.mxu0 %v2877
      %v3420 = vpop.f32.mrf.mxu0
      %v3421 = vadd.f32 %v3308, %v3420
      %3422 = vmatmul.f32.gmra.mxu0 %v2879
      %v3423 = vpop.f32.mrf.mxu0
      %v3424 = vadd.f32 %v3311, %v3423
      %3425 = vmatmul.f32.gmra.mxu0 %v2882
      %v3426 = vpop.f32.mrf.mxu0
      %v3427 = vadd.f32 %v3314, %v3426
      %3428 = vmatmul.f32.gmra.mxu0 %v2884
      %v3429 = vpop.f32.mrf.mxu0
      %v3430 = vadd.f32 %v3317, %v3429
      %3431 = vmatmul.f32.gmra.mxu0 %v2887
      %v3432 = vpop.f32.mrf.mxu0
      %v3433 = vadd.f32 %v3320, %v3432
      %3434 = vmatmul.f32.gmra.mxu0 %v2889
      %v3435 = vpop.f32.mrf.mxu0
      %v3436 = vadd.f32 %v3323, %v3435
      %3437 = vmatmul.f32.gmra.mxu0 %v2892
      %v3438 = vpop.f32.mrf.mxu0
      %v3439 = vadd.f32 %v3326, %v3438
      %3440 = vmatmul.f32.gmra.mxu0 %v2894
      %v3441 = vpop.f32.mrf.mxu0
      %v3442 = vadd.f32 %v3329, %v3441
      %3443 = vdwg.mxu0
      %3444 = vmatpush.msra.mxu0 %v3024
      %3445 = vmatpush.msra.mxu0 %v3023
      %3446 = vmatpush.msra.mxu0 %v3022
      %3447 = vmatpush.msra.mxu0 %v3021
      %3448 = vmatpush.msra.mxu0 %v3020
      %3449 = vmatpush.msra.mxu0 %v3019
      %3450 = vmatpush.msra.mxu0 %v3018
      %3451 = vmatpush.msra.mxu0 %v3017
      %3452 = vmatpush.msra.mxu0 %v3016
      %3453 = vmatpush.msra.mxu0 %v3015
      %3454 = vmatpush.msra.mxu0 %v3014
      %3455 = vmatpush.msra.mxu0 %v3013
      %3456 = vmatpush.msra.mxu0 %v3012
      %3457 = vmatpush.msra.mxu0 %v3011
      %3458 = vmatpush.msra.mxu0 %v3010
      %3459 = vmatpush.msra.mxu0 %v3009
      %3460 = vmatmul.f32.gmra.mxu0 %v2604
      %v3461 = vpop.f32.mrf.mxu0
      %v3462 = vadd.f32 %v3349, %v3461
      %3463 = vmatmul.f32.gmra.mxu0 %v2605
      %v3464 = vpop.f32.mrf.mxu0
      %v3465 = vadd.f32 %v3352, %v3464
      %3466 = vmatmul.f32.gmra.mxu0 %v2607
      %v3467 = vpop.f32.mrf.mxu0
      %v3468 = vadd.f32 %v3355, %v3467
      %3469 = vmatmul.f32.gmra.mxu0 %v2608
      %v3470 = vpop.f32.mrf.mxu0
      %v3471 = vadd.f32 %v3358, %v3470
      %3472 = vmatmul.f32.gmra.mxu0 %v2610
      %v3473 = vpop.f32.mrf.mxu0
      %v3474 = vadd.f32 %v3361, %v3473
      %3475 = vmatmul.f32.gmra.mxu0 %v2611
      %v3476 = vpop.f32.mrf.mxu0
      %v3477 = vadd.f32 %v3364, %v3476
      %3478 = vmatmul.f32.gmra.mxu0 %v2613
      %v3479 = vpop.f32.mrf.mxu0
      %v3480 = vadd.f32 %v3367, %v3479
      %3481 = vmatmul.f32.gmra.mxu0 %v2614
      %v3482 = vpop.f32.mrf.mxu0
      %v3483 = vadd.f32 %v3370, %v3482
      %3484 = vmatmul.f32.gmra.mxu0 %v2616
      %v3485 = vpop.f32.mrf.mxu0
      %v3486 = vadd.f32 %v3373, %v3485
      %3487 = vmatmul.f32.gmra.mxu0 %v2617
      %v3488 = vpop.f32.mrf.mxu0
      %v3489 = vadd.f32 %v3376, %v3488
      %3490 = vmatmul.f32.gmra.mxu0 %v2619
      %v3491 = vpop.f32.mrf.mxu0
      %v3492 = vadd.f32 %v3379, %v3491
      %3493 = vmatmul.f32.gmra.mxu0 %v2620
      %v3494 = vpop.f32.mrf.mxu0
      %v3495 = vadd.f32 %v3382, %v3494
      %3496 = vmatmul.f32.gmra.mxu0 %v2622
      %v3497 = vpop.f32.mrf.mxu0
      %v3498 = vadd.f32 %v3385, %v3497
      %3499 = vmatmul.f32.gmra.mxu0 %v2623
      %v3500 = vpop.f32.mrf.mxu0
      %v3501 = vadd.f32 %v3388, %v3500
      %3502 = vmatmul.f32.gmra.mxu0 %v2625
      %v3503 = vpop.f32.mrf.mxu0
      %v3504 = vadd.f32 %v3391, %v3503
      %3505 = vmatmul.f32.gmra.mxu0 %v2626
      %v3506 = vpop.f32.mrf.mxu0
      %v3507 = vadd.f32 %v3394, %v3506
      %3508 = vmatmul.f32.gmra.mxu0 %v2628
      %v3509 = vpop.f32.mrf.mxu0
      %v3510 = vadd.f32 %v3397, %v3509
      %3511 = vmatmul.f32.gmra.mxu0 %v2629
      %v3512 = vpop.f32.mrf.mxu0
      %v3513 = vadd.f32 %v3400, %v3512
      %3514 = vmatmul.f32.gmra.mxu0 %v2631
      %v3515 = vpop.f32.mrf.mxu0
      %v3516 = vadd.f32 %v3403, %v3515
      %3517 = vmatmul.f32.gmra.mxu0 %v2632
      %v3518 = vpop.f32.mrf.mxu0
      %v3519 = vadd.f32 %v3406, %v3518
      %3520 = vmatmul.f32.gmra.mxu0 %v2634
      %v3521 = vpop.f32.mrf.mxu0
      %v3522 = vadd.f32 %v3409, %v3521
      %3523 = vmatmul.f32.gmra.mxu0 %v2635
      %v3524 = vpop.f32.mrf.mxu0
      %v3525 = vadd.f32 %v3412, %v3524
      %3526 = vmatmul.f32.gmra.mxu0 %v2637
      %v3527 = vpop.f32.mrf.mxu0
      %v3528 = vadd.f32 %v3415, %v3527
      %3529 = vmatmul.f32.gmra.mxu0 %v2638
      %v3530 = vpop.f32.mrf.mxu0
      %v3531 = vadd.f32 %v3418, %v3530
      %3532 = vmatmul.f32.gmra.mxu0 %v2640
      %v3533 = vpop.f32.mrf.mxu0
      %v3534 = vadd.f32 %v3421, %v3533
      %3535 = vmatmul.f32.gmra.mxu0 %v2641
      %v3536 = vpop.f32.mrf.mxu0
      %v3537 = vadd.f32 %v3424, %v3536
      %3538 = vmatmul.f32.gmra.mxu0 %v2643
      %v3539 = vpop.f32.mrf.mxu0
      %v3540 = vadd.f32 %v3427, %v3539
      %3541 = vmatmul.f32.gmra.mxu0 %v2644
      %v3542 = vpop.f32.mrf.mxu0
      %v3543 = vadd.f32 %v3430, %v3542
      %3544 = vmatmul.f32.gmra.mxu0 %v2646
      %v3545 = vpop.f32.mrf.mxu0
      %v3546 = vadd.f32 %v3433, %v3545
      %3547 = vmatmul.f32.gmra.mxu0 %v2647
      %v3548 = vpop.f32.mrf.mxu0
      %v3549 = vadd.f32 %v3436, %v3548
      %3550 = vmatmul.f32.gmra.mxu0 %v2649
      %v3551 = vpop.f32.mrf.mxu0
      %v3552 = vadd.f32 %v3439, %v3551
      %3553 = vmatmul.f32.gmra.mxu0 %v2650
      %v3554 = vpop.f32.mrf.mxu0
      %v3555 = vadd.f32 %v3442, %v3554
      %3556 = vdwg.mxu0
      %3557 = vmatpush.msra.mxu0 %v3040
      %3558 = vmatpush.msra.mxu0 %v3039
      %3559 = vmatpush.msra.mxu0 %v3038
      %3560 = vmatpush.msra.mxu0 %v3037
      %3561 = vmatpush.msra.mxu0 %v3036
      %3562 = vmatpush.msra.mxu0 %v3035
      %3563 = vmatpush.msra.mxu0 %v3034
      %3564 = vmatpush.msra.mxu0 %v3033
      %3565 = vmatpush.msra.mxu0 %v3032
      %3566 = vmatpush.msra.mxu0 %v3031
      %3567 = vmatpush.msra.mxu0 %v3030
      %3568 = vmatpush.msra.mxu0 %v3029
      %3569 = vmatpush.msra.mxu0 %v3028
      %3570 = vmatpush.msra.mxu0 %v3027
      %3571 = vmatpush.msra.mxu0 %v3026
      %3572 = vmatpush.msra.mxu0 %v3025
      %3573 = vmatmul.f32.gmra.mxu0 %v2710
      %v3574 = vpop.f32.mrf.mxu0
      %v3575 = vadd.f32 %v3462, %v3574
      %3576 = vmatmul.f32.gmra.mxu0 %v2712
      %v3577 = vpop.f32.mrf.mxu0
      %v3578 = vadd.f32 %v3465, %v3577
      %3579 = vmatmul.f32.gmra.mxu0 %v2715
      %v3580 = vpop.f32.mrf.mxu0
      %v3581 = vadd.f32 %v3468, %v3580
      %3582 = vmatmul.f32.gmra.mxu0 %v2717
      %v3583 = vpop.f32.mrf.mxu0
      %v3584 = vadd.f32 %v3471, %v3583
      %3585 = vmatmul.f32.gmra.mxu0 %v2720
      %v3586 = vpop.f32.mrf.mxu0
      %v3587 = vadd.f32 %v3474, %v3586
      %3588 = vmatmul.f32.gmra.mxu0 %v2722
      %v3589 = vpop.f32.mrf.mxu0
      %v3590 = vadd.f32 %v3477, %v3589
      %3591 = vmatmul.f32.gmra.mxu0 %v2725
      %v3592 = vpop.f32.mrf.mxu0
      %v3593 = vadd.f32 %v3480, %v3592
      %3594 = vmatmul.f32.gmra.mxu0 %v2727
      %v3595 = vpop.f32.mrf.mxu0
      %v3596 = vadd.f32 %v3483, %v3595
      %3597 = vmatmul.f32.gmra.mxu0 %v2730
      %v3598 = vpop.f32.mrf.mxu0
      %v3599 = vadd.f32 %v3486, %v3598
      %3600 = vmatmul.f32.gmra.mxu0 %v2732
      %v3601 = vpop.f32.mrf.mxu0
      %v3602 = vadd.f32 %v3489, %v3601
      %3603 = vmatmul.f32.gmra.mxu0 %v2735
      %v3604 = vpop.f32.mrf.mxu0
      %v3605 = vadd.f32 %v3492, %v3604
      %3606 = vmatmul.f32.gmra.mxu0 %v2737
      %v3607 = vpop.f32.mrf.mxu0
      %v3608 = vadd.f32 %v3495, %v3607
      %3609 = vmatmul.f32.gmra.mxu0 %v2740
      %v3610 = vpop.f32.mrf.mxu0
      %v3611 = vadd.f32 %v3498, %v3610
      %3612 = vmatmul.f32.gmra.mxu0 %v2742
      %v3613 = vpop.f32.mrf.mxu0
      %v3614 = vadd.f32 %v3501, %v3613
      %3615 = vmatmul.f32.gmra.mxu0 %v2745
      %v3616 = vpop.f32.mrf.mxu0
      %v3617 = vadd.f32 %v3504, %v3616
      %3618 = vmatmul.f32.gmra.mxu0 %v2747
      %v3619 = vpop.f32.mrf.mxu0
      %v3620 = vadd.f32 %v3507, %v3619
      %3621 = vmatmul.f32.gmra.mxu0 %v2750
      %v3622 = vpop.f32.mrf.mxu0
      %v3623 = vadd.f32 %v3510, %v3622
      %3624 = vmatmul.f32.gmra.mxu0 %v2752
      %v3625 = vpop.f32.mrf.mxu0
      %v3626 = vadd.f32 %v3513, %v3625
      %3627 = vmatmul.f32.gmra.mxu0 %v2755
      %v3628 = vpop.f32.mrf.mxu0
      %v3629 = vadd.f32 %v3516, %v3628
      %3630 = vmatmul.f32.gmra.mxu0 %v2757
      %v3631 = vpop.f32.mrf.mxu0
      %v3632 = vadd.f32 %v3519, %v3631
      %3633 = vmatmul.f32.gmra.mxu0 %v2760
      %v3634 = vpop.f32.mrf.mxu0
      %v3635 = vadd.f32 %v3522, %v3634
      %3636 = vmatmul.f32.gmra.mxu0 %v2762
      %v3637 = vpop.f32.mrf.mxu0
      %v3638 = vadd.f32 %v3525, %v3637
      %3639 = vmatmul.f32.gmra.mxu0 %v2765
      %v3640 = vpop.f32.mrf.mxu0
      %v3641 = vadd.f32 %v3528, %v3640
      %3642 = vmatmul.f32.gmra.mxu0 %v2767
      %v3643 = vpop.f32.mrf.mxu0
      %v3644 = vadd.f32 %v3531, %v3643
      %3645 = vmatmul.f32.gmra.mxu0 %v2770
      %v3646 = vpop.f32.mrf.mxu0
      %v3647 = vadd.f32 %v3534, %v3646
      %3648 = vmatmul.f32.gmra.mxu0 %v2772
      %v3649 = vpop.f32.mrf.mxu0
      %v3650 = vadd.f32 %v3537, %v3649
      %3651 = vmatmul.f32.gmra.mxu0 %v2775
      %v3652 = vpop.f32.mrf.mxu0
      %v3653 = vadd.f32 %v3540, %v3652
      %3654 = vmatmul.f32.gmra.mxu0 %v2777
      %v3655 = vpop.f32.mrf.mxu0
      %v3656 = vadd.f32 %v3543, %v3655
      %3657 = vmatmul.f32.gmra.mxu0 %v2780
      %v3658 = vpop.f32.mrf.mxu0
      %v3659 = vadd.f32 %v3546, %v3658
      %3660 = vmatmul.f32.gmra.mxu0 %v2782
      %v3661 = vpop.f32.mrf.mxu0
      %v3662 = vadd.f32 %v3549, %v3661
      %3663 = vmatmul.f32.gmra.mxu0 %v2932
      %v3664 = vpop.f32.mrf.mxu0
      %v3665 = vadd.f32 %v3552, %v3664
      %3666 = vmatmul.f32.gmra.mxu0 %v2934
      %v3667 = vpop.f32.mrf.mxu0
      %v3668 = vadd.f32 %v3555, %v3667
      %3669 = vdwg.mxu0
      %3670 = vmatpush.msra.mxu0 %v3056
      %3671 = vmatpush.msra.mxu0 %v3055
      %3672 = vmatpush.msra.mxu0 %v3054
      %3673 = vmatpush.msra.mxu0 %v3053
      %3674 = vmatpush.msra.mxu0 %v3052
      %3675 = vmatpush.msra.mxu0 %v3051
      %3676 = vmatpush.msra.mxu0 %v3050
      %3677 = vmatpush.msra.mxu0 %v3049
      %3678 = vmatpush.msra.mxu0 %v3048
      %3679 = vmatpush.msra.mxu0 %v3047
      %3680 = vmatpush.msra.mxu0 %v3046
      %3681 = vmatpush.msra.mxu0 %v3045
      %3682 = vmatpush.msra.mxu0 %v3044
      %3683 = vmatpush.msra.mxu0 %v3043
      %3684 = vmatpush.msra.mxu0 %v3042
      %3685 = vmatpush.msra.mxu0 %v3041
      %3686 = vmatmul.f32.gmra.mxu0 %v2822
      %v3687 = vpop.f32.mrf.mxu0
      %v3688 = vadd.f32 %v3575, %v3687
      %3689 = vmatmul.f32.gmra.mxu0 %v2824
      %v3690 = vpop.f32.mrf.mxu0
      %v3691 = vadd.f32 %v3578, %v3690
      %3692 = vmatmul.f32.gmra.mxu0 %v2827
      %v3693 = vpop.f32.mrf.mxu0
      %v3694 = vadd.f32 %v3581, %v3693
      %3695 = vmatmul.f32.gmra.mxu0 %v2829
      %v3696 = vpop.f32.mrf.mxu0
      %v3697 = vadd.f32 %v3584, %v3696
      %3698 = vmatmul.f32.gmra.mxu0 %v2832
      %v3699 = vpop.f32.mrf.mxu0
      %v3700 = vadd.f32 %v3587, %v3699
      %3701 = vmatmul.f32.gmra.mxu0 %v2834
      %v3702 = vpop.f32.mrf.mxu0
      %v3703 = vadd.f32 %v3590, %v3702
      %3704 = vmatmul.f32.gmra.mxu0 %v2837
      %v3705 = vpop.f32.mrf.mxu0
      %v3706 = vadd.f32 %v3593, %v3705
      %3707 = vmatmul.f32.gmra.mxu0 %v2839
      %v3708 = vpop.f32.mrf.mxu0
      %v3709 = vadd.f32 %v3596, %v3708
      %3710 = vmatmul.f32.gmra.mxu0 %v2842
      %v3711 = vpop.f32.mrf.mxu0
      %v3712 = vadd.f32 %v3599, %v3711
      %3713 = vmatmul.f32.gmra.mxu0 %v2844
      %v3714 = vpop.f32.mrf.mxu0
      %v3715 = vadd.f32 %v3602, %v3714
      %3716 = vmatmul.f32.gmra.mxu0 %v2847
      %v3717 = vpop.f32.mrf.mxu0
      %v3718 = vadd.f32 %v3605, %v3717
      %3719 = vmatmul.f32.gmra.mxu0 %v2849
      %v3720 = vpop.f32.mrf.mxu0
      %v3721 = vadd.f32 %v3608, %v3720
      %3722 = vmatmul.f32.gmra.mxu0 %v2852
      %v3723 = vpop.f32.mrf.mxu0
      %v3724 = vadd.f32 %v3611, %v3723
      %3725 = vmatmul.f32.gmra.mxu0 %v2854
      %v3726 = vpop.f32.mrf.mxu0
      %v3727 = vadd.f32 %v3614, %v3726
      %3728 = vmatmul.f32.gmra.mxu0 %v2857
      %v3729 = vpop.f32.mrf.mxu0
      %v3730 = vadd.f32 %v3617, %v3729
      %3731 = vmatmul.f32.gmra.mxu0 %v2859
      %v3732 = vpop.f32.mrf.mxu0
      %v3733 = vadd.f32 %v3620, %v3732
      %3734 = vmatmul.f32.gmra.mxu0 %v2862
      %v3735 = vpop.f32.mrf.mxu0
      %v3736 = vadd.f32 %v3623, %v3735
      %3737 = vmatmul.f32.gmra.mxu0 %v2864
      %v3738 = vpop.f32.mrf.mxu0
      %v3739 = vadd.f32 %v3626, %v3738
      %3740 = vmatmul.f32.gmra.mxu0 %v2867
      %v3741 = vpop.f32.mrf.mxu0
      %v3742 = vadd.f32 %v3629, %v3741
      %3743 = vmatmul.f32.gmra.mxu0 %v2869
      %v3744 = vpop.f32.mrf.mxu0
      %v3745 = vadd.f32 %v3632, %v3744
      %3746 = vmatmul.f32.gmra.mxu0 %v2872
      %v3747 = vpop.f32.mrf.mxu0
      %v3748 = vadd.f32 %v3635, %v3747
      %3749 = vmatmul.f32.gmra.mxu0 %v2874
      %v3750 = vpop.f32.mrf.mxu0
      %v3751 = vadd.f32 %v3638, %v3750
      %3752 = vmatmul.f32.gmra.mxu0 %v2877
      %v3753 = vpop.f32.mrf.mxu0
      %v3754 = vadd.f32 %v3641, %v3753
      %3755 = vmatmul.f32.gmra.mxu0 %v2879
      %v3756 = vpop.f32.mrf.mxu0
      %v3757 = vadd.f32 %v3644, %v3756
      %3758 = vmatmul.f32.gmra.mxu0 %v2882
      %v3759 = vpop.f32.mrf.mxu0
      %v3760 = vadd.f32 %v3647, %v3759
      %3761 = vmatmul.f32.gmra.mxu0 %v2884
      %v3762 = vpop.f32.mrf.mxu0
      %v3763 = vadd.f32 %v3650, %v3762
      %3764 = vmatmul.f32.gmra.mxu0 %v2887
      %v3765 = vpop.f32.mrf.mxu0
      %v3766 = vadd.f32 %v3653, %v3765
      %3767 = vmatmul.f32.gmra.mxu0 %v2889
      %v3768 = vpop.f32.mrf.mxu0
      %v3769 = vadd.f32 %v3656, %v3768
      %3770 = vmatmul.f32.gmra.mxu0 %v2892
      %v3771 = vpop.f32.mrf.mxu0
      %v3772 = vadd.f32 %v3659, %v3771
      %3773 = vmatmul.f32.gmra.mxu0 %v2894
      %v3774 = vpop.f32.mrf.mxu0
      %v3775 = vadd.f32 %v3662, %v3774
      %3776 = vmatmul.f32.gmra.mxu0 %v2939
      %v3777 = vpop.f32.mrf.mxu0
      %v3778 = vadd.f32 %v3665, %v3777
      %3779 = vmatmul.f32.gmra.mxu0 %v2941
      %v3780 = vpop.f32.mrf.mxu0
      %v3781 = vadd.f32 %v3668, %v3780
      %3782 = vdwg.mxu0
      %3783 = vmatpush.msra.mxu0 %v3072
      %3784 = vmatpush.msra.mxu0 %v3071
      %3785 = vmatpush.msra.mxu0 %v3070
      %3786 = vmatpush.msra.mxu0 %v3069
      %3787 = vmatpush.msra.mxu0 %v3068
      %3788 = vmatpush.msra.mxu0 %v3067
      %3789 = vmatpush.msra.mxu0 %v3066
      %3790 = vmatpush.msra.mxu0 %v3065
      %3791 = vmatpush.msra.mxu0 %v3064
      %3792 = vmatpush.msra.mxu0 %v3063
      %3793 = vmatpush.msra.mxu0 %v3062
      %3794 = vmatpush.msra.mxu0 %v3061
      %3795 = vmatpush.msra.mxu0 %v3060
      %3796 = vmatpush.msra.mxu0 %v3059
      %3797 = vmatpush.msra.mxu0 %v3058
      %3798 = vmatpush.msra.mxu0 %v3057
      %3799 = vmatmul.f32.gmra.mxu0 %v2607
      %v3800 = vpop.f32.mrf.mxu0
      %v3801 = vadd.f32 %v3688, %v3800
      %3802 = vmatmul.f32.gmra.mxu0 %v2608
      %v3803 = vpop.f32.mrf.mxu0
      %v3804 = vadd.f32 %v3691, %v3803
      %3805 = vmatmul.f32.gmra.mxu0 %v2610
      %v3806 = vpop.f32.mrf.mxu0
      %v3807 = vadd.f32 %v3694, %v3806
      %3808 = vmatmul.f32.gmra.mxu0 %v2611
      %v3809 = vpop.f32.mrf.mxu0
      %v3810 = vadd.f32 %v3697, %v3809
      %3811 = vmatmul.f32.gmra.mxu0 %v2613
      %v3812 = vpop.f32.mrf.mxu0
      %v3813 = vadd.f32 %v3700, %v3812
      %3814 = vmatmul.f32.gmra.mxu0 %v2614
      %v3815 = vpop.f32.mrf.mxu0
      %v3816 = vadd.f32 %v3703, %v3815
      %3817 = vmatmul.f32.gmra.mxu0 %v2616
      %v3818 = vpop.f32.mrf.mxu0
      %v3819 = vadd.f32 %v3706, %v3818
      %3820 = vmatmul.f32.gmra.mxu0 %v2617
      %v3821 = vpop.f32.mrf.mxu0
      %v3822 = vadd.f32 %v3709, %v3821
      %3823 = vmatmul.f32.gmra.mxu0 %v2619
      %v3824 = vpop.f32.mrf.mxu0
      %v3825 = vadd.f32 %v3712, %v3824
      %3826 = vmatmul.f32.gmra.mxu0 %v2620
      %v3827 = vpop.f32.mrf.mxu0
      %v3828 = vadd.f32 %v3715, %v3827
      %3829 = vmatmul.f32.gmra.mxu0 %v2622
      %v3830 = vpop.f32.mrf.mxu0
      %v3831 = vadd.f32 %v3718, %v3830
      %3832 = vmatmul.f32.gmra.mxu0 %v2623
      %v3833 = vpop.f32.mrf.mxu0
      %v3834 = vadd.f32 %v3721, %v3833
      %3835 = vmatmul.f32.gmra.mxu0 %v2625
      %v3836 = vpop.f32.mrf.mxu0
      %v3837 = vadd.f32 %v3724, %v3836
      %3838 = vmatmul.f32.gmra.mxu0 %v2626
      %v3839 = vpop.f32.mrf.mxu0
      %v3840 = vadd.f32 %v3727, %v3839
      %3841 = vmatmul.f32.gmra.mxu0 %v2628
      %v3842 = vpop.f32.mrf.mxu0
      %v3843 = vadd.f32 %v3730, %v3842
      %3844 = vmatmul.f32.gmra.mxu0 %v2629
      %v3845 = vpop.f32.mrf.mxu0
      %v3846 = vadd.f32 %v3733, %v3845
      %3847 = vmatmul.f32.gmra.mxu0 %v2631
      %v3848 = vpop.f32.mrf.mxu0
      %v3849 = vadd.f32 %v3736, %v3848
      %3850 = vmatmul.f32.gmra.mxu0 %v2632
      %v3851 = vpop.f32.mrf.mxu0
      %v3852 = vadd.f32 %v3739, %v3851
      %3853 = vmatmul.f32.gmra.mxu0 %v2634
      %v3854 = vpop.f32.mrf.mxu0
      %v3855 = vadd.f32 %v3742, %v3854
      %3856 = vmatmul.f32.gmra.mxu0 %v2635
      %v3857 = vpop.f32.mrf.mxu0
      %v3858 = vadd.f32 %v3745, %v3857
      %3859 = vmatmul.f32.gmra.mxu0 %v2637
      %v3860 = vpop.f32.mrf.mxu0
      %v3861 = vadd.f32 %v3748, %v3860
      %3862 = vmatmul.f32.gmra.mxu0 %v2638
      %v3863 = vpop.f32.mrf.mxu0
      %v3864 = vadd.f32 %v3751, %v3863
      %3865 = vmatmul.f32.gmra.mxu0 %v2640
      %v3866 = vpop.f32.mrf.mxu0
      %v3867 = vadd.f32 %v3754, %v3866
      %3868 = vmatmul.f32.gmra.mxu0 %v2641
      %v3869 = vpop.f32.mrf.mxu0
      %v3870 = vadd.f32 %v3757, %v3869
      %3871 = vmatmul.f32.gmra.mxu0 %v2643
      %v3872 = vpop.f32.mrf.mxu0
      %v3873 = vadd.f32 %v3760, %v3872
      %3874 = vmatmul.f32.gmra.mxu0 %v2644
      %v3875 = vpop.f32.mrf.mxu0
      %v3876 = vadd.f32 %v3763, %v3875
      %3877 = vmatmul.f32.gmra.mxu0 %v2646
      %v3878 = vpop.f32.mrf.mxu0
      %v3879 = vadd.f32 %v3766, %v3878
      %3880 = vmatmul.f32.gmra.mxu0 %v2647
      %v3881 = vpop.f32.mrf.mxu0
      %v3882 = vadd.f32 %v3769, %v3881
      %3883 = vmatmul.f32.gmra.mxu0 %v2649
      %v3884 = vpop.f32.mrf.mxu0
      %v3885 = vadd.f32 %v3772, %v3884
      %3886 = vmatmul.f32.gmra.mxu0 %v2650
      %v3887 = vpop.f32.mrf.mxu0
      %v3888 = vadd.f32 %v3775, %v3887
      %3889 = vmatmul.f32.gmra.mxu0 %v2652
      %v3890 = vpop.f32.mrf.mxu0
      %v3891 = vadd.f32 %v3778, %v3890
      %3892 = vmatmul.f32.gmra.mxu0 %v2653
      %v3893 = vpop.f32.mrf.mxu0
      %v3894 = vadd.f32 %v3781, %v3893
      %3895 = vdwg.mxu0
      %3896 = vmatpush.msra.mxu0 %v3088
      %3897 = vmatpush.msra.mxu0 %v3087
      %3898 = vmatpush.msra.mxu0 %v3086
      %3899 = vmatpush.msra.mxu0 %v3085
      %3900 = vmatpush.msra.mxu0 %v3084
      %3901 = vmatpush.msra.mxu0 %v3083
      %3902 = vmatpush.msra.mxu0 %v3082
      %3903 = vmatpush.msra.mxu0 %v3081
      %3904 = vmatpush.msra.mxu0 %v3080
      %3905 = vmatpush.msra.mxu0 %v3079
      %3906 = vmatpush.msra.mxu0 %v3078
      %3907 = vmatpush.msra.mxu0 %v3077
      %3908 = vmatpush.msra.mxu0 %v3076
      %3909 = vmatpush.msra.mxu0 %v3075
      %3910 = vmatpush.msra.mxu0 %v3074
      %3911 = vmatpush.msra.mxu0 %v3073
      %3912 = vmatmul.f32.gmra.mxu0 %v2715
      %v3913 = vpop.f32.mrf.mxu0
      %v3914 = vadd.f32 %v3801, %v3913
      %3915 = vmatmul.f32.gmra.mxu0 %v2717
      %v3916 = vpop.f32.mrf.mxu0
      %v3917 = vadd.f32 %v3804, %v3916
      %3918 = vmatmul.f32.gmra.mxu0 %v2720
      %v3919 = vpop.f32.mrf.mxu0
      %v3920 = vadd.f32 %v3807, %v3919
      %3921 = vmatmul.f32.gmra.mxu0 %v2722
      %v3922 = vpop.f32.mrf.mxu0
      %v3923 = vadd.f32 %v3810, %v3922
      %3924 = vmatmul.f32.gmra.mxu0 %v2725
      %v3925 = vpop.f32.mrf.mxu0
      %v3926 = vadd.f32 %v3813, %v3925
      %3927 = vmatmul.f32.gmra.mxu0 %v2727
      %v3928 = vpop.f32.mrf.mxu0
      %v3929 = vadd.f32 %v3816, %v3928
      %3930 = vmatmul.f32.gmra.mxu0 %v2730
      %v3931 = vpop.f32.mrf.mxu0
      %v3932 = vadd.f32 %v3819, %v3931
      %3933 = vmatmul.f32.gmra.mxu0 %v2732
      %v3934 = vpop.f32.mrf.mxu0
      %v3935 = vadd.f32 %v3822, %v3934
      %3936 = vmatmul.f32.gmra.mxu0 %v2735
      %v3937 = vpop.f32.mrf.mxu0
      %v3938 = vadd.f32 %v3825, %v3937
      %3939 = vmatmul.f32.gmra.mxu0 %v2737
      %v3940 = vpop.f32.mrf.mxu0
      %v3941 = vadd.f32 %v3828, %v3940
      %3942 = vmatmul.f32.gmra.mxu0 %v2740
      %v3943 = vpop.f32.mrf.mxu0
      %v3944 = vadd.f32 %v3831, %v3943
      %3945 = vmatmul.f32.gmra.mxu0 %v2742
      %v3946 = vpop.f32.mrf.mxu0
      %v3947 = vadd.f32 %v3834, %v3946
      %3948 = vmatmul.f32.gmra.mxu0 %v2745
      %v3949 = vpop.f32.mrf.mxu0
      %v3950 = vadd.f32 %v3837, %v3949
      %3951 = vmatmul.f32.gmra.mxu0 %v2747
      %v3952 = vpop.f32.mrf.mxu0
      %v3953 = vadd.f32 %v3840, %v3952
      %3954 = vmatmul.f32.gmra.mxu0 %v2750
      %v3955 = vpop.f32.mrf.mxu0
      %v3956 = vadd.f32 %v3843, %v3955
      %3957 = vmatmul.f32.gmra.mxu0 %v2752
      %v3958 = vpop.f32.mrf.mxu0
      %v3959 = vadd.f32 %v3846, %v3958
      %3960 = vmatmul.f32.gmra.mxu0 %v2755
      %v3961 = vpop.f32.mrf.mxu0
      %v3962 = vadd.f32 %v3849, %v3961
      %3963 = vmatmul.f32.gmra.mxu0 %v2757
      %v3964 = vpop.f32.mrf.mxu0
      %v3965 = vadd.f32 %v3852, %v3964
      %3966 = vmatmul.f32.gmra.mxu0 %v2760
      %v3967 = vpop.f32.mrf.mxu0
      %v3968 = vadd.f32 %v3855, %v3967
      %3969 = vmatmul.f32.gmra.mxu0 %v2762
      %v3970 = vpop.f32.mrf.mxu0
      %v3971 = vadd.f32 %v3858, %v3970
      %3972 = vmatmul.f32.gmra.mxu0 %v2765
      %v3973 = vpop.f32.mrf.mxu0
      %v3974 = vadd.f32 %v3861, %v3973
      %3975 = vmatmul.f32.gmra.mxu0 %v2767
      %v3976 = vpop.f32.mrf.mxu0
      %v3977 = vadd.f32 %v3864, %v3976
      %3978 = vmatmul.f32.gmra.mxu0 %v2770
      %v3979 = vpop.f32.mrf.mxu0
      %v3980 = vadd.f32 %v3867, %v3979
      %3981 = vmatmul.f32.gmra.mxu0 %v2772
      %v3982 = vpop.f32.mrf.mxu0
      %v3983 = vadd.f32 %v3870, %v3982
      %3984 = vmatmul.f32.gmra.mxu0 %v2775
      %v3985 = vpop.f32.mrf.mxu0
      %v3986 = vadd.f32 %v3873, %v3985
      %3987 = vmatmul.f32.gmra.mxu0 %v2777
      %v3988 = vpop.f32.mrf.mxu0
      %v3989 = vadd.f32 %v3876, %v3988
      %3990 = vmatmul.f32.gmra.mxu0 %v2780
      %v3991 = vpop.f32.mrf.mxu0
      %v3992 = vadd.f32 %v3879, %v3991
      %3993 = vmatmul.f32.gmra.mxu0 %v2782
      %v3994 = vpop.f32.mrf.mxu0
      %v3995 = vadd.f32 %v3882, %v3994
      %3996 = vmatmul.f32.gmra.mxu0 %v2932
      %v3997 = vpop.f32.mrf.mxu0
      %v3998 = vadd.f32 %v3885, %v3997
      %3999 = vmatmul.f32.gmra.mxu0 %v2934
      %v4000 = vpop.f32.mrf.mxu0
      %v4001 = vadd.f32 %v3888, %v4000
      %4002 = vmatmul.f32.gmra.mxu0 %v2949
      %v4003 = vpop.f32.mrf.mxu0
      %v4004 = vadd.f32 %v3891, %v4003
      %4005 = vmatmul.f32.gmra.mxu0 %v2951
      %v4006 = vpop.f32.mrf.mxu0
      %v4007 = vadd.f32 %v3894, %v4006
      %4008 = vdwg.mxu0
      %4009 = vmatpush.msra.mxu0 %v3104
      %4010 = vmatpush.msra.mxu0 %v3103
      %4011 = vmatpush.msra.mxu0 %v3102
      %4012 = vmatpush.msra.mxu0 %v3101
      %4013 = vmatpush.msra.mxu0 %v3100
      %4014 = vmatpush.msra.mxu0 %v3099
      %4015 = vmatpush.msra.mxu0 %v3098
      %4016 = vmatpush.msra.mxu0 %v3097
      %4017 = vmatpush.msra.mxu0 %v3096
      %4018 = vmatpush.msra.mxu0 %v3095
      %4019 = vmatpush.msra.mxu0 %v3094
      %4020 = vmatpush.msra.mxu0 %v3093
      %4021 = vmatpush.msra.mxu0 %v3092
      %4022 = vmatpush.msra.mxu0 %v3091
      %4023 = vmatpush.msra.mxu0 %v3090
      %4024 = vmatpush.msra.mxu0 %v3089
      %4025 = vmatmul.f32.gmra.mxu0 %v2827
      %v4026 = vpop.f32.mrf.mxu0
      %v4027 = vadd.f32 %v3914, %v4026
      %4028 = vmatmul.f32.gmra.mxu0 %v2829
      %v4029 = vpop.f32.mrf.mxu0
      %v4030 = vadd.f32 %v3917, %v4029
      %4031 = vmatmul.f32.gmra.mxu0 %v2832
      %v4032 = vpop.f32.mrf.mxu0
      %v4033 = vadd.f32 %v3920, %v4032
      %4034 = vmatmul.f32.gmra.mxu0 %v2834
      %v4035 = vpop.f32.mrf.mxu0
      %v4036 = vadd.f32 %v3923, %v4035
      %4037 = vmatmul.f32.gmra.mxu0 %v2837
      %v4038 = vpop.f32.mrf.mxu0
      %v4039 = vadd.f32 %v3926, %v4038
      %4040 = vmatmul.f32.gmra.mxu0 %v2839
      %v4041 = vpop.f32.mrf.mxu0
      %v4042 = vadd.f32 %v3929, %v4041
      %4043 = vmatmul.f32.gmra.mxu0 %v2842
      %v4044 = vpop.f32.mrf.mxu0
      %v4045 = vadd.f32 %v3932, %v4044
      %4046 = vmatmul.f32.gmra.mxu0 %v2844
      %v4047 = vpop.f32.mrf.mxu0
      %v4048 = vadd.f32 %v3935, %v4047
      %4049 = vmatmul.f32.gmra.mxu0 %v2847
      %v4050 = vpop.f32.mrf.mxu0
      %v4051 = vadd.f32 %v3938, %v4050
      %4052 = vmatmul.f32.gmra.mxu0 %v2849
      %v4053 = vpop.f32.mrf.mxu0
      %v4054 = vadd.f32 %v3941, %v4053
      %4055 = vmatmul.f32.gmra.mxu0 %v2852
      %v4056 = vpop.f32.mrf.mxu0
      %v4057 = vadd.f32 %v3944, %v4056
      %4058 = vmatmul.f32.gmra.mxu0 %v2854
      %v4059 = vpop.f32.mrf.mxu0
      %v4060 = vadd.f32 %v3947, %v4059
      %4061 = vmatmul.f32.gmra.mxu0 %v2857
      %v4062 = vpop.f32.mrf.mxu0
      %v4063 = vadd.f32 %v3950, %v4062
      %4064 = vmatmul.f32.gmra.mxu0 %v2859
      %v4065 = vpop.f32.mrf.mxu0
      %v4066 = vadd.f32 %v3953, %v4065
      %4067 = vmatmul.f32.gmra.mxu0 %v2862
      %v4068 = vpop.f32.mrf.mxu0
      %v4069 = vadd.f32 %v3956, %v4068
      %4070 = vmatmul.f32.gmra.mxu0 %v2864
      %v4071 = vpop.f32.mrf.mxu0
      %v4072 = vadd.f32 %v3959, %v4071
      %4073 = vmatmul.f32.gmra.mxu0 %v2867
      %v4074 = vpop.f32.mrf.mxu0
      %v4075 = vadd.f32 %v3962, %v4074
      %4076 = vmatmul.f32.gmra.mxu0 %v2869
      %v4077 = vpop.f32.mrf.mxu0
      %v4078 = vadd.f32 %v3965, %v4077
      %4079 = vmatmul.f32.gmra.mxu0 %v2872
      %v4080 = vpop.f32.mrf.mxu0
      %v4081 = vadd.f32 %v3968, %v4080
      %4082 = vmatmul.f32.gmra.mxu0 %v2874
      %v4083 = vpop.f32.mrf.mxu0
      %v4084 = vadd.f32 %v3971, %v4083
      %4085 = vmatmul.f32.gmra.mxu0 %v2877
      %v4086 = vpop.f32.mrf.mxu0
      %v4087 = vadd.f32 %v3974, %v4086
      %4088 = vmatmul.f32.gmra.mxu0 %v2879
      %v4089 = vpop.f32.mrf.mxu0
      %v4090 = vadd.f32 %v3977, %v4089
      %4091 = vmatmul.f32.gmra.mxu0 %v2882
      %v4092 = vpop.f32.mrf.mxu0
      %v4093 = vadd.f32 %v3980, %v4092
      %4094 = vmatmul.f32.gmra.mxu0 %v2884
      %v4095 = vpop.f32.mrf.mxu0
      %v4096 = vadd.f32 %v3983, %v4095
      %4097 = vmatmul.f32.gmra.mxu0 %v2887
      %v4098 = vpop.f32.mrf.mxu0
      %v4099 = vadd.f32 %v3986, %v4098
      %4100 = vmatmul.f32.gmra.mxu0 %v2889
      %v4101 = vpop.f32.mrf.mxu0
      %v4102 = vadd.f32 %v3989, %v4101
      %4103 = vmatmul.f32.gmra.mxu0 %v2892
      %v4104 = vpop.f32.mrf.mxu0
      %v4105 = vadd.f32 %v3992, %v4104
      %4106 = vmatmul.f32.gmra.mxu0 %v2894
      %v4107 = vpop.f32.mrf.mxu0
      %v4108 = vadd.f32 %v3995, %v4107
      %4109 = vmatmul.f32.gmra.mxu0 %v2939
      %v4110 = vpop.f32.mrf.mxu0
      %v4111 = vadd.f32 %v3998, %v4110
      %4112 = vmatmul.f32.gmra.mxu0 %v2941
      %v4113 = vpop.f32.mrf.mxu0
      %v4114 = vadd.f32 %v4001, %v4113
      %4115 = vmatmul.f32.gmra.mxu0 %v2956
      %v4116 = vpop.f32.mrf.mxu0
      %v4117 = vadd.f32 %v4004, %v4116
      %4118 = vmatmul.f32.gmra.mxu0 %v2958
      %v4119 = vpop.f32.mrf.mxu0
      %v4120 = vadd.f32 %v4007, %v4119
      %4121 = vdwg.mxu0
      %v4122 = vld [vmem:[%s5] sm:$0x1]
      %v4124 = vperm.slane %v4122, 0
      %v4126 = vmul.f32 %v4027, %v4124
      %v4127 = vmul.f32 %v4030, %v4124
      %v4128 = vmul.f32 %v4033, %v4124
      %v4129 = vmul.f32 %v4036, %v4124
      %v4130 = vmul.f32 %v4039, %v4124
      %v4131 = vmul.f32 %v4042, %v4124
      %v4132 = vmul.f32 %v4045, %v4124
      %v4133 = vmul.f32 %v4048, %v4124
      %v4134 = vmul.f32 %v4051, %v4124
      %v4135 = vmul.f32 %v4054, %v4124
      %v4136 = vmul.f32 %v4057, %v4124
      %v4137 = vmul.f32 %v4060, %v4124
      %v4138 = vmul.f32 %v4063, %v4124
      %v4139 = vmul.f32 %v4066, %v4124
      %v4140 = vmul.f32 %v4069, %v4124
      %v4141 = vmul.f32 %v4072, %v4124
      %v4142 = vmul.f32 %v4075, %v4124
      %v4143 = vmul.f32 %v4078, %v4124
      %v4144 = vmul.f32 %v4081, %v4124
      %v4145 = vmul.f32 %v4084, %v4124
      %v4146 = vmul.f32 %v4087, %v4124
      %v4147 = vmul.f32 %v4090, %v4124
      %v4148 = vmul.f32 %v4093, %v4124
      %v4149 = vmul.f32 %v4096, %v4124
      %v4150 = vmul.f32 %v4099, %v4124
      %v4151 = vmul.f32 %v4102, %v4124
      %v4152 = vmul.f32 %v4105, %v4124
      %v4153 = vmul.f32 %v4108, %v4124
      %v4154 = vmul.f32 %v4111, %v4124
      %v4155 = vmul.f32 %v4114, %v4124
      %v4156 = vmul.f32 %v4117, %v4124
      %v4157 = vmul.f32 %v4120, %v4124
      %v4158 = vld [vmem:[%s6] sm:$0x1]
      %v4160 = vperm.slane %v4158, 0
      %v4162 = vadd.f32 %v4126, %v4160
      %v4163 = vadd.f32 %v4127, %v4160
      %v4164 = vadd.f32 %v4128, %v4160
      %v4165 = vadd.f32 %v4129, %v4160
      %v4166 = vadd.f32 %v4130, %v4160
      %v4167 = vadd.f32 %v4131, %v4160
      %v4168 = vadd.f32 %v4132, %v4160
      %v4169 = vadd.f32 %v4133, %v4160
      %v4170 = vadd.f32 %v4134, %v4160
      %v4171 = vadd.f32 %v4135, %v4160
      %v4172 = vadd.f32 %v4136, %v4160
      %v4173 = vadd.f32 %v4137, %v4160
      %v4174 = vadd.f32 %v4138, %v4160
      %v4175 = vadd.f32 %v4139, %v4160
      %v4176 = vadd.f32 %v4140, %v4160
      %v4177 = vadd.f32 %v4141, %v4160
      %v4178 = vadd.f32 %v4142, %v4160
      %v4179 = vadd.f32 %v4143, %v4160
      %v4180 = vadd.f32 %v4144, %v4160
      %v4181 = vadd.f32 %v4145, %v4160
      %v4182 = vadd.f32 %v4146, %v4160
      %v4183 = vadd.f32 %v4147, %v4160
      %v4184 = vadd.f32 %v4148, %v4160
      %v4185 = vadd.f32 %v4149, %v4160
      %v4186 = vadd.f32 %v4150, %v4160
      %v4187 = vadd.f32 %v4151, %v4160
      %v4188 = vadd.f32 %v4152, %v4160
      %v4189 = vadd.f32 %v4153, %v4160
      %v4190 = vadd.f32 %v4154, %v4160
      %v4191 = vadd.f32 %v4155, %v4160
      %v4192 = vadd.f32 %v4156, %v4160
      %v4193 = vadd.f32 %v4157, %v4160
      %v4194 = vxor.u32 %v4162, 2147483648
      %v4195 = vxor.u32 %v4163, 2147483648
      %v4196 = vxor.u32 %v4164, 2147483648
      %v4197 = vxor.u32 %v4165, 2147483648
      %v4198 = vxor.u32 %v4166, 2147483648
      %v4199 = vxor.u32 %v4167, 2147483648
      %v4200 = vxor.u32 %v4168, 2147483648
      %v4201 = vxor.u32 %v4169, 2147483648
      %v4202 = vxor.u32 %v4170, 2147483648
      %v4203 = vxor.u32 %v4171, 2147483648
      %v4204 = vxor.u32 %v4172, 2147483648
      %v4205 = vxor.u32 %v4173, 2147483648
      %v4206 = vxor.u32 %v4174, 2147483648
      %v4207 = vxor.u32 %v4175, 2147483648
      %v4208 = vxor.u32 %v4176, 2147483648
      %v4209 = vxor.u32 %v4177, 2147483648
      %v4210 = vxor.u32 %v4178, 2147483648
      %v4211 = vxor.u32 %v4179, 2147483648
      %v4212 = vxor.u32 %v4180, 2147483648
      %v4213 = vxor.u32 %v4181, 2147483648
      %v4214 = vxor.u32 %v4182, 2147483648
      %v4215 = vxor.u32 %v4183, 2147483648
      %v4216 = vxor.u32 %v4184, 2147483648
      %v4217 = vxor.u32 %v4185, 2147483648
      %v4218 = vxor.u32 %v4186, 2147483648
      %v4219 = vxor.u32 %v4187, 2147483648
      %v4220 = vxor.u32 %v4188, 2147483648
      %v4221 = vxor.u32 %v4189, 2147483648
      %v4222 = vxor.u32 %v4190, 2147483648
      %v4223 = vxor.u32 %v4191, 2147483648
      %v4224 = vxor.u32 %v4192, 2147483648
      %v4225 = vxor.u32 %v4193, 2147483648
      %v4226 = vmul.f32 %v4194, 1.442695
      %v4227 = vpow.pop %v4226
      %v4228 = vmul.f32 %v4195, 1.442695
      %v4229 = vpow.pop %v4228
      %v4230 = vmul.f32 %v4196, 1.442695
      %v4231 = vpow.pop %v4230
      %v4232 = vmul.f32 %v4197, 1.442695
      %v4233 = vpow.pop %v4232
      %v4234 = vmul.f32 %v4198, 1.442695
      %v4235 = vpow.pop %v4234
      %v4236 = vmul.f32 %v4199, 1.442695
      %v4237 = vpow.pop %v4236
      %v4238 = vmul.f32 %v4200, 1.442695
      %v4239 = vpow.pop %v4238
      %v4240 = vmul.f32 %v4201, 1.442695
      %v4241 = vpow.pop %v4240
      %v4242 = vmul.f32 %v4202, 1.442695
      %v4243 = vpow.pop %v4242
      %v4244 = vmul.f32 %v4203, 1.442695
      %v4245 = vpow.pop %v4244
      %v4246 = vmul.f32 %v4204, 1.442695
      %v4247 = vpow.pop %v4246
      %v4248 = vmul.f32 %v4205, 1.442695
      %v4249 = vpow.pop %v4248
      %v4250 = vmul.f32 %v4206, 1.442695
      %v4251 = vpow.pop %v4250
      %v4252 = vmul.f32 %v4207, 1.442695
      %v4253 = vpow.pop %v4252
      %v4254 = vmul.f32 %v4208, 1.442695
      %v4255 = vpow.pop %v4254
      %v4256 = vmul.f32 %v4209, 1.442695
      %v4257 = vpow.pop %v4256
      %v4258 = vmul.f32 %v4210, 1.442695
      %v4259 = vpow.pop %v4258
      %v4260 = vmul.f32 %v4211, 1.442695
      %v4261 = vpow.pop %v4260
      %v4262 = vmul.f32 %v4212, 1.442695
      %v4263 = vpow.pop %v4262
      %v4264 = vmul.f32 %v4213, 1.442695
      %v4265 = vpow.pop %v4264
      %v4266 = vmul.f32 %v4214, 1.442695
      %v4267 = vpow.pop %v4266
      %v4268 = vmul.f32 %v4215, 1.442695
      %v4269 = vpow.pop %v4268
      %v4270 = vmul.f32 %v4216, 1.442695
      %v4271 = vpow.pop %v4270
      %v4272 = vmul.f32 %v4217, 1.442695
      %v4273 = vpow.pop %v4272
      %v4274 = vmul.f32 %v4218, 1.442695
      %v4275 = vpow.pop %v4274
      %v4276 = vmul.f32 %v4219, 1.442695
      %v4277 = vpow.pop %v4276
      %v4278 = vmul.f32 %v4220, 1.442695
      %v4279 = vpow.pop %v4278
      %v4280 = vmul.f32 %v4221, 1.442695
      %v4281 = vpow.pop %v4280
      %v4282 = vmul.f32 %v4222, 1.442695
      %v4283 = vpow.pop %v4282
      %v4284 = vmul.f32 %v4223, 1.442695
      %v4285 = vpow.pop %v4284
      %v4286 = vmul.f32 %v4224, 1.442695
      %v4287 = vpow.pop %v4286
      %v4288 = vmul.f32 %v4225, 1.442695
      %v4289 = vpow.pop %v4288
      %v4290 = vadd.f32 %v4227, 1.0
      %v4291 = vadd.f32 %v4229, 1.0
      %v4292 = vadd.f32 %v4231, 1.0
      %v4293 = vadd.f32 %v4233, 1.0
      %v4294 = vadd.f32 %v4235, 1.0
      %v4295 = vadd.f32 %v4237, 1.0
      %v4296 = vadd.f32 %v4239, 1.0
      %v4297 = vadd.f32 %v4241, 1.0
      %v4298 = vadd.f32 %v4243, 1.0
      %v4299 = vadd.f32 %v4245, 1.0
      %v4300 = vadd.f32 %v4247, 1.0
      %v4301 = vadd.f32 %v4249, 1.0
      %v4302 = vadd.f32 %v4251, 1.0
      %v4303 = vadd.f32 %v4253, 1.0
      %v4304 = vadd.f32 %v4255, 1.0
      %v4305 = vadd.f32 %v4257, 1.0
      %v4306 = vadd.f32 %v4259, 1.0
      %v4307 = vadd.f32 %v4261, 1.0
      %v4308 = vadd.f32 %v4263, 1.0
      %v4309 = vadd.f32 %v4265, 1.0
      %v4310 = vadd.f32 %v4267, 1.0
      %v4311 = vadd.f32 %v4269, 1.0
      %v4312 = vadd.f32 %v4271, 1.0
      %v4313 = vadd.f32 %v4273, 1.0
      %v4314 = vadd.f32 %v4275, 1.0
      %v4315 = vadd.f32 %v4277, 1.0
      %v4316 = vadd.f32 %v4279, 1.0
      %v4317 = vadd.f32 %v4281, 1.0
      %v4318 = vadd.f32 %v4283, 1.0
      %v4319 = vadd.f32 %v4285, 1.0
      %v4320 = vadd.f32 %v4287, 1.0
      %v4321 = vadd.f32 %v4289, 1.0
      %v4322 = vrcp.pop %v4290
      %v4323 = vmul.f32 %v4290, %v4322
      %v4324 = vsub.f32 1.0, %v4323
      %v4325 = vmul.f32 %v4322, %v4324
      %v4326 = vadd.f32 %v4322, %v4325
      %vm4327 = vweird.f32 %v4290
      %vm4328 = vweird.f32 %v4322
      %vm4329 = vmor %vm4327, %vm4328
      %v4330 = vsel %vm4329, %v4322, %v4326
      %v4331 = vand.u32 2147483647, %v4290
      %vm4332 = vcmp.eq.f32.partialorder %v4331, 8.507059e+37
      %v4333 = vand.u32 %v4290, 2147483648
      %v4334 = vor.u32 1.1754944e-38, %v4333
      %v4335 = vsel %vm4332, %v4334, %v4330
      %v4336 = vmul.f32 1.0, %v4335
      %v4337 = vrcp.pop %v4291
      %v4338 = vmul.f32 %v4291, %v4337
      %v4339 = vsub.f32 1.0, %v4338
      %v4340 = vmul.f32 %v4337, %v4339
      %v4341 = vadd.f32 %v4337, %v4340
      %vm4342 = vweird.f32 %v4291
      %vm4343 = vweird.f32 %v4337
      %vm4344 = vmor %vm4342, %vm4343
      %v4345 = vsel %vm4344, %v4337, %v4341
      %v4346 = vand.u32 2147483647, %v4291
      %vm4347 = vcmp.eq.f32.partialorder %v4346, 8.507059e+37
      %v4348 = vand.u32 %v4291, 2147483648
      %v4349 = vor.u32 1.1754944e-38, %v4348
      %v4350 = vsel %vm4347, %v4349, %v4345
      %v4351 = vmul.f32 1.0, %v4350
      %v4352 = vrcp.pop %v4292
      %v4353 = vmul.f32 %v4292, %v4352
      %v4354 = vsub.f32 1.0, %v4353
      %v4355 = vmul.f32 %v4352, %v4354
      %v4356 = vadd.f32 %v4352, %v4355
      %vm4357 = vweird.f32 %v4292
      %vm4358 = vweird.f32 %v4352
      %vm4359 = vmor %vm4357, %vm4358
      %v4360 = vsel %vm4359, %v4352, %v4356
      %v4361 = vand.u32 2147483647, %v4292
      %vm4362 = vcmp.eq.f32.partialorder %v4361, 8.507059e+37
      %v4363 = vand.u32 %v4292, 2147483648
      %v4364 = vor.u32 1.1754944e-38, %v4363
      %v4365 = vsel %vm4362, %v4364, %v4360
      %v4366 = vmul.f32 1.0, %v4365
      %v4367 = vrcp.pop %v4293
      %v4368 = vmul.f32 %v4293, %v4367
      %v4369 = vsub.f32 1.0, %v4368
      %v4370 = vmul.f32 %v4367, %v4369
      %v4371 = vadd.f32 %v4367, %v4370
      %vm4372 = vweird.f32 %v4293
      %vm4373 = vweird.f32 %v4367
      %vm4374 = vmor %vm4372, %vm4373
      %v4375 = vsel %vm4374, %v4367, %v4371
      %v4376 = vand.u32 2147483647, %v4293
      %vm4377 = vcmp.eq.f32.partialorder %v4376, 8.507059e+37
      %v4378 = vand.u32 %v4293, 2147483648
      %v4379 = vor.u32 1.1754944e-38, %v4378
      %v4380 = vsel %vm4377, %v4379, %v4375
      %v4381 = vmul.f32 1.0, %v4380
      %v4382 = vrcp.pop %v4294
      %v4383 = vmul.f32 %v4294, %v4382
      %v4384 = vsub.f32 1.0, %v4383
      %v4385 = vmul.f32 %v4382, %v4384
      %v4386 = vadd.f32 %v4382, %v4385
      %vm4387 = vweird.f32 %v4294
      %vm4388 = vweird.f32 %v4382
      %vm4389 = vmor %vm4387, %vm4388
      %v4390 = vsel %vm4389, %v4382, %v4386
      %v4391 = vand.u32 2147483647, %v4294
      %vm4392 = vcmp.eq.f32.partialorder %v4391, 8.507059e+37
      %v4393 = vand.u32 %v4294, 2147483648
      %v4394 = vor.u32 1.1754944e-38, %v4393
      %v4395 = vsel %vm4392, %v4394, %v4390
      %v4396 = vmul.f32 1.0, %v4395
      %v4397 = vrcp.pop %v4295
      %v4398 = vmul.f32 %v4295, %v4397
      %v4399 = vsub.f32 1.0, %v4398
      %v4400 = vmul.f32 %v4397, %v4399
      %v4401 = vadd.f32 %v4397, %v4400
      %vm4402 = vweird.f32 %v4295
      %vm4403 = vweird.f32 %v4397
      %vm4404 = vmor %vm4402, %vm4403
      %v4405 = vsel %vm4404, %v4397, %v4401
      %v4406 = vand.u32 2147483647, %v4295
      %vm4407 = vcmp.eq.f32.partialorder %v4406, 8.507059e+37
      %v4408 = vand.u32 %v4295, 2147483648
      %v4409 = vor.u32 1.1754944e-38, %v4408
      %v4410 = vsel %vm4407, %v4409, %v4405
      %v4411 = vmul.f32 1.0, %v4410
      %v4412 = vrcp.pop %v4296
      %v4413 = vmul.f32 %v4296, %v4412
      %v4414 = vsub.f32 1.0, %v4413
      %v4415 = vmul.f32 %v4412, %v4414
      %v4416 = vadd.f32 %v4412, %v4415
      %vm4417 = vweird.f32 %v4296
      %vm4418 = vweird.f32 %v4412
      %vm4419 = vmor %vm4417, %vm4418
      %v4420 = vsel %vm4419, %v4412, %v4416
      %v4421 = vand.u32 2147483647, %v4296
      %vm4422 = vcmp.eq.f32.partialorder %v4421, 8.507059e+37
      %v4423 = vand.u32 %v4296, 2147483648
      %v4424 = vor.u32 1.1754944e-38, %v4423
      %v4425 = vsel %vm4422, %v4424, %v4420
      %v4426 = vmul.f32 1.0, %v4425
      %v4427 = vrcp.pop %v4297
      %v4428 = vmul.f32 %v4297, %v4427
      %v4429 = vsub.f32 1.0, %v4428
      %v4430 = vmul.f32 %v4427, %v4429
      %v4431 = vadd.f32 %v4427, %v4430
      %vm4432 = vweird.f32 %v4297
      %vm4433 = vweird.f32 %v4427
      %vm4434 = vmor %vm4432, %vm4433
      %v4435 = vsel %vm4434, %v4427, %v4431
      %v4436 = vand.u32 2147483647, %v4297
      %vm4437 = vcmp.eq.f32.partialorder %v4436, 8.507059e+37
      %v4438 = vand.u32 %v4297, 2147483648
      %v4439 = vor.u32 1.1754944e-38, %v4438
      %v4440 = vsel %vm4437, %v4439, %v4435
      %v4441 = vmul.f32 1.0, %v4440
      %v4442 = vrcp.pop %v4298
      %v4443 = vmul.f32 %v4298, %v4442
      %v4444 = vsub.f32 1.0, %v4443
      %v4445 = vmul.f32 %v4442, %v4444
      %v4446 = vadd.f32 %v4442, %v4445
      %vm4447 = vweird.f32 %v4298
      %vm4448 = vweird.f32 %v4442
      %vm4449 = vmor %vm4447, %vm4448
      %v4450 = vsel %vm4449, %v4442, %v4446
      %v4451 = vand.u32 2147483647, %v4298
      %vm4452 = vcmp.eq.f32.partialorder %v4451, 8.507059e+37
      %v4453 = vand.u32 %v4298, 2147483648
      %v4454 = vor.u32 1.1754944e-38, %v4453
      %v4455 = vsel %vm4452, %v4454, %v4450
      %v4456 = vmul.f32 1.0, %v4455
      %v4457 = vrcp.pop %v4299
      %v4458 = vmul.f32 %v4299, %v4457
      %v4459 = vsub.f32 1.0, %v4458
      %v4460 = vmul.f32 %v4457, %v4459
      %v4461 = vadd.f32 %v4457, %v4460
      %vm4462 = vweird.f32 %v4299
      %vm4463 = vweird.f32 %v4457
      %vm4464 = vmor %vm4462, %vm4463
      %v4465 = vsel %vm4464, %v4457, %v4461
      %v4466 = vand.u32 2147483647, %v4299
      %vm4467 = vcmp.eq.f32.partialorder %v4466, 8.507059e+37
      %v4468 = vand.u32 %v4299, 2147483648
      %v4469 = vor.u32 1.1754944e-38, %v4468
      %v4470 = vsel %vm4467, %v4469, %v4465
      %v4471 = vmul.f32 1.0, %v4470
      %v4472 = vrcp.pop %v4300
      %v4473 = vmul.f32 %v4300, %v4472
      %v4474 = vsub.f32 1.0, %v4473
      %v4475 = vmul.f32 %v4472, %v4474
      %v4476 = vadd.f32 %v4472, %v4475
      %vm4477 = vweird.f32 %v4300
      %vm4478 = vweird.f32 %v4472
      %vm4479 = vmor %vm4477, %vm4478
      %v4480 = vsel %vm4479, %v4472, %v4476
      %v4481 = vand.u32 2147483647, %v4300
      %vm4482 = vcmp.eq.f32.partialorder %v4481, 8.507059e+37
      %v4483 = vand.u32 %v4300, 2147483648
      %v4484 = vor.u32 1.1754944e-38, %v4483
      %v4485 = vsel %vm4482, %v4484, %v4480
      %v4486 = vmul.f32 1.0, %v4485
      %v4487 = vrcp.pop %v4301
      %v4488 = vmul.f32 %v4301, %v4487
      %v4489 = vsub.f32 1.0, %v4488
      %v4490 = vmul.f32 %v4487, %v4489
      %v4491 = vadd.f32 %v4487, %v4490
      %vm4492 = vweird.f32 %v4301
      %vm4493 = vweird.f32 %v4487
      %vm4494 = vmor %vm4492, %vm4493
      %v4495 = vsel %vm4494, %v4487, %v4491
      %v4496 = vand.u32 2147483647, %v4301
      %vm4497 = vcmp.eq.f32.partialorder %v4496, 8.507059e+37
      %v4498 = vand.u32 %v4301, 2147483648
      %v4499 = vor.u32 1.1754944e-38, %v4498
      %v4500 = vsel %vm4497, %v4499, %v4495
      %v4501 = vmul.f32 1.0, %v4500
      %v4502 = vrcp.pop %v4302
      %v4503 = vmul.f32 %v4302, %v4502
      %v4504 = vsub.f32 1.0, %v4503
      %v4505 = vmul.f32 %v4502, %v4504
      %v4506 = vadd.f32 %v4502, %v4505
      %vm4507 = vweird.f32 %v4302
      %vm4508 = vweird.f32 %v4502
      %vm4509 = vmor %vm4507, %vm4508
      %v4510 = vsel %vm4509, %v4502, %v4506
      %v4511 = vand.u32 2147483647, %v4302
      %vm4512 = vcmp.eq.f32.partialorder %v4511, 8.507059e+37
      %v4513 = vand.u32 %v4302, 2147483648
      %v4514 = vor.u32 1.1754944e-38, %v4513
      %v4515 = vsel %vm4512, %v4514, %v4510
      %v4516 = vmul.f32 1.0, %v4515
      %v4517 = vrcp.pop %v4303
      %v4518 = vmul.f32 %v4303, %v4517
      %v4519 = vsub.f32 1.0, %v4518
      %v4520 = vmul.f32 %v4517, %v4519
      %v4521 = vadd.f32 %v4517, %v4520
      %vm4522 = vweird.f32 %v4303
      %vm4523 = vweird.f32 %v4517
      %vm4524 = vmor %vm4522, %vm4523
      %v4525 = vsel %vm4524, %v4517, %v4521
      %v4526 = vand.u32 2147483647, %v4303
      %vm4527 = vcmp.eq.f32.partialorder %v4526, 8.507059e+37
      %v4528 = vand.u32 %v4303, 2147483648
      %v4529 = vor.u32 1.1754944e-38, %v4528
      %v4530 = vsel %vm4527, %v4529, %v4525
      %v4531 = vmul.f32 1.0, %v4530
      %v4532 = vrcp.pop %v4304
      %v4533 = vmul.f32 %v4304, %v4532
      %v4534 = vsub.f32 1.0, %v4533
      %v4535 = vmul.f32 %v4532, %v4534
      %v4536 = vadd.f32 %v4532, %v4535
      %vm4537 = vweird.f32 %v4304
      %vm4538 = vweird.f32 %v4532
      %vm4539 = vmor %vm4537, %vm4538
      %v4540 = vsel %vm4539, %v4532, %v4536
      %v4541 = vand.u32 2147483647, %v4304
      %vm4542 = vcmp.eq.f32.partialorder %v4541, 8.507059e+37
      %v4543 = vand.u32 %v4304, 2147483648
      %v4544 = vor.u32 1.1754944e-38, %v4543
      %v4545 = vsel %vm4542, %v4544, %v4540
      %v4546 = vmul.f32 1.0, %v4545
      %v4547 = vrcp.pop %v4305
      %v4548 = vmul.f32 %v4305, %v4547
      %v4549 = vsub.f32 1.0, %v4548
      %v4550 = vmul.f32 %v4547, %v4549
      %v4551 = vadd.f32 %v4547, %v4550
      %vm4552 = vweird.f32 %v4305
      %vm4553 = vweird.f32 %v4547
      %vm4554 = vmor %vm4552, %vm4553
      %v4555 = vsel %vm4554, %v4547, %v4551
      %v4556 = vand.u32 2147483647, %v4305
      %vm4557 = vcmp.eq.f32.partialorder %v4556, 8.507059e+37
      %v4558 = vand.u32 %v4305, 2147483648
      %v4559 = vor.u32 1.1754944e-38, %v4558
      %v4560 = vsel %vm4557, %v4559, %v4555
      %v4561 = vmul.f32 1.0, %v4560
      %v4562 = vrcp.pop %v4306
      %v4563 = vmul.f32 %v4306, %v4562
      %v4564 = vsub.f32 1.0, %v4563
      %v4565 = vmul.f32 %v4562, %v4564
      %v4566 = vadd.f32 %v4562, %v4565
      %vm4567 = vweird.f32 %v4306
      %vm4568 = vweird.f32 %v4562
      %vm4569 = vmor %vm4567, %vm4568
      %v4570 = vsel %vm4569, %v4562, %v4566
      %v4571 = vand.u32 2147483647, %v4306
      %vm4572 = vcmp.eq.f32.partialorder %v4571, 8.507059e+37
      %v4573 = vand.u32 %v4306, 2147483648
      %v4574 = vor.u32 1.1754944e-38, %v4573
      %v4575 = vsel %vm4572, %v4574, %v4570
      %v4576 = vmul.f32 1.0, %v4575
      %v4577 = vrcp.pop %v4307
      %v4578 = vmul.f32 %v4307, %v4577
      %v4579 = vsub.f32 1.0, %v4578
      %v4580 = vmul.f32 %v4577, %v4579
      %v4581 = vadd.f32 %v4577, %v4580
      %vm4582 = vweird.f32 %v4307
      %vm4583 = vweird.f32 %v4577
      %vm4584 = vmor %vm4582, %vm4583
      %v4585 = vsel %vm4584, %v4577, %v4581
      %v4586 = vand.u32 2147483647, %v4307
      %vm4587 = vcmp.eq.f32.partialorder %v4586, 8.507059e+37
      %v4588 = vand.u32 %v4307, 2147483648
      %v4589 = vor.u32 1.1754944e-38, %v4588
      %v4590 = vsel %vm4587, %v4589, %v4585
      %v4591 = vmul.f32 1.0, %v4590
      %v4592 = vrcp.pop %v4308
      %v4593 = vmul.f32 %v4308, %v4592
      %v4594 = vsub.f32 1.0, %v4593
      %v4595 = vmul.f32 %v4592, %v4594
      %v4596 = vadd.f32 %v4592, %v4595
      %vm4597 = vweird.f32 %v4308
      %vm4598 = vweird.f32 %v4592
      %vm4599 = vmor %vm4597, %vm4598
      %v4600 = vsel %vm4599, %v4592, %v4596
      %v4601 = vand.u32 2147483647, %v4308
      %vm4602 = vcmp.eq.f32.partialorder %v4601, 8.507059e+37
      %v4603 = vand.u32 %v4308, 2147483648
      %v4604 = vor.u32 1.1754944e-38, %v4603
      %v4605 = vsel %vm4602, %v4604, %v4600
      %v4606 = vmul.f32 1.0, %v4605
      %v4607 = vrcp.pop %v4309
      %v4608 = vmul.f32 %v4309, %v4607
      %v4609 = vsub.f32 1.0, %v4608
      %v4610 = vmul.f32 %v4607, %v4609
      %v4611 = vadd.f32 %v4607, %v4610
      %vm4612 = vweird.f32 %v4309
      %vm4613 = vweird.f32 %v4607
      %vm4614 = vmor %vm4612, %vm4613
      %v4615 = vsel %vm4614, %v4607, %v4611
      %v4616 = vand.u32 2147483647, %v4309
      %vm4617 = vcmp.eq.f32.partialorder %v4616, 8.507059e+37
      %v4618 = vand.u32 %v4309, 2147483648
      %v4619 = vor.u32 1.1754944e-38, %v4618
      %v4620 = vsel %vm4617, %v4619, %v4615
      %v4621 = vmul.f32 1.0, %v4620
      %v4622 = vrcp.pop %v4310
      %v4623 = vmul.f32 %v4310, %v4622
      %v4624 = vsub.f32 1.0, %v4623
      %v4625 = vmul.f32 %v4622, %v4624
      %v4626 = vadd.f32 %v4622, %v4625
      %vm4627 = vweird.f32 %v4310
      %vm4628 = vweird.f32 %v4622
      %vm4629 = vmor %vm4627, %vm4628
      %v4630 = vsel %vm4629, %v4622, %v4626
      %v4631 = vand.u32 2147483647, %v4310
      %vm4632 = vcmp.eq.f32.partialorder %v4631, 8.507059e+37
      %v4633 = vand.u32 %v4310, 2147483648
      %v4634 = vor.u32 1.1754944e-38, %v4633
      %v4635 = vsel %vm4632, %v4634, %v4630
      %v4636 = vmul.f32 1.0, %v4635
      %v4637 = vrcp.pop %v4311
      %v4638 = vmul.f32 %v4311, %v4637
      %v4639 = vsub.f32 1.0, %v4638
      %v4640 = vmul.f32 %v4637, %v4639
      %v4641 = vadd.f32 %v4637, %v4640
      %vm4642 = vweird.f32 %v4311
      %vm4643 = vweird.f32 %v4637
      %vm4644 = vmor %vm4642, %vm4643
      %v4645 = vsel %vm4644, %v4637, %v4641
      %v4646 = vand.u32 2147483647, %v4311
      %vm4647 = vcmp.eq.f32.partialorder %v4646, 8.507059e+37
      %v4648 = vand.u32 %v4311, 2147483648
      %v4649 = vor.u32 1.1754944e-38, %v4648
      %v4650 = vsel %vm4647, %v4649, %v4645
      %v4651 = vmul.f32 1.0, %v4650
      %v4652 = vrcp.pop %v4312
      %v4653 = vmul.f32 %v4312, %v4652
      %v4654 = vsub.f32 1.0, %v4653
      %v4655 = vmul.f32 %v4652, %v4654
      %v4656 = vadd.f32 %v4652, %v4655
      %vm4657 = vweird.f32 %v4312
      %vm4658 = vweird.f32 %v4652
      %vm4659 = vmor %vm4657, %vm4658
      %v4660 = vsel %vm4659, %v4652, %v4656
      %v4661 = vand.u32 2147483647, %v4312
      %vm4662 = vcmp.eq.f32.partialorder %v4661, 8.507059e+37
      %v4663 = vand.u32 %v4312, 2147483648
      %v4664 = vor.u32 1.1754944e-38, %v4663
      %v4665 = vsel %vm4662, %v4664, %v4660
      %v4666 = vmul.f32 1.0, %v4665
      %v4667 = vrcp.pop %v4313
      %v4668 = vmul.f32 %v4313, %v4667
      %v4669 = vsub.f32 1.0, %v4668
      %v4670 = vmul.f32 %v4667, %v4669
      %v4671 = vadd.f32 %v4667, %v4670
      %vm4672 = vweird.f32 %v4313
      %vm4673 = vweird.f32 %v4667
      %vm4674 = vmor %vm4672, %vm4673
      %v4675 = vsel %vm4674, %v4667, %v4671
      %v4676 = vand.u32 2147483647, %v4313
      %vm4677 = vcmp.eq.f32.partialorder %v4676, 8.507059e+37
      %v4678 = vand.u32 %v4313, 2147483648
      %v4679 = vor.u32 1.1754944e-38, %v4678
      %v4680 = vsel %vm4677, %v4679, %v4675
      %v4681 = vmul.f32 1.0, %v4680
      %v4682 = vrcp.pop %v4314
      %v4683 = vmul.f32 %v4314, %v4682
      %v4684 = vsub.f32 1.0, %v4683
      %v4685 = vmul.f32 %v4682, %v4684
      %v4686 = vadd.f32 %v4682, %v4685
      %vm4687 = vweird.f32 %v4314
      %vm4688 = vweird.f32 %v4682
      %vm4689 = vmor %vm4687, %vm4688
      %v4690 = vsel %vm4689, %v4682, %v4686
      %v4691 = vand.u32 2147483647, %v4314
      %vm4692 = vcmp.eq.f32.partialorder %v4691, 8.507059e+37
      %v4693 = vand.u32 %v4314, 2147483648
      %v4694 = vor.u32 1.1754944e-38, %v4693
      %v4695 = vsel %vm4692, %v4694, %v4690
      %v4696 = vmul.f32 1.0, %v4695
      %v4697 = vrcp.pop %v4315
      %v4698 = vmul.f32 %v4315, %v4697
      %v4699 = vsub.f32 1.0, %v4698
      %v4700 = vmul.f32 %v4697, %v4699
      %v4701 = vadd.f32 %v4697, %v4700
      %vm4702 = vweird.f32 %v4315
      %vm4703 = vweird.f32 %v4697
      %vm4704 = vmor %vm4702, %vm4703
      %v4705 = vsel %vm4704, %v4697, %v4701
      %v4706 = vand.u32 2147483647, %v4315
      %vm4707 = vcmp.eq.f32.partialorder %v4706, 8.507059e+37
      %v4708 = vand.u32 %v4315, 2147483648
      %v4709 = vor.u32 1.1754944e-38, %v4708
      %v4710 = vsel %vm4707, %v4709, %v4705
      %v4711 = vmul.f32 1.0, %v4710
      %v4712 = vrcp.pop %v4316
      %v4713 = vmul.f32 %v4316, %v4712
      %v4714 = vsub.f32 1.0, %v4713
      %v4715 = vmul.f32 %v4712, %v4714
      %v4716 = vadd.f32 %v4712, %v4715
      %vm4717 = vweird.f32 %v4316
      %vm4718 = vweird.f32 %v4712
      %vm4719 = vmor %vm4717, %vm4718
      %v4720 = vsel %vm4719, %v4712, %v4716
      %v4721 = vand.u32 2147483647, %v4316
      %vm4722 = vcmp.eq.f32.partialorder %v4721, 8.507059e+37
      %v4723 = vand.u32 %v4316, 2147483648
      %v4724 = vor.u32 1.1754944e-38, %v4723
      %v4725 = vsel %vm4722, %v4724, %v4720
      %v4726 = vmul.f32 1.0, %v4725
      %v4727 = vrcp.pop %v4317
      %v4728 = vmul.f32 %v4317, %v4727
      %v4729 = vsub.f32 1.0, %v4728
      %v4730 = vmul.f32 %v4727, %v4729
      %v4731 = vadd.f32 %v4727, %v4730
      %vm4732 = vweird.f32 %v4317
      %vm4733 = vweird.f32 %v4727
      %vm4734 = vmor %vm4732, %vm4733
      %v4735 = vsel %vm4734, %v4727, %v4731
      %v4736 = vand.u32 2147483647, %v4317
      %vm4737 = vcmp.eq.f32.partialorder %v4736, 8.507059e+37
      %v4738 = vand.u32 %v4317, 2147483648
      %v4739 = vor.u32 1.1754944e-38, %v4738
      %v4740 = vsel %vm4737, %v4739, %v4735
      %v4741 = vmul.f32 1.0, %v4740
      %v4742 = vrcp.pop %v4318
      %v4743 = vmul.f32 %v4318, %v4742
      %v4744 = vsub.f32 1.0, %v4743
      %v4745 = vmul.f32 %v4742, %v4744
      %v4746 = vadd.f32 %v4742, %v4745
      %vm4747 = vweird.f32 %v4318
      %vm4748 = vweird.f32 %v4742
      %vm4749 = vmor %vm4747, %vm4748
      %v4750 = vsel %vm4749, %v4742, %v4746
      %v4751 = vand.u32 2147483647, %v4318
      %vm4752 = vcmp.eq.f32.partialorder %v4751, 8.507059e+37
      %v4753 = vand.u32 %v4318, 2147483648
      %v4754 = vor.u32 1.1754944e-38, %v4753
      %v4755 = vsel %vm4752, %v4754, %v4750
      %v4756 = vmul.f32 1.0, %v4755
      %v4757 = vrcp.pop %v4319
      %v4758 = vmul.f32 %v4319, %v4757
      %v4759 = vsub.f32 1.0, %v4758
      %v4760 = vmul.f32 %v4757, %v4759
      %v4761 = vadd.f32 %v4757, %v4760
      %vm4762 = vweird.f32 %v4319
      %vm4763 = vweird.f32 %v4757
      %vm4764 = vmor %vm4762, %vm4763
      %v4765 = vsel %vm4764, %v4757, %v4761
      %v4766 = vand.u32 2147483647, %v4319
      %vm4767 = vcmp.eq.f32.partialorder %v4766, 8.507059e+37
      %v4768 = vand.u32 %v4319, 2147483648
      %v4769 = vor.u32 1.1754944e-38, %v4768
      %v4770 = vsel %vm4767, %v4769, %v4765
      %v4771 = vmul.f32 1.0, %v4770
      %v4772 = vrcp.pop %v4320
      %v4773 = vmul.f32 %v4320, %v4772
      %v4774 = vsub.f32 1.0, %v4773
      %v4775 = vmul.f32 %v4772, %v4774
      %v4776 = vadd.f32 %v4772, %v4775
      %vm4777 = vweird.f32 %v4320
      %vm4778 = vweird.f32 %v4772
      %vm4779 = vmor %vm4777, %vm4778
      %v4780 = vsel %vm4779, %v4772, %v4776
      %v4781 = vand.u32 2147483647, %v4320
      %vm4782 = vcmp.eq.f32.partialorder %v4781, 8.507059e+37
      %v4783 = vand.u32 %v4320, 2147483648
      %v4784 = vor.u32 1.1754944e-38, %v4783
      %v4785 = vsel %vm4782, %v4784, %v4780
      %v4786 = vmul.f32 1.0, %v4785
      %v4787 = vrcp.pop %v4321
      %v4788 = vmul.f32 %v4321, %v4787
      %v4789 = vsub.f32 1.0, %v4788
      %v4790 = vmul.f32 %v4787, %v4789
      %v4791 = vadd.f32 %v4787, %v4790
      %vm4792 = vweird.f32 %v4321
      %vm4793 = vweird.f32 %v4787
      %vm4794 = vmor %vm4792, %vm4793
      %v4795 = vsel %vm4794, %v4787, %v4791
      %v4796 = vand.u32 2147483647, %v4321
      %vm4797 = vcmp.eq.f32.partialorder %v4796, 8.507059e+37
      %v4798 = vand.u32 %v4321, 2147483648
      %v4799 = vor.u32 1.1754944e-38, %v4798
      %v4800 = vsel %vm4797, %v4799, %v4795
      %v4801 = vmul.f32 1.0, %v4800
      %v4802 = vmul.f32 %v4162, %v4336
      %v4803 = vmul.f32 %v4163, %v4351
      %v4804 = vmul.f32 %v4164, %v4366
      %v4805 = vmul.f32 %v4165, %v4381
      %v4806 = vmul.f32 %v4166, %v4396
      %v4807 = vmul.f32 %v4167, %v4411
      %v4808 = vmul.f32 %v4168, %v4426
      %v4809 = vmul.f32 %v4169, %v4441
      %v4810 = vmul.f32 %v4170, %v4456
      %v4811 = vmul.f32 %v4171, %v4471
      %v4812 = vmul.f32 %v4172, %v4486
      %v4813 = vmul.f32 %v4173, %v4501
      %v4814 = vmul.f32 %v4174, %v4516
      %v4815 = vmul.f32 %v4175, %v4531
      %v4816 = vmul.f32 %v4176, %v4546
      %v4817 = vmul.f32 %v4177, %v4561
      %v4818 = vmul.f32 %v4178, %v4576
      %v4819 = vmul.f32 %v4179, %v4591
      %v4820 = vmul.f32 %v4180, %v4606
      %v4821 = vmul.f32 %v4181, %v4621
      %v4822 = vmul.f32 %v4182, %v4636
      %v4823 = vmul.f32 %v4183, %v4651
      %v4824 = vmul.f32 %v4184, %v4666
      %v4825 = vmul.f32 %v4185, %v4681
      %v4826 = vmul.f32 %v4186, %v4696
      %v4827 = vmul.f32 %v4187, %v4711
      %v4828 = vmul.f32 %v4188, %v4726
      %v4829 = vmul.f32 %v4189, %v4741
      %v4830 = vmul.f32 %v4190, %v4756
      %v4831 = vmul.f32 %v4191, %v4771
      %v4832 = vmul.f32 %v4192, %v4786
      %v4833 = vmul.f32 %v4193, %v4801
      %4834 = vst [vmem:[%s278] sm:$0xff] %v4802
      %4835 = vst [vmem:[%s278 + $0x8] sm:$0xff] %v4803
      %4836 = vst [vmem:[%s278 + $0x10] sm:$0xff] %v4804
      %4837 = vst [vmem:[%s278 + $0x18] sm:$0xff] %v4805
      %4838 = vst [vmem:[%s278 + $0x20] sm:$0xff] %v4806
      %4839 = vst [vmem:[%s278 + $0x28] sm:$0xff] %v4807
      %4840 = vst [vmem:[%s278 + $0x30] sm:$0xff] %v4808
      %4841 = vst [vmem:[%s278 + $0x38] sm:$0xff] %v4809
      %4842 = vst [vmem:[%s278 + $0x40] sm:$0xff] %v4810
      %4843 = vst [vmem:[%s278 + $0x48] sm:$0xff] %v4811
      %4844 = vst [vmem:[%s278 + $0x50] sm:$0xff] %v4812
      %4845 = vst [vmem:[%s278 + $0x58] sm:$0xff] %v4813
      %4846 = vst [vmem:[%s278 + $0x60] sm:$0xff] %v4814
      %4847 = vst [vmem:[%s278 + $0x68] sm:$0xff] %v4815
      %4848 = vst [vmem:[%s278 + $0x70] sm:$0xff] %v4816
      %4849 = vst [vmem:[%s278 + $0x78] sm:$0xff] %v4817
      %4850 = vst [vmem:[%s278 + $0x80] sm:$0xff] %v4818
      %4851 = vst [vmem:[%s278 + $0x88] sm:$0xff] %v4819
      %4852 = vst [vmem:[%s278 + $0x90] sm:$0xff] %v4820
      %4853 = vst [vmem:[%s278 + $0x98] sm:$0xff] %v4821
      %4854 = vst [vmem:[%s278 + $0xa0] sm:$0xff] %v4822
      %4855 = vst [vmem:[%s278 + $0xa8] sm:$0xff] %v4823
      %4856 = vst [vmem:[%s278 + $0xb0] sm:$0xff] %v4824
      %4857 = vst [vmem:[%s278 + $0xb8] sm:$0xff] %v4825
      %4858 = vst [vmem:[%s278 + $0xc0] sm:$0xff] %v4826
      %4859 = vst [vmem:[%s278 + $0xc8] sm:$0xff] %v4827
      %4860 = vst [vmem:[%s278 + $0xd0] sm:$0xff] %v4828
      %4861 = vst [vmem:[%s278 + $0xd8] sm:$0xff] %v4829
      %4862 = vst [vmem:[%s278 + $0xe0] sm:$0xff] %v4830
      %4863 = vst [vmem:[%s278 + $0xe8] sm:$0xff] %v4831
      %4864 = vst [vmem:[%s278 + $0xf0] sm:$0xff] %v4832
      %4865 = vst [vmem:[%s278 + $0xf8] sm:$0xff] %v4833
      %p4866 = scmp.lt.s32.totalorder %s18, 1
      %s4867 = scalar_select %p4866, %s18, 1
      %s4868 = smul.addr %s4867, 32
      %s4869 = smul.addr %s4868, 8
      %s4870 = scalar_lea.vmem %s7, %s4869
      // Predicated region
      $region49: #{c2f_forward.4} parent=47 // pred_check
        %p4871 = pneg %p188
      $region50: #{c2f_forward.4} parent=47 // pred_check_branch
        %4873 = sbr.rel (%p4871) target = $region52
      $region51: #{c2f_forward.4} parent=47 // pred_region
        _
      $region52: #{c2f_forward.4} parent=47 // pred_fallthru
        _
    $region48: #{c2f_forward.4} parent=5 // pred_fallthru
      _
    %p4874 = scmp.le.s32.totalorder 2, %s13
    // Predicated region
    $region53: #{c2f_forward.4} parent=5 // pred_check
      %p4875 = pneg %p4874
    $region54: #{c2f_forward.4} parent=5 // pred_check_branch
      %4877 = sbr.rel (%p4875) target = $region56
    $region55: #{c2f_forward.4} parent=5 // pred_region
      %s4878 = ssub.s32 %s13, 2
      // Predicated region
      $region57: #{c2f_forward.4} parent=55 // pred_check
        %p4879 = pneg %p194
      $region58: #{c2f_forward.4} parent=55 // pred_check_branch
        %4881 = sbr.rel (%p4879) target = $region60
      $region59: #{c2f_forward.4} parent=55 // pred_region
        %p4882 = scmp.lt.s32.totalorder %s19, 1
        %s4883 = scalar_select %p4882, %s19, 1
        %s4884 = smul.addr %s4883, 32
        %s4885 = smul.addr %s4884, 8
        %s4886 = scalar_lea.vmem %s7, %s4885
      $region60: #{c2f_forward.4} parent=55 // pred_fallthru
        _
    $region56: #{c2f_forward.4} parent=5 // pred_fallthru
      _
  $region6: #{c2f_forward.4} parent=0 // loop_footer
    %s17 = sadd.s32 1, %s13
  $region7: #{c2f_forward.4} parent=0 // loop_footer_branch
    %12 = sbr.rel target = $region3
  $region8: #{c2f_forward.4} parent=0 // loop_exit
    _

</llo_original>
